<compile_context>
chip_gen: v6e
topology: v6e:2x2x1
jax: 0.10.0
libtpu: 0.0.40
codegen_flags: <defaults>
</compile_context>

<pallas_src>
import functools

import jax
import jax.numpy as jnp
from jax.experimental import pallas as pl
from jax.experimental.pallas import tpu as pltpu

LANE = 128  # TPU lane width; all channel-like dims are padded to this.


# ----------------------------- Pallas kernels ------------------------------

def _conv3x3_relu_kernel(x_ref, w_ref, b_ref, o_ref, *, H, W):
    """3x3 stride-1 conv (+bias, ReLU) on one image held in VMEM.

    x_ref: (1, H+2, W+2, C)  bf16, spatially zero-padded input
    w_ref: (9, C, Co)        bf16, tap-major weights
    b_ref: (1, Co)           f32
    o_ref: (1, H*W, Co)      bf16  (lane-dense: Co == 128)
    """
    C = x_ref.shape[-1]
    Co = w_ref.shape[-1]
    acc = jnp.zeros((H * W, Co), jnp.float32)
    for di in range(3):               # 9 shifted matmuls, unrolled
        for dj in range(3):
            patch = x_ref[0, di:di + H, dj:dj + W, :].reshape(H * W, C)
            acc += jnp.dot(patch, w_ref[di * 3 + dj],
                           preferred_element_type=jnp.float32)
    acc = jnp.maximum(acc + b_ref[...], 0.0)
    o_ref[0] = acc.astype(o_ref.dtype)


def _conv3x3_gap_mlp_kernel(x_ref, w2_ref, b2_ref, w3_ref, b3_ref,
                            w4_ref, b4_ref, h_ref, z_ref, *, H, W):
    """Fused tail: conv2(3x3,s1)+ReLU -> GAP -> fc1+ReLU -> fc2.

    Conv activation, h and z1 never leave VMEM.
    h_ref: (1, 1, C2) f32, z_ref: (1, 1, P) f32.
    """
    C = x_ref.shape[-1]
    C2 = w2_ref.shape[-1]
    acc = jnp.zeros((H * W, C2), jnp.float32)
    for di in range(3):
        for dj in range(3):
            patch = x_ref[0, di:di + H, dj:dj + W, :].reshape(H * W, C)
            acc += jnp.dot(patch, w2_ref[di * 3 + dj],
                           preferred_element_type=jnp.float32)
    a2 = jnp.maximum(acc + b2_ref[...], 0.0)          # (H*W, C2) f32

    h = jnp.mean(a2, axis=0, keepdims=True)           # (1, C2) global avg pool
    h_ref[0] = h.astype(h_ref.dtype)

    z1 = jnp.dot(h.astype(jnp.bfloat16), w3_ref[...],
                 preferred_element_type=jnp.float32) + b3_ref[...]
    z1 = jnp.maximum(z1, 0.0)
    z = jnp.dot(z1.astype(jnp.bfloat16), w4_ref[...],
                preferred_element_type=jnp.float32) + b4_ref[...]
    z_ref[0] = z.astype(z_ref.dtype)


# ------------------------------ wrappers ------------------------------------

def conv3x3_relu(x_pad, w, b):
    """x_pad: (N, H+2, W+2, C) bf16 -> (N, H*W, Co) bf16."""
    N, Hp, Wp, C = x_pad.shape
    H, W = Hp - 2, Wp - 2
    Co = w.shape[-1]
    flops = 2 * N * H * W * 9 * C * Co
    bytes_accessed = (x_pad.size * 2 + w.size * 2 + b.size * 4
                      + N * H * W * Co * 2)
    return pl.pallas_call(
        functools.partial(_conv3x3_relu_kernel, H=H, W=W),
        out_shape=jax.ShapeDtypeStruct((N, H * W, Co), jnp.bfloat16),
        grid=(N,),
        in_specs=[
            pl.BlockSpec((1, Hp, Wp, C), lambda n: (n, 0, 0, 0)),
            pl.BlockSpec((9, C, Co), lambda n: (0, 0, 0)),
            pl.BlockSpec((1, Co), lambda n: (0, 0)),
        ],
        out_specs=pl.BlockSpec((1, H * W, Co), lambda n: (n, 0, 0)),
        compiler_params=pltpu.CompilerParams(
            dimension_semantics=("parallel",)),
        cost_estimate=pl.CostEstimate(flops=flops, transcendentals=0,
                                      bytes_accessed=bytes_accessed),
    )(x_pad, w, b)


def conv_gap_mlp(x_pad, w2, b2, w3, b3, w4, b4):
    """Fused conv2+ReLU+GAP+fc1+ReLU+fc2.  Returns (h, z) padded to LANE."""
    N, Hp, Wp, C = x_pad.shape
    H, W = Hp - 2, Wp - 2
    C2, Hd, P = w2.shape[-1], w3.shape[-1], w4.shape[-1]
    flops = 2 * N * (H * W * 9 * C * C2 + C2 * Hd + Hd * P)
    bytes_accessed = (x_pad.size * 2 + (w2.size + w3.size + w4.size) * 2
                      + (b2.size + b3.size + b4.size) * 4 + N * (C2 + P) * 4)
    h, z = pl.pallas_call(
        functools.partial(_conv3x3_gap_mlp_kernel, H=H, W=W),
        out_shape=(jax.ShapeDtypeStruct((N, 1, C2), jnp.float32),
                   jax.ShapeDtypeStruct((N, 1, P), jnp.float32)),
        grid=(N,),
        in_specs=[
            pl.BlockSpec((1, Hp, Wp, C), lambda n: (n, 0, 0, 0)),
            pl.BlockSpec((9, C, C2), lambda n: (0, 0, 0)),
            pl.BlockSpec((1, C2), lambda n: (0, 0)),
            pl.BlockSpec((C2, Hd), lambda n: (0, 0)),
            pl.BlockSpec((1, Hd), lambda n: (0, 0)),
            pl.BlockSpec((Hd, P), lambda n: (0, 0)),
            pl.BlockSpec((1, P), lambda n: (0, 0)),
        ],
        out_specs=(pl.BlockSpec((1, 1, C2), lambda n: (n, 0, 0)),
                   pl.BlockSpec((1, 1, P), lambda n: (n, 0, 0))),
        compiler_params=pltpu.CompilerParams(
            dimension_semantics=("parallel",)),
        cost_estimate=pl.CostEstimate(flops=flops, transcendentals=0,
                                      bytes_accessed=bytes_accessed),
    )(x_pad, w2, b2, w3, b3, w4, b4)
    return h[:, 0, :], z[:, 0, :]


# ------------------------------ params ---------------------------------------

def init_params(key, c_in=3, c1=8, c2=16, hidden=32, proj=16):
    ks = jax.random.split(key, 8)
    sc = lambda fan_in: 1.0 / jnp.sqrt(fan_in)
    return {
        # conv weights in (kh, kw, Cin, Cout) layout.
        # TODO(synk): real PyTorch Conv2d weights are (Cout, Cin, kh, kw);
        # permute with .transpose(2, 3, 1, 0) before loading them here.
        "conv1_w": jax.random.normal(ks[0], (3, 3, c_in, c1), jnp.float32) * sc(9 * c_in),
        "conv1_b": jax.random.normal(ks[1], (c1,), jnp.float32) * 0.01,
        "conv2_w": jax.random.normal(ks[2], (3, 3, c1, c2), jnp.float32) * sc(9 * c1),
        "conv2_b": jax.random.normal(ks[3], (c2,), jnp.float32) * 0.01,
        "fc1_w": jax.random.normal(ks[4], (c2, hidden), jnp.float32) * sc(c2),
        "fc1_b": jax.random.normal(ks[5], (hidden,), jnp.float32) * 0.01,
        "fc2_w": jax.random.normal(ks[6], (hidden, proj), jnp.float32) * sc(hidden),
        "fc2_b": jax.random.normal(ks[7], (proj,), jnp.float32) * 0.01,
    }


def pad_params(params):
    """Zero-pad every channel-like dim to LANE, cast weights to bf16 (done once,
    outside the forward, so it is not re-traced per call)."""
    def conv(w):
        kh, kw, ci, co = w.shape
        w = w.reshape(kh * kw, ci, co)
        return jnp.pad(w, ((0, 0), (0, LANE - ci), (0, LANE - co))).astype(jnp.bfloat16)

    def fc(w):
        k, n = w.shape
        return jnp.pad(w, ((0, LANE - k), (0, LANE - n))).astype(jnp.bfloat16)

    def bias(b):
        return jnp.pad(b, (0, LANE - b.shape[0])).reshape(1, LANE).astype(jnp.float32)

    return {
        "conv1_w": conv(params["conv1_w"]), "conv1_b": bias(params["conv1_b"]),
        "conv2_w": conv(params["conv2_w"]), "conv2_b": bias(params["conv2_b"]),
        "fc1_w": fc(params["fc1_w"]), "fc1_b": bias(params["fc1_b"]),
        "fc2_w": fc(params["fc2_w"]), "fc2_b": bias(params["fc2_b"]),
    }


# ------------------------------ model forward --------------------------------

@functools.partial(jax.jit, static_argnames=("feat_dim", "proj_dim"))
def continual_ssl_forward(pp, x_nchw, *, feat_dim=16, proj_dim=16):
    """Equivalent of ContinualSSLModel.forward(x) -> self.net(x) -> (h, z)."""
    x = jnp.transpose(x_nchw, (0, 2, 3, 1))                       # NCHW -> NHWC
    N, H, W, Cin = x.shape
    # channel pad to LANE + spatial halo of 1; bf16 inputs for the MXU
    xp = jnp.pad(x, ((0, 0), (1, 1), (1, 1), (0, LANE - Cin))).astype(jnp.bfloat16)

    # encoder stage 1 (Pallas conv kernel)
    a1 = conv3x3_relu(xp, pp["conv1_w"], pp["conv1_b"])           # (N, H*W, 128)
    a1 = a1.reshape(N, H, W, LANE)
    a1p = jnp.pad(a1, ((0, 0), (1, 1), (1, 1), (0, 0)))           # halo for conv2

    # fused conv2 + GAP + projection head (single Pallas kernel)
    h_pad, z_pad = conv_gap_mlp(a1p,
                                pp["conv2_w"], pp["conv2_b"],
                                pp["fc1_w"], pp["fc1_b"],
                                pp["fc2_w"], pp["fc2_b"])
    return h_pad[:, :feat_dim], z_pad[:, :proj_dim]


# ------------------------------ main ----------------------------------------

if __name__ == "__main__":
    key = jax.random.PRNGKey(0)
    k_param, k_x = jax.random.split(key)

    params = init_params(k_param)
    pparams = pad_params(params)

    # small shapes: batch=2, 3-channel 16x16 images (img_size analog)
    x = jax.random.normal(k_x, (2, 3, 16, 16), jnp.float32)

    h, z = continual_ssl_forward(pparams, x, feat_dim=16, proj_dim=16)
    jax.block_until_ready((h, z))

    assert h.shape == (2, 16) and z.shape == (2, 16)
    assert bool(jnp.all(jnp.isfinite(h))) and bool(jnp.all(jnp.isfinite(z)))
    print("KERNEL_OK")
</pallas_src>

<mosaic_0001>
module attributes {stable_mosaic.version = 11 : i64} {
  func.func @_conv3x3_relu_kernel(%arg0: i32, %arg1: memref<1x18x18x128xbf16, #tpu.memory_space<vmem>>, %arg2: memref<9x128x128xbf16, #tpu.memory_space<vmem>>, %arg3: memref<1x128xf32, #tpu.memory_space<vmem>>, %arg4: memref<1x256x128xbf16, #tpu.memory_space<vmem>>) attributes {dimension_semantics = [#tpu.dimension_semantics<parallel>], iteration_bounds = array<i64: 2>, scalar_prefetch = 0 : i64, scratch_operands = 0 : i64, tpu.core_type = #tpu.core_type<tc>, window_params = [{transform_indices = @transform_0, window_bounds = array<i64: 1, 18, 18, 128>}, {pipeline_mode = #tpu.pipeline_mode<synchronous>, transform_indices = @transform_1, window_bounds = array<i64: 9, 128, 128>}, {pipeline_mode = #tpu.pipeline_mode<synchronous>, transform_indices = @transform_2, window_bounds = array<i64: 1, 128>}, {transform_indices = @transform_3, window_bounds = array<i64: 1, 256, 128>}]} {
    %cst = arith.constant 0.000000e+00 : f32
    %0 = vector.broadcast %cst : f32 to vector<256x128xf32>
    %c0 = arith.constant 0 : index
    %c0_0 = arith.constant 0 : index
    %c0_1 = arith.constant 0 : index
    %c0_2 = arith.constant 0 : index
    %1 = vector.load %arg1[%c0, %c0_0, %c0_1, %c0_2] : memref<1x18x18x128xbf16, #tpu.memory_space<vmem>>, vector<1x16x16x128xbf16>
    %2 = vector.shape_cast %1 : vector<1x16x16x128xbf16> to vector<16x16x128xbf16>
    %3 = vector.shape_cast %2 : vector<16x16x128xbf16> to vector<256x128xbf16>
    %c0_3 = arith.constant 0 : index
    %c0_4 = arith.constant 0 : index
    %c0_5 = arith.constant 0 : index
    %4 = vector.load %arg2[%c0_3, %c0_4, %c0_5] : memref<9x128x128xbf16, #tpu.memory_space<vmem>>, vector<1x128x128xbf16>
    %5 = vector.shape_cast %4 : vector<1x128x128xbf16> to vector<128x128xbf16>
    %cst_6 = arith.constant dense<0.000000e+00> : vector<256x128xf32>
    %6 = tpu.matmul %3, %5, %cst_6 {dimension_numbers = #tpu.dot_dimension_numbers<[1], [0], [0], [1], [0, 0, 1, 1], [], []>} : vector<256x128xbf16>, vector<128x128xbf16>, vector<256x128xf32> -> vector<256x128xf32>
    %7 = arith.addf %0, %6 : vector<256x128xf32>
    %c0_7 = arith.constant 0 : index
    %c0_8 = arith.constant 0 : index
    %c1 = arith.constant 1 : index
    %c0_9 = arith.constant 0 : index
    %8 = vector.load %arg1[%c0_7, %c0_8, %c1, %c0_9] : memref<1x18x18x128xbf16, #tpu.memory_space<vmem>>, vector<1x16x16x128xbf16>
    %9 = vector.shape_cast %8 : vector<1x16x16x128xbf16> to vector<16x16x128xbf16>
    %10 = vector.shape_cast %9 : vector<16x16x128xbf16> to vector<256x128xbf16>
    %c1_10 = arith.constant 1 : index
    %c0_11 = arith.constant 0 : index
    %c0_12 = arith.constant 0 : index
    %11 = vector.load %arg2[%c1_10, %c0_11, %c0_12] : memref<9x128x128xbf16, #tpu.memory_space<vmem>>, vector<1x128x128xbf16>
    %12 = vector.shape_cast %11 : vector<1x128x128xbf16> to vector<128x128xbf16>
    %cst_13 = arith.constant dense<0.000000e+00> : vector<256x128xf32>
    %13 = tpu.matmul %10, %12, %cst_13 {dimension_numbers = #tpu.dot_dimension_numbers<[1], [0], [0], [1], [0, 0, 1, 1], [], []>} : vector<256x128xbf16>, vector<128x128xbf16>, vector<256x128xf32> -> vector<256x128xf32>
    %14 = arith.addf %7, %13 : vector<256x128xf32>
    %c0_14 = arith.constant 0 : index
    %c0_15 = arith.constant 0 : index
    %c2 = arith.constant 2 : index
    %c0_16 = arith.constant 0 : index
    %15 = vector.load %arg1[%c0_14, %c0_15, %c2, %c0_16] : memref<1x18x18x128xbf16, #tpu.memory_space<vmem>>, vector<1x16x16x128xbf16>
    %16 = vector.shape_cast %15 : vector<1x16x16x128xbf16> to vector<16x16x128xbf16>
    %17 = vector.shape_cast %16 : vector<16x16x128xbf16> to vector<256x128xbf16>
    %c2_17 = arith.constant 2 : index
    %c0_18 = arith.constant 0 : index
    %c0_19 = arith.constant 0 : index
    %18 = vector.load %arg2[%c2_17, %c0_18, %c0_19] : memref<9x128x128xbf16, #tpu.memory_space<vmem>>, vector<1x128x128xbf16>
    %19 = vector.shape_cast %18 : vector<1x128x128xbf16> to vector<128x128xbf16>
    %cst_20 = arith.constant dense<0.000000e+00> : vector<256x128xf32>
    %20 = tpu.matmul %17, %19, %cst_20 {dimension_numbers = #tpu.dot_dimension_numbers<[1], [0], [0], [1], [0, 0, 1, 1], [], []>} : vector<256x128xbf16>, vector<128x128xbf16>, vector<256x128xf32> -> vector<256x128xf32>
    %21 = arith.addf %14, %20 : vector<256x128xf32>
    %c0_21 = arith.constant 0 : index
    %c1_22 = arith.constant 1 : index
    %c0_23 = arith.constant 0 : index
    %c0_24 = arith.constant 0 : index
    %22 = vector.load %arg1[%c0_21, %c1_22, %c0_23, %c0_24] : memref<1x18x18x128xbf16, #tpu.memory_space<vmem>>, vector<1x16x16x128xbf16>
    %23 = vector.shape_cast %22 : vector<1x16x16x128xbf16> to vector<16x16x128xbf16>
    %24 = vector.shape_cast %23 : vector<16x16x128xbf16> to vector<256x128xbf16>
    %c3 = arith.constant 3 : index
    %c0_25 = arith.constant 0 : index
    %c0_26 = arith.constant 0 : index
    %25 = vector.load %arg2[%c3, %c0_25, %c0_26] : memref<9x128x128xbf16, #tpu.memory_space<vmem>>, vector<1x128x128xbf16>
    %26 = vector.shape_cast %25 : vector<1x128x128xbf16> to vector<128x128xbf16>
    %cst_27 = arith.constant dense<0.000000e+00> : vector<256x128xf32>
    %27 = tpu.matmul %24, %26, %cst_27 {dimension_numbers = #tpu.dot_dimension_numbers<[1], [0], [0], [1], [0, 0, 1, 1], [], []>} : vector<256x128xbf16>, vector<128x128xbf16>, vector<256x128xf32> -> vector<256x128xf32>
    %28 = arith.addf %21, %27 : vector<256x128xf32>
    %c0_28 = arith.constant 0 : index
    %c1_29 = arith.constant 1 : index
    %c1_30 = arith.constant 1 : index
    %c0_31 = arith.constant 0 : index
    %29 = vector.load %arg1[%c0_28, %c1_29, %c1_30, %c0_31] : memref<1x18x18x128xbf16, #tpu.memory_space<vmem>>, vector<1x16x16x128xbf16>
    %30 = vector.shape_cast %29 : vector<1x16x16x128xbf16> to vector<16x16x128xbf16>
    %31 = vector.shape_cast %30 : vector<16x16x128xbf16> to vector<256x128xbf16>
    %c4 = arith.constant 4 : index
    %c0_32 = arith.constant 0 : index
    %c0_33 = arith.constant 0 : index
    %32 = vector.load %arg2[%c4, %c0_32, %c0_33] : memref<9x128x128xbf16, #tpu.memory_space<vmem>>, vector<1x128x128xbf16>
    %33 = vector.shape_cast %32 : vector<1x128x128xbf16> to vector<128x128xbf16>
    %cst_34 = arith.constant dense<0.000000e+00> : vector<256x128xf32>
    %34 = tpu.matmul %31, %33, %cst_34 {dimension_numbers = #tpu.dot_dimension_numbers<[1], [0], [0], [1], [0, 0, 1, 1], [], []>} : vector<256x128xbf16>, vector<128x128xbf16>, vector<256x128xf32> -> vector<256x128xf32>
    %35 = arith.addf %28, %34 : vector<256x128xf32>
    %c0_35 = arith.constant 0 : index
    %c1_36 = arith.constant 1 : index
    %c2_37 = arith.constant 2 : index
    %c0_38 = arith.constant 0 : index
    %36 = vector.load %arg1[%c0_35, %c1_36, %c2_37, %c0_38] : memref<1x18x18x128xbf16, #tpu.memory_space<vmem>>, vector<1x16x16x128xbf16>
    %37 = vector.shape_cast %36 : vector<1x16x16x128xbf16> to vector<16x16x128xbf16>
    %38 = vector.shape_cast %37 : vector<16x16x128xbf16> to vector<256x128xbf16>
    %c5 = arith.constant 5 : index
    %c0_39 = arith.constant 0 : index
    %c0_40 = arith.constant 0 : index
    %39 = vector.load %arg2[%c5, %c0_39, %c0_40] : memref<9x128x128xbf16, #tpu.memory_space<vmem>>, vector<1x128x128xbf16>
    %40 = vector.shape_cast %39 : vector<1x128x128xbf16> to vector<128x128xbf16>
    %cst_41 = arith.constant dense<0.000000e+00> : vector<256x128xf32>
    %41 = tpu.matmul %38, %40, %cst_41 {dimension_numbers = #tpu.dot_dimension_numbers<[1], [0], [0], [1], [0, 0, 1, 1], [], []>} : vector<256x128xbf16>, vector<128x128xbf16>, vector<256x128xf32> -> vector<256x128xf32>
    %42 = arith.addf %35, %41 : vector<256x128xf32>
    %c0_42 = arith.constant 0 : index
    %c2_43 = arith.constant 2 : index
    %c0_44 = arith.constant 0 : index
    %c0_45 = arith.constant 0 : index
    %43 = vector.load %arg1[%c0_42, %c2_43, %c0_44, %c0_45] : memref<1x18x18x128xbf16, #tpu.memory_space<vmem>>, vector<1x16x16x128xbf16>
    %44 = vector.shape_cast %43 : vector<1x16x16x128xbf16> to vector<16x16x128xbf16>
    %45 = vector.shape_cast %44 : vector<16x16x128xbf16> to vector<256x128xbf16>
    %c6 = arith.constant 6 : index
    %c0_46 = arith.constant 0 : index
    %c0_47 = arith.constant 0 : index
    %46 = vector.load %arg2[%c6, %c0_46, %c0_47] : memref<9x128x128xbf16, #tpu.memory_space<vmem>>, vector<1x128x128xbf16>
    %47 = vector.shape_cast %46 : vector<1x128x128xbf16> to vector<128x128xbf16>
    %cst_48 = arith.constant dense<0.000000e+00> : vector<256x128xf32>
    %48 = tpu.matmul %45, %47, %cst_48 {dimension_numbers = #tpu.dot_dimension_numbers<[1], [0], [0], [1], [0, 0, 1, 1], [], []>} : vector<256x128xbf16>, vector<128x128xbf16>, vector<256x128xf32> -> vector<256x128xf32>
    %49 = arith.addf %42, %48 : vector<256x128xf32>
    %c0_49 = arith.constant 0 : index
    %c2_50 = arith.constant 2 : index
    %c1_51 = arith.constant 1 : index
    %c0_52 = arith.constant 0 : index
    %50 = vector.load %arg1[%c0_49, %c2_50, %c1_51, %c0_52] : memref<1x18x18x128xbf16, #tpu.memory_space<vmem>>, vector<1x16x16x128xbf16>
    %51 = vector.shape_cast %50 : vector<1x16x16x128xbf16> to vector<16x16x128xbf16>
    %52 = vector.shape_cast %51 : vector<16x16x128xbf16> to vector<256x128xbf16>
    %c7 = arith.constant 7 : index
    %c0_53 = arith.constant 0 : index
    %c0_54 = arith.constant 0 : index
    %53 = vector.load %arg2[%c7, %c0_53, %c0_54] : memref<9x128x128xbf16, #tpu.memory_space<vmem>>, vector<1x128x128xbf16>
    %54 = vector.shape_cast %53 : vector<1x128x128xbf16> to vector<128x128xbf16>
    %cst_55 = arith.constant dense<0.000000e+00> : vector<256x128xf32>
    %55 = tpu.matmul %52, %54, %cst_55 {dimension_numbers = #tpu.dot_dimension_numbers<[1], [0], [0], [1], [0, 0, 1, 1], [], []>} : vector<256x128xbf16>, vector<128x128xbf16>, vector<256x128xf32> -> vector<256x128xf32>
    %56 = arith.addf %49, %55 : vector<256x128xf32>
    %c0_56 = arith.constant 0 : index
    %c2_57 = arith.constant 2 : index
    %c2_58 = arith.constant 2 : index
    %c0_59 = arith.constant 0 : index
    %57 = vector.load %arg1[%c0_56, %c2_57, %c2_58, %c0_59] : memref<1x18x18x128xbf16, #tpu.memory_space<vmem>>, vector<1x16x16x128xbf16>
    %58 = vector.shape_cast %57 : vector<1x16x16x128xbf16> to vector<16x16x128xbf16>
    %59 = vector.shape_cast %58 : vector<16x16x128xbf16> to vector<256x128xbf16>
    %c8 = arith.constant 8 : index
    %c0_60 = arith.constant 0 : index
    %c0_61 = arith.constant 0 : index
    %60 = vector.load %arg2[%c8, %c0_60, %c0_61] : memref<9x128x128xbf16, #tpu.memory_space<vmem>>, vector<1x128x128xbf16>
    %61 = vector.shape_cast %60 : vector<1x128x128xbf16> to vector<128x128xbf16>
    %cst_62 = arith.constant dense<0.000000e+00> : vector<256x128xf32>
    %62 = tpu.matmul %59, %61, %cst_62 {dimension_numbers = #tpu.dot_dimension_numbers<[1], [0], [0], [1], [0, 0, 1, 1], [], []>} : vector<256x128xbf16>, vector<128x128xbf16>, vector<256x128xf32> -> vector<256x128xf32>
    %63 = arith.addf %56, %62 : vector<256x128xf32>
    %c0_63 = arith.constant 0 : index
    %c0_64 = arith.constant 0 : index
    %64 = vector.load %arg3[%c0_63, %c0_64] : memref<1x128xf32, #tpu.memory_space<vmem>>, vector<1x128xf32>
    %65 = vector.broadcast %64 : vector<1x128xf32> to vector<256x128xf32>
    %66 = arith.addf %63, %65 : vector<256x128xf32>
    %cst_65 = arith.constant 0.000000e+00 : f32
    %67 = vector.broadcast %cst_65 : f32 to vector<256x128xf32>
    %68 = arith.maximumf %66, %67 : vector<256x128xf32>
    %69 = arith.truncf %68 : vector<256x128xf32> to vector<256x128xbf16>
    %c0_66 = arith.constant 0 : index
    %c0_67 = arith.constant 0 : index
    %c0_68 = arith.constant 0 : index
    %70 = vector.load %arg4[%c0_66, %c0_67, %c0_68] : memref<1x256x128xbf16, #tpu.memory_space<vmem>>, vector<1x256x128xbf16>
    %71 = vector.shape_cast %70 : vector<1x256x128xbf16> to vector<256x128xbf16>
    %72 = vector.shape_cast %69 : vector<256x128xbf16> to vector<1x256x128xbf16>
    tpu.vector_store %arg4[%c0_66, %c0_67, %c0_68], %72 {strides = array<i32>} : memref<1x256x128xbf16, #tpu.memory_space<vmem>>, vector<1x256x128xbf16>,
    return
  }
  func.func @transform_0(%arg0: i32) -> (i32, i32, i32, i32) {
    %c0_i32 = arith.constant 0 : i32
    %c0_i32_0 = arith.constant 0 : i32
    %c0_i32_1 = arith.constant 0 : i32
    %c0_i32_2 = arith.constant 0 : i32
    return %arg0, %c0_i32, %c0_i32_0, %c0_i32_1 : i32, i32, i32, i32
  }
  func.func @transform_1(%arg0: i32) -> (i32, i32, i32) {
    %c0_i32 = arith.constant 0 : i32
    %c0_i32_0 = arith.constant 0 : i32
    %c0_i32_1 = arith.constant 0 : i32
    %c0_i32_2 = arith.constant 0 : i32
    return %c0_i32, %c0_i32_0, %c0_i32_1 : i32, i32, i32
  }
  func.func @transform_2(%arg0: i32) -> (i32, i32) {
    %c0_i32 = arith.constant 0 : i32
    %c0_i32_0 = arith.constant 0 : i32
    %c0_i32_1 = arith.constant 0 : i32
    return %c0_i32, %c0_i32_0 : i32, i32
  }
  func.func @transform_3(%arg0: i32) -> (i32, i32, i32) {
    %c0_i32 = arith.constant 0 : i32
    %c0_i32_0 = arith.constant 0 : i32
    %c0_i32_1 = arith.constant 0 : i32
    return %arg0, %c0_i32, %c0_i32_0 : i32, i32, i32
  }
}

module attributes {stable_mosaic.version = 11 : i64} {
  func.func @_conv3x3_gap_mlp_kernel(%arg0: i32, %arg1: memref<1x18x18x128xbf16, #tpu.memory_space<vmem>>, %arg2: memref<9x128x128xbf16, #tpu.memory_space<vmem>>, %arg3: memref<1x128xf32, #tpu.memory_space<vmem>>, %arg4: memref<128x128xbf16, #tpu.memory_space<vmem>>, %arg5: memref<1x128xf32, #tpu.memory_space<vmem>>, %arg6: memref<128x128xbf16, #tpu.memory_space<vmem>>, %arg7: memref<1x128xf32, #tpu.memory_space<vmem>>, %arg8: memref<1x1x128xf32, #tpu.memory_space<vmem>>, %arg9: memref<1x1x128xf32, #tpu.memory_space<vmem>>) attributes {dimension_semantics = [#tpu.dimension_semantics<parallel>], iteration_bounds = array<i64: 2>, scalar_prefetch = 0 : i64, scratch_operands = 0 : i64, tpu.core_type = #tpu.core_type<tc>, window_params = [{transform_indices = @transform_0, window_bounds = array<i64: 1, 18, 18, 128>}, {pipeline_mode = #tpu.pipeline_mode<synchronous>, transform_indices = @transform_1, window_bounds = array<i64: 9, 128, 128>}, {pipeline_mode = #tpu.pipeline_mode<synchronous>, transform_indices = @transform_2, window_bounds = array<i64: 1, 128>}, {pipeline_mode = #tpu.pipeline_mode<synchronous>, transform_indices = @transform_3, window_bounds = array<i64: 128, 128>}, {pipeline_mode = #tpu.pipeline_mode<synchronous>, transform_indices = @transform_4, window_bounds = array<i64: 1, 128>}, {pipeline_mode = #tpu.pipeline_mode<synchronous>, transform_indices = @transform_5, window_bounds = array<i64: 128, 128>}, {pipeline_mode = #tpu.pipeline_mode<synchronous>, transform_indices = @transform_6, window_bounds = array<i64: 1, 128>}, {transform_indices = @transform_7, window_bounds = array<i64: 1, 1, 128>}, {transform_indices = @transform_8, window_bounds = array<i64: 1, 1, 128>}]} {
    %cst = arith.constant 0.000000e+00 : f32
    %0 = vector.broadcast %cst : f32 to vector<256x128xf32>
    %c0 = arith.constant 0 : index
    %c0_0 = arith.constant 0 : index
    %c0_1 = arith.constant 0 : index
    %c0_2 = arith.constant 0 : index
    %1 = vector.load %arg1[%c0, %c0_0, %c0_1, %c0_2] : memref<1x18x18x128xbf16, #tpu.memory_space<vmem>>, vector<1x16x16x128xbf16>
    %2 = vector.shape_cast %1 : vector<1x16x16x128xbf16> to vector<16x16x128xbf16>
    %3 = vector.shape_cast %2 : vector<16x16x128xbf16> to vector<256x128xbf16>
    %c0_3 = arith.constant 0 : index
    %c0_4 = arith.constant 0 : index
    %c0_5 = arith.constant 0 : index
    %4 = vector.load %arg2[%c0_3, %c0_4, %c0_5] : memref<9x128x128xbf16, #tpu.memory_space<vmem>>, vector<1x128x128xbf16>
    %5 = vector.shape_cast %4 : vector<1x128x128xbf16> to vector<128x128xbf16>
    %cst_6 = arith.constant dense<0.000000e+00> : vector<256x128xf32>
    %6 = tpu.matmul %3, %5, %cst_6 {dimension_numbers = #tpu.dot_dimension_numbers<[1], [0], [0], [1], [0, 0, 1, 1], [], []>} : vector<256x128xbf16>, vector<128x128xbf16>, vector<256x128xf32> -> vector<256x128xf32>
    %7 = arith.addf %0, %6 : vector<256x128xf32>
    %c0_7 = arith.constant 0 : index
    %c0_8 = arith.constant 0 : index
    %c1 = arith.constant 1 : index
    %c0_9 = arith.constant 0 : index
    %8 = vector.load %arg1[%c0_7, %c0_8, %c1, %c0_9] : memref<1x18x18x128xbf16, #tpu.memory_space<vmem>>, vector<1x16x16x128xbf16>
    %9 = vector.shape_cast %8 : vector<1x16x16x128xbf16> to vector<16x16x128xbf16>
    %10 = vector.shape_cast %9 : vector<16x16x128xbf16> to vector<256x128xbf16>
    %c1_10 = arith.constant 1 : index
    %c0_11 = arith.constant 0 : index
    %c0_12 = arith.constant 0 : index
    %11 = vector.load %arg2[%c1_10, %c0_11, %c0_12] : memref<9x128x128xbf16, #tpu.memory_space<vmem>>, vector<1x128x128xbf16>
    %12 = vector.shape_cast %11 : vector<1x128x128xbf16> to vector<128x128xbf16>
    %cst_13 = arith.constant dense<0.000000e+00> : vector<256x128xf32>
    %13 = tpu.matmul %10, %12, %cst_13 {dimension_numbers = #tpu.dot_dimension_numbers<[1], [0], [0], [1], [0, 0, 1, 1], [], []>} : vector<256x128xbf16>, vector<128x128xbf16>, vector<256x128xf32> -> vector<256x128xf32>
    %14 = arith.addf %7, %13 : vector<256x128xf32>
    %c0_14 = arith.constant 0 : index
    %c0_15 = arith.constant 0 : index
    %c2 = arith.constant 2 : index
    %c0_16 = arith.constant 0 : index
    %15 = vector.load %arg1[%c0_14, %c0_15, %c2, %c0_16] : memref<1x18x18x128xbf16, #tpu.memory_space<vmem>>, vector<1x16x16x128xbf16>
    %16 = vector.shape_cast %15 : vector<1x16x16x128xbf16> to vector<16x16x128xbf16>
    %17 = vector.shape_cast %16 : vector<16x16x128xbf16> to vector<256x128xbf16>
    %c2_17 = arith.constant 2 : index
    %c0_18 = arith.constant 0 : index
    %c0_19 = arith.constant 0 : index
    %18 = vector.load %arg2[%c2_17, %c0_18, %c0_19] : memref<9x128x128xbf16, #tpu.memory_space<vmem>>, vector<1x128x128xbf16>
    %19 = vector.shape_cast %18 : vector<1x128x128xbf16> to vector<128x128xbf16>
    %cst_20 = arith.constant dense<0.000000e+00> : vector<256x128xf32>
    %20 = tpu.matmul %17, %19, %cst_20 {dimension_numbers = #tpu.dot_dimension_numbers<[1], [0], [0], [1], [0, 0, 1, 1], [], []>} : vector<256x128xbf16>, vector<128x128xbf16>, vector<256x128xf32> -> vector<256x128xf32>
    %21 = arith.addf %14, %20 : vector<256x128xf32>
    %c0_21 = arith.constant 0 : index
    %c1_22 = arith.constant 1 : index
    %c0_23 = arith.constant 0 : index
    %c0_24 = arith.constant 0 : index
    %22 = vector.load %arg1[%c0_21, %c1_22, %c0_23, %c0_24] : memref<1x18x18x128xbf16, #tpu.memory_space<vmem>>, vector<1x16x16x128xbf16>
    %23 = vector.shape_cast %22 : vector<1x16x16x128xbf16> to vector<16x16x128xbf16>
    %24 = vector.shape_cast %23 : vector<16x16x128xbf16> to vector<256x128xbf16>
    %c3 = arith.constant 3 : index
    %c0_25 = arith.constant 0 : index
    %c0_26 = arith.constant 0 : index
    %25 = vector.load %arg2[%c3, %c0_25, %c0_26] : memref<9x128x128xbf16, #tpu.memory_space<vmem>>, vector<1x128x128xbf16>
    %26 = vector.shape_cast %25 : vector<1x128x128xbf16> to vector<128x128xbf16>
    %cst_27 = arith.constant dense<0.000000e+00> : vector<256x128xf32>
    %27 = tpu.matmul %24, %26, %cst_27 {dimension_numbers = #tpu.dot_dimension_numbers<[1], [0], [0], [1], [0, 0, 1, 1], [], []>} : vector<256x128xbf16>, vector<128x128xbf16>, vector<256x128xf32> -> vector<256x128xf32>
    %28 = arith.addf %21, %27 : vector<256x128xf32>
    %c0_28 = arith.constant 0 : index
    %c1_29 = arith.constant 1 : index
    %c1_30 = arith.constant 1 : index
    %c0_31 = arith.constant 0 : index
    %29 = vector.load %arg1[%c0_28, %c1_29, %c1_30, %c0_31] : memref<1x18x18x128xbf16, #tpu.memory_space<vmem>>, vector<1x16x16x128xbf16>
    %30 = vector.shape_cast %29 : vector<1x16x16x128xbf16> to vector<16x16x128xbf16>
    %31 = vector.shape_cast %30 : vector<16x16x128xbf16> to vector<256x128xbf16>
    %c4 = arith.constant 4 : index
    %c0_32 = arith.constant 0 : index
    %c0_33 = arith.constant 0 : index
    %32 = vector.load %arg2[%c4, %c0_32, %c0_33] : memref<9x128x128xbf16, #tpu.memory_space<vmem>>, vector<1x128x128xbf16>
    %33 = vector.shape_cast %32 : vector<1x128x128xbf16> to vector<128x128xbf16>
    %cst_34 = arith.constant dense<0.000000e+00> : vector<256x128xf32>
    %34 = tpu.matmul %31, %33, %cst_34 {dimension_numbers = #tpu.dot_dimension_numbers<[1], [0], [0], [1], [0, 0, 1, 1], [], []>} : vector<256x128xbf16>, vector<128x128xbf16>, vector<256x128xf32> -> vector<256x128xf32>
    %35 = arith.addf %28, %34 : vector<256x128xf32>
    %c0_35 = arith.constant 0 : index
    %c1_36 = arith.constant 1 : index
    %c2_37 = arith.constant 2 : index
    %c0_38 = arith.constant 0 : index
    %36 = vector.load %arg1[%c0_35, %c1_36, %c2_37, %c0_38] : memref<1x18x18x128xbf16, #tpu.memory_space<vmem>>, vector<1x16x16x128xbf16>
    %37 = vector.shape_cast %36 : vector<1x16x16x128xbf16> to vector<16x16x128xbf16>
    %38 = vector.shape_cast %37 : vector<16x16x128xbf16> to vector<256x128xbf16>
    %c5 = arith.constant 5 : index
    %c0_39 = arith.constant 0 : index
    %c0_40 = arith.constant 0 : index
    %39 = vector.load %arg2[%c5, %c0_39, %c0_40] : memref<9x128x128xbf16, #tpu.memory_space<vmem>>, vector<1x128x128xbf16>
    %40 = vector.shape_cast %39 : vector<1x128x128xbf16> to vector<128x128xbf16>
    %cst_41 = arith.constant dense<0.000000e+00> : vector<256x128xf32>
    %41 = tpu.matmul %38, %40, %cst_41 {dimension_numbers = #tpu.dot_dimension_numbers<[1], [0], [0], [1], [0, 0, 1, 1], [], []>} : vector<256x128xbf16>, vector<128x128xbf16>, vector<256x128xf32> -> vector<256x128xf32>
    %42 = arith.addf %35, %41 : vector<256x128xf32>
    %c0_42 = arith.constant 0 : index
    %c2_43 = arith.constant 2 : index
    %c0_44 = arith.constant 0 : index
    %c0_45 = arith.constant 0 : index
    %43 = vector.load %arg1[%c0_42, %c2_43, %c0_44, %c0_45] : memref<1x18x18x128xbf16, #tpu.memory_space<vmem>>, vector<1x16x16x128xbf16>
    %44 = vector.shape_cast %43 : vector<1x16x16x128xbf16> to vector<16x16x128xbf16>
    %45 = vector.shape_cast %44 : vector<16x16x128xbf16> to vector<256x128xbf16>
    %c6 = arith.constant 6 : index
    %c0_46 = arith.constant 0 : index
    %c0_47 = arith.constant 0 : index
    %46 = vector.load %arg2[%c6, %c0_46, %c0_47] : memref<9x128x128xbf16, #tpu.memory_space<vmem>>, vector<1x128x128xbf16>
    %47 = vector.shape_cast %46 : vector<1x128x128xbf16> to vector<128x128xbf16>
    %cst_48 = arith.constant dense<0.000000e+00> : vector<256x128xf32>
    %48 = tpu.matmul %45, %47, %cst_48 {dimension_numbers = #tpu.dot_dimension_numbers<[1], [0], [0], [1], [0, 0, 1, 1], [], []>} : vector<256x128xbf16>, vector<128x128xbf16>, vector<256x128xf32> -> vector<256x128xf32>
    %49 = arith.addf %42, %48 : vector<256x128xf32>
    %c0_49 = arith.constant 0 : index
    %c2_50 = arith.constant 2 : index
    %c1_51 = arith.constant 1 : index
    %c0_52 = arith.constant 0 : index
    %50 = vector.load %arg1[%c0_49, %c2_50, %c1_51, %c0_52] : memref<1x18x18x128xbf16, #tpu.memory_space<vmem>>, vector<1x16x16x128xbf16>
    %51 = vector.shape_cast %50 : vector<1x16x16x128xbf16> to vector<16x16x128xbf16>
    %52 = vector.shape_cast %51 : vector<16x16x128xbf16> to vector<256x128xbf16>
    %c7 = arith.constant 7 : index
    %c0_53 = arith.constant 0 : index
    %c0_54 = arith.constant 0 : index
    %53 = vector.load %arg2[%c7, %c0_53, %c0_54] : memref<9x128x128xbf16, #tpu.memory_space<vmem>>, vector<1x128x128xbf16>
    %54 = vector.shape_cast %53 : vector<1x128x128xbf16> to vector<128x128xbf16>
    %cst_55 = arith.constant dense<0.000000e+00> : vector<256x128xf32>
    %55 = tpu.matmul %52, %54, %cst_55 {dimension_numbers = #tpu.dot_dimension_numbers<[1], [0], [0], [1], [0, 0, 1, 1], [], []>} : vector<256x128xbf16>, vector<128x128xbf16>, vector<256x128xf32> -> vector<256x128xf32>
    %56 = arith.addf %49, %55 : vector<256x128xf32>
    %c0_56 = arith.constant 0 : index
    %c2_57 = arith.constant 2 : index
    %c2_58 = arith.constant 2 : index
    %c0_59 = arith.constant 0 : index
    %57 = vector.load %arg1[%c0_56, %c2_57, %c2_58, %c0_59] : memref<1x18x18x128xbf16, #tpu.memory_space<vmem>>, vector<1x16x16x128xbf16>
    %58 = vector.shape_cast %57 : vector<1x16x16x128xbf16> to vector<16x16x128xbf16>
    %59 = vector.shape_cast %58 : vector<16x16x128xbf16> to vector<256x128xbf16>
    %c8 = arith.constant 8 : index
    %c0_60 = arith.constant 0 : index
    %c0_61 = arith.constant 0 : index
    %60 = vector.load %arg2[%c8, %c0_60, %c0_61] : memref<9x128x128xbf16, #tpu.memory_space<vmem>>, vector<1x128x128xbf16>
    %61 = vector.shape_cast %60 : vector<1x128x128xbf16> to vector<128x128xbf16>
    %cst_62 = arith.constant dense<0.000000e+00> : vector<256x128xf32>
    %62 = tpu.matmul %59, %61, %cst_62 {dimension_numbers = #tpu.dot_dimension_numbers<[1], [0], [0], [1], [0, 0, 1, 1], [], []>} : vector<256x128xbf16>, vector<128x128xbf16>, vector<256x128xf32> -> vector<256x128xf32>
    %63 = arith.addf %56, %62 : vector<256x128xf32>
    %c0_63 = arith.constant 0 : index
    %c0_64 = arith.constant 0 : index
    %64 = vector.load %arg3[%c0_63, %c0_64] : memref<1x128xf32, #tpu.memory_space<vmem>>, vector<1x128xf32>
    %65 = vector.broadcast %64 : vector<1x128xf32> to vector<256x128xf32>
    %66 = arith.addf %63, %65 : vector<256x128xf32>
    %cst_65 = arith.constant 0.000000e+00 : f32
    %67 = vector.broadcast %cst_65 : f32 to vector<256x128xf32>
    %68 = arith.maximumf %66, %67 : vector<256x128xf32>
    %cst_66 = arith.constant dense<0.000000e+00> : vector<128xf32>
    %69 = vector.multi_reduction <add>, %68, %cst_66 [0] : vector<256x128xf32> to vector<128xf32>
    %70 = vector.shape_cast %69 : vector<128xf32> to vector<1x128xf32>
    %cst_67 = arith.constant 2.560000e+02 : f32
    %71 = vector.broadcast %cst_67 : f32 to vector<1x128xf32>
    %72 = arith.divf %70, %71 : vector<1x128xf32>
    %c0_68 = arith.constant 0 : index
    %c0_69 = arith.constant 0 : index
    %c0_70 = arith.constant 0 : index
    %73 = vector.load %arg8[%c0_68, %c0_69, %c0_70] : memref<1x1x128xf32, #tpu.memory_space<vmem>>, vector<1x1x128xf32>
    %74 = vector.shape_cast %73 : vector<1x1x128xf32> to vector<1x128xf32>
    %75 = vector.shape_cast %72 : vector<1x128xf32> to vector<1x1x128xf32>
    tpu.vector_store %arg8[%c0_68, %c0_69, %c0_70], %75 {strides = array<i32>} : memref<1x1x128xf32, #tpu.memory_space<vmem>>, vector<1x1x128xf32>,
    %76 = arith.truncf %72 : vector<1x128xf32> to vector<1x128xbf16>
    %c0_71 = arith.constant 0 : index
    %c0_72 = arith.constant 0 : index
    %77 = vector.load %arg4[%c0_71, %c0_72] : memref<128x128xbf16, #tpu.memory_space<vmem>>, vector<128x128xbf16>
    %cst_73 = arith.constant dense<0.000000e+00> : vector<1x128xf32>
    %78 = tpu.matmul %76, %77, %cst_73 {dimension_numbers = #tpu.dot_dimension_numbers<[1], [0], [0], [1], [0, 0, 1, 1], [], []>} : vector<1x128xbf16>, vector<128x128xbf16>, vector<1x128xf32> -> vector<1x128xf32>
    %c0_74 = arith.constant 0 : index
    %c0_75 = arith.constant 0 : index
    %79 = vector.load %arg5[%c0_74, %c0_75] : memref<1x128xf32, #tpu.memory_space<vmem>>, vector<1x128xf32>
    %80 = arith.addf %78, %79 : vector<1x128xf32>
    %cst_76 = arith.constant 0.000000e+00 : f32
    %81 = vector.broadcast %cst_76 : f32 to vector<1x128xf32>
    %82 = arith.maximumf %80, %81 : vector<1x128xf32>
    %83 = arith.truncf %82 : vector<1x128xf32> to vector<1x128xbf16>
    %c0_77 = arith.constant 0 : index
    %c0_78 = arith.constant 0 : index
    %84 = vector.load %arg6[%c0_77, %c0_78] : memref<128x128xbf16, #tpu.memory_space<vmem>>, vector<128x128xbf16>
    %cst_79 = arith.constant dense<0.000000e+00> : vector<1x128xf32>
    %85 = tpu.matmul %83, %84, %cst_79 {dimension_numbers = #tpu.dot_dimension_numbers<[1], [0], [0], [1], [0, 0, 1, 1], [], []>} : vector<1x128xbf16>, vector<128x128xbf16>, vector<1x128xf32> -> vector<1x128xf32>
    %c0_80 = arith.constant 0 : index
    %c0_81 = arith.constant 0 : index
    %86 = vector.load %arg7[%c0_80, %c0_81] : memref<1x128xf32, #tpu.memory_space<vmem>>, vector<1x128xf32>
    %87 = arith.addf %85, %86 : vector<1x128xf32>
    %c0_82 = arith.constant 0 : index
    %c0_83 = arith.constant 0 : index
    %c0_84 = arith.constant 0 : index
    %88 = vector.load %arg9[%c0_82, %c0_83, %c0_84] : memref<1x1x128xf32, #tpu.memory_space<vmem>>, vector<1x1x128xf32>
    %89 = vector.shape_cast %88 : vector<1x1x128xf32> to vector<1x128xf32>
    %90 = vector.shape_cast %87 : vector<1x128xf32> to vector<1x1x128xf32>
    tpu.vector_store %arg9[%c0_82, %c0_83, %c0_84], %90 {strides = array<i32>} : memref<1x1x128xf32, #tpu.memory_space<vmem>>, vector<1x1x128xf32>,
    return
  }
  func.func @transform_0(%arg0: i32) -> (i32, i32, i32, i32) {
    %c0_i32 = arith.constant 0 : i32
    %c0_i32_0 = arith.constant 0 : i32
    %c0_i32_1 = arith.constant 0 : i32
    %c0_i32_2 = arith.constant 0 : i32
    return %arg0, %c0_i32, %c0_i32_0, %c0_i32_1 : i32, i32, i32, i32
  }
  func.func @transform_1(%arg0: i32) -> (i32, i32, i32) {
    %c0_i32 = arith.constant 0 : i32
    %c0_i32_0 = arith.constant 0 : i32
    %c0_i32_1 = arith.constant 0 : i32
    %c0_i32_2 = arith.constant 0 : i32
    return %c0_i32, %c0_i32_0, %c0_i32_1 : i32, i32, i32
  }
  func.func @transform_2(%arg0: i32) -> (i32, i32) {
    %c0_i32 = arith.constant 0 : i32
    %c0_i32_0 = arith.constant 0 : i32
    %c0_i32_1 = arith.constant 0 : i32
    return %c0_i32, %c0_i32_0 : i32, i32
  }
  func.func @transform_3(%arg0: i32) -> (i32, i32) {
    %c0_i32 = arith.constant 0 : i32
    %c0_i32_0 = arith.constant 0 : i32
    %c0_i32_1 = arith.constant 0 : i32
    return %c0_i32, %c0_i32_0 : i32, i32
  }
  func.func @transform_4(%arg0: i32) -> (i32, i32) {
    %c0_i32 = arith.constant 0 : i32
    %c0_i32_0 = arith.constant 0 : i32
    %c0_i32_1 = arith.constant 0 : i32
    return %c0_i32, %c0_i32_0 : i32, i32
  }
  func.func @transform_5(%arg0: i32) -> (i32, i32) {
    %c0_i32 = arith.constant 0 : i32
    %c0_i32_0 = arith.constant 0 : i32
    %c0_i32_1 = arith.constant 0 : i32
    return %c0_i32, %c0_i32_0 : i32, i32
  }
  func.func @transform_6(%arg0: i32) -> (i32, i32) {
    %c0_i32 = arith.constant 0 : i32
    %c0_i32_0 = arith.constant 0 : i32
    %c0_i32_1 = arith.constant 0 : i32
    return %c0_i32, %c0_i32_0 : i32, i32
  }
  func.func @transform_7(%arg0: i32) -> (i32, i32, i32) {
    %c0_i32 = arith.constant 0 : i32
    %c0_i32_0 = arith.constant 0 : i32
    %c0_i32_1 = arith.constant 0 : i32
    return %arg0, %c0_i32, %c0_i32_0 : i32, i32, i32
  }
  func.func @transform_8(%arg0: i32) -> (i32, i32, i32) {
    %c0_i32 = arith.constant 0 : i32
    %c0_i32_0 = arith.constant 0 : i32
    %c0_i32_1 = arith.constant 0 : i32
    return %arg0, %c0_i32, %c0_i32_0 : i32, i32, i32
  }
}

</mosaic_0001>

<llo_original>
// kernel: continual_ssl_forward.2
$region0: #{continual_ssl_forward.2}
  #allocation0 [shape = 'u32[]', space=smem, size = 0x4, offset = 0x4, fixed_abs, tag = 'smem constant byte address 0x4 - core index']
  #allocation1 [shape = 'u32[144,128]{1,0:T(1,128)}', space=vmem, size = 0x12000, scoped, tag = 'internal scratch']
  %s0 = inlined_call_operand.vmem [shape: bf16[2,18,18,128], index: 0, kind: input, shape index: {}]
  %s1 = inlined_call_operand.vmem [shape: bf16[9,128,128], index: 1, kind: input, shape index: {}]
  %s2 = inlined_call_operand.vmem [shape: f32[1,128], index: 2, kind: input, shape index: {}]
  %s3 = inlined_call_operand.vmem [shape: bf16[2,256,128], index: 3, kind: output, shape index: {}]
  %s4 = sld [smem:[#allocation0]]
  $region45: #{continual_ssl_forward.2} parent=0
    _
  %s6 = ssub.s32 1, %s4
  %s7 = scalar_select 0, %s6, %s4
  loop: start=0, step=1, limit=4
  $region2: #{continual_ssl_forward.2} parent=0 // loop_pre_header
    _
  $region3: #{continual_ssl_forward.2} parent=0 // loop_header
    %s9 = sphi 0, %s13
    %p10 = scmp.ge.s32.totalorder %s9, 4
    %s19 = sphi 0, %s21
    %s22 = sphi 0, %s19
    %s23 = sphi 0, %s22
    %s39 = sphi 0, %s23
    %s43 = sphi 0, %s43
    %s45 = sphi 0, %s43
    %s46 = sphi 0, %s45
    %s60 = sphi 0, %s46
    %s64 = sphi 0, %s64
    %s66 = sphi 0, %s64
    %s67 = sphi 0, %s66
    %s81 = sphi 0, %s67
    %s87 = sphi 0, %s89
    %s90 = sphi 0, %s87
    %s91 = sphi 0, %s90
    %s107 = sphi 0, %s91
  $region4: #{continual_ssl_forward.2} parent=0 // loop_header_branch
    %12 = sbr.rel (%p10) target = $region8
  $region5: #{continual_ssl_forward.2} parent=0 // loop_body
    %s14 = ssub.s32 %s9, 1
    %s15 = ssub.s32 %s9, 2
    %s16 = sadd.s32 %s9, 1
    %s17 = ssub.s32 %s9, %s16
    %p18 = scmp.eq.s32.totalorder %s17, 0
    %s20 = sadd.s32 %s19, 1
    %s21 = scalar_select %p18, %s19, %s20
    %p24 = pneg %p18
    %p25 = scmp.eq.s32.totalorder %s9, 1
    %p26 = por %p24, %p25
    %p27 = scmp.ne.s32.totalorder %s19, %s22
    %p28 = scmp.eq.s32.totalorder %s9, 0
    %p29 = por %p27, %p28
    %p30 = scmp.ne.s32.totalorder %s19, %s22
    %p31 = scmp.eq.s32.totalorder %s14, 1
    %p32 = por %p30, %p31
    %p33 = scmp.ne.s32.totalorder %s22, %s23
    %p34 = scmp.eq.s32.totalorder %s14, 0
    %p35 = por %p33, %p34
    %p36 = scmp.ne.s32.totalorder %s22, %s23
    %p37 = scmp.eq.s32.totalorder %s15, 1
    %p38 = por %p36, %p37
    %p40 = scmp.ne.s32.totalorder %s23, %s39
    %p41 = scmp.eq.s32.totalorder %s15, 0
    %p42 = por %p40, %p41
    %s44 = sadd.s32 %s43, 1
    %p47 = scmp.eq.s32.totalorder %s9, 1
    %p48 = scmp.ne.s32.totalorder %s43, %s45
    %p49 = scmp.eq.s32.totalorder %s9, 0
    %p50 = por %p48, %p49
    %p51 = scmp.ne.s32.totalorder %s43, %s45
    %p52 = scmp.eq.s32.totalorder %s14, 1
    %p53 = por %p51, %p52
    %p54 = scmp.ne.s32.totalorder %s45, %s46
    %p55 = scmp.eq.s32.totalorder %s14, 0
    %p56 = por %p54, %p55
    %p57 = scmp.ne.s32.totalorder %s45, %s46
    %p58 = scmp.eq.s32.totalorder %s15, 1
    %p59 = por %p57, %p58
    %p61 = scmp.ne.s32.totalorder %s46, %s60
    %p62 = scmp.eq.s32.totalorder %s15, 0
    %p63 = por %p61, %p62
    %s65 = sadd.s32 %s64, 1
    %p68 = scmp.eq.s32.totalorder %s9, 1
    %p69 = scmp.ne.s32.totalorder %s64, %s66
    %p70 = scmp.eq.s32.totalorder %s9, 0
    %p71 = por %p69, %p70
    %p72 = scmp.ne.s32.totalorder %s64, %s66
    %p73 = scmp.eq.s32.totalorder %s14, 1
    %p74 = por %p72, %p73
    %p75 = scmp.ne.s32.totalorder %s66, %s67
    %p76 = scmp.eq.s32.totalorder %s14, 0
    %p77 = por %p75, %p76
    %p78 = scmp.ne.s32.totalorder %s66, %s67
    %p79 = scmp.eq.s32.totalorder %s15, 1
    %p80 = por %p78, %p79
    %p82 = scmp.ne.s32.totalorder %s67, %s81
    %p83 = scmp.eq.s32.totalorder %s15, 0
    %p84 = por %p82, %p83
    %s85 = ssub.s32 %s9, %s16
    %p86 = scmp.eq.s32.totalorder %s85, 0
    %s88 = sadd.s32 %s87, 1
    %s89 = scalar_select %p86, %s87, %s88
    %p92 = pneg %p86
    %p93 = scmp.eq.s32.totalorder %s9, 1
    %p94 = por %p92, %p93
    %p95 = scmp.ne.s32.totalorder %s87, %s90
    %p96 = scmp.eq.s32.totalorder %s9, 0
    %p97 = por %p95, %p96
    %p98 = scmp.ne.s32.totalorder %s87, %s90
    %p99 = scmp.eq.s32.totalorder %s14, 1
    %p100 = por %p98, %p99
    %p101 = scmp.ne.s32.totalorder %s90, %s91
    %p102 = scmp.eq.s32.totalorder %s14, 0
    %p103 = por %p101, %p102
    %p104 = scmp.ne.s32.totalorder %s90, %s91
    %p105 = scmp.eq.s32.totalorder %s15, 1
    %p106 = por %p104, %p105
    %p108 = scmp.ne.s32.totalorder %s91, %s107
    %p109 = scmp.eq.s32.totalorder %s15, 0
    %p110 = por %p108, %p109
    %p111 = scmp.le.s32.totalorder 1, %s9
    %p112 = scmp.lt.s32.totalorder %s9, 3
    %p113 = pnand %p111, %p112
    %p114 = pneg %p113
    // Predicated region
    $region9: #{continual_ssl_forward.2} parent=5 // pred_check
      _
    $region10: #{continual_ssl_forward.2} parent=5 // pred_check_branch
      %116 = sbr.rel (%p113) target = $region12
    $region11: #{continual_ssl_forward.2} parent=5 // pred_region
      %s117 = ssub.s32 %s9, 1
      // Predicated region
      $region13: #{continual_ssl_forward.2} parent=11 // pred_check
        %p118 = pneg %p56
      $region14: #{continual_ssl_forward.2} parent=11 // pred_check_branch
        %120 = sbr.rel (%p118) target = $region16
      $region15: #{continual_ssl_forward.2} parent=11 // pred_region
        _
      $region16: #{continual_ssl_forward.2} parent=11 // pred_fallthru
        _
      // Predicated region
      $region17: #{continual_ssl_forward.2} parent=11 // pred_check
        %p121 = pneg %p77
      $region18: #{continual_ssl_forward.2} parent=11 // pred_check_branch
        %123 = sbr.rel (%p121) target = $region20
      $region19: #{continual_ssl_forward.2} parent=11 // pred_region
        _
      $region20: #{continual_ssl_forward.2} parent=11 // pred_fallthru
        _
    $region12: #{continual_ssl_forward.2} parent=5 // pred_fallthru
      _
    %p124 = scmp.lt.s32.totalorder %s9, 2
    // Predicated region
    $region21: #{continual_ssl_forward.2} parent=5 // pred_check
      %p125 = pneg %p124
    $region22: #{continual_ssl_forward.2} parent=5 // pred_check_branch
      %127 = sbr.rel (%p125) target = $region24
    $region23: #{continual_ssl_forward.2} parent=5 // pred_region
      // Predicated region
      $region25: #{continual_ssl_forward.2} parent=23 // pred_check
        %p128 = pneg %p29
      $region26: #{continual_ssl_forward.2} parent=23 // pred_check_branch
        %130 = sbr.rel (%p128) target = $region28
      $region27: #{continual_ssl_forward.2} parent=23 // pred_region
        %p131 = scmp.lt.s32.totalorder %s9, 1
        %s132 = scalar_select %p131, %s9, 1
        %s133 = smul.addr %s132, 54
        %s134 = smul.addr %s133, 4
        %s135 = scalar_lea.vmem %s0, %s134
      $region28: #{continual_ssl_forward.2} parent=23 // pred_fallthru
        _
    $region24: #{continual_ssl_forward.2} parent=5 // pred_fallthru
      _
    %p136 = scmp.le.s32.totalorder 1, %s9
    %p137 = scmp.lt.s32.totalorder %s9, 3
    %p138 = pnand %p136, %p137
    %p139 = pneg %p138
    // Predicated region
    $region29: #{continual_ssl_forward.2} parent=5 // pred_check
      _
    $region30: #{continual_ssl_forward.2} parent=5 // pred_check_branch
      %141 = sbr.rel (%p138) target = $region32
    $region31: #{continual_ssl_forward.2} parent=5 // pred_region
      %s142 = ssub.s32 %s9, 1
      %p143 = scmp.lt.s32.totalorder %s14, 1
      %s144 = scalar_select %p143, %s14, 1
      %s145 = smul.addr %s144, 54
      %s146 = smul.addr %s145, 4
      %s147 = scalar_lea.vmem %s0, %s146
      %p148 = pneg %p35
      %p149 = pneg %p32
      %p150 = pneg %p56
      %p151 = pneg %p53
      %p152 = pneg %p77
      %p153 = pneg %p74
      %p154 = pneg %p103
      %p155 = pneg %p100
      %p156 = scmp.lt.s32.totalorder %s14, 1
      %s157 = scalar_select %p156, %s14, 1
      %s158 = smul.addr %s157, 32
      %s159 = smul.addr %s158, 4
      %s160 = scalar_lea.vmem %s3, %s159
      %p161 = scmp.lt.s32.totalorder %s14, 1
      %s162 = scalar_select %p161, %s14, 1
      %s163 = smul.addr %s162, 54
      %s164 = smul.addr %s163, 4
      %s165 = scalar_lea.vmem %s0, %s164
      %p166 = scmp.lt.s32.totalorder %s14, 1
      %s167 = scalar_select %p166, %s14, 1
      %s168 = smul.addr %s167, 32
      %s169 = smul.addr %s168, 4
      %s170 = scalar_lea.vmem %s3, %s169
      %v172 = vld [vmem:[%s165] sm:$0xf]
      %v173 = vld [vmem:[%s165 + $0x4] sm:$0xf]
      %v174 = vld [vmem:[%s165 + $0xc] sm:$0xf]
      %v175 = vld [vmem:[%s165 + $0x10] sm:$0xf]
      %v176 = vld [vmem:[%s165 + $0x18] sm:$0xf]
      %v177 = vld [vmem:[%s165 + $0x1c] sm:$0xf]
      %v178 = vld [vmem:[%s165 + $0x24] sm:$0xf]
      %v179 = vld [vmem:[%s165 + $0x28] sm:$0xf]
      %v180 = vld [vmem:[%s165 + $0x30] sm:$0xf]
      %v181 = vld [vmem:[%s165 + $0x34] sm:$0xf]
      %v182 = vld [vmem:[%s165 + $0x3c] sm:$0xf]
      %v183 = vld [vmem:[%s165 + $0x40] sm:$0xf]
      %v184 = vld [vmem:[%s165 + $0x48] sm:$0xf]
      %v185 = vld [vmem:[%s165 + $0x4c] sm:$0xf]
      %v186 = vld [vmem:[%s165 + $0x54] sm:$0xf]
      %v187 = vld [vmem:[%s165 + $0x58] sm:$0xf]
      %v188 = vld [vmem:[%s165 + $0x60] sm:$0xf]
      %v189 = vld [vmem:[%s165 + $0x64] sm:$0xf]
      %v190 = vld [vmem:[%s165 + $0x6c] sm:$0xf]
      %v191 = vld [vmem:[%s165 + $0x70] sm:$0xf]
      %v192 = vld [vmem:[%s165 + $0x78] sm:$0xf]
      %v193 = vld [vmem:[%s165 + $0x7c] sm:$0xf]
      %v194 = vld [vmem:[%s165 + $0x84] sm:$0xf]
      %v195 = vld [vmem:[%s165 + $0x88] sm:$0xf]
      %v196 = vld [vmem:[%s165 + $0x90] sm:$0xf]
      %v197 = vld [vmem:[%s165 + $0x94] sm:$0xf]
      %v198 = vld [vmem:[%s165 + $0x9c] sm:$0xf]
      %v199 = vld [vmem:[%s165 + $0xa0] sm:$0xf]
      %v200 = vld [vmem:[%s165 + $0xa8] sm:$0xf]
      %v201 = vld [vmem:[%s165 + $0xac] sm:$0xf]
      %v202 = vld [vmem:[%s165 + $0xb4] sm:$0xf]
      %v203 = vld [vmem:[%s165 + $0xb8] sm:$0xf]
      %v204 = vld [vmem:[%s1] sm:$0xf]
      %v205 = vld [vmem:[%s1 + $0x4] sm:$0xf]
      %v206 = vld [vmem:[%s1 + $0x8] sm:$0xf]
      %v207 = vld [vmem:[%s1 + $0xc] sm:$0xf]
      %v208 = vld [vmem:[%s1 + $0x10] sm:$0xf]
      %v209 = vld [vmem:[%s1 + $0x14] sm:$0xf]
      %v210 = vld [vmem:[%s1 + $0x18] sm:$0xf]
      %v211 = vld [vmem:[%s1 + $0x1c] sm:$0xf]
      %v212 = vld [vmem:[%s1 + $0x20] sm:$0xf]
      %v213 = vld [vmem:[%s1 + $0x24] sm:$0xf]
      %v214 = vld [vmem:[%s1 + $0x28] sm:$0xf]
      %v215 = vld [vmem:[%s1 + $0x2c] sm:$0xf]
      %v216 = vld [vmem:[%s1 + $0x30] sm:$0xf]
      %v217 = vld [vmem:[%s1 + $0x34] sm:$0xf]
      %v218 = vld [vmem:[%s1 + $0x38] sm:$0xf]
      %v219 = vld [vmem:[%s1 + $0x3c] sm:$0xf]
      %v220 = vld [vmem:[%s165 + $0x8] sm:$0x1]
      %v221 = vld [vmem:[%s165 + $0x14] sm:$0x1]
      %v222 = vld [vmem:[%s165 + $0x20] sm:$0x1]
      %v223 = vld [vmem:[%s165 + $0x2c] sm:$0x1]
      %v224 = vld [vmem:[%s165 + $0x38] sm:$0x1]
      %v225 = vld [vmem:[%s165 + $0x44] sm:$0x1]
      %v226 = vld [vmem:[%s165 + $0x50] sm:$0x1]
      %v227 = vld [vmem:[%s165 + $0x5c] sm:$0x1]
      %v228 = vld [vmem:[%s165 + $0x68] sm:$0x1]
      %v229 = vld [vmem:[%s165 + $0x74] sm:$0x1]
      %v230 = vld [vmem:[%s165 + $0x80] sm:$0x1]
      %v231 = vld [vmem:[%s165 + $0x8c] sm:$0x1]
      %v232 = vld [vmem:[%s165 + $0x98] sm:$0x1]
      %v233 = vld [vmem:[%s165 + $0xa4] sm:$0x1]
      %v234 = vld [vmem:[%s165 + $0xb0] sm:$0x1]
      %v235 = vld [vmem:[%s165 + $0xbc] sm:$0x1]
      %vm236 = vsmask.f32 3328
      %vm237 = vsmask.f32 7440
      %vm238 = vmor %vm236, %vm237
      %v240 = vshrl.u32 %v172, 16
      %v242 = vrot.slane %v240, 4
      %v243 = vshll.u32 %v172, 16
      %v245 = vrot.slane %v243, 5
      %v246 = vor.u32 %v242, %v245
      %v247 = vrot.slane %v246, 4
      %v249 = vshll.u32 %v173, 16
      %v251 = vrot.slane %v249, 5
      %v252 = vsel %vm238, %v247, %v251
      %v253 = vshrl.u32 %v173, 16
      %v255 = vrot.slane %v253, 4
      %v256 = vor.u32 %v255, %v251
      %v257 = vrot.slane %v256, 4
      %v259 = vshll.u32 %v220, 16
      %v261 = vrot.slane %v259, 5
      %v262 = vsel %vm238, %v257, %v261
      %v264 = vshrl.u32 %v174, 16
      %v266 = vrot.slane %v264, 4
      %v267 = vshll.u32 %v174, 16
      %v269 = vrot.slane %v267, 5
      %v270 = vor.u32 %v266, %v269
      %v271 = vrot.slane %v270, 4
      %v273 = vshll.u32 %v175, 16
      %v275 = vrot.slane %v273, 5
      %v276 = vsel %vm238, %v271, %v275
      %v277 = vshrl.u32 %v175, 16
      %v279 = vrot.slane %v277, 4
      %v280 = vor.u32 %v279, %v275
      %v281 = vrot.slane %v280, 4
      %v283 = vshll.u32 %v221, 16
      %v285 = vrot.slane %v283, 5
      %v286 = vsel %vm238, %v281, %v285
      %v288 = vshrl.u32 %v176, 16
      %v290 = vrot.slane %v288, 4
      %v291 = vshll.u32 %v176, 16
      %v293 = vrot.slane %v291, 5
      %v294 = vor.u32 %v290, %v293
      %v295 = vrot.slane %v294, 4
      %v297 = vshll.u32 %v177, 16
      %v299 = vrot.slane %v297, 5
      %v300 = vsel %vm238, %v295, %v299
      %v301 = vshrl.u32 %v177, 16
      %v303 = vrot.slane %v301, 4
      %v304 = vor.u32 %v303, %v299
      %v305 = vrot.slane %v304, 4
      %v307 = vshll.u32 %v222, 16
      %v309 = vrot.slane %v307, 5
      %v310 = vsel %vm238, %v305, %v309
      %v312 = vshrl.u32 %v178, 16
      %v314 = vrot.slane %v312, 4
      %v315 = vshll.u32 %v178, 16
      %v317 = vrot.slane %v315, 5
      %v318 = vor.u32 %v314, %v317
      %v319 = vrot.slane %v318, 4
      %v321 = vshll.u32 %v179, 16
      %v323 = vrot.slane %v321, 5
      %v324 = vsel %vm238, %v319, %v323
      %v325 = vshrl.u32 %v179, 16
      %v327 = vrot.slane %v325, 4
      %v328 = vor.u32 %v327, %v323
      %v329 = vrot.slane %v328, 4
      %v331 = vshll.u32 %v223, 16
      %v333 = vrot.slane %v331, 5
      %v334 = vsel %vm238, %v329, %v333
      %v336 = vshrl.u32 %v180, 16
      %v338 = vrot.slane %v336, 4
      %v339 = vshll.u32 %v180, 16
      %v341 = vrot.slane %v339, 5
      %v342 = vor.u32 %v338, %v341
      %v343 = vrot.slane %v342, 4
      %v345 = vshll.u32 %v181, 16
      %v347 = vrot.slane %v345, 5
      %v348 = vsel %vm238, %v343, %v347
      %v349 = vshrl.u32 %v181, 16
      %v351 = vrot.slane %v349, 4
      %v352 = vor.u32 %v351, %v347
      %v353 = vrot.slane %v352, 4
      %v355 = vshll.u32 %v224, 16
      %v357 = vrot.slane %v355, 5
      %v358 = vsel %vm238, %v353, %v357
      %v360 = vshrl.u32 %v182, 16
      %v362 = vrot.slane %v360, 4
      %v363 = vshll.u32 %v182, 16
      %v365 = vrot.slane %v363, 5
      %v366 = vor.u32 %v362, %v365
      %v367 = vrot.slane %v366, 4
      %v369 = vshll.u32 %v183, 16
      %v371 = vrot.slane %v369, 5
      %v372 = vsel %vm238, %v367, %v371
      %v373 = vshrl.u32 %v183, 16
      %v375 = vrot.slane %v373, 4
      %v376 = vor.u32 %v375, %v371
      %v377 = vrot.slane %v376, 4
      %v379 = vshll.u32 %v225, 16
      %v381 = vrot.slane %v379, 5
      %v382 = vsel %vm238, %v377, %v381
      %v384 = vshrl.u32 %v184, 16
      %v386 = vrot.slane %v384, 4
      %v387 = vshll.u32 %v184, 16
      %v389 = vrot.slane %v387, 5
      %v390 = vor.u32 %v386, %v389
      %v391 = vrot.slane %v390, 4
      %v393 = vshll.u32 %v185, 16
      %v395 = vrot.slane %v393, 5
      %v396 = vsel %vm238, %v391, %v395
      %v397 = vshrl.u32 %v185, 16
      %v399 = vrot.slane %v397, 4
      %v400 = vor.u32 %v399, %v395
      %v401 = vrot.slane %v400, 4
      %v403 = vshll.u32 %v226, 16
      %v405 = vrot.slane %v403, 5
      %v406 = vsel %vm238, %v401, %v405
      %v408 = vshrl.u32 %v186, 16
      %v410 = vrot.slane %v408, 4
      %v411 = vshll.u32 %v186, 16
      %v413 = vrot.slane %v411, 5
      %v414 = vor.u32 %v410, %v413
      %v415 = vrot.slane %v414, 4
      %v417 = vshll.u32 %v187, 16
      %v419 = vrot.slane %v417, 5
      %v420 = vsel %vm238, %v415, %v419
      %v421 = vshrl.u32 %v187, 16
      %v423 = vrot.slane %v421, 4
      %v424 = vor.u32 %v423, %v419
      %v425 = vrot.slane %v424, 4
      %v427 = vshll.u32 %v227, 16
      %v429 = vrot.slane %v427, 5
      %v430 = vsel %vm238, %v425, %v429
      %v432 = vshrl.u32 %v188, 16
      %v434 = vrot.slane %v432, 4
      %v435 = vshll.u32 %v188, 16
      %v437 = vrot.slane %v435, 5
      %v438 = vor.u32 %v434, %v437
      %v439 = vrot.slane %v438, 4
      %v441 = vshll.u32 %v189, 16
      %v443 = vrot.slane %v441, 5
      %v444 = vsel %vm238, %v439, %v443
      %v445 = vshrl.u32 %v189, 16
      %v447 = vrot.slane %v445, 4
      %v448 = vor.u32 %v447, %v443
      %v449 = vrot.slane %v448, 4
      %v451 = vshll.u32 %v228, 16
      %v453 = vrot.slane %v451, 5
      %v454 = vsel %vm238, %v449, %v453
      %v456 = vshrl.u32 %v190, 16
      %v458 = vrot.slane %v456, 4
      %v459 = vshll.u32 %v190, 16
      %v461 = vrot.slane %v459, 5
      %v462 = vor.u32 %v458, %v461
      %v463 = vrot.slane %v462, 4
      %v465 = vshll.u32 %v191, 16
      %v467 = vrot.slane %v465, 5
      %v468 = vsel %vm238, %v463, %v467
      %v469 = vshrl.u32 %v191, 16
      %v471 = vrot.slane %v469, 4
      %v472 = vor.u32 %v471, %v467
      %v473 = vrot.slane %v472, 4
      %v475 = vshll.u32 %v229, 16
      %v477 = vrot.slane %v475, 5
      %v478 = vsel %vm238, %v473, %v477
      %v480 = vshrl.u32 %v192, 16
      %v482 = vrot.slane %v480, 4
      %v483 = vshll.u32 %v192, 16
      %v485 = vrot.slane %v483, 5
      %v486 = vor.u32 %v482, %v485
      %v487 = vrot.slane %v486, 4
      %v489 = vshll.u32 %v193, 16
      %v491 = vrot.slane %v489, 5
      %v492 = vsel %vm238, %v487, %v491
      %v493 = vshrl.u32 %v193, 16
      %v495 = vrot.slane %v493, 4
      %v496 = vor.u32 %v495, %v491
      %v497 = vrot.slane %v496, 4
      %v499 = vshll.u32 %v230, 16
      %v501 = vrot.slane %v499, 5
      %v502 = vsel %vm238, %v497, %v501
      %v504 = vshrl.u32 %v194, 16
      %v506 = vrot.slane %v504, 4
      %v507 = vshll.u32 %v194, 16
      %v509 = vrot.slane %v507, 5
      %v510 = vor.u32 %v506, %v509
      %v511 = vrot.slane %v510, 4
      %v513 = vshll.u32 %v195, 16
      %v515 = vrot.slane %v513, 5
      %v516 = vsel %vm238, %v511, %v515
      %v517 = vshrl.u32 %v195, 16
      %v519 = vrot.slane %v517, 4
      %v520 = vor.u32 %v519, %v515
      %v521 = vrot.slane %v520, 4
      %v523 = vshll.u32 %v231, 16
      %v525 = vrot.slane %v523, 5
      %v526 = vsel %vm238, %v521, %v525
      %v528 = vshrl.u32 %v196, 16
      %v530 = vrot.slane %v528, 4
      %v531 = vshll.u32 %v196, 16
      %v533 = vrot.slane %v531, 5
      %v534 = vor.u32 %v530, %v533
      %v535 = vrot.slane %v534, 4
      %v537 = vshll.u32 %v197, 16
      %v539 = vrot.slane %v537, 5
      %v540 = vsel %vm238, %v535, %v539
      %v541 = vshrl.u32 %v197, 16
      %v543 = vrot.slane %v541, 4
      %v544 = vor.u32 %v543, %v539
      %v545 = vrot.slane %v544, 4
      %v547 = vshll.u32 %v232, 16
      %v549 = vrot.slane %v547, 5
      %v550 = vsel %vm238, %v545, %v549
      %v552 = vshrl.u32 %v198, 16
      %v554 = vrot.slane %v552, 4
      %v555 = vshll.u32 %v198, 16
      %v557 = vrot.slane %v555, 5
      %v558 = vor.u32 %v554, %v557
      %v559 = vrot.slane %v558, 4
      %v561 = vshll.u32 %v199, 16
      %v563 = vrot.slane %v561, 5
      %v564 = vsel %vm238, %v559, %v563
      %v565 = vshrl.u32 %v199, 16
      %v567 = vrot.slane %v565, 4
      %v568 = vor.u32 %v567, %v563
      %v569 = vrot.slane %v568, 4
      %v571 = vshll.u32 %v233, 16
      %v573 = vrot.slane %v571, 5
      %v574 = vsel %vm238, %v569, %v573
      %v576 = vshrl.u32 %v200, 16
      %v578 = vrot.slane %v576, 4
      %v579 = vshll.u32 %v200, 16
      %v581 = vrot.slane %v579, 5
      %v582 = vor.u32 %v578, %v581
      %v583 = vrot.slane %v582, 4
      %v585 = vshll.u32 %v201, 16
      %v587 = vrot.slane %v585, 5
      %v588 = vsel %vm238, %v583, %v587
      %v589 = vshrl.u32 %v201, 16
      %v591 = vrot.slane %v589, 4
      %v592 = vor.u32 %v591, %v587
      %v593 = vrot.slane %v592, 4
      %v595 = vshll.u32 %v234, 16
      %v597 = vrot.slane %v595, 5
      %v598 = vsel %vm238, %v593, %v597
      %v600 = vshrl.u32 %v202, 16
      %v602 = vrot.slane %v600, 4
      %v603 = vshll.u32 %v202, 16
      %v605 = vrot.slane %v603, 5
      %v606 = vor.u32 %v602, %v605
      %v607 = vrot.slane %v606, 4
      %v609 = vshll.u32 %v203, 16
      %v611 = vrot.slane %v609, 5
      %v612 = vsel %vm238, %v607, %v611
      %v613 = vshrl.u32 %v203, 16
      %v615 = vrot.slane %v613, 4
      %v616 = vor.u32 %v615, %v611
      %v617 = vrot.slane %v616, 4
      %v619 = vshll.u32 %v235, 16
      %v621 = vrot.slane %v619, 5
      %v622 = vsel %vm238, %v617, %v621
      %s623 = scalar_lea.vmem %s1, 64
      %v624 = vld [vmem:[%s623] sm:$0xf]
      %v625 = vld [vmem:[%s623 + $0x4] sm:$0xf]
      %v626 = vld [vmem:[%s623 + $0x8] sm:$0xf]
      %v627 = vld [vmem:[%s623 + $0xc] sm:$0xf]
      %v628 = vld [vmem:[%s623 + $0x10] sm:$0xf]
      %v629 = vld [vmem:[%s623 + $0x14] sm:$0xf]
      %v630 = vld [vmem:[%s623 + $0x18] sm:$0xf]
      %v631 = vld [vmem:[%s623 + $0x1c] sm:$0xf]
      %v632 = vld [vmem:[%s623 + $0x20] sm:$0xf]
      %v633 = vld [vmem:[%s623 + $0x24] sm:$0xf]
      %v634 = vld [vmem:[%s623 + $0x28] sm:$0xf]
      %v635 = vld [vmem:[%s623 + $0x2c] sm:$0xf]
      %v636 = vld [vmem:[%s623 + $0x30] sm:$0xf]
      %v637 = vld [vmem:[%s623 + $0x34] sm:$0xf]
      %v638 = vld [vmem:[%s623 + $0x38] sm:$0xf]
      %v639 = vld [vmem:[%s623 + $0x3c] sm:$0xf]
      %v640 = vunpack.c.l.b16 %v252
      %v641 = vunpack.c.l.b16 %v262
      %v642 = vunpack.c.l.b16 %v276
      %v643 = vunpack.c.l.b16 %v286
      %v644 = vunpack.c.l.b16 %v300
      %v645 = vunpack.c.l.b16 %v310
      %v646 = vunpack.c.l.b16 %v324
      %v647 = vunpack.c.l.b16 %v334
      %v648 = vunpack.c.l.b16 %v348
      %v649 = vunpack.c.l.b16 %v358
      %v650 = vunpack.c.l.b16 %v372
      %v651 = vunpack.c.l.b16 %v382
      %v652 = vunpack.c.l.b16 %v396
      %v653 = vunpack.c.l.b16 %v406
      %v654 = vunpack.c.l.b16 %v420
      %v655 = vunpack.c.l.b16 %v430
      %v656 = vunpack.c.l.b16 %v444
      %v657 = vunpack.c.l.b16 %v454
      %v658 = vunpack.c.l.b16 %v468
      %v659 = vunpack.c.l.b16 %v478
      %v660 = vunpack.c.l.b16 %v492
      %v661 = vunpack.c.l.b16 %v502
      %v662 = vunpack.c.l.b16 %v516
      %v663 = vunpack.c.l.b16 %v526
      %v664 = vunpack.c.l.b16 %v540
      %v665 = vunpack.c.l.b16 %v550
      %v666 = vunpack.c.l.b16 %v564
      %v667 = vunpack.c.l.b16 %v574
      %v668 = vunpack.c.l.b16 %v588
      %v669 = vunpack.c.l.b16 %v598
      %v670 = vunpack.c.l.b16 %v612
      %v671 = vunpack.c.l.b16 %v622
      %v672 = vpack.c.b16 %v641, %v640
      %v673 = vpack.c.b16 %v643, %v642
      %v674 = vpack.c.b16 %v645, %v644
      %v675 = vpack.c.b16 %v647, %v646
      %v676 = vpack.c.b16 %v649, %v648
      %v677 = vpack.c.b16 %v651, %v650
      %v678 = vpack.c.b16 %v653, %v652
      %v679 = vpack.c.b16 %v655, %v654
      %v680 = vpack.c.b16 %v657, %v656
      %v681 = vpack.c.b16 %v659, %v658
      %v682 = vpack.c.b16 %v661, %v660
      %v683 = vpack.c.b16 %v663, %v662
      %v684 = vpack.c.b16 %v665, %v664
      %v685 = vpack.c.b16 %v667, %v666
      %v686 = vpack.c.b16 %v669, %v668
      %v687 = vpack.c.b16 %v671, %v670
      %v720 = vunpack.c.l.b16 %v624
      %v721 = vunpack.c.l.b16 %v625
      %v722 = vunpack.c.l.b16 %v626
      %v723 = vunpack.c.l.b16 %v627
      %v724 = vunpack.c.l.b16 %v628
      %v725 = vunpack.c.l.b16 %v629
      %v726 = vunpack.c.l.b16 %v630
      %v727 = vunpack.c.l.b16 %v631
      %v728 = vunpack.c.l.b16 %v632
      %v729 = vunpack.c.l.b16 %v633
      %v730 = vunpack.c.l.b16 %v634
      %v731 = vunpack.c.l.b16 %v635
      %v732 = vunpack.c.l.b16 %v636
      %v733 = vunpack.c.l.b16 %v637
      %v734 = vunpack.c.l.b16 %v638
      %v735 = vunpack.c.l.b16 %v639
      %v736 = vpack.c.b16 %v721, %v720
      %v737 = vpack.c.b16 %v723, %v722
      %v738 = vpack.c.b16 %v725, %v724
      %v739 = vpack.c.b16 %v727, %v726
      %v740 = vpack.c.b16 %v729, %v728
      %v741 = vpack.c.b16 %v731, %v730
      %v742 = vpack.c.b16 %v733, %v732
      %v743 = vpack.c.b16 %v735, %v734
      %752 = vmatprep.subr.bf16.mxu0 0
      %753 = vmatpush1.bf16.msra.mxu0 %v743
      %754 = vmatprep.subr.bf16.mxu0 0
      %755 = vmatpush1.bf16.msra.mxu0 %v742
      %756 = vmatprep.subr.bf16.mxu0 0
      %757 = vmatpush1.bf16.msra.mxu0 %v741
      %758 = vmatprep.subr.bf16.mxu0 0
      %759 = vmatpush1.bf16.msra.mxu0 %v740
      %760 = vmatprep.subr.bf16.mxu0 0
      %761 = vmatpush1.bf16.msra.mxu0 %v739
      %762 = vmatprep.subr.bf16.mxu0 0
      %763 = vmatpush1.bf16.msra.mxu0 %v738
      %764 = vmatprep.subr.bf16.mxu0 0
      %765 = vmatpush1.bf16.msra.mxu0 %v737
      %766 = vmatprep.subr.bf16.mxu0 0
      %767 = vmatpush1.bf16.msra.mxu0 %v736
      %768 = vmatprep.subr.bf16.mxu0 0
      %769 = vmatpush2.bf16.msra.mxu0 0
      %770 = vmatprep.subr.bf16.mxu0 0
      %771 = vmatpush2.bf16.msra.mxu0 0
      %772 = vmatprep.subr.bf16.mxu0 0
      %773 = vmatpush2.bf16.msra.mxu0 0
      %774 = vmatprep.subr.bf16.mxu0 0
      %775 = vmatpush2.bf16.msra.mxu0 0
      %776 = vmatprep.subr.bf16.mxu0 0
      %777 = vmatpush2.bf16.msra.mxu0 0
      %778 = vmatprep.subr.bf16.mxu0 0
      %779 = vmatpush2.bf16.msra.mxu0 0
      %780 = vmatprep.subr.bf16.mxu0 0
      %781 = vmatpush2.bf16.msra.mxu0 0
      %782 = vmatprep.subr.bf16.mxu0 0
      %783 = vmatpush2.bf16.msra.mxu0 0
      %784 = vmatprep.mubr.bf16.mxu0 0
      %785 = vmatmul.mubr.bf16.gmra.mxu0 %v672
      %v786 = vpop.f32.mrf.mxu0
      %v787 = vadd.f32 0.0, %v786
      %v788 = vpop.f32.mrf.mxu0
      %v789 = vpop.f32.mrf.mxu0
      %v790 = vadd.f32 0.0, %v789
      %v791 = vpop.f32.mrf.mxu0
      %792 = vmatprep.mubr.bf16.mxu0 0
      %793 = vmatmul.mubr.bf16.gmra.mxu0 %v673
      %v794 = vpop.f32.mrf.mxu0
      %v795 = vadd.f32 0.0, %v794
      %v796 = vpop.f32.mrf.mxu0
      %v797 = vpop.f32.mrf.mxu0
      %v798 = vadd.f32 0.0, %v797
      %v799 = vpop.f32.mrf.mxu0
      %800 = vmatprep.mubr.bf16.mxu0 0
      %801 = vmatmul.mubr.bf16.gmra.mxu0 %v674
      %v802 = vpop.f32.mrf.mxu0
      %v803 = vadd.f32 0.0, %v802
      %v804 = vpop.f32.mrf.mxu0
      %v805 = vpop.f32.mrf.mxu0
      %v806 = vadd.f32 0.0, %v805
      %v807 = vpop.f32.mrf.mxu0
      %808 = vmatprep.mubr.bf16.mxu0 0
      %809 = vmatmul.mubr.bf16.gmra.mxu0 %v675
      %v810 = vpop.f32.mrf.mxu0
      %v811 = vadd.f32 0.0, %v810
      %v812 = vpop.f32.mrf.mxu0
      %v813 = vpop.f32.mrf.mxu0
      %v814 = vadd.f32 0.0, %v813
      %v815 = vpop.f32.mrf.mxu0
      %816 = vmatprep.mubr.bf16.mxu0 0
      %817 = vmatmul.mubr.bf16.gmra.mxu0 %v676
      %v818 = vpop.f32.mrf.mxu0
      %v819 = vadd.f32 0.0, %v818
      %v820 = vpop.f32.mrf.mxu0
      %v821 = vpop.f32.mrf.mxu0
      %v822 = vadd.f32 0.0, %v821
      %v823 = vpop.f32.mrf.mxu0
      %824 = vmatprep.mubr.bf16.mxu0 0
      %825 = vmatmul.mubr.bf16.gmra.mxu0 %v677
      %v826 = vpop.f32.mrf.mxu0
      %v827 = vadd.f32 0.0, %v826
      %v828 = vpop.f32.mrf.mxu0
      %v829 = vpop.f32.mrf.mxu0
      %v830 = vadd.f32 0.0, %v829
      %v831 = vpop.f32.mrf.mxu0
      %832 = vmatprep.mubr.bf16.mxu0 0
      %833 = vmatmul.mubr.bf16.gmra.mxu0 %v678
      %v834 = vpop.f32.mrf.mxu0
      %v835 = vadd.f32 0.0, %v834
      %v836 = vpop.f32.mrf.mxu0
      %v837 = vpop.f32.mrf.mxu0
      %v838 = vadd.f32 0.0, %v837
      %v839 = vpop.f32.mrf.mxu0
      %840 = vmatprep.mubr.bf16.mxu0 0
      %841 = vmatmul.mubr.bf16.gmra.mxu0 %v679
      %v842 = vpop.f32.mrf.mxu0
      %v843 = vadd.f32 0.0, %v842
      %v844 = vpop.f32.mrf.mxu0
      %v845 = vpop.f32.mrf.mxu0
      %v846 = vadd.f32 0.0, %v845
      %v847 = vpop.f32.mrf.mxu0
      %848 = vmatprep.mubr.bf16.mxu0 0
      %849 = vmatmul.mubr.bf16.gmra.mxu0 %v680
      %v850 = vpop.f32.mrf.mxu0
      %v851 = vadd.f32 0.0, %v850
      %v852 = vpop.f32.mrf.mxu0
      %v853 = vpop.f32.mrf.mxu0
      %v854 = vadd.f32 0.0, %v853
      %v855 = vpop.f32.mrf.mxu0
      %856 = vmatprep.mubr.bf16.mxu0 0
      %857 = vmatmul.mubr.bf16.gmra.mxu0 %v681
      %v858 = vpop.f32.mrf.mxu0
      %v859 = vadd.f32 0.0, %v858
      %v860 = vpop.f32.mrf.mxu0
      %v861 = vpop.f32.mrf.mxu0
      %v862 = vadd.f32 0.0, %v861
      %v863 = vpop.f32.mrf.mxu0
      %864 = vmatprep.mubr.bf16.mxu0 0
      %865 = vmatmul.mubr.bf16.gmra.mxu0 %v682
      %v866 = vpop.f32.mrf.mxu0
      %v867 = vadd.f32 0.0, %v866
      %v868 = vpop.f32.mrf.mxu0
      %v869 = vpop.f32.mrf.mxu0
      %v870 = vadd.f32 0.0, %v869
      %v871 = vpop.f32.mrf.mxu0
      %872 = vmatprep.mubr.bf16.mxu0 0
      %873 = vmatmul.mubr.bf16.gmra.mxu0 %v683
      %v874 = vpop.f32.mrf.mxu0
      %v875 = vadd.f32 0.0, %v874
      %v876 = vpop.f32.mrf.mxu0
      %v877 = vpop.f32.mrf.mxu0
      %v878 = vadd.f32 0.0, %v877
      %v879 = vpop.f32.mrf.mxu0
      %880 = vmatprep.mubr.bf16.mxu0 0
      %881 = vmatmul.mubr.bf16.gmra.mxu0 %v684
      %v882 = vpop.f32.mrf.mxu0
      %v883 = vadd.f32 0.0, %v882
      %v884 = vpop.f32.mrf.mxu0
      %v885 = vpop.f32.mrf.mxu0
      %v886 = vadd.f32 0.0, %v885
      %v887 = vpop.f32.mrf.mxu0
      %888 = vmatprep.mubr.bf16.mxu0 0
      %889 = vmatmul.mubr.bf16.gmra.mxu0 %v685
      %v890 = vpop.f32.mrf.mxu0
      %v891 = vadd.f32 0.0, %v890
      %v892 = vpop.f32.mrf.mxu0
      %v893 = vpop.f32.mrf.mxu0
      %v894 = vadd.f32 0.0, %v893
      %v895 = vpop.f32.mrf.mxu0
      %896 = vmatprep.mubr.bf16.mxu0 0
      %897 = vmatmul.mubr.bf16.gmra.mxu0 %v686
      %v898 = vpop.f32.mrf.mxu0
      %v899 = vadd.f32 0.0, %v898
      %v900 = vpop.f32.mrf.mxu0
      %v901 = vpop.f32.mrf.mxu0
      %v902 = vadd.f32 0.0, %v901
      %v903 = vpop.f32.mrf.mxu0
      %904 = vmatprep.mubr.bf16.mxu0 0
      %905 = vmatmul.mubr.bf16.gmra.mxu0 %v687
      %v906 = vpop.f32.mrf.mxu0
      %v907 = vadd.f32 0.0, %v906
      %v908 = vpop.f32.mrf.mxu0
      %v909 = vpop.f32.mrf.mxu0
      %v910 = vadd.f32 0.0, %v909
      %v911 = vpop.f32.mrf.mxu0
      %912 = vdwg.mxu0
      %v945 = vunpack.c.l.b16 %v172
      %v946 = vunpack.c.l.b16 %v173
      %v947 = vunpack.c.l.b16 %v174
      %v948 = vunpack.c.l.b16 %v175
      %v949 = vunpack.c.l.b16 %v176
      %v950 = vunpack.c.l.b16 %v177
      %v951 = vunpack.c.l.b16 %v178
      %v952 = vunpack.c.l.b16 %v179
      %v953 = vunpack.c.l.b16 %v180
      %v954 = vunpack.c.l.b16 %v181
      %v955 = vunpack.c.l.b16 %v182
      %v956 = vunpack.c.l.b16 %v183
      %v957 = vunpack.c.l.b16 %v184
      %v958 = vunpack.c.l.b16 %v185
      %v959 = vunpack.c.l.b16 %v186
      %v960 = vunpack.c.l.b16 %v187
      %v961 = vunpack.c.l.b16 %v188
      %v962 = vunpack.c.l.b16 %v189
      %v963 = vunpack.c.l.b16 %v190
      %v964 = vunpack.c.l.b16 %v191
      %v965 = vunpack.c.l.b16 %v192
      %v966 = vunpack.c.l.b16 %v193
      %v967 = vunpack.c.l.b16 %v194
      %v968 = vunpack.c.l.b16 %v195
      %v969 = vunpack.c.l.b16 %v196
      %v970 = vunpack.c.l.b16 %v197
      %v971 = vunpack.c.l.b16 %v198
      %v972 = vunpack.c.l.b16 %v199
      %v973 = vunpack.c.l.b16 %v200
      %v974 = vunpack.c.l.b16 %v201
      %v975 = vunpack.c.l.b16 %v202
      %v976 = vunpack.c.l.b16 %v203
      %v977 = vpack.c.b16 %v946, %v945
      %v978 = vpack.c.b16 %v948, %v947
      %v979 = vpack.c.b16 %v950, %v949
      %v980 = vpack.c.b16 %v952, %v951
      %v981 = vpack.c.b16 %v954, %v953
      %v982 = vpack.c.b16 %v956, %v955
      %v983 = vpack.c.b16 %v958, %v957
      %v984 = vpack.c.b16 %v960, %v959
      %v985 = vpack.c.b16 %v962, %v961
      %v986 = vpack.c.b16 %v964, %v963
      %v987 = vpack.c.b16 %v966, %v965
      %v988 = vpack.c.b16 %v968, %v967
      %v989 = vpack.c.b16 %v970, %v969
      %v990 = vpack.c.b16 %v972, %v971
      %v991 = vpack.c.b16 %v974, %v973
      %v992 = vpack.c.b16 %v976, %v975
      %v1025 = vunpack.c.l.b16 %v204
      %v1026 = vunpack.c.l.b16 %v205
      %v1027 = vunpack.c.l.b16 %v206
      %v1028 = vunpack.c.l.b16 %v207
      %v1029 = vunpack.c.l.b16 %v208
      %v1030 = vunpack.c.l.b16 %v209
      %v1031 = vunpack.c.l.b16 %v210
      %v1032 = vunpack.c.l.b16 %v211
      %v1033 = vunpack.c.l.b16 %v212
      %v1034 = vunpack.c.l.b16 %v213
      %v1035 = vunpack.c.l.b16 %v214
      %v1036 = vunpack.c.l.b16 %v215
      %v1037 = vunpack.c.l.b16 %v216
      %v1038 = vunpack.c.l.b16 %v217
      %v1039 = vunpack.c.l.b16 %v218
      %v1040 = vunpack.c.l.b16 %v219
      %v1041 = vpack.c.b16 %v1026, %v1025
      %v1042 = vpack.c.b16 %v1028, %v1027
      %v1043 = vpack.c.b16 %v1030, %v1029
      %v1044 = vpack.c.b16 %v1032, %v1031
      %v1045 = vpack.c.b16 %v1034, %v1033
      %v1046 = vpack.c.b16 %v1036, %v1035
      %v1047 = vpack.c.b16 %v1038, %v1037
      %v1048 = vpack.c.b16 %v1040, %v1039
      %1057 = vmatprep.subr.bf16.mxu0 0
      %1058 = vmatpush1.bf16.msra.mxu0 %v1048
      %1059 = vmatprep.subr.bf16.mxu0 0
      %1060 = vmatpush1.bf16.msra.mxu0 %v1047
      %1061 = vmatprep.subr.bf16.mxu0 0
      %1062 = vmatpush1.bf16.msra.mxu0 %v1046
      %1063 = vmatprep.subr.bf16.mxu0 0
      %1064 = vmatpush1.bf16.msra.mxu0 %v1045
      %1065 = vmatprep.subr.bf16.mxu0 0
      %1066 = vmatpush1.bf16.msra.mxu0 %v1044
      %1067 = vmatprep.subr.bf16.mxu0 0
      %1068 = vmatpush1.bf16.msra.mxu0 %v1043
      %1069 = vmatprep.subr.bf16.mxu0 0
      %1070 = vmatpush1.bf16.msra.mxu0 %v1042
      %1071 = vmatprep.subr.bf16.mxu0 0
      %1072 = vmatpush1.bf16.msra.mxu0 %v1041
      %1073 = vmatprep.subr.bf16.mxu0 0
      %1074 = vmatpush2.bf16.msra.mxu0 0
      %1075 = vmatprep.subr.bf16.mxu0 0
      %1076 = vmatpush2.bf16.msra.mxu0 0
      %1077 = vmatprep.subr.bf16.mxu0 0
      %1078 = vmatpush2.bf16.msra.mxu0 0
      %1079 = vmatprep.subr.bf16.mxu0 0
      %1080 = vmatpush2.bf16.msra.mxu0 0
      %1081 = vmatprep.subr.bf16.mxu0 0
      %1082 = vmatpush2.bf16.msra.mxu0 0
      %1083 = vmatprep.subr.bf16.mxu0 0
      %1084 = vmatpush2.bf16.msra.mxu0 0
      %1085 = vmatprep.subr.bf16.mxu0 0
      %1086 = vmatpush2.bf16.msra.mxu0 0
      %1087 = vmatprep.subr.bf16.mxu0 0
      %1088 = vmatpush2.bf16.msra.mxu0 0
      %1089 = vmatprep.mubr.bf16.mxu0 0
      %1090 = vmatmul.mubr.bf16.gmra.mxu0 %v977
      %v1091 = vpop.f32.mrf.mxu0
      %v1092 = vadd.f32 %v787, %v1091
      %v1093 = vpop.f32.mrf.mxu0
      %v1094 = vpop.f32.mrf.mxu0
      %v1095 = vadd.f32 %v790, %v1094
      %v1096 = vpop.f32.mrf.mxu0
      %1097 = vmatprep.mubr.bf16.mxu0 0
      %1098 = vmatmul.mubr.bf16.gmra.mxu0 %v978
      %v1099 = vpop.f32.mrf.mxu0
      %v1100 = vadd.f32 %v795, %v1099
      %v1101 = vpop.f32.mrf.mxu0
      %v1102 = vpop.f32.mrf.mxu0
      %v1103 = vadd.f32 %v798, %v1102
      %v1104 = vpop.f32.mrf.mxu0
      %1105 = vmatprep.mubr.bf16.mxu0 0
      %1106 = vmatmul.mubr.bf16.gmra.mxu0 %v979
      %v1107 = vpop.f32.mrf.mxu0
      %v1108 = vadd.f32 %v803, %v1107
      %v1109 = vpop.f32.mrf.mxu0
      %v1110 = vpop.f32.mrf.mxu0
      %v1111 = vadd.f32 %v806, %v1110
      %v1112 = vpop.f32.mrf.mxu0
      %1113 = vmatprep.mubr.bf16.mxu0 0
      %1114 = vmatmul.mubr.bf16.gmra.mxu0 %v980
      %v1115 = vpop.f32.mrf.mxu0
      %v1116 = vadd.f32 %v811, %v1115
      %v1117 = vpop.f32.mrf.mxu0
      %v1118 = vpop.f32.mrf.mxu0
      %v1119 = vadd.f32 %v814, %v1118
      %v1120 = vpop.f32.mrf.mxu0
      %1121 = vmatprep.mubr.bf16.mxu0 0
      %1122 = vmatmul.mubr.bf16.gmra.mxu0 %v981
      %v1123 = vpop.f32.mrf.mxu0
      %v1124 = vadd.f32 %v819, %v1123
      %v1125 = vpop.f32.mrf.mxu0
      %v1126 = vpop.f32.mrf.mxu0
      %v1127 = vadd.f32 %v822, %v1126
      %v1128 = vpop.f32.mrf.mxu0
      %1129 = vmatprep.mubr.bf16.mxu0 0
      %1130 = vmatmul.mubr.bf16.gmra.mxu0 %v982
      %v1131 = vpop.f32.mrf.mxu0
      %v1132 = vadd.f32 %v827, %v1131
      %v1133 = vpop.f32.mrf.mxu0
      %v1134 = vpop.f32.mrf.mxu0
      %v1135 = vadd.f32 %v830, %v1134
      %v1136 = vpop.f32.mrf.mxu0
      %1137 = vmatprep.mubr.bf16.mxu0 0
      %1138 = vmatmul.mubr.bf16.gmra.mxu0 %v983
      %v1139 = vpop.f32.mrf.mxu0
      %v1140 = vadd.f32 %v835, %v1139
      %v1141 = vpop.f32.mrf.mxu0
      %v1142 = vpop.f32.mrf.mxu0
      %v1143 = vadd.f32 %v838, %v1142
      %v1144 = vpop.f32.mrf.mxu0
      %1145 = vmatprep.mubr.bf16.mxu0 0
      %1146 = vmatmul.mubr.bf16.gmra.mxu0 %v984
      %v1147 = vpop.f32.mrf.mxu0
      %v1148 = vadd.f32 %v843, %v1147
      %v1149 = vpop.f32.mrf.mxu0
      %v1150 = vpop.f32.mrf.mxu0
      %v1151 = vadd.f32 %v846, %v1150
      %v1152 = vpop.f32.mrf.mxu0
      %1153 = vmatprep.mubr.bf16.mxu0 0
      %1154 = vmatmul.mubr.bf16.gmra.mxu0 %v985
      %v1155 = vpop.f32.mrf.mxu0
      %v1156 = vadd.f32 %v851, %v1155
      %v1157 = vpop.f32.mrf.mxu0
      %v1158 = vpop.f32.mrf.mxu0
      %v1159 = vadd.f32 %v854, %v1158
      %v1160 = vpop.f32.mrf.mxu0
      %1161 = vmatprep.mubr.bf16.mxu0 0
      %1162 = vmatmul.mubr.bf16.gmra.mxu0 %v986
      %v1163 = vpop.f32.mrf.mxu0
      %v1164 = vadd.f32 %v859, %v1163
      %v1165 = vpop.f32.mrf.mxu0
      %v1166 = vpop.f32.mrf.mxu0
      %v1167 = vadd.f32 %v862, %v1166
      %v1168 = vpop.f32.mrf.mxu0
      %1169 = vmatprep.mubr.bf16.mxu0 0
      %1170 = vmatmul.mubr.bf16.gmra.mxu0 %v987
      %v1171 = vpop.f32.mrf.mxu0
      %v1172 = vadd.f32 %v867, %v1171
      %v1173 = vpop.f32.mrf.mxu0
      %v1174 = vpop.f32.mrf.mxu0
      %v1175 = vadd.f32 %v870, %v1174
      %v1176 = vpop.f32.mrf.mxu0
      %1177 = vmatprep.mubr.bf16.mxu0 0
      %1178 = vmatmul.mubr.bf16.gmra.mxu0 %v988
      %v1179 = vpop.f32.mrf.mxu0
      %v1180 = vadd.f32 %v875, %v1179
      %v1181 = vpop.f32.mrf.mxu0
      %v1182 = vpop.f32.mrf.mxu0
      %v1183 = vadd.f32 %v878, %v1182
      %v1184 = vpop.f32.mrf.mxu0
      %1185 = vmatprep.mubr.bf16.mxu0 0
      %1186 = vmatmul.mubr.bf16.gmra.mxu0 %v989
      %v1187 = vpop.f32.mrf.mxu0
      %v1188 = vadd.f32 %v883, %v1187
      %v1189 = vpop.f32.mrf.mxu0
      %v1190 = vpop.f32.mrf.mxu0
      %v1191 = vadd.f32 %v886, %v1190
      %v1192 = vpop.f32.mrf.mxu0
      %1193 = vmatprep.mubr.bf16.mxu0 0
      %1194 = vmatmul.mubr.bf16.gmra.mxu0 %v990
      %v1195 = vpop.f32.mrf.mxu0
      %v1196 = vadd.f32 %v891, %v1195
      %v1197 = vpop.f32.mrf.mxu0
      %v1198 = vpop.f32.mrf.mxu0
      %v1199 = vadd.f32 %v894, %v1198
      %v1200 = vpop.f32.mrf.mxu0
      %1201 = vmatprep.mubr.bf16.mxu0 0
      %1202 = vmatmul.mubr.bf16.gmra.mxu0 %v991
      %v1203 = vpop.f32.mrf.mxu0
      %v1204 = vadd.f32 %v899, %v1203
      %v1205 = vpop.f32.mrf.mxu0
      %v1206 = vpop.f32.mrf.mxu0
      %v1207 = vadd.f32 %v902, %v1206
      %v1208 = vpop.f32.mrf.mxu0
      %1209 = vmatprep.mubr.bf16.mxu0 0
      %1210 = vmatmul.mubr.bf16.gmra.mxu0 %v992
      %v1211 = vpop.f32.mrf.mxu0
      %v1212 = vadd.f32 %v907, %v1211
      %v1213 = vpop.f32.mrf.mxu0
      %v1214 = vpop.f32.mrf.mxu0
      %v1215 = vadd.f32 %v910, %v1214
      %v1216 = vpop.f32.mrf.mxu0
      %1217 = vdwg.mxu0
      %v1218 = vld [vmem:[%s165] sm:$0xe]
      %v1219 = vld [vmem:[%s165 + $0xc] sm:$0xe]
      %v1220 = vld [vmem:[%s165 + $0x18] sm:$0xe]
      %v1221 = vld [vmem:[%s165 + $0x24] sm:$0xe]
      %v1222 = vld [vmem:[%s165 + $0x30] sm:$0xe]
      %v1223 = vld [vmem:[%s165 + $0x3c] sm:$0xe]
      %v1224 = vld [vmem:[%s165 + $0x48] sm:$0xe]
      %v1225 = vld [vmem:[%s165 + $0x54] sm:$0xe]
      %v1226 = vld [vmem:[%s165 + $0x60] sm:$0xe]
      %v1227 = vld [vmem:[%s165 + $0x6c] sm:$0xe]
      %v1228 = vld [vmem:[%s165 + $0x78] sm:$0xe]
      %v1229 = vld [vmem:[%s165 + $0x84] sm:$0xe]
      %v1230 = vld [vmem:[%s165 + $0x90] sm:$0xe]
      %v1231 = vld [vmem:[%s165 + $0x9c] sm:$0xe]
      %v1232 = vld [vmem:[%s165 + $0xa8] sm:$0xe]
      %v1233 = vld [vmem:[%s165 + $0xb4] sm:$0xe]
      %vm1266 = vcmask 1042432
      %vm1267 = vcmask 1046532
      %vm1268 = vmor %vm1266, %vm1267
      %v1269 = vrot.slane %v1218, 5
      %v1270 = vrot.slane %v1269, 4
      %v1271 = vrot.slane %v173, 5
      %v1272 = vsel %vm1268, %v1270, %v1271
      %v1273 = vrot.slane %v1271, 4
      %v1274 = vrot.slane %v220, 5
      %v1275 = vsel %vm1268, %v1273, %v1274
      %v1276 = vrot.slane %v1219, 5
      %v1277 = vrot.slane %v1276, 4
      %v1278 = vrot.slane %v175, 5
      %v1279 = vsel %vm1268, %v1277, %v1278
      %v1280 = vrot.slane %v1278, 4
      %v1281 = vrot.slane %v221, 5
      %v1282 = vsel %vm1268, %v1280, %v1281
      %v1283 = vrot.slane %v1220, 5
      %v1284 = vrot.slane %v1283, 4
      %v1285 = vrot.slane %v177, 5
      %v1286 = vsel %vm1268, %v1284, %v1285
      %v1287 = vrot.slane %v1285, 4
      %v1288 = vrot.slane %v222, 5
      %v1289 = vsel %vm1268, %v1287, %v1288
      %v1290 = vrot.slane %v1221, 5
      %v1291 = vrot.slane %v1290, 4
      %v1292 = vrot.slane %v179, 5
      %v1293 = vsel %vm1268, %v1291, %v1292
      %v1294 = vrot.slane %v1292, 4
      %v1295 = vrot.slane %v223, 5
      %v1296 = vsel %vm1268, %v1294, %v1295
      %v1297 = vrot.slane %v1222, 5
      %v1298 = vrot.slane %v1297, 4
      %v1299 = vrot.slane %v181, 5
      %v1300 = vsel %vm1268, %v1298, %v1299
      %v1301 = vrot.slane %v1299, 4
      %v1302 = vrot.slane %v224, 5
      %v1303 = vsel %vm1268, %v1301, %v1302
      %v1304 = vrot.slane %v1223, 5
      %v1305 = vrot.slane %v1304, 4
      %v1306 = vrot.slane %v183, 5
      %v1307 = vsel %vm1268, %v1305, %v1306
      %v1308 = vrot.slane %v1306, 4
      %v1309 = vrot.slane %v225, 5
      %v1310 = vsel %vm1268, %v1308, %v1309
      %v1311 = vrot.slane %v1224, 5
      %v1312 = vrot.slane %v1311, 4
      %v1313 = vrot.slane %v185, 5
      %v1314 = vsel %vm1268, %v1312, %v1313
      %v1315 = vrot.slane %v1313, 4
      %v1316 = vrot.slane %v226, 5
      %v1317 = vsel %vm1268, %v1315, %v1316
      %v1318 = vrot.slane %v1225, 5
      %v1319 = vrot.slane %v1318, 4
      %v1320 = vrot.slane %v187, 5
      %v1321 = vsel %vm1268, %v1319, %v1320
      %v1322 = vrot.slane %v1320, 4
      %v1323 = vrot.slane %v227, 5
      %v1324 = vsel %vm1268, %v1322, %v1323
      %v1325 = vrot.slane %v1226, 5
      %v1326 = vrot.slane %v1325, 4
      %v1327 = vrot.slane %v189, 5
      %v1328 = vsel %vm1268, %v1326, %v1327
      %v1329 = vrot.slane %v1327, 4
      %v1330 = vrot.slane %v228, 5
      %v1331 = vsel %vm1268, %v1329, %v1330
      %v1332 = vrot.slane %v1227, 5
      %v1333 = vrot.slane %v1332, 4
      %v1334 = vrot.slane %v191, 5
      %v1335 = vsel %vm1268, %v1333, %v1334
      %v1336 = vrot.slane %v1334, 4
      %v1337 = vrot.slane %v229, 5
      %v1338 = vsel %vm1268, %v1336, %v1337
      %v1339 = vrot.slane %v1228, 5
      %v1340 = vrot.slane %v1339, 4
      %v1341 = vrot.slane %v193, 5
      %v1342 = vsel %vm1268, %v1340, %v1341
      %v1343 = vrot.slane %v1341, 4
      %v1344 = vrot.slane %v230, 5
      %v1345 = vsel %vm1268, %v1343, %v1344
      %v1346 = vrot.slane %v1229, 5
      %v1347 = vrot.slane %v1346, 4
      %v1348 = vrot.slane %v195, 5
      %v1349 = vsel %vm1268, %v1347, %v1348
      %v1350 = vrot.slane %v1348, 4
      %v1351 = vrot.slane %v231, 5
      %v1352 = vsel %vm1268, %v1350, %v1351
      %v1353 = vrot.slane %v1230, 5
      %v1354 = vrot.slane %v1353, 4
      %v1355 = vrot.slane %v197, 5
      %v1356 = vsel %vm1268, %v1354, %v1355
      %v1357 = vrot.slane %v1355, 4
      %v1358 = vrot.slane %v232, 5
      %v1359 = vsel %vm1268, %v1357, %v1358
      %v1360 = vrot.slane %v1231, 5
      %v1361 = vrot.slane %v1360, 4
      %v1362 = vrot.slane %v199, 5
      %v1363 = vsel %vm1268, %v1361, %v1362
      %v1364 = vrot.slane %v1362, 4
      %v1365 = vrot.slane %v233, 5
      %v1366 = vsel %vm1268, %v1364, %v1365
      %v1367 = vrot.slane %v1232, 5
      %v1368 = vrot.slane %v1367, 4
      %v1369 = vrot.slane %v201, 5
      %v1370 = vsel %vm1268, %v1368, %v1369
      %v1371 = vrot.slane %v1369, 4
      %v1372 = vrot.slane %v234, 5
      %v1373 = vsel %vm1268, %v1371, %v1372
      %v1374 = vrot.slane %v1233, 5
      %v1375 = vrot.slane %v1374, 4
      %v1376 = vrot.slane %v203, 5
      %v1377 = vsel %vm1268, %v1375, %v1376
      %v1378 = vrot.slane %v1376, 4
      %v1379 = vrot.slane %v235, 5
      %v1380 = vsel %vm1268, %v1378, %v1379
      %s1381 = scalar_lea.vmem %s1, 128
      %v1382 = vld [vmem:[%s1381] sm:$0xf]
      %v1383 = vld [vmem:[%s1381 + $0x4] sm:$0xf]
      %v1384 = vld [vmem:[%s1381 + $0x8] sm:$0xf]
      %v1385 = vld [vmem:[%s1381 + $0xc] sm:$0xf]
      %v1386 = vld [vmem:[%s1381 + $0x10] sm:$0xf]
      %v1387 = vld [vmem:[%s1381 + $0x14] sm:$0xf]
      %v1388 = vld [vmem:[%s1381 + $0x18] sm:$0xf]
      %v1389 = vld [vmem:[%s1381 + $0x1c] sm:$0xf]
      %v1390 = vld [vmem:[%s1381 + $0x20] sm:$0xf]
      %v1391 = vld [vmem:[%s1381 + $0x24] sm:$0xf]
      %v1392 = vld [vmem:[%s1381 + $0x28] sm:$0xf]
      %v1393 = vld [vmem:[%s1381 + $0x2c] sm:$0xf]
      %v1394 = vld [vmem:[%s1381 + $0x30] sm:$0xf]
      %v1395 = vld [vmem:[%s1381 + $0x34] sm:$0xf]
      %v1396 = vld [vmem:[%s1381 + $0x38] sm:$0xf]
      %v1397 = vld [vmem:[%s1381 + $0x3c] sm:$0xf]
      %v1398 = vunpack.c.l.b16 %v1272
      %v1399 = vunpack.c.l.b16 %v1275
      %v1400 = vunpack.c.l.b16 %v1279
      %v1401 = vunpack.c.l.b16 %v1282
      %v1402 = vunpack.c.l.b16 %v1286
      %v1403 = vunpack.c.l.b16 %v1289
      %v1404 = vunpack.c.l.b16 %v1293
      %v1405 = vunpack.c.l.b16 %v1296
      %v1406 = vunpack.c.l.b16 %v1300
      %v1407 = vunpack.c.l.b16 %v1303
      %v1408 = vunpack.c.l.b16 %v1307
      %v1409 = vunpack.c.l.b16 %v1310
      %v1410 = vunpack.c.l.b16 %v1314
      %v1411 = vunpack.c.l.b16 %v1317
      %v1412 = vunpack.c.l.b16 %v1321
      %v1413 = vunpack.c.l.b16 %v1324
      %v1414 = vunpack.c.l.b16 %v1328
      %v1415 = vunpack.c.l.b16 %v1331
      %v1416 = vunpack.c.l.b16 %v1335
      %v1417 = vunpack.c.l.b16 %v1338
      %v1418 = vunpack.c.l.b16 %v1342
      %v1419 = vunpack.c.l.b16 %v1345
      %v1420 = vunpack.c.l.b16 %v1349
      %v1421 = vunpack.c.l.b16 %v1352
      %v1422 = vunpack.c.l.b16 %v1356
      %v1423 = vunpack.c.l.b16 %v1359
      %v1424 = vunpack.c.l.b16 %v1363
      %v1425 = vunpack.c.l.b16 %v1366
      %v1426 = vunpack.c.l.b16 %v1370
      %v1427 = vunpack.c.l.b16 %v1373
      %v1428 = vunpack.c.l.b16 %v1377
      %v1429 = vunpack.c.l.b16 %v1380
      %v1430 = vpack.c.b16 %v1399, %v1398
      %v1431 = vpack.c.b16 %v1401, %v1400
      %v1432 = vpack.c.b16 %v1403, %v1402
      %v1433 = vpack.c.b16 %v1405, %v1404
      %v1434 = vpack.c.b16 %v1407, %v1406
      %v1435 = vpack.c.b16 %v1409, %v1408
      %v1436 = vpack.c.b16 %v1411, %v1410
      %v1437 = vpack.c.b16 %v1413, %v1412
      %v1438 = vpack.c.b16 %v1415, %v1414
      %v1439 = vpack.c.b16 %v1417, %v1416
      %v1440 = vpack.c.b16 %v1419, %v1418
      %v1441 = vpack.c.b16 %v1421, %v1420
      %v1442 = vpack.c.b16 %v1423, %v1422
      %v1443 = vpack.c.b16 %v1425, %v1424
      %v1444 = vpack.c.b16 %v1427, %v1426
      %v1445 = vpack.c.b16 %v1429, %v1428
      %v1478 = vunpack.c.l.b16 %v1382
      %v1479 = vunpack.c.l.b16 %v1383
      %v1480 = vunpack.c.l.b16 %v1384
      %v1481 = vunpack.c.l.b16 %v1385
      %v1482 = vunpack.c.l.b16 %v1386
      %v1483 = vunpack.c.l.b16 %v1387
      %v1484 = vunpack.c.l.b16 %v1388
      %v1485 = vunpack.c.l.b16 %v1389
      %v1486 = vunpack.c.l.b16 %v1390
      %v1487 = vunpack.c.l.b16 %v1391
      %v1488 = vunpack.c.l.b16 %v1392
      %v1489 = vunpack.c.l.b16 %v1393
      %v1490 = vunpack.c.l.b16 %v1394
      %v1491 = vunpack.c.l.b16 %v1395
      %v1492 = vunpack.c.l.b16 %v1396
      %v1493 = vunpack.c.l.b16 %v1397
      %v1494 = vpack.c.b16 %v1479, %v1478
      %v1495 = vpack.c.b16 %v1481, %v1480
      %v1496 = vpack.c.b16 %v1483, %v1482
      %v1497 = vpack.c.b16 %v1485, %v1484
      %v1498 = vpack.c.b16 %v1487, %v1486
      %v1499 = vpack.c.b16 %v1489, %v1488
      %v1500 = vpack.c.b16 %v1491, %v1490
      %v1501 = vpack.c.b16 %v1493, %v1492
      %1510 = vmatprep.subr.bf16.mxu0 0
      %1511 = vmatpush1.bf16.msra.mxu0 %v1501
      %1512 = vmatprep.subr.bf16.mxu0 0
      %1513 = vmatpush1.bf16.msra.mxu0 %v1500
      %1514 = vmatprep.subr.bf16.mxu0 0
      %1515 = vmatpush1.bf16.msra.mxu0 %v1499
      %1516 = vmatprep.subr.bf16.mxu0 0
      %1517 = vmatpush1.bf16.msra.mxu0 %v1498
      %1518 = vmatprep.subr.bf16.mxu0 0
      %1519 = vmatpush1.bf16.msra.mxu0 %v1497
      %1520 = vmatprep.subr.bf16.mxu0 0
      %1521 = vmatpush1.bf16.msra.mxu0 %v1496
      %1522 = vmatprep.subr.bf16.mxu0 0
      %1523 = vmatpush1.bf16.msra.mxu0 %v1495
      %1524 = vmatprep.subr.bf16.mxu0 0
      %1525 = vmatpush1.bf16.msra.mxu0 %v1494
      %1526 = vmatprep.subr.bf16.mxu0 0
      %1527 = vmatpush2.bf16.msra.mxu0 0
      %1528 = vmatprep.subr.bf16.mxu0 0
      %1529 = vmatpush2.bf16.msra.mxu0 0
      %1530 = vmatprep.subr.bf16.mxu0 0
      %1531 = vmatpush2.bf16.msra.mxu0 0
      %1532 = vmatprep.subr.bf16.mxu0 0
      %1533 = vmatpush2.bf16.msra.mxu0 0
      %1534 = vmatprep.subr.bf16.mxu0 0
      %1535 = vmatpush2.bf16.msra.mxu0 0
      %1536 = vmatprep.subr.bf16.mxu0 0
      %1537 = vmatpush2.bf16.msra.mxu0 0
      %1538 = vmatprep.subr.bf16.mxu0 0
      %1539 = vmatpush2.bf16.msra.mxu0 0
      %1540 = vmatprep.subr.bf16.mxu0 0
      %1541 = vmatpush2.bf16.msra.mxu0 0
      %1542 = vmatprep.mubr.bf16.mxu0 0
      %1543 = vmatmul.mubr.bf16.gmra.mxu0 %v1430
      %v1544 = vpop.f32.mrf.mxu0
      %v1545 = vadd.f32 0.0, %v1544
      %v1546 = vpop.f32.mrf.mxu0
      %v1547 = vpop.f32.mrf.mxu0
      %v1548 = vadd.f32 0.0, %v1547
      %v1549 = vpop.f32.mrf.mxu0
      %1550 = vmatprep.mubr.bf16.mxu0 0
      %1551 = vmatmul.mubr.bf16.gmra.mxu0 %v1431
      %v1552 = vpop.f32.mrf.mxu0
      %v1553 = vadd.f32 0.0, %v1552
      %v1554 = vpop.f32.mrf.mxu0
      %v1555 = vpop.f32.mrf.mxu0
      %v1556 = vadd.f32 0.0, %v1555
      %v1557 = vpop.f32.mrf.mxu0
      %1558 = vmatprep.mubr.bf16.mxu0 0
      %1559 = vmatmul.mubr.bf16.gmra.mxu0 %v1432
      %v1560 = vpop.f32.mrf.mxu0
      %v1561 = vadd.f32 0.0, %v1560
      %v1562 = vpop.f32.mrf.mxu0
      %v1563 = vpop.f32.mrf.mxu0
      %v1564 = vadd.f32 0.0, %v1563
      %v1565 = vpop.f32.mrf.mxu0
      %1566 = vmatprep.mubr.bf16.mxu0 0
      %1567 = vmatmul.mubr.bf16.gmra.mxu0 %v1433
      %v1568 = vpop.f32.mrf.mxu0
      %v1569 = vadd.f32 0.0, %v1568
      %v1570 = vpop.f32.mrf.mxu0
      %v1571 = vpop.f32.mrf.mxu0
      %v1572 = vadd.f32 0.0, %v1571
      %v1573 = vpop.f32.mrf.mxu0
      %1574 = vmatprep.mubr.bf16.mxu0 0
      %1575 = vmatmul.mubr.bf16.gmra.mxu0 %v1434
      %v1576 = vpop.f32.mrf.mxu0
      %v1577 = vadd.f32 0.0, %v1576
      %v1578 = vpop.f32.mrf.mxu0
      %v1579 = vpop.f32.mrf.mxu0
      %v1580 = vadd.f32 0.0, %v1579
      %v1581 = vpop.f32.mrf.mxu0
      %1582 = vmatprep.mubr.bf16.mxu0 0
      %1583 = vmatmul.mubr.bf16.gmra.mxu0 %v1435
      %v1584 = vpop.f32.mrf.mxu0
      %v1585 = vadd.f32 0.0, %v1584
      %v1586 = vpop.f32.mrf.mxu0
      %v1587 = vpop.f32.mrf.mxu0
      %v1588 = vadd.f32 0.0, %v1587
      %v1589 = vpop.f32.mrf.mxu0
      %1590 = vmatprep.mubr.bf16.mxu0 0
      %1591 = vmatmul.mubr.bf16.gmra.mxu0 %v1436
      %v1592 = vpop.f32.mrf.mxu0
      %v1593 = vadd.f32 0.0, %v1592
      %v1594 = vpop.f32.mrf.mxu0
      %v1595 = vpop.f32.mrf.mxu0
      %v1596 = vadd.f32 0.0, %v1595
      %v1597 = vpop.f32.mrf.mxu0
      %1598 = vmatprep.mubr.bf16.mxu0 0
      %1599 = vmatmul.mubr.bf16.gmra.mxu0 %v1437
      %v1600 = vpop.f32.mrf.mxu0
      %v1601 = vadd.f32 0.0, %v1600
      %v1602 = vpop.f32.mrf.mxu0
      %v1603 = vpop.f32.mrf.mxu0
      %v1604 = vadd.f32 0.0, %v1603
      %v1605 = vpop.f32.mrf.mxu0
      %1606 = vmatprep.mubr.bf16.mxu0 0
      %1607 = vmatmul.mubr.bf16.gmra.mxu0 %v1438
      %v1608 = vpop.f32.mrf.mxu0
      %v1609 = vadd.f32 0.0, %v1608
      %v1610 = vpop.f32.mrf.mxu0
      %v1611 = vpop.f32.mrf.mxu0
      %v1612 = vadd.f32 0.0, %v1611
      %v1613 = vpop.f32.mrf.mxu0
      %1614 = vmatprep.mubr.bf16.mxu0 0
      %1615 = vmatmul.mubr.bf16.gmra.mxu0 %v1439
      %v1616 = vpop.f32.mrf.mxu0
      %v1617 = vadd.f32 0.0, %v1616
      %v1618 = vpop.f32.mrf.mxu0
      %v1619 = vpop.f32.mrf.mxu0
      %v1620 = vadd.f32 0.0, %v1619
      %v1621 = vpop.f32.mrf.mxu0
      %1622 = vmatprep.mubr.bf16.mxu0 0
      %1623 = vmatmul.mubr.bf16.gmra.mxu0 %v1440
      %v1624 = vpop.f32.mrf.mxu0
      %v1625 = vadd.f32 0.0, %v1624
      %v1626 = vpop.f32.mrf.mxu0
      %v1627 = vpop.f32.mrf.mxu0
      %v1628 = vadd.f32 0.0, %v1627
      %v1629 = vpop.f32.mrf.mxu0
      %1630 = vmatprep.mubr.bf16.mxu0 0
      %1631 = vmatmul.mubr.bf16.gmra.mxu0 %v1441
      %v1632 = vpop.f32.mrf.mxu0
      %v1633 = vadd.f32 0.0, %v1632
      %v1634 = vpop.f32.mrf.mxu0
      %v1635 = vpop.f32.mrf.mxu0
      %v1636 = vadd.f32 0.0, %v1635
      %v1637 = vpop.f32.mrf.mxu0
      %1638 = vmatprep.mubr.bf16.mxu0 0
      %1639 = vmatmul.mubr.bf16.gmra.mxu0 %v1442
      %v1640 = vpop.f32.mrf.mxu0
      %v1641 = vadd.f32 0.0, %v1640
      %v1642 = vpop.f32.mrf.mxu0
      %v1643 = vpop.f32.mrf.mxu0
      %v1644 = vadd.f32 0.0, %v1643
      %v1645 = vpop.f32.mrf.mxu0
      %1646 = vmatprep.mubr.bf16.mxu0 0
      %1647 = vmatmul.mubr.bf16.gmra.mxu0 %v1443
      %v1648 = vpop.f32.mrf.mxu0
      %v1649 = vadd.f32 0.0, %v1648
      %v1650 = vpop.f32.mrf.mxu0
      %v1651 = vpop.f32.mrf.mxu0
      %v1652 = vadd.f32 0.0, %v1651
      %v1653 = vpop.f32.mrf.mxu0
      %1654 = vmatprep.mubr.bf16.mxu0 0
      %1655 = vmatmul.mubr.bf16.gmra.mxu0 %v1444
      %v1656 = vpop.f32.mrf.mxu0
      %v1657 = vadd.f32 0.0, %v1656
      %v1658 = vpop.f32.mrf.mxu0
      %v1659 = vpop.f32.mrf.mxu0
      %v1660 = vadd.f32 0.0, %v1659
      %v1661 = vpop.f32.mrf.mxu0
      %1662 = vmatprep.mubr.bf16.mxu0 0
      %1663 = vmatmul.mubr.bf16.gmra.mxu0 %v1445
      %v1664 = vpop.f32.mrf.mxu0
      %v1665 = vadd.f32 0.0, %v1664
      %v1666 = vpop.f32.mrf.mxu0
      %v1667 = vpop.f32.mrf.mxu0
      %v1668 = vadd.f32 0.0, %v1667
      %v1669 = vpop.f32.mrf.mxu0
      %1670 = vdwg.mxu0
      %v1671 = vadd.f32 %v1092, %v1545
      %v1672 = vadd.f32 %v1095, %v1548
      %v1673 = vadd.f32 %v1100, %v1553
      %v1674 = vadd.f32 %v1103, %v1556
      %v1675 = vadd.f32 %v1108, %v1561
      %v1676 = vadd.f32 %v1111, %v1564
      %v1677 = vadd.f32 %v1116, %v1569
      %v1678 = vadd.f32 %v1119, %v1572
      %v1679 = vadd.f32 %v1124, %v1577
      %v1680 = vadd.f32 %v1127, %v1580
      %v1681 = vadd.f32 %v1132, %v1585
      %v1682 = vadd.f32 %v1135, %v1588
      %v1683 = vadd.f32 %v1140, %v1593
      %v1684 = vadd.f32 %v1143, %v1596
      %v1685 = vadd.f32 %v1148, %v1601
      %v1686 = vadd.f32 %v1151, %v1604
      %v1687 = vadd.f32 %v1156, %v1609
      %v1688 = vadd.f32 %v1159, %v1612
      %v1689 = vadd.f32 %v1164, %v1617
      %v1690 = vadd.f32 %v1167, %v1620
      %v1691 = vadd.f32 %v1172, %v1625
      %v1692 = vadd.f32 %v1175, %v1628
      %v1693 = vadd.f32 %v1180, %v1633
      %v1694 = vadd.f32 %v1183, %v1636
      %v1695 = vadd.f32 %v1188, %v1641
      %v1696 = vadd.f32 %v1191, %v1644
      %v1697 = vadd.f32 %v1196, %v1649
      %v1698 = vadd.f32 %v1199, %v1652
      %v1699 = vadd.f32 %v1204, %v1657
      %v1700 = vadd.f32 %v1207, %v1660
      %v1701 = vadd.f32 %v1212, %v1665
      %v1702 = vadd.f32 %v1215, %v1668
      %s1703 = scalar_lea.vmem %s165, 12
      %v1704 = vld [vmem:[%s1703] sm:$0xf]
      %v1705 = vld [vmem:[%s1703 + $0x4] sm:$0xf]
      %v1706 = vld [vmem:[%s1703 + $0xc] sm:$0xf]
      %v1707 = vld [vmem:[%s1703 + $0x10] sm:$0xf]
      %v1708 = vld [vmem:[%s1703 + $0x18] sm:$0xf]
      %v1709 = vld [vmem:[%s1703 + $0x1c] sm:$0xf]
      %v1710 = vld [vmem:[%s1703 + $0x24] sm:$0xf]
      %v1711 = vld [vmem:[%s1703 + $0x28] sm:$0xf]
      %v1712 = vld [vmem:[%s1703 + $0x30] sm:$0xf]
      %v1713 = vld [vmem:[%s1703 + $0x34] sm:$0xf]
      %v1714 = vld [vmem:[%s1703 + $0x3c] sm:$0xf]
      %v1715 = vld [vmem:[%s1703 + $0x40] sm:$0xf]
      %v1716 = vld [vmem:[%s1703 + $0x48] sm:$0xf]
      %v1717 = vld [vmem:[%s1703 + $0x4c] sm:$0xf]
      %v1718 = vld [vmem:[%s1703 + $0x54] sm:$0xf]
      %v1719 = vld [vmem:[%s1703 + $0x58] sm:$0xf]
      %v1720 = vld [vmem:[%s1703 + $0x60] sm:$0xf]
      %v1721 = vld [vmem:[%s1703 + $0x64] sm:$0xf]
      %v1722 = vld [vmem:[%s1703 + $0x6c] sm:$0xf]
      %v1723 = vld [vmem:[%s1703 + $0x70] sm:$0xf]
      %v1724 = vld [vmem:[%s1703 + $0x78] sm:$0xf]
      %v1725 = vld [vmem:[%s1703 + $0x7c] sm:$0xf]
      %v1726 = vld [vmem:[%s1703 + $0x84] sm:$0xf]
      %v1727 = vld [vmem:[%s1703 + $0x88] sm:$0xf]
      %v1728 = vld [vmem:[%s1703 + $0x90] sm:$0xf]
      %v1729 = vld [vmem:[%s1703 + $0x94] sm:$0xf]
      %v1730 = vld [vmem:[%s1703 + $0x9c] sm:$0xf]
      %v1731 = vld [vmem:[%s1703 + $0xa0] sm:$0xf]
      %v1732 = vld [vmem:[%s1703 + $0xa8] sm:$0xf]
      %v1733 = vld [vmem:[%s1703 + $0xac] sm:$0xf]
      %v1734 = vld [vmem:[%s1703 + $0xb4] sm:$0xf]
      %v1735 = vld [vmem:[%s1703 + $0xb8] sm:$0xf]
      %s1736 = scalar_lea.vmem %s1, 192
      %v1737 = vld [vmem:[%s1736] sm:$0xf]
      %v1738 = vld [vmem:[%s1736 + $0x4] sm:$0xf]
      %v1739 = vld [vmem:[%s1736 + $0x8] sm:$0xf]
      %v1740 = vld [vmem:[%s1736 + $0xc] sm:$0xf]
      %v1741 = vld [vmem:[%s1736 + $0x10] sm:$0xf]
      %v1742 = vld [vmem:[%s1736 + $0x14] sm:$0xf]
      %v1743 = vld [vmem:[%s1736 + $0x18] sm:$0xf]
      %v1744 = vld [vmem:[%s1736 + $0x1c] sm:$0xf]
      %v1745 = vld [vmem:[%s1736 + $0x20] sm:$0xf]
      %v1746 = vld [vmem:[%s1736 + $0x24] sm:$0xf]
      %v1747 = vld [vmem:[%s1736 + $0x28] sm:$0xf]
      %v1748 = vld [vmem:[%s1736 + $0x2c] sm:$0xf]
      %v1749 = vld [vmem:[%s1736 + $0x30] sm:$0xf]
      %v1750 = vld [vmem:[%s1736 + $0x34] sm:$0xf]
      %v1751 = vld [vmem:[%s1736 + $0x38] sm:$0xf]
      %v1752 = vld [vmem:[%s1736 + $0x3c] sm:$0xf]
      %v1785 = vunpack.c.l.b16 %v1704
      %v1786 = vunpack.c.l.b16 %v1705
      %v1787 = vunpack.c.l.b16 %v1706
      %v1788 = vunpack.c.l.b16 %v1707
      %v1789 = vunpack.c.l.b16 %v1708
      %v1790 = vunpack.c.l.b16 %v1709
      %v1791 = vunpack.c.l.b16 %v1710
      %v1792 = vunpack.c.l.b16 %v1711
      %v1793 = vunpack.c.l.b16 %v1712
      %v1794 = vunpack.c.l.b16 %v1713
      %v1795 = vunpack.c.l.b16 %v1714
      %v1796 = vunpack.c.l.b16 %v1715
      %v1797 = vunpack.c.l.b16 %v1716
      %v1798 = vunpack.c.l.b16 %v1717
      %v1799 = vunpack.c.l.b16 %v1718
      %v1800 = vunpack.c.l.b16 %v1719
      %v1801 = vunpack.c.l.b16 %v1720
      %v1802 = vunpack.c.l.b16 %v1721
      %v1803 = vunpack.c.l.b16 %v1722
      %v1804 = vunpack.c.l.b16 %v1723
      %v1805 = vunpack.c.l.b16 %v1724
      %v1806 = vunpack.c.l.b16 %v1725
      %v1807 = vunpack.c.l.b16 %v1726
      %v1808 = vunpack.c.l.b16 %v1727
      %v1809 = vunpack.c.l.b16 %v1728
      %v1810 = vunpack.c.l.b16 %v1729
      %v1811 = vunpack.c.l.b16 %v1730
      %v1812 = vunpack.c.l.b16 %v1731
      %v1813 = vunpack.c.l.b16 %v1732
      %v1814 = vunpack.c.l.b16 %v1733
      %v1815 = vunpack.c.l.b16 %v1734
      %v1816 = vunpack.c.l.b16 %v1735
      %v1817 = vpack.c.b16 %v1786, %v1785
      %v1818 = vpack.c.b16 %v1788, %v1787
      %v1819 = vpack.c.b16 %v1790, %v1789
      %v1820 = vpack.c.b16 %v1792, %v1791
      %v1821 = vpack.c.b16 %v1794, %v1793
      %v1822 = vpack.c.b16 %v1796, %v1795
      %v1823 = vpack.c.b16 %v1798, %v1797
      %v1824 = vpack.c.b16 %v1800, %v1799
      %v1825 = vpack.c.b16 %v1802, %v1801
      %v1826 = vpack.c.b16 %v1804, %v1803
      %v1827 = vpack.c.b16 %v1806, %v1805
      %v1828 = vpack.c.b16 %v1808, %v1807
      %v1829 = vpack.c.b16 %v1810, %v1809
      %v1830 = vpack.c.b16 %v1812, %v1811
      %v1831 = vpack.c.b16 %v1814, %v1813
      %v1832 = vpack.c.b16 %v1816, %v1815
      %v1865 = vunpack.c.l.b16 %v1737
      %v1866 = vunpack.c.l.b16 %v1738
      %v1867 = vunpack.c.l.b16 %v1739
      %v1868 = vunpack.c.l.b16 %v1740
      %v1869 = vunpack.c.l.b16 %v1741
      %v1870 = vunpack.c.l.b16 %v1742
      %v1871 = vunpack.c.l.b16 %v1743
      %v1872 = vunpack.c.l.b16 %v1744
      %v1873 = vunpack.c.l.b16 %v1745
      %v1874 = vunpack.c.l.b16 %v1746
      %v1875 = vunpack.c.l.b16 %v1747
      %v1876 = vunpack.c.l.b16 %v1748
      %v1877 = vunpack.c.l.b16 %v1749
      %v1878 = vunpack.c.l.b16 %v1750
      %v1879 = vunpack.c.l.b16 %v1751
      %v1880 = vunpack.c.l.b16 %v1752
      %v1881 = vpack.c.b16 %v1866, %v1865
      %v1882 = vpack.c.b16 %v1868, %v1867
      %v1883 = vpack.c.b16 %v1870, %v1869
      %v1884 = vpack.c.b16 %v1872, %v1871
      %v1885 = vpack.c.b16 %v1874, %v1873
      %v1886 = vpack.c.b16 %v1876, %v1875
      %v1887 = vpack.c.b16 %v1878, %v1877
      %v1888 = vpack.c.b16 %v1880, %v1879
      %1897 = vmatprep.subr.bf16.mxu0 0
      %1898 = vmatpush1.bf16.msra.mxu0 %v1888
      %1899 = vmatprep.subr.bf16.mxu0 0
      %1900 = vmatpush1.bf16.msra.mxu0 %v1887
      %1901 = vmatprep.subr.bf16.mxu0 0
      %1902 = vmatpush1.bf16.msra.mxu0 %v1886
      %1903 = vmatprep.subr.bf16.mxu0 0
      %1904 = vmatpush1.bf16.msra.mxu0 %v1885
      %1905 = vmatprep.subr.bf16.mxu0 0
      %1906 = vmatpush1.bf16.msra.mxu0 %v1884
      %1907 = vmatprep.subr.bf16.mxu0 0
      %1908 = vmatpush1.bf16.msra.mxu0 %v1883
      %1909 = vmatprep.subr.bf16.mxu0 0
      %1910 = vmatpush1.bf16.msra.mxu0 %v1882
      %1911 = vmatprep.subr.bf16.mxu0 0
      %1912 = vmatpush1.bf16.msra.mxu0 %v1881
      %1913 = vmatprep.subr.bf16.mxu0 0
      %1914 = vmatpush2.bf16.msra.mxu0 0
      %1915 = vmatprep.subr.bf16.mxu0 0
      %1916 = vmatpush2.bf16.msra.mxu0 0
      %1917 = vmatprep.subr.bf16.mxu0 0
      %1918 = vmatpush2.bf16.msra.mxu0 0
      %1919 = vmatprep.subr.bf16.mxu0 0
      %1920 = vmatpush2.bf16.msra.mxu0 0
      %1921 = vmatprep.subr.bf16.mxu0 0
      %1922 = vmatpush2.bf16.msra.mxu0 0
      %1923 = vmatprep.subr.bf16.mxu0 0
      %1924 = vmatpush2.bf16.msra.mxu0 0
      %1925 = vmatprep.subr.bf16.mxu0 0
      %1926 = vmatpush2.bf16.msra.mxu0 0
      %1927 = vmatprep.subr.bf16.mxu0 0
      %1928 = vmatpush2.bf16.msra.mxu0 0
      %1929 = vmatprep.mubr.bf16.mxu0 0
      %1930 = vmatmul.mubr.bf16.gmra.mxu0 %v1817
      %v1931 = vpop.f32.mrf.mxu0
      %v1932 = vadd.f32 0.0, %v1931
      %v1933 = vpop.f32.mrf.mxu0
      %v1934 = vpop.f32.mrf.mxu0
      %v1935 = vadd.f32 0.0, %v1934
      %v1936 = vpop.f32.mrf.mxu0
      %1937 = vmatprep.mubr.bf16.mxu0 0
      %1938 = vmatmul.mubr.bf16.gmra.mxu0 %v1818
      %v1939 = vpop.f32.mrf.mxu0
      %v1940 = vadd.f32 0.0, %v1939
      %v1941 = vpop.f32.mrf.mxu0
      %v1942 = vpop.f32.mrf.mxu0
      %v1943 = vadd.f32 0.0, %v1942
      %v1944 = vpop.f32.mrf.mxu0
      %1945 = vmatprep.mubr.bf16.mxu0 0
      %1946 = vmatmul.mubr.bf16.gmra.mxu0 %v1819
      %v1947 = vpop.f32.mrf.mxu0
      %v1948 = vadd.f32 0.0, %v1947
      %v1949 = vpop.f32.mrf.mxu0
      %v1950 = vpop.f32.mrf.mxu0
      %v1951 = vadd.f32 0.0, %v1950
      %v1952 = vpop.f32.mrf.mxu0
      %1953 = vmatprep.mubr.bf16.mxu0 0
      %1954 = vmatmul.mubr.bf16.gmra.mxu0 %v1820
      %v1955 = vpop.f32.mrf.mxu0
      %v1956 = vadd.f32 0.0, %v1955
      %v1957 = vpop.f32.mrf.mxu0
      %v1958 = vpop.f32.mrf.mxu0
      %v1959 = vadd.f32 0.0, %v1958
      %v1960 = vpop.f32.mrf.mxu0
      %1961 = vmatprep.mubr.bf16.mxu0 0
      %1962 = vmatmul.mubr.bf16.gmra.mxu0 %v1821
      %v1963 = vpop.f32.mrf.mxu0
      %v1964 = vadd.f32 0.0, %v1963
      %v1965 = vpop.f32.mrf.mxu0
      %v1966 = vpop.f32.mrf.mxu0
      %v1967 = vadd.f32 0.0, %v1966
      %v1968 = vpop.f32.mrf.mxu0
      %1969 = vmatprep.mubr.bf16.mxu0 0
      %1970 = vmatmul.mubr.bf16.gmra.mxu0 %v1822
      %v1971 = vpop.f32.mrf.mxu0
      %v1972 = vadd.f32 0.0, %v1971
      %v1973 = vpop.f32.mrf.mxu0
      %v1974 = vpop.f32.mrf.mxu0
      %v1975 = vadd.f32 0.0, %v1974
      %v1976 = vpop.f32.mrf.mxu0
      %1977 = vmatprep.mubr.bf16.mxu0 0
      %1978 = vmatmul.mubr.bf16.gmra.mxu0 %v1823
      %v1979 = vpop.f32.mrf.mxu0
      %v1980 = vadd.f32 0.0, %v1979
      %v1981 = vpop.f32.mrf.mxu0
      %v1982 = vpop.f32.mrf.mxu0
      %v1983 = vadd.f32 0.0, %v1982
      %v1984 = vpop.f32.mrf.mxu0
      %1985 = vmatprep.mubr.bf16.mxu0 0
      %1986 = vmatmul.mubr.bf16.gmra.mxu0 %v1824
      %v1987 = vpop.f32.mrf.mxu0
      %v1988 = vadd.f32 0.0, %v1987
      %v1989 = vpop.f32.mrf.mxu0
      %v1990 = vpop.f32.mrf.mxu0
      %v1991 = vadd.f32 0.0, %v1990
      %v1992 = vpop.f32.mrf.mxu0
      %1993 = vmatprep.mubr.bf16.mxu0 0
      %1994 = vmatmul.mubr.bf16.gmra.mxu0 %v1825
      %v1995 = vpop.f32.mrf.mxu0
      %v1996 = vadd.f32 0.0, %v1995
      %v1997 = vpop.f32.mrf.mxu0
      %v1998 = vpop.f32.mrf.mxu0
      %v1999 = vadd.f32 0.0, %v1998
      %v2000 = vpop.f32.mrf.mxu0
      %2001 = vmatprep.mubr.bf16.mxu0 0
      %2002 = vmatmul.mubr.bf16.gmra.mxu0 %v1826
      %v2003 = vpop.f32.mrf.mxu0
      %v2004 = vadd.f32 0.0, %v2003
      %v2005 = vpop.f32.mrf.mxu0
      %v2006 = vpop.f32.mrf.mxu0
      %v2007 = vadd.f32 0.0, %v2006
      %v2008 = vpop.f32.mrf.mxu0
      %2009 = vmatprep.mubr.bf16.mxu0 0
      %2010 = vmatmul.mubr.bf16.gmra.mxu0 %v1827
      %v2011 = vpop.f32.mrf.mxu0
      %v2012 = vadd.f32 0.0, %v2011
      %v2013 = vpop.f32.mrf.mxu0
      %v2014 = vpop.f32.mrf.mxu0
      %v2015 = vadd.f32 0.0, %v2014
      %v2016 = vpop.f32.mrf.mxu0
      %2017 = vmatprep.mubr.bf16.mxu0 0
      %2018 = vmatmul.mubr.bf16.gmra.mxu0 %v1828
      %v2019 = vpop.f32.mrf.mxu0
      %v2020 = vadd.f32 0.0, %v2019
      %v2021 = vpop.f32.mrf.mxu0
      %v2022 = vpop.f32.mrf.mxu0
      %v2023 = vadd.f32 0.0, %v2022
      %v2024 = vpop.f32.mrf.mxu0
      %2025 = vmatprep.mubr.bf16.mxu0 0
      %2026 = vmatmul.mubr.bf16.gmra.mxu0 %v1829
      %v2027 = vpop.f32.mrf.mxu0
      %v2028 = vadd.f32 0.0, %v2027
      %v2029 = vpop.f32.mrf.mxu0
      %v2030 = vpop.f32.mrf.mxu0
      %v2031 = vadd.f32 0.0, %v2030
      %v2032 = vpop.f32.mrf.mxu0
      %2033 = vmatprep.mubr.bf16.mxu0 0
      %2034 = vmatmul.mubr.bf16.gmra.mxu0 %v1830
      %v2035 = vpop.f32.mrf.mxu0
      %v2036 = vadd.f32 0.0, %v2035
      %v2037 = vpop.f32.mrf.mxu0
      %v2038 = vpop.f32.mrf.mxu0
      %v2039 = vadd.f32 0.0, %v2038
      %v2040 = vpop.f32.mrf.mxu0
      %2041 = vmatprep.mubr.bf16.mxu0 0
      %2042 = vmatmul.mubr.bf16.gmra.mxu0 %v1831
      %v2043 = vpop.f32.mrf.mxu0
      %v2044 = vadd.f32 0.0, %v2043
      %v2045 = vpop.f32.mrf.mxu0
      %v2046 = vpop.f32.mrf.mxu0
      %v2047 = vadd.f32 0.0, %v2046
      %v2048 = vpop.f32.mrf.mxu0
      %2049 = vmatprep.mubr.bf16.mxu0 0
      %2050 = vmatmul.mubr.bf16.gmra.mxu0 %v1832
      %v2051 = vpop.f32.mrf.mxu0
      %v2052 = vadd.f32 0.0, %v2051
      %v2053 = vpop.f32.mrf.mxu0
      %v2054 = vpop.f32.mrf.mxu0
      %v2055 = vadd.f32 0.0, %v2054
      %v2056 = vpop.f32.mrf.mxu0
      %2057 = vdwg.mxu0
      %v2058 = vadd.f32 %v1671, %v1932
      %v2059 = vadd.f32 %v1672, %v1935
      %v2060 = vadd.f32 %v1673, %v1940
      %v2061 = vadd.f32 %v1674, %v1943
      %v2062 = vadd.f32 %v1675, %v1948
      %v2063 = vadd.f32 %v1676, %v1951
      %v2064 = vadd.f32 %v1677, %v1956
      %v2065 = vadd.f32 %v1678, %v1959
      %v2066 = vadd.f32 %v1679, %v1964
      %v2067 = vadd.f32 %v1680, %v1967
      %v2068 = vadd.f32 %v1681, %v1972
      %v2069 = vadd.f32 %v1682, %v1975
      %v2070 = vadd.f32 %v1683, %v1980
      %v2071 = vadd.f32 %v1684, %v1983
      %v2072 = vadd.f32 %v1685, %v1988
      %v2073 = vadd.f32 %v1686, %v1991
      %v2074 = vadd.f32 %v1687, %v1996
      %v2075 = vadd.f32 %v1688, %v1999
      %v2076 = vadd.f32 %v1689, %v2004
      %v2077 = vadd.f32 %v1690, %v2007
      %v2078 = vadd.f32 %v1691, %v2012
      %v2079 = vadd.f32 %v1692, %v2015
      %v2080 = vadd.f32 %v1693, %v2020
      %v2081 = vadd.f32 %v1694, %v2023
      %v2082 = vadd.f32 %v1695, %v2028
      %v2083 = vadd.f32 %v1696, %v2031
      %v2084 = vadd.f32 %v1697, %v2036
      %v2085 = vadd.f32 %v1698, %v2039
      %v2086 = vadd.f32 %v1699, %v2044
      %v2087 = vadd.f32 %v1700, %v2047
      %v2088 = vadd.f32 %v1701, %v2052
      %v2089 = vadd.f32 %v1702, %v2055
      %v2090 = vld [vmem:[%s1703] sm:$0xf]
      %v2091 = vld [vmem:[%s1703 + $0x4] sm:$0xf]
      %v2092 = vld [vmem:[%s1703 + $0x8] sm:$0x1]
      %v2093 = vld [vmem:[%s1703 + $0xc] sm:$0xf]
      %v2094 = vld [vmem:[%s1703 + $0x10] sm:$0xf]
      %v2095 = vld [vmem:[%s1703 + $0x14] sm:$0x1]
      %v2096 = vld [vmem:[%s1703 + $0x18] sm:$0xf]
      %v2097 = vld [vmem:[%s1703 + $0x1c] sm:$0xf]
      %v2098 = vld [vmem:[%s1703 + $0x20] sm:$0x1]
      %v2099 = vld [vmem:[%s1703 + $0x24] sm:$0xf]
      %v2100 = vld [vmem:[%s1703 + $0x28] sm:$0xf]
      %v2101 = vld [vmem:[%s1703 + $0x2c] sm:$0x1]
      %v2102 = vld [vmem:[%s1703 + $0x30] sm:$0xf]
      %v2103 = vld [vmem:[%s1703 + $0x34] sm:$0xf]
      %v2104 = vld [vmem:[%s1703 + $0x38] sm:$0x1]
      %v2105 = vld [vmem:[%s1703 + $0x3c] sm:$0xf]
      %v2106 = vld [vmem:[%s1703 + $0x40] sm:$0xf]
      %v2107 = vld [vmem:[%s1703 + $0x44] sm:$0x1]
      %v2108 = vld [vmem:[%s1703 + $0x48] sm:$0xf]
      %v2109 = vld [vmem:[%s1703 + $0x4c] sm:$0xf]
      %v2110 = vld [vmem:[%s1703 + $0x50] sm:$0x1]
      %v2111 = vld [vmem:[%s1703 + $0x54] sm:$0xf]
      %v2112 = vld [vmem:[%s1703 + $0x58] sm:$0xf]
      %v2113 = vld [vmem:[%s1703 + $0x5c] sm:$0x1]
      %v2114 = vld [vmem:[%s1703 + $0x60] sm:$0xf]
      %v2115 = vld [vmem:[%s1703 + $0x64] sm:$0xf]
      %v2116 = vld [vmem:[%s1703 + $0x68] sm:$0x1]
      %v2117 = vld [vmem:[%s1703 + $0x6c] sm:$0xf]
      %v2118 = vld [vmem:[%s1703 + $0x70] sm:$0xf]
      %v2119 = vld [vmem:[%s1703 + $0x74] sm:$0x1]
      %v2120 = vld [vmem:[%s1703 + $0x78] sm:$0xf]
      %v2121 = vld [vmem:[%s1703 + $0x7c] sm:$0xf]
      %v2122 = vld [vmem:[%s1703 + $0x80] sm:$0x1]
      %v2123 = vld [vmem:[%s1703 + $0x84] sm:$0xf]
      %v2124 = vld [vmem:[%s1703 + $0x88] sm:$0xf]
      %v2125 = vld [vmem:[%s1703 + $0x8c] sm:$0x1]
      %v2126 = vld [vmem:[%s1703 + $0x90] sm:$0xf]
      %v2127 = vld [vmem:[%s1703 + $0x94] sm:$0xf]
      %v2128 = vld [vmem:[%s1703 + $0x98] sm:$0x1]
      %v2129 = vld [vmem:[%s1703 + $0x9c] sm:$0xf]
      %v2130 = vld [vmem:[%s1703 + $0xa0] sm:$0xf]
      %v2131 = vld [vmem:[%s1703 + $0xa4] sm:$0x1]
      %v2132 = vld [vmem:[%s1703 + $0xa8] sm:$0xf]
      %v2133 = vld [vmem:[%s1703 + $0xac] sm:$0xf]
      %v2134 = vld [vmem:[%s1703 + $0xb0] sm:$0x1]
      %v2135 = vld [vmem:[%s1703 + $0xb4] sm:$0xf]
      %v2136 = vld [vmem:[%s1703 + $0xb8] sm:$0xf]
      %v2137 = vld [vmem:[%s1703 + $0xbc] sm:$0x1]
      %v2139 = vshrl.u32 %v2090, 16
      %v2141 = vrot.slane %v2139, 4
      %v2142 = vshll.u32 %v2090, 16
      %v2144 = vrot.slane %v2142, 5
      %v2145 = vor.u32 %v2141, %v2144
      %v2146 = vrot.slane %v2145, 4
      %v2148 = vshll.u32 %v2091, 16
      %v2150 = vrot.slane %v2148, 5
      %v2151 = vsel %vm238, %v2146, %v2150
      %v2152 = vshrl.u32 %v2091, 16
      %v2154 = vrot.slane %v2152, 4
      %v2155 = vor.u32 %v2154, %v2150
      %v2156 = vrot.slane %v2155, 4
      %v2158 = vshll.u32 %v2092, 16
      %v2160 = vrot.slane %v2158, 5
      %v2161 = vsel %vm238, %v2156, %v2160
      %v2163 = vshrl.u32 %v2093, 16
      %v2165 = vrot.slane %v2163, 4
      %v2166 = vshll.u32 %v2093, 16
      %v2168 = vrot.slane %v2166, 5
      %v2169 = vor.u32 %v2165, %v2168
      %v2170 = vrot.slane %v2169, 4
      %v2172 = vshll.u32 %v2094, 16
      %v2174 = vrot.slane %v2172, 5
      %v2175 = vsel %vm238, %v2170, %v2174
      %v2176 = vshrl.u32 %v2094, 16
      %v2178 = vrot.slane %v2176, 4
      %v2179 = vor.u32 %v2178, %v2174
      %v2180 = vrot.slane %v2179, 4
      %v2182 = vshll.u32 %v2095, 16
      %v2184 = vrot.slane %v2182, 5
      %v2185 = vsel %vm238, %v2180, %v2184
      %v2187 = vshrl.u32 %v2096, 16
      %v2189 = vrot.slane %v2187, 4
      %v2190 = vshll.u32 %v2096, 16
      %v2192 = vrot.slane %v2190, 5
      %v2193 = vor.u32 %v2189, %v2192
      %v2194 = vrot.slane %v2193, 4
      %v2196 = vshll.u32 %v2097, 16
      %v2198 = vrot.slane %v2196, 5
      %v2199 = vsel %vm238, %v2194, %v2198
      %v2200 = vshrl.u32 %v2097, 16
      %v2202 = vrot.slane %v2200, 4
      %v2203 = vor.u32 %v2202, %v2198
      %v2204 = vrot.slane %v2203, 4
      %v2206 = vshll.u32 %v2098, 16
      %v2208 = vrot.slane %v2206, 5
      %v2209 = vsel %vm238, %v2204, %v2208
      %v2211 = vshrl.u32 %v2099, 16
      %v2213 = vrot.slane %v2211, 4
      %v2214 = vshll.u32 %v2099, 16
      %v2216 = vrot.slane %v2214, 5
      %v2217 = vor.u32 %v2213, %v2216
      %v2218 = vrot.slane %v2217, 4
      %v2220 = vshll.u32 %v2100, 16
      %v2222 = vrot.slane %v2220, 5
      %v2223 = vsel %vm238, %v2218, %v2222
      %v2224 = vshrl.u32 %v2100, 16
      %v2226 = vrot.slane %v2224, 4
      %v2227 = vor.u32 %v2226, %v2222
      %v2228 = vrot.slane %v2227, 4
      %v2230 = vshll.u32 %v2101, 16
      %v2232 = vrot.slane %v2230, 5
      %v2233 = vsel %vm238, %v2228, %v2232
      %v2235 = vshrl.u32 %v2102, 16
      %v2237 = vrot.slane %v2235, 4
      %v2238 = vshll.u32 %v2102, 16
      %v2240 = vrot.slane %v2238, 5
      %v2241 = vor.u32 %v2237, %v2240
      %v2242 = vrot.slane %v2241, 4
      %v2244 = vshll.u32 %v2103, 16
      %v2246 = vrot.slane %v2244, 5
      %v2247 = vsel %vm238, %v2242, %v2246
      %v2248 = vshrl.u32 %v2103, 16
      %v2250 = vrot.slane %v2248, 4
      %v2251 = vor.u32 %v2250, %v2246
      %v2252 = vrot.slane %v2251, 4
      %v2254 = vshll.u32 %v2104, 16
      %v2256 = vrot.slane %v2254, 5
      %v2257 = vsel %vm238, %v2252, %v2256
      %v2259 = vshrl.u32 %v2105, 16
      %v2261 = vrot.slane %v2259, 4
      %v2262 = vshll.u32 %v2105, 16
      %v2264 = vrot.slane %v2262, 5
      %v2265 = vor.u32 %v2261, %v2264
      %v2266 = vrot.slane %v2265, 4
      %v2268 = vshll.u32 %v2106, 16
      %v2270 = vrot.slane %v2268, 5
      %v2271 = vsel %vm238, %v2266, %v2270
      %v2272 = vshrl.u32 %v2106, 16
      %v2274 = vrot.slane %v2272, 4
      %v2275 = vor.u32 %v2274, %v2270
      %v2276 = vrot.slane %v2275, 4
      %v2278 = vshll.u32 %v2107, 16
      %v2280 = vrot.slane %v2278, 5
      %v2281 = vsel %vm238, %v2276, %v2280
      %v2283 = vshrl.u32 %v2108, 16
      %v2285 = vrot.slane %v2283, 4
      %v2286 = vshll.u32 %v2108, 16
      %v2288 = vrot.slane %v2286, 5
      %v2289 = vor.u32 %v2285, %v2288
      %v2290 = vrot.slane %v2289, 4
      %v2292 = vshll.u32 %v2109, 16
      %v2294 = vrot.slane %v2292, 5
      %v2295 = vsel %vm238, %v2290, %v2294
      %v2296 = vshrl.u32 %v2109, 16
      %v2298 = vrot.slane %v2296, 4
      %v2299 = vor.u32 %v2298, %v2294
      %v2300 = vrot.slane %v2299, 4
      %v2302 = vshll.u32 %v2110, 16
      %v2304 = vrot.slane %v2302, 5
      %v2305 = vsel %vm238, %v2300, %v2304
      %v2307 = vshrl.u32 %v2111, 16
      %v2309 = vrot.slane %v2307, 4
      %v2310 = vshll.u32 %v2111, 16
      %v2312 = vrot.slane %v2310, 5
      %v2313 = vor.u32 %v2309, %v2312
      %v2314 = vrot.slane %v2313, 4
      %v2316 = vshll.u32 %v2112, 16
      %v2318 = vrot.slane %v2316, 5
      %v2319 = vsel %vm238, %v2314, %v2318
      %v2320 = vshrl.u32 %v2112, 16
      %v2322 = vrot.slane %v2320, 4
      %v2323 = vor.u32 %v2322, %v2318
      %v2324 = vrot.slane %v2323, 4
      %v2326 = vshll.u32 %v2113, 16
      %v2328 = vrot.slane %v2326, 5
      %v2329 = vsel %vm238, %v2324, %v2328
      %v2331 = vshrl.u32 %v2114, 16
      %v2333 = vrot.slane %v2331, 4
      %v2334 = vshll.u32 %v2114, 16
      %v2336 = vrot.slane %v2334, 5
      %v2337 = vor.u32 %v2333, %v2336
      %v2338 = vrot.slane %v2337, 4
      %v2340 = vshll.u32 %v2115, 16
      %v2342 = vrot.slane %v2340, 5
      %v2343 = vsel %vm238, %v2338, %v2342
      %v2344 = vshrl.u32 %v2115, 16
      %v2346 = vrot.slane %v2344, 4
      %v2347 = vor.u32 %v2346, %v2342
      %v2348 = vrot.slane %v2347, 4
      %v2350 = vshll.u32 %v2116, 16
      %v2352 = vrot.slane %v2350, 5
      %v2353 = vsel %vm238, %v2348, %v2352
      %v2355 = vshrl.u32 %v2117, 16
      %v2357 = vrot.slane %v2355, 4
      %v2358 = vshll.u32 %v2117, 16
      %v2360 = vrot.slane %v2358, 5
      %v2361 = vor.u32 %v2357, %v2360
      %v2362 = vrot.slane %v2361, 4
      %v2364 = vshll.u32 %v2118, 16
      %v2366 = vrot.slane %v2364, 5
      %v2367 = vsel %vm238, %v2362, %v2366
      %v2368 = vshrl.u32 %v2118, 16
      %v2370 = vrot.slane %v2368, 4
      %v2371 = vor.u32 %v2370, %v2366
      %v2372 = vrot.slane %v2371, 4
      %v2374 = vshll.u32 %v2119, 16
      %v2376 = vrot.slane %v2374, 5
      %v2377 = vsel %vm238, %v2372, %v2376
      %v2379 = vshrl.u32 %v2120, 16
      %v2381 = vrot.slane %v2379, 4
      %v2382 = vshll.u32 %v2120, 16
      %v2384 = vrot.slane %v2382, 5
      %v2385 = vor.u32 %v2381, %v2384
      %v2386 = vrot.slane %v2385, 4
      %v2388 = vshll.u32 %v2121, 16
      %v2390 = vrot.slane %v2388, 5
      %v2391 = vsel %vm238, %v2386, %v2390
      %v2392 = vshrl.u32 %v2121, 16
      %v2394 = vrot.slane %v2392, 4
      %v2395 = vor.u32 %v2394, %v2390
      %v2396 = vrot.slane %v2395, 4
      %v2398 = vshll.u32 %v2122, 16
      %v2400 = vrot.slane %v2398, 5
      %v2401 = vsel %vm238, %v2396, %v2400
      %v2403 = vshrl.u32 %v2123, 16
      %v2405 = vrot.slane %v2403, 4
      %v2406 = vshll.u32 %v2123, 16
      %v2408 = vrot.slane %v2406, 5
      %v2409 = vor.u32 %v2405, %v2408
      %v2410 = vrot.slane %v2409, 4
      %v2412 = vshll.u32 %v2124, 16
      %v2414 = vrot.slane %v2412, 5
      %v2415 = vsel %vm238, %v2410, %v2414
      %v2416 = vshrl.u32 %v2124, 16
      %v2418 = vrot.slane %v2416, 4
      %v2419 = vor.u32 %v2418, %v2414
      %v2420 = vrot.slane %v2419, 4
      %v2422 = vshll.u32 %v2125, 16
      %v2424 = vrot.slane %v2422, 5
      %v2425 = vsel %vm238, %v2420, %v2424
      %v2427 = vshrl.u32 %v2126, 16
      %v2429 = vrot.slane %v2427, 4
      %v2430 = vshll.u32 %v2126, 16
      %v2432 = vrot.slane %v2430, 5
      %v2433 = vor.u32 %v2429, %v2432
      %v2434 = vrot.slane %v2433, 4
      %v2436 = vshll.u32 %v2127, 16
      %v2438 = vrot.slane %v2436, 5
      %v2439 = vsel %vm238, %v2434, %v2438
      %v2440 = vshrl.u32 %v2127, 16
      %v2442 = vrot.slane %v2440, 4
      %v2443 = vor.u32 %v2442, %v2438
      %v2444 = vrot.slane %v2443, 4
      %v2446 = vshll.u32 %v2128, 16
      %v2448 = vrot.slane %v2446, 5
      %v2449 = vsel %vm238, %v2444, %v2448
      %v2451 = vshrl.u32 %v2129, 16
      %v2453 = vrot.slane %v2451, 4
      %v2454 = vshll.u32 %v2129, 16
      %v2456 = vrot.slane %v2454, 5
      %v2457 = vor.u32 %v2453, %v2456
      %v2458 = vrot.slane %v2457, 4
      %v2460 = vshll.u32 %v2130, 16
      %v2462 = vrot.slane %v2460, 5
      %v2463 = vsel %vm238, %v2458, %v2462
      %v2464 = vshrl.u32 %v2130, 16
      %v2466 = vrot.slane %v2464, 4
      %v2467 = vor.u32 %v2466, %v2462
      %v2468 = vrot.slane %v2467, 4
      %v2470 = vshll.u32 %v2131, 16
      %v2472 = vrot.slane %v2470, 5
      %v2473 = vsel %vm238, %v2468, %v2472
      %v2475 = vshrl.u32 %v2132, 16
      %v2477 = vrot.slane %v2475, 4
      %v2478 = vshll.u32 %v2132, 16
      %v2480 = vrot.slane %v2478, 5
      %v2481 = vor.u32 %v2477, %v2480
      %v2482 = vrot.slane %v2481, 4
      %v2484 = vshll.u32 %v2133, 16
      %v2486 = vrot.slane %v2484, 5
      %v2487 = vsel %vm238, %v2482, %v2486
      %v2488 = vshrl.u32 %v2133, 16
      %v2490 = vrot.slane %v2488, 4
      %v2491 = vor.u32 %v2490, %v2486
      %v2492 = vrot.slane %v2491, 4
      %v2494 = vshll.u32 %v2134, 16
      %v2496 = vrot.slane %v2494, 5
      %v2497 = vsel %vm238, %v2492, %v2496
      %v2499 = vshrl.u32 %v2135, 16
      %v2501 = vrot.slane %v2499, 4
      %v2502 = vshll.u32 %v2135, 16
      %v2504 = vrot.slane %v2502, 5
      %v2505 = vor.u32 %v2501, %v2504
      %v2506 = vrot.slane %v2505, 4
      %v2508 = vshll.u32 %v2136, 16
      %v2510 = vrot.slane %v2508, 5
      %v2511 = vsel %vm238, %v2506, %v2510
      %v2512 = vshrl.u32 %v2136, 16
      %v2514 = vrot.slane %v2512, 4
      %v2515 = vor.u32 %v2514, %v2510
      %v2516 = vrot.slane %v2515, 4
      %v2518 = vshll.u32 %v2137, 16
      %v2520 = vrot.slane %v2518, 5
      %v2521 = vsel %vm238, %v2516, %v2520
      %s2522 = scalar_lea.vmem %s1, 256
      %v2523 = vld [vmem:[%s2522] sm:$0xf]
      %v2524 = vld [vmem:[%s2522 + $0x4] sm:$0xf]
      %v2525 = vld [vmem:[%s2522 + $0x8] sm:$0xf]
      %v2526 = vld [vmem:[%s2522 + $0xc] sm:$0xf]
      %v2527 = vld [vmem:[%s2522 + $0x10] sm:$0xf]
      %v2528 = vld [vmem:[%s2522 + $0x14] sm:$0xf]
      %v2529 = vld [vmem:[%s2522 + $0x18] sm:$0xf]
      %v2530 = vld [vmem:[%s2522 + $0x1c] sm:$0xf]
      %v2531 = vld [vmem:[%s2522 + $0x20] sm:$0xf]
      %v2532 = vld [vmem:[%s2522 + $0x24] sm:$0xf]
      %v2533 = vld [vmem:[%s2522 + $0x28] sm:$0xf]
      %v2534 = vld [vmem:[%s2522 + $0x2c] sm:$0xf]
      %v2535 = vld [vmem:[%s2522 + $0x30] sm:$0xf]
      %v2536 = vld [vmem:[%s2522 + $0x34] sm:$0xf]
      %v2537 = vld [vmem:[%s2522 + $0x38] sm:$0xf]
      %v2538 = vld [vmem:[%s2522 + $0x3c] sm:$0xf]
      %v2539 = vunpack.c.l.b16 %v2151
      %v2540 = vunpack.c.l.b16 %v2161
      %v2541 = vunpack.c.l.b16 %v2175
      %v2542 = vunpack.c.l.b16 %v2185
      %v2543 = vunpack.c.l.b16 %v2199
      %v2544 = vunpack.c.l.b16 %v2209
      %v2545 = vunpack.c.l.b16 %v2223
      %v2546 = vunpack.c.l.b16 %v2233
      %v2547 = vunpack.c.l.b16 %v2247
      %v2548 = vunpack.c.l.b16 %v2257
      %v2549 = vunpack.c.l.b16 %v2271
      %v2550 = vunpack.c.l.b16 %v2281
      %v2551 = vunpack.c.l.b16 %v2295
      %v2552 = vunpack.c.l.b16 %v2305
      %v2553 = vunpack.c.l.b16 %v2319
      %v2554 = vunpack.c.l.b16 %v2329
      %v2555 = vunpack.c.l.b16 %v2343
      %v2556 = vunpack.c.l.b16 %v2353
      %v2557 = vunpack.c.l.b16 %v2367
      %v2558 = vunpack.c.l.b16 %v2377
      %v2559 = vunpack.c.l.b16 %v2391
      %v2560 = vunpack.c.l.b16 %v2401
      %v2561 = vunpack.c.l.b16 %v2415
      %v2562 = vunpack.c.l.b16 %v2425
      %v2563 = vunpack.c.l.b16 %v2439
      %v2564 = vunpack.c.l.b16 %v2449
      %v2565 = vunpack.c.l.b16 %v2463
      %v2566 = vunpack.c.l.b16 %v2473
      %v2567 = vunpack.c.l.b16 %v2487
      %v2568 = vunpack.c.l.b16 %v2497
      %v2569 = vunpack.c.l.b16 %v2511
      %v2570 = vunpack.c.l.b16 %v2521
      %v2571 = vpack.c.b16 %v2540, %v2539
      %v2572 = vpack.c.b16 %v2542, %v2541
      %v2573 = vpack.c.b16 %v2544, %v2543
      %v2574 = vpack.c.b16 %v2546, %v2545
      %v2575 = vpack.c.b16 %v2548, %v2547
      %v2576 = vpack.c.b16 %v2550, %v2549
      %v2577 = vpack.c.b16 %v2552, %v2551
      %v2578 = vpack.c.b16 %v2554, %v2553
      %v2579 = vpack.c.b16 %v2556, %v2555
      %v2580 = vpack.c.b16 %v2558, %v2557
      %v2581 = vpack.c.b16 %v2560, %v2559
      %v2582 = vpack.c.b16 %v2562, %v2561
      %v2583 = vpack.c.b16 %v2564, %v2563
      %v2584 = vpack.c.b16 %v2566, %v2565
      %v2585 = vpack.c.b16 %v2568, %v2567
      %v2586 = vpack.c.b16 %v2570, %v2569
      %v2619 = vunpack.c.l.b16 %v2523
      %v2620 = vunpack.c.l.b16 %v2524
      %v2621 = vunpack.c.l.b16 %v2525
      %v2622 = vunpack.c.l.b16 %v2526
      %v2623 = vunpack.c.l.b16 %v2527
      %v2624 = vunpack.c.l.b16 %v2528
      %v2625 = vunpack.c.l.b16 %v2529
      %v2626 = vunpack.c.l.b16 %v2530
      %v2627 = vunpack.c.l.b16 %v2531
      %v2628 = vunpack.c.l.b16 %v2532
      %v2629 = vunpack.c.l.b16 %v2533
      %v2630 = vunpack.c.l.b16 %v2534
      %v2631 = vunpack.c.l.b16 %v2535
      %v2632 = vunpack.c.l.b16 %v2536
      %v2633 = vunpack.c.l.b16 %v2537
      %v2634 = vunpack.c.l.b16 %v2538
      %v2635 = vpack.c.b16 %v2620, %v2619
      %v2636 = vpack.c.b16 %v2622, %v2621
      %v2637 = vpack.c.b16 %v2624, %v2623
      %v2638 = vpack.c.b16 %v2626, %v2625
      %v2639 = vpack.c.b16 %v2628, %v2627
      %v2640 = vpack.c.b16 %v2630, %v2629
      %v2641 = vpack.c.b16 %v2632, %v2631
      %v2642 = vpack.c.b16 %v2634, %v2633
      %2651 = vmatprep.subr.bf16.mxu0 0
      %2652 = vmatpush1.bf16.msra.mxu0 %v2642
      %2653 = vmatprep.subr.bf16.mxu0 0
      %2654 = vmatpush1.bf16.msra.mxu0 %v2641
      %2655 = vmatprep.subr.bf16.mxu0 0
      %2656 = vmatpush1.bf16.msra.mxu0 %v2640
      %2657 = vmatprep.subr.bf16.mxu0 0
      %2658 = vmatpush1.bf16.msra.mxu0 %v2639
      %2659 = vmatprep.subr.bf16.mxu0 0
      %2660 = vmatpush1.bf16.msra.mxu0 %v2638
      %2661 = vmatprep.subr.bf16.mxu0 0
      %2662 = vmatpush1.bf16.msra.mxu0 %v2637
      %2663 = vmatprep.subr.bf16.mxu0 0
      %2664 = vmatpush1.bf16.msra.mxu0 %v2636
      %2665 = vmatprep.subr.bf16.mxu0 0
      %2666 = vmatpush1.bf16.msra.mxu0 %v2635
      %2667 = vmatprep.subr.bf16.mxu0 0
      %2668 = vmatpush2.bf16.msra.mxu0 0
      %2669 = vmatprep.subr.bf16.mxu0 0
      %2670 = vmatpush2.bf16.msra.mxu0 0
      %2671 = vmatprep.subr.bf16.mxu0 0
      %2672 = vmatpush2.bf16.msra.mxu0 0
      %2673 = vmatprep.subr.bf16.mxu0 0
      %2674 = vmatpush2.bf16.msra.mxu0 0
      %2675 = vmatprep.subr.bf16.mxu0 0
      %2676 = vmatpush2.bf16.msra.mxu0 0
      %2677 = vmatprep.subr.bf16.mxu0 0
      %2678 = vmatpush2.bf16.msra.mxu0 0
      %2679 = vmatprep.subr.bf16.mxu0 0
      %2680 = vmatpush2.bf16.msra.mxu0 0
      %2681 = vmatprep.subr.bf16.mxu0 0
      %2682 = vmatpush2.bf16.msra.mxu0 0
      %2683 = vmatprep.mubr.bf16.mxu0 0
      %2684 = vmatmul.mubr.bf16.gmra.mxu0 %v2571
      %v2685 = vpop.f32.mrf.mxu0
      %v2686 = vadd.f32 0.0, %v2685
      %v2687 = vpop.f32.mrf.mxu0
      %v2688 = vpop.f32.mrf.mxu0
      %v2689 = vadd.f32 0.0, %v2688
      %v2690 = vpop.f32.mrf.mxu0
      %2691 = vmatprep.mubr.bf16.mxu0 0
      %2692 = vmatmul.mubr.bf16.gmra.mxu0 %v2572
      %v2693 = vpop.f32.mrf.mxu0
      %v2694 = vadd.f32 0.0, %v2693
      %v2695 = vpop.f32.mrf.mxu0
      %v2696 = vpop.f32.mrf.mxu0
      %v2697 = vadd.f32 0.0, %v2696
      %v2698 = vpop.f32.mrf.mxu0
      %2699 = vmatprep.mubr.bf16.mxu0 0
      %2700 = vmatmul.mubr.bf16.gmra.mxu0 %v2573
      %v2701 = vpop.f32.mrf.mxu0
      %v2702 = vadd.f32 0.0, %v2701
      %v2703 = vpop.f32.mrf.mxu0
      %v2704 = vpop.f32.mrf.mxu0
      %v2705 = vadd.f32 0.0, %v2704
      %v2706 = vpop.f32.mrf.mxu0
      %2707 = vmatprep.mubr.bf16.mxu0 0
      %2708 = vmatmul.mubr.bf16.gmra.mxu0 %v2574
      %v2709 = vpop.f32.mrf.mxu0
      %v2710 = vadd.f32 0.0, %v2709
      %v2711 = vpop.f32.mrf.mxu0
      %v2712 = vpop.f32.mrf.mxu0
      %v2713 = vadd.f32 0.0, %v2712
      %v2714 = vpop.f32.mrf.mxu0
      %2715 = vmatprep.mubr.bf16.mxu0 0
      %2716 = vmatmul.mubr.bf16.gmra.mxu0 %v2575
      %v2717 = vpop.f32.mrf.mxu0
      %v2718 = vadd.f32 0.0, %v2717
      %v2719 = vpop.f32.mrf.mxu0
      %v2720 = vpop.f32.mrf.mxu0
      %v2721 = vadd.f32 0.0, %v2720
      %v2722 = vpop.f32.mrf.mxu0
      %2723 = vmatprep.mubr.bf16.mxu0 0
      %2724 = vmatmul.mubr.bf16.gmra.mxu0 %v2576
      %v2725 = vpop.f32.mrf.mxu0
      %v2726 = vadd.f32 0.0, %v2725
      %v2727 = vpop.f32.mrf.mxu0
      %v2728 = vpop.f32.mrf.mxu0
      %v2729 = vadd.f32 0.0, %v2728
      %v2730 = vpop.f32.mrf.mxu0
      %2731 = vmatprep.mubr.bf16.mxu0 0
      %2732 = vmatmul.mubr.bf16.gmra.mxu0 %v2577
      %v2733 = vpop.f32.mrf.mxu0
      %v2734 = vadd.f32 0.0, %v2733
      %v2735 = vpop.f32.mrf.mxu0
      %v2736 = vpop.f32.mrf.mxu0
      %v2737 = vadd.f32 0.0, %v2736
      %v2738 = vpop.f32.mrf.mxu0
      %2739 = vmatprep.mubr.bf16.mxu0 0
      %2740 = vmatmul.mubr.bf16.gmra.mxu0 %v2578
      %v2741 = vpop.f32.mrf.mxu0
      %v2742 = vadd.f32 0.0, %v2741
      %v2743 = vpop.f32.mrf.mxu0
      %v2744 = vpop.f32.mrf.mxu0
      %v2745 = vadd.f32 0.0, %v2744
      %v2746 = vpop.f32.mrf.mxu0
      %2747 = vmatprep.mubr.bf16.mxu0 0
      %2748 = vmatmul.mubr.bf16.gmra.mxu0 %v2579
      %v2749 = vpop.f32.mrf.mxu0
      %v2750 = vadd.f32 0.0, %v2749
      %v2751 = vpop.f32.mrf.mxu0
      %v2752 = vpop.f32.mrf.mxu0
      %v2753 = vadd.f32 0.0, %v2752
      %v2754 = vpop.f32.mrf.mxu0
      %2755 = vmatprep.mubr.bf16.mxu0 0
      %2756 = vmatmul.mubr.bf16.gmra.mxu0 %v2580
      %v2757 = vpop.f32.mrf.mxu0
      %v2758 = vadd.f32 0.0, %v2757
      %v2759 = vpop.f32.mrf.mxu0
      %v2760 = vpop.f32.mrf.mxu0
      %v2761 = vadd.f32 0.0, %v2760
      %v2762 = vpop.f32.mrf.mxu0
      %2763 = vmatprep.mubr.bf16.mxu0 0
      %2764 = vmatmul.mubr.bf16.gmra.mxu0 %v2581
      %v2765 = vpop.f32.mrf.mxu0
      %v2766 = vadd.f32 0.0, %v2765
      %v2767 = vpop.f32.mrf.mxu0
      %v2768 = vpop.f32.mrf.mxu0
      %v2769 = vadd.f32 0.0, %v2768
      %v2770 = vpop.f32.mrf.mxu0
      %2771 = vmatprep.mubr.bf16.mxu0 0
      %2772 = vmatmul.mubr.bf16.gmra.mxu0 %v2582
      %v2773 = vpop.f32.mrf.mxu0
      %v2774 = vadd.f32 0.0, %v2773
      %v2775 = vpop.f32.mrf.mxu0
      %v2776 = vpop.f32.mrf.mxu0
      %v2777 = vadd.f32 0.0, %v2776
      %v2778 = vpop.f32.mrf.mxu0
      %2779 = vmatprep.mubr.bf16.mxu0 0
      %2780 = vmatmul.mubr.bf16.gmra.mxu0 %v2583
      %v2781 = vpop.f32.mrf.mxu0
      %v2782 = vadd.f32 0.0, %v2781
      %v2783 = vpop.f32.mrf.mxu0
      %v2784 = vpop.f32.mrf.mxu0
      %v2785 = vadd.f32 0.0, %v2784
      %v2786 = vpop.f32.mrf.mxu0
      %2787 = vmatprep.mubr.bf16.mxu0 0
      %2788 = vmatmul.mubr.bf16.gmra.mxu0 %v2584
      %v2789 = vpop.f32.mrf.mxu0
      %v2790 = vadd.f32 0.0, %v2789
      %v2791 = vpop.f32.mrf.mxu0
      %v2792 = vpop.f32.mrf.mxu0
      %v2793 = vadd.f32 0.0, %v2792
      %v2794 = vpop.f32.mrf.mxu0
      %2795 = vmatprep.mubr.bf16.mxu0 0
      %2796 = vmatmul.mubr.bf16.gmra.mxu0 %v2585
      %v2797 = vpop.f32.mrf.mxu0
      %v2798 = vadd.f32 0.0, %v2797
      %v2799 = vpop.f32.mrf.mxu0
      %v2800 = vpop.f32.mrf.mxu0
      %v2801 = vadd.f32 0.0, %v2800
      %v2802 = vpop.f32.mrf.mxu0
      %2803 = vmatprep.mubr.bf16.mxu0 0
      %2804 = vmatmul.mubr.bf16.gmra.mxu0 %v2586
      %v2805 = vpop.f32.mrf.mxu0
      %v2806 = vadd.f32 0.0, %v2805
      %v2807 = vpop.f32.mrf.mxu0
      %v2808 = vpop.f32.mrf.mxu0
      %v2809 = vadd.f32 0.0, %v2808
      %v2810 = vpop.f32.mrf.mxu0
      %2811 = vdwg.mxu0
      %v2812 = vadd.f32 %v2058, %v2686
      %v2813 = vadd.f32 %v2059, %v2689
      %v2814 = vadd.f32 %v2060, %v2694
      %v2815 = vadd.f32 %v2061, %v2697
      %v2816 = vadd.f32 %v2062, %v2702
      %v2817 = vadd.f32 %v2063, %v2705
      %v2818 = vadd.f32 %v2064, %v2710
      %v2819 = vadd.f32 %v2065, %v2713
      %v2820 = vadd.f32 %v2066, %v2718
      %v2821 = vadd.f32 %v2067, %v2721
      %v2822 = vadd.f32 %v2068, %v2726
      %v2823 = vadd.f32 %v2069, %v2729
      %v2824 = vadd.f32 %v2070, %v2734
      %v2825 = vadd.f32 %v2071, %v2737
      %v2826 = vadd.f32 %v2072, %v2742
      %v2827 = vadd.f32 %v2073, %v2745
      %v2828 = vadd.f32 %v2074, %v2750
      %v2829 = vadd.f32 %v2075, %v2753
      %v2830 = vadd.f32 %v2076, %v2758
      %v2831 = vadd.f32 %v2077, %v2761
      %v2832 = vadd.f32 %v2078, %v2766
      %v2833 = vadd.f32 %v2079, %v2769
      %v2834 = vadd.f32 %v2080, %v2774
      %v2835 = vadd.f32 %v2081, %v2777
      %v2836 = vadd.f32 %v2082, %v2782
      %v2837 = vadd.f32 %v2083, %v2785
      %v2838 = vadd.f32 %v2084, %v2790
      %v2839 = vadd.f32 %v2085, %v2793
      %v2840 = vadd.f32 %v2086, %v2798
      %v2841 = vadd.f32 %v2087, %v2801
      %v2842 = vadd.f32 %v2088, %v2806
      %v2843 = vadd.f32 %v2089, %v2809
      %v2844 = vld [vmem:[%s1703] sm:$0xe]
      %v2845 = vld [vmem:[%s1703 + $0xc] sm:$0xe]
      %v2846 = vld [vmem:[%s1703 + $0x18] sm:$0xe]
      %v2847 = vld [vmem:[%s1703 + $0x24] sm:$0xe]
      %v2848 = vld [vmem:[%s1703 + $0x30] sm:$0xe]
      %v2849 = vld [vmem:[%s1703 + $0x3c] sm:$0xe]
      %v2850 = vld [vmem:[%s1703 + $0x48] sm:$0xe]
      %v2851 = vld [vmem:[%s1703 + $0x54] sm:$0xe]
      %v2852 = vld [vmem:[%s1703 + $0x60] sm:$0xe]
      %v2853 = vld [vmem:[%s1703 + $0x6c] sm:$0xe]
      %v2854 = vld [vmem:[%s1703 + $0x78] sm:$0xe]
      %v2855 = vld [vmem:[%s1703 + $0x84] sm:$0xe]
      %v2856 = vld [vmem:[%s1703 + $0x90] sm:$0xe]
      %v2857 = vld [vmem:[%s1703 + $0x9c] sm:$0xe]
      %v2858 = vld [vmem:[%s1703 + $0xa8] sm:$0xe]
      %v2859 = vld [vmem:[%s1703 + $0xb4] sm:$0xe]
      %v2908 = vrot.slane %v2844, 5
      %v2909 = vrot.slane %v2908, 4
      %v2910 = vrot.slane %v2091, 5
      %v2911 = vsel %vm1268, %v2909, %v2910
      %v2912 = vrot.slane %v2910, 4
      %v2913 = vrot.slane %v2092, 5
      %v2914 = vsel %vm1268, %v2912, %v2913
      %v2915 = vrot.slane %v2845, 5
      %v2916 = vrot.slane %v2915, 4
      %v2917 = vrot.slane %v2094, 5
      %v2918 = vsel %vm1268, %v2916, %v2917
      %v2919 = vrot.slane %v2917, 4
      %v2920 = vrot.slane %v2095, 5
      %v2921 = vsel %vm1268, %v2919, %v2920
      %v2922 = vrot.slane %v2846, 5
      %v2923 = vrot.slane %v2922, 4
      %v2924 = vrot.slane %v2097, 5
      %v2925 = vsel %vm1268, %v2923, %v2924
      %v2926 = vrot.slane %v2924, 4
      %v2927 = vrot.slane %v2098, 5
      %v2928 = vsel %vm1268, %v2926, %v2927
      %v2929 = vrot.slane %v2847, 5
      %v2930 = vrot.slane %v2929, 4
      %v2931 = vrot.slane %v2100, 5
      %v2932 = vsel %vm1268, %v2930, %v2931
      %v2933 = vrot.slane %v2931, 4
      %v2934 = vrot.slane %v2101, 5
      %v2935 = vsel %vm1268, %v2933, %v2934
      %v2936 = vrot.slane %v2848, 5
      %v2937 = vrot.slane %v2936, 4
      %v2938 = vrot.slane %v2103, 5
      %v2939 = vsel %vm1268, %v2937, %v2938
      %v2940 = vrot.slane %v2938, 4
      %v2941 = vrot.slane %v2104, 5
      %v2942 = vsel %vm1268, %v2940, %v2941
      %v2943 = vrot.slane %v2849, 5
      %v2944 = vrot.slane %v2943, 4
      %v2945 = vrot.slane %v2106, 5
      %v2946 = vsel %vm1268, %v2944, %v2945
      %v2947 = vrot.slane %v2945, 4
      %v2948 = vrot.slane %v2107, 5
      %v2949 = vsel %vm1268, %v2947, %v2948
      %v2950 = vrot.slane %v2850, 5
      %v2951 = vrot.slane %v2950, 4
      %v2952 = vrot.slane %v2109, 5
      %v2953 = vsel %vm1268, %v2951, %v2952
      %v2954 = vrot.slane %v2952, 4
      %v2955 = vrot.slane %v2110, 5
      %v2956 = vsel %vm1268, %v2954, %v2955
      %v2957 = vrot.slane %v2851, 5
      %v2958 = vrot.slane %v2957, 4
      %v2959 = vrot.slane %v2112, 5
      %v2960 = vsel %vm1268, %v2958, %v2959
      %v2961 = vrot.slane %v2959, 4
      %v2962 = vrot.slane %v2113, 5
      %v2963 = vsel %vm1268, %v2961, %v2962
      %v2964 = vrot.slane %v2852, 5
      %v2965 = vrot.slane %v2964, 4
      %v2966 = vrot.slane %v2115, 5
      %v2967 = vsel %vm1268, %v2965, %v2966
      %v2968 = vrot.slane %v2966, 4
      %v2969 = vrot.slane %v2116, 5
      %v2970 = vsel %vm1268, %v2968, %v2969
      %v2971 = vrot.slane %v2853, 5
      %v2972 = vrot.slane %v2971, 4
      %v2973 = vrot.slane %v2118, 5
      %v2974 = vsel %vm1268, %v2972, %v2973
      %v2975 = vrot.slane %v2973, 4
      %v2976 = vrot.slane %v2119, 5
      %v2977 = vsel %vm1268, %v2975, %v2976
      %v2978 = vrot.slane %v2854, 5
      %v2979 = vrot.slane %v2978, 4
      %v2980 = vrot.slane %v2121, 5
      %v2981 = vsel %vm1268, %v2979, %v2980
      %v2982 = vrot.slane %v2980, 4
      %v2983 = vrot.slane %v2122, 5
      %v2984 = vsel %vm1268, %v2982, %v2983
      %v2985 = vrot.slane %v2855, 5
      %v2986 = vrot.slane %v2985, 4
      %v2987 = vrot.slane %v2124, 5
      %v2988 = vsel %vm1268, %v2986, %v2987
      %v2989 = vrot.slane %v2987, 4
      %v2990 = vrot.slane %v2125, 5
      %v2991 = vsel %vm1268, %v2989, %v2990
      %v2992 = vrot.slane %v2856, 5
      %v2993 = vrot.slane %v2992, 4
      %v2994 = vrot.slane %v2127, 5
      %v2995 = vsel %vm1268, %v2993, %v2994
      %v2996 = vrot.slane %v2994, 4
      %v2997 = vrot.slane %v2128, 5
      %v2998 = vsel %vm1268, %v2996, %v2997
      %v2999 = vrot.slane %v2857, 5
      %v3000 = vrot.slane %v2999, 4
      %v3001 = vrot.slane %v2130, 5
      %v3002 = vsel %vm1268, %v3000, %v3001
      %v3003 = vrot.slane %v3001, 4
      %v3004 = vrot.slane %v2131, 5
      %v3005 = vsel %vm1268, %v3003, %v3004
      %v3006 = vrot.slane %v2858, 5
      %v3007 = vrot.slane %v3006, 4
      %v3008 = vrot.slane %v2133, 5
      %v3009 = vsel %vm1268, %v3007, %v3008
      %v3010 = vrot.slane %v3008, 4
      %v3011 = vrot.slane %v2134, 5
      %v3012 = vsel %vm1268, %v3010, %v3011
      %v3013 = vrot.slane %v2859, 5
      %v3014 = vrot.slane %v3013, 4
      %v3015 = vrot.slane %v2136, 5
      %v3016 = vsel %vm1268, %v3014, %v3015
      %v3017 = vrot.slane %v3015, 4
      %v3018 = vrot.slane %v2137, 5
      %v3019 = vsel %vm1268, %v3017, %v3018
      %s3020 = scalar_lea.vmem %s1, 320
      %v3021 = vld [vmem:[%s3020] sm:$0xf]
      %v3022 = vld [vmem:[%s3020 + $0x4] sm:$0xf]
      %v3023 = vld [vmem:[%s3020 + $0x8] sm:$0xf]
      %v3024 = vld [vmem:[%s3020 + $0xc] sm:$0xf]
      %v3025 = vld [vmem:[%s3020 + $0x10] sm:$0xf]
      %v3026 = vld [vmem:[%s3020 + $0x14] sm:$0xf]
      %v3027 = vld [vmem:[%s3020 + $0x18] sm:$0xf]
      %v3028 = vld [vmem:[%s3020 + $0x1c] sm:$0xf]
      %v3029 = vld [vmem:[%s3020 + $0x20] sm:$0xf]
      %v3030 = vld [vmem:[%s3020 + $0x24] sm:$0xf]
      %v3031 = vld [vmem:[%s3020 + $0x28] sm:$0xf]
      %v3032 = vld [vmem:[%s3020 + $0x2c] sm:$0xf]
      %v3033 = vld [vmem:[%s3020 + $0x30] sm:$0xf]
      %v3034 = vld [vmem:[%s3020 + $0x34] sm:$0xf]
      %v3035 = vld [vmem:[%s3020 + $0x38] sm:$0xf]
      %v3036 = vld [vmem:[%s3020 + $0x3c] sm:$0xf]
      %v3037 = vunpack.c.l.b16 %v2911
      %v3038 = vunpack.c.l.b16 %v2914
      %v3039 = vunpack.c.l.b16 %v2918
      %v3040 = vunpack.c.l.b16 %v2921
      %v3041 = vunpack.c.l.b16 %v2925
      %v3042 = vunpack.c.l.b16 %v2928
      %v3043 = vunpack.c.l.b16 %v2932
      %v3044 = vunpack.c.l.b16 %v2935
      %v3045 = vunpack.c.l.b16 %v2939
      %v3046 = vunpack.c.l.b16 %v2942
      %v3047 = vunpack.c.l.b16 %v2946
      %v3048 = vunpack.c.l.b16 %v2949
      %v3049 = vunpack.c.l.b16 %v2953
      %v3050 = vunpack.c.l.b16 %v2956
      %v3051 = vunpack.c.l.b16 %v2960
      %v3052 = vunpack.c.l.b16 %v2963
      %v3053 = vunpack.c.l.b16 %v2967
      %v3054 = vunpack.c.l.b16 %v2970
      %v3055 = vunpack.c.l.b16 %v2974
      %v3056 = vunpack.c.l.b16 %v2977
      %v3057 = vunpack.c.l.b16 %v2981
      %v3058 = vunpack.c.l.b16 %v2984
      %v3059 = vunpack.c.l.b16 %v2988
      %v3060 = vunpack.c.l.b16 %v2991
      %v3061 = vunpack.c.l.b16 %v2995
      %v3062 = vunpack.c.l.b16 %v2998
      %v3063 = vunpack.c.l.b16 %v3002
      %v3064 = vunpack.c.l.b16 %v3005
      %v3065 = vunpack.c.l.b16 %v3009
      %v3066 = vunpack.c.l.b16 %v3012
      %v3067 = vunpack.c.l.b16 %v3016
      %v3068 = vunpack.c.l.b16 %v3019
      %v3069 = vpack.c.b16 %v3038, %v3037
      %v3070 = vpack.c.b16 %v3040, %v3039
      %v3071 = vpack.c.b16 %v3042, %v3041
      %v3072 = vpack.c.b16 %v3044, %v3043
      %v3073 = vpack.c.b16 %v3046, %v3045
      %v3074 = vpack.c.b16 %v3048, %v3047
      %v3075 = vpack.c.b16 %v3050, %v3049
      %v3076 = vpack.c.b16 %v3052, %v3051
      %v3077 = vpack.c.b16 %v3054, %v3053
      %v3078 = vpack.c.b16 %v3056, %v3055
      %v3079 = vpack.c.b16 %v3058, %v3057
      %v3080 = vpack.c.b16 %v3060, %v3059
      %v3081 = vpack.c.b16 %v3062, %v3061
      %v3082 = vpack.c.b16 %v3064, %v3063
      %v3083 = vpack.c.b16 %v3066, %v3065
      %v3084 = vpack.c.b16 %v3068, %v3067
      %v3117 = vunpack.c.l.b16 %v3021
      %v3118 = vunpack.c.l.b16 %v3022
      %v3119 = vunpack.c.l.b16 %v3023
      %v3120 = vunpack.c.l.b16 %v3024
      %v3121 = vunpack.c.l.b16 %v3025
      %v3122 = vunpack.c.l.b16 %v3026
      %v3123 = vunpack.c.l.b16 %v3027
      %v3124 = vunpack.c.l.b16 %v3028
      %v3125 = vunpack.c.l.b16 %v3029
      %v3126 = vunpack.c.l.b16 %v3030
      %v3127 = vunpack.c.l.b16 %v3031
      %v3128 = vunpack.c.l.b16 %v3032
      %v3129 = vunpack.c.l.b16 %v3033
      %v3130 = vunpack.c.l.b16 %v3034
      %v3131 = vunpack.c.l.b16 %v3035
      %v3132 = vunpack.c.l.b16 %v3036
      %v3133 = vpack.c.b16 %v3118, %v3117
      %v3134 = vpack.c.b16 %v3120, %v3119
      %v3135 = vpack.c.b16 %v3122, %v3121
      %v3136 = vpack.c.b16 %v3124, %v3123
      %v3137 = vpack.c.b16 %v3126, %v3125
      %v3138 = vpack.c.b16 %v3128, %v3127
      %v3139 = vpack.c.b16 %v3130, %v3129
      %v3140 = vpack.c.b16 %v3132, %v3131
      %3149 = vmatprep.subr.bf16.mxu0 0
      %3150 = vmatpush1.bf16.msra.mxu0 %v3140
      %3151 = vmatprep.subr.bf16.mxu0 0
      %3152 = vmatpush1.bf16.msra.mxu0 %v3139
      %3153 = vmatprep.subr.bf16.mxu0 0
      %3154 = vmatpush1.bf16.msra.mxu0 %v3138
      %3155 = vmatprep.subr.bf16.mxu0 0
      %3156 = vmatpush1.bf16.msra.mxu0 %v3137
      %3157 = vmatprep.subr.bf16.mxu0 0
      %3158 = vmatpush1.bf16.msra.mxu0 %v3136
      %3159 = vmatprep.subr.bf16.mxu0 0
      %3160 = vmatpush1.bf16.msra.mxu0 %v3135
      %3161 = vmatprep.subr.bf16.mxu0 0
      %3162 = vmatpush1.bf16.msra.mxu0 %v3134
      %3163 = vmatprep.subr.bf16.mxu0 0
      %3164 = vmatpush1.bf16.msra.mxu0 %v3133
      %3165 = vmatprep.subr.bf16.mxu0 0
      %3166 = vmatpush2.bf16.msra.mxu0 0
      %3167 = vmatprep.subr.bf16.mxu0 0
      %3168 = vmatpush2.bf16.msra.mxu0 0
      %3169 = vmatprep.subr.bf16.mxu0 0
      %3170 = vmatpush2.bf16.msra.mxu0 0
      %3171 = vmatprep.subr.bf16.mxu0 0
      %3172 = vmatpush2.bf16.msra.mxu0 0
      %3173 = vmatprep.subr.bf16.mxu0 0
      %3174 = vmatpush2.bf16.msra.mxu0 0
      %3175 = vmatprep.subr.bf16.mxu0 0
      %3176 = vmatpush2.bf16.msra.mxu0 0
      %3177 = vmatprep.subr.bf16.mxu0 0
      %3178 = vmatpush2.bf16.msra.mxu0 0
      %3179 = vmatprep.subr.bf16.mxu0 0
      %3180 = vmatpush2.bf16.msra.mxu0 0
      %3181 = vmatprep.mubr.bf16.mxu0 0
      %3182 = vmatmul.mubr.bf16.gmra.mxu0 %v3069
      %v3183 = vpop.f32.mrf.mxu0
      %v3184 = vadd.f32 0.0, %v3183
      %v3185 = vpop.f32.mrf.mxu0
      %v3186 = vpop.f32.mrf.mxu0
      %v3187 = vadd.f32 0.0, %v3186
      %v3188 = vpop.f32.mrf.mxu0
      %3189 = vmatprep.mubr.bf16.mxu0 0
      %3190 = vmatmul.mubr.bf16.gmra.mxu0 %v3070
      %v3191 = vpop.f32.mrf.mxu0
      %v3192 = vadd.f32 0.0, %v3191
      %v3193 = vpop.f32.mrf.mxu0
      %v3194 = vpop.f32.mrf.mxu0
      %v3195 = vadd.f32 0.0, %v3194
      %v3196 = vpop.f32.mrf.mxu0
      %3197 = vmatprep.mubr.bf16.mxu0 0
      %3198 = vmatmul.mubr.bf16.gmra.mxu0 %v3071
      %v3199 = vpop.f32.mrf.mxu0
      %v3200 = vadd.f32 0.0, %v3199
      %v3201 = vpop.f32.mrf.mxu0
      %v3202 = vpop.f32.mrf.mxu0
      %v3203 = vadd.f32 0.0, %v3202
      %v3204 = vpop.f32.mrf.mxu0
      %3205 = vmatprep.mubr.bf16.mxu0 0
      %3206 = vmatmul.mubr.bf16.gmra.mxu0 %v3072
      %v3207 = vpop.f32.mrf.mxu0
      %v3208 = vadd.f32 0.0, %v3207
      %v3209 = vpop.f32.mrf.mxu0
      %v3210 = vpop.f32.mrf.mxu0
      %v3211 = vadd.f32 0.0, %v3210
      %v3212 = vpop.f32.mrf.mxu0
      %3213 = vmatprep.mubr.bf16.mxu0 0
      %3214 = vmatmul.mubr.bf16.gmra.mxu0 %v3073
      %v3215 = vpop.f32.mrf.mxu0
      %v3216 = vadd.f32 0.0, %v3215
      %v3217 = vpop.f32.mrf.mxu0
      %v3218 = vpop.f32.mrf.mxu0
      %v3219 = vadd.f32 0.0, %v3218
      %v3220 = vpop.f32.mrf.mxu0
      %3221 = vmatprep.mubr.bf16.mxu0 0
      %3222 = vmatmul.mubr.bf16.gmra.mxu0 %v3074
      %v3223 = vpop.f32.mrf.mxu0
      %v3224 = vadd.f32 0.0, %v3223
      %v3225 = vpop.f32.mrf.mxu0
      %v3226 = vpop.f32.mrf.mxu0
      %v3227 = vadd.f32 0.0, %v3226
      %v3228 = vpop.f32.mrf.mxu0
      %3229 = vmatprep.mubr.bf16.mxu0 0
      %3230 = vmatmul.mubr.bf16.gmra.mxu0 %v3075
      %v3231 = vpop.f32.mrf.mxu0
      %v3232 = vadd.f32 0.0, %v3231
      %v3233 = vpop.f32.mrf.mxu0
      %v3234 = vpop.f32.mrf.mxu0
      %v3235 = vadd.f32 0.0, %v3234
      %v3236 = vpop.f32.mrf.mxu0
      %3237 = vmatprep.mubr.bf16.mxu0 0
      %3238 = vmatmul.mubr.bf16.gmra.mxu0 %v3076
      %v3239 = vpop.f32.mrf.mxu0
      %v3240 = vadd.f32 0.0, %v3239
      %v3241 = vpop.f32.mrf.mxu0
      %v3242 = vpop.f32.mrf.mxu0
      %v3243 = vadd.f32 0.0, %v3242
      %v3244 = vpop.f32.mrf.mxu0
      %3245 = vmatprep.mubr.bf16.mxu0 0
      %3246 = vmatmul.mubr.bf16.gmra.mxu0 %v3077
      %v3247 = vpop.f32.mrf.mxu0
      %v3248 = vadd.f32 0.0, %v3247
      %v3249 = vpop.f32.mrf.mxu0
      %v3250 = vpop.f32.mrf.mxu0
      %v3251 = vadd.f32 0.0, %v3250
      %v3252 = vpop.f32.mrf.mxu0
      %3253 = vmatprep.mubr.bf16.mxu0 0
      %3254 = vmatmul.mubr.bf16.gmra.mxu0 %v3078
      %v3255 = vpop.f32.mrf.mxu0
      %v3256 = vadd.f32 0.0, %v3255
      %v3257 = vpop.f32.mrf.mxu0
      %v3258 = vpop.f32.mrf.mxu0
      %v3259 = vadd.f32 0.0, %v3258
      %v3260 = vpop.f32.mrf.mxu0
      %3261 = vmatprep.mubr.bf16.mxu0 0
      %3262 = vmatmul.mubr.bf16.gmra.mxu0 %v3079
      %v3263 = vpop.f32.mrf.mxu0
      %v3264 = vadd.f32 0.0, %v3263
      %v3265 = vpop.f32.mrf.mxu0
      %v3266 = vpop.f32.mrf.mxu0
      %v3267 = vadd.f32 0.0, %v3266
      %v3268 = vpop.f32.mrf.mxu0
      %3269 = vmatprep.mubr.bf16.mxu0 0
      %3270 = vmatmul.mubr.bf16.gmra.mxu0 %v3080
      %v3271 = vpop.f32.mrf.mxu0
      %v3272 = vadd.f32 0.0, %v3271
      %v3273 = vpop.f32.mrf.mxu0
      %v3274 = vpop.f32.mrf.mxu0
      %v3275 = vadd.f32 0.0, %v3274
      %v3276 = vpop.f32.mrf.mxu0
      %3277 = vmatprep.mubr.bf16.mxu0 0
      %3278 = vmatmul.mubr.bf16.gmra.mxu0 %v3081
      %v3279 = vpop.f32.mrf.mxu0
      %v3280 = vadd.f32 0.0, %v3279
      %v3281 = vpop.f32.mrf.mxu0
      %v3282 = vpop.f32.mrf.mxu0
      %v3283 = vadd.f32 0.0, %v3282
      %v3284 = vpop.f32.mrf.mxu0
      %3285 = vmatprep.mubr.bf16.mxu0 0
      %3286 = vmatmul.mubr.bf16.gmra.mxu0 %v3082
      %v3287 = vpop.f32.mrf.mxu0
      %v3288 = vadd.f32 0.0, %v3287
      %v3289 = vpop.f32.mrf.mxu0
      %v3290 = vpop.f32.mrf.mxu0
      %v3291 = vadd.f32 0.0, %v3290
      %v3292 = vpop.f32.mrf.mxu0
      %3293 = vmatprep.mubr.bf16.mxu0 0
      %3294 = vmatmul.mubr.bf16.gmra.mxu0 %v3083
      %v3295 = vpop.f32.mrf.mxu0
      %v3296 = vadd.f32 0.0, %v3295
      %v3297 = vpop.f32.mrf.mxu0
      %v3298 = vpop.f32.mrf.mxu0
      %v3299 = vadd.f32 0.0, %v3298
      %v3300 = vpop.f32.mrf.mxu0
      %3301 = vmatprep.mubr.bf16.mxu0 0
      %3302 = vmatmul.mubr.bf16.gmra.mxu0 %v3084
      %v3303 = vpop.f32.mrf.mxu0
      %v3304 = vadd.f32 0.0, %v3303
      %v3305 = vpop.f32.mrf.mxu0
      %v3306 = vpop.f32.mrf.mxu0
      %v3307 = vadd.f32 0.0, %v3306
      %v3308 = vpop.f32.mrf.mxu0
      %3309 = vdwg.mxu0
      %v3310 = vadd.f32 %v2812, %v3184
      %v3311 = vadd.f32 %v2813, %v3187
      %v3312 = vadd.f32 %v2814, %v3192
      %v3313 = vadd.f32 %v2815, %v3195
      %v3314 = vadd.f32 %v2816, %v3200
      %v3315 = vadd.f32 %v2817, %v3203
      %v3316 = vadd.f32 %v2818, %v3208
      %v3317 = vadd.f32 %v2819, %v3211
      %v3318 = vadd.f32 %v2820, %v3216
      %v3319 = vadd.f32 %v2821, %v3219
      %v3320 = vadd.f32 %v2822, %v3224
      %v3321 = vadd.f32 %v2823, %v3227
      %v3322 = vadd.f32 %v2824, %v3232
      %v3323 = vadd.f32 %v2825, %v3235
      %v3324 = vadd.f32 %v2826, %v3240
      %v3325 = vadd.f32 %v2827, %v3243
      %v3326 = vadd.f32 %v2828, %v3248
      %v3327 = vadd.f32 %v2829, %v3251
      %v3328 = vadd.f32 %v2830, %v3256
      %v3329 = vadd.f32 %v2831, %v3259
      %v3330 = vadd.f32 %v2832, %v3264
      %v3331 = vadd.f32 %v2833, %v3267
      %v3332 = vadd.f32 %v2834, %v3272
      %v3333 = vadd.f32 %v2835, %v3275
      %v3334 = vadd.f32 %v2836, %v3280
      %v3335 = vadd.f32 %v2837, %v3283
      %v3336 = vadd.f32 %v2838, %v3288
      %v3337 = vadd.f32 %v2839, %v3291
      %v3338 = vadd.f32 %v2840, %v3296
      %v3339 = vadd.f32 %v2841, %v3299
      %v3340 = vadd.f32 %v2842, %v3304
      %v3341 = vadd.f32 %v2843, %v3307
      %s3342 = scalar_lea.vmem %s165, 24
      %v3343 = vld [vmem:[%s3342] sm:$0xf]
      %v3344 = vld [vmem:[%s3342 + $0x4] sm:$0xf]
      %v3345 = vld [vmem:[%s3342 + $0xc] sm:$0xf]
      %v3346 = vld [vmem:[%s3342 + $0x10] sm:$0xf]
      %v3347 = vld [vmem:[%s3342 + $0x18] sm:$0xf]
      %v3348 = vld [vmem:[%s3342 + $0x1c] sm:$0xf]
      %v3349 = vld [vmem:[%s3342 + $0x24] sm:$0xf]
      %v3350 = vld [vmem:[%s3342 + $0x28] sm:$0xf]
      %v3351 = vld [vmem:[%s3342 + $0x30] sm:$0xf]
      %v3352 = vld [vmem:[%s3342 + $0x34] sm:$0xf]
      %v3353 = vld [vmem:[%s3342 + $0x3c] sm:$0xf]
      %v3354 = vld [vmem:[%s3342 + $0x40] sm:$0xf]
      %v3355 = vld [vmem:[%s3342 + $0x48] sm:$0xf]
      %v3356 = vld [vmem:[%s3342 + $0x4c] sm:$0xf]
      %v3357 = vld [vmem:[%s3342 + $0x54] sm:$0xf]
      %v3358 = vld [vmem:[%s3342 + $0x58] sm:$0xf]
      %v3359 = vld [vmem:[%s3342 + $0x60] sm:$0xf]
      %v3360 = vld [vmem:[%s3342 + $0x64] sm:$0xf]
      %v3361 = vld [vmem:[%s3342 + $0x6c] sm:$0xf]
      %v3362 = vld [vmem:[%s3342 + $0x70] sm:$0xf]
      %v3363 = vld [vmem:[%s3342 + $0x78] sm:$0xf]
      %v3364 = vld [vmem:[%s3342 + $0x7c] sm:$0xf]
      %v3365 = vld [vmem:[%s3342 + $0x84] sm:$0xf]
      %v3366 = vld [vmem:[%s3342 + $0x88] sm:$0xf]
      %v3367 = vld [vmem:[%s3342 + $0x90] sm:$0xf]
      %v3368 = vld [vmem:[%s3342 + $0x94] sm:$0xf]
      %v3369 = vld [vmem:[%s3342 + $0x9c] sm:$0xf]
      %v3370 = vld [vmem:[%s3342 + $0xa0] sm:$0xf]
      %v3371 = vld [vmem:[%s3342 + $0xa8] sm:$0xf]
      %v3372 = vld [vmem:[%s3342 + $0xac] sm:$0xf]
      %v3373 = vld [vmem:[%s3342 + $0xb4] sm:$0xf]
      %v3374 = vld [vmem:[%s3342 + $0xb8] sm:$0xf]
      %s3375 = scalar_lea.vmem %s1, 384
      %v3376 = vld [vmem:[%s3375] sm:$0xf]
      %v3377 = vld [vmem:[%s3375 + $0x4] sm:$0xf]
      %v3378 = vld [vmem:[%s3375 + $0x8] sm:$0xf]
      %v3379 = vld [vmem:[%s3375 + $0xc] sm:$0xf]
      %v3380 = vld [vmem:[%s3375 + $0x10] sm:$0xf]
      %v3381 = vld [vmem:[%s3375 + $0x14] sm:$0xf]
      %v3382 = vld [vmem:[%s3375 + $0x18] sm:$0xf]
      %v3383 = vld [vmem:[%s3375 + $0x1c] sm:$0xf]
      %v3384 = vld [vmem:[%s3375 + $0x20] sm:$0xf]
      %v3385 = vld [vmem:[%s3375 + $0x24] sm:$0xf]
      %v3386 = vld [vmem:[%s3375 + $0x28] sm:$0xf]
      %v3387 = vld [vmem:[%s3375 + $0x2c] sm:$0xf]
      %v3388 = vld [vmem:[%s3375 + $0x30] sm:$0xf]
      %v3389 = vld [vmem:[%s3375 + $0x34] sm:$0xf]
      %v3390 = vld [vmem:[%s3375 + $0x38] sm:$0xf]
      %v3391 = vld [vmem:[%s3375 + $0x3c] sm:$0xf]
      %v3424 = vunpack.c.l.b16 %v3343
      %v3425 = vunpack.c.l.b16 %v3344
      %v3426 = vunpack.c.l.b16 %v3345
      %v3427 = vunpack.c.l.b16 %v3346
      %v3428 = vunpack.c.l.b16 %v3347
      %v3429 = vunpack.c.l.b16 %v3348
      %v3430 = vunpack.c.l.b16 %v3349
      %v3431 = vunpack.c.l.b16 %v3350
      %v3432 = vunpack.c.l.b16 %v3351
      %v3433 = vunpack.c.l.b16 %v3352
      %v3434 = vunpack.c.l.b16 %v3353
      %v3435 = vunpack.c.l.b16 %v3354
      %v3436 = vunpack.c.l.b16 %v3355
      %v3437 = vunpack.c.l.b16 %v3356
      %v3438 = vunpack.c.l.b16 %v3357
      %v3439 = vunpack.c.l.b16 %v3358
      %v3440 = vunpack.c.l.b16 %v3359
      %v3441 = vunpack.c.l.b16 %v3360
      %v3442 = vunpack.c.l.b16 %v3361
      %v3443 = vunpack.c.l.b16 %v3362
      %v3444 = vunpack.c.l.b16 %v3363
      %v3445 = vunpack.c.l.b16 %v3364
      %v3446 = vunpack.c.l.b16 %v3365
      %v3447 = vunpack.c.l.b16 %v3366
      %v3448 = vunpack.c.l.b16 %v3367
      %v3449 = vunpack.c.l.b16 %v3368
      %v3450 = vunpack.c.l.b16 %v3369
      %v3451 = vunpack.c.l.b16 %v3370
      %v3452 = vunpack.c.l.b16 %v3371
      %v3453 = vunpack.c.l.b16 %v3372
      %v3454 = vunpack.c.l.b16 %v3373
      %v3455 = vunpack.c.l.b16 %v3374
      %v3456 = vpack.c.b16 %v3425, %v3424
      %v3457 = vpack.c.b16 %v3427, %v3426
      %v3458 = vpack.c.b16 %v3429, %v3428
      %v3459 = vpack.c.b16 %v3431, %v3430
      %v3460 = vpack.c.b16 %v3433, %v3432
      %v3461 = vpack.c.b16 %v3435, %v3434
      %v3462 = vpack.c.b16 %v3437, %v3436
      %v3463 = vpack.c.b16 %v3439, %v3438
      %v3464 = vpack.c.b16 %v3441, %v3440
      %v3465 = vpack.c.b16 %v3443, %v3442
      %v3466 = vpack.c.b16 %v3445, %v3444
      %v3467 = vpack.c.b16 %v3447, %v3446
      %v3468 = vpack.c.b16 %v3449, %v3448
      %v3469 = vpack.c.b16 %v3451, %v3450
      %v3470 = vpack.c.b16 %v3453, %v3452
      %v3471 = vpack.c.b16 %v3455, %v3454
      %v3504 = vunpack.c.l.b16 %v3376
      %v3505 = vunpack.c.l.b16 %v3377
      %v3506 = vunpack.c.l.b16 %v3378
      %v3507 = vunpack.c.l.b16 %v3379
      %v3508 = vunpack.c.l.b16 %v3380
      %v3509 = vunpack.c.l.b16 %v3381
      %v3510 = vunpack.c.l.b16 %v3382
      %v3511 = vunpack.c.l.b16 %v3383
      %v3512 = vunpack.c.l.b16 %v3384
      %v3513 = vunpack.c.l.b16 %v3385
      %v3514 = vunpack.c.l.b16 %v3386
      %v3515 = vunpack.c.l.b16 %v3387
      %v3516 = vunpack.c.l.b16 %v3388
      %v3517 = vunpack.c.l.b16 %v3389
      %v3518 = vunpack.c.l.b16 %v3390
      %v3519 = vunpack.c.l.b16 %v3391
      %v3520 = vpack.c.b16 %v3505, %v3504
      %v3521 = vpack.c.b16 %v3507, %v3506
      %v3522 = vpack.c.b16 %v3509, %v3508
      %v3523 = vpack.c.b16 %v3511, %v3510
      %v3524 = vpack.c.b16 %v3513, %v3512
      %v3525 = vpack.c.b16 %v3515, %v3514
      %v3526 = vpack.c.b16 %v3517, %v3516
      %v3527 = vpack.c.b16 %v3519, %v3518
      %3536 = vmatprep.subr.bf16.mxu0 0
      %3537 = vmatpush1.bf16.msra.mxu0 %v3527
      %3538 = vmatprep.subr.bf16.mxu0 0
      %3539 = vmatpush1.bf16.msra.mxu0 %v3526
      %3540 = vmatprep.subr.bf16.mxu0 0
      %3541 = vmatpush1.bf16.msra.mxu0 %v3525
      %3542 = vmatprep.subr.bf16.mxu0 0
      %3543 = vmatpush1.bf16.msra.mxu0 %v3524
      %3544 = vmatprep.subr.bf16.mxu0 0
      %3545 = vmatpush1.bf16.msra.mxu0 %v3523
      %3546 = vmatprep.subr.bf16.mxu0 0
      %3547 = vmatpush1.bf16.msra.mxu0 %v3522
      %3548 = vmatprep.subr.bf16.mxu0 0
      %3549 = vmatpush1.bf16.msra.mxu0 %v3521
      %3550 = vmatprep.subr.bf16.mxu0 0
      %3551 = vmatpush1.bf16.msra.mxu0 %v3520
      %3552 = vmatprep.subr.bf16.mxu0 0
      %3553 = vmatpush2.bf16.msra.mxu0 0
      %3554 = vmatprep.subr.bf16.mxu0 0
      %3555 = vmatpush2.bf16.msra.mxu0 0
      %3556 = vmatprep.subr.bf16.mxu0 0
      %3557 = vmatpush2.bf16.msra.mxu0 0
      %3558 = vmatprep.subr.bf16.mxu0 0
      %3559 = vmatpush2.bf16.msra.mxu0 0
      %3560 = vmatprep.subr.bf16.mxu0 0
      %3561 = vmatpush2.bf16.msra.mxu0 0
      %3562 = vmatprep.subr.bf16.mxu0 0
      %3563 = vmatpush2.bf16.msra.mxu0 0
      %3564 = vmatprep.subr.bf16.mxu0 0
      %3565 = vmatpush2.bf16.msra.mxu0 0
      %3566 = vmatprep.subr.bf16.mxu0 0
      %3567 = vmatpush2.bf16.msra.mxu0 0
      %3568 = vmatprep.mubr.bf16.mxu0 0
      %3569 = vmatmul.mubr.bf16.gmra.mxu0 %v3456
      %v3570 = vpop.f32.mrf.mxu0
      %v3571 = vadd.f32 0.0, %v3570
      %v3572 = vpop.f32.mrf.mxu0
      %v3573 = vpop.f32.mrf.mxu0
      %v3574 = vadd.f32 0.0, %v3573
      %v3575 = vpop.f32.mrf.mxu0
      %3576 = vmatprep.mubr.bf16.mxu0 0
      %3577 = vmatmul.mubr.bf16.gmra.mxu0 %v3457
      %v3578 = vpop.f32.mrf.mxu0
      %v3579 = vadd.f32 0.0, %v3578
      %v3580 = vpop.f32.mrf.mxu0
      %v3581 = vpop.f32.mrf.mxu0
      %v3582 = vadd.f32 0.0, %v3581
      %v3583 = vpop.f32.mrf.mxu0
      %3584 = vmatprep.mubr.bf16.mxu0 0
      %3585 = vmatmul.mubr.bf16.gmra.mxu0 %v3458
      %v3586 = vpop.f32.mrf.mxu0
      %v3587 = vadd.f32 0.0, %v3586
      %v3588 = vpop.f32.mrf.mxu0
      %v3589 = vpop.f32.mrf.mxu0
      %v3590 = vadd.f32 0.0, %v3589
      %v3591 = vpop.f32.mrf.mxu0
      %3592 = vmatprep.mubr.bf16.mxu0 0
      %3593 = vmatmul.mubr.bf16.gmra.mxu0 %v3459
      %v3594 = vpop.f32.mrf.mxu0
      %v3595 = vadd.f32 0.0, %v3594
      %v3596 = vpop.f32.mrf.mxu0
      %v3597 = vpop.f32.mrf.mxu0
      %v3598 = vadd.f32 0.0, %v3597
      %v3599 = vpop.f32.mrf.mxu0
      %3600 = vmatprep.mubr.bf16.mxu0 0
      %3601 = vmatmul.mubr.bf16.gmra.mxu0 %v3460
      %v3602 = vpop.f32.mrf.mxu0
      %v3603 = vadd.f32 0.0, %v3602
      %v3604 = vpop.f32.mrf.mxu0
      %v3605 = vpop.f32.mrf.mxu0
      %v3606 = vadd.f32 0.0, %v3605
      %v3607 = vpop.f32.mrf.mxu0
      %3608 = vmatprep.mubr.bf16.mxu0 0
      %3609 = vmatmul.mubr.bf16.gmra.mxu0 %v3461
      %v3610 = vpop.f32.mrf.mxu0
      %v3611 = vadd.f32 0.0, %v3610
      %v3612 = vpop.f32.mrf.mxu0
      %v3613 = vpop.f32.mrf.mxu0
      %v3614 = vadd.f32 0.0, %v3613
      %v3615 = vpop.f32.mrf.mxu0
      %3616 = vmatprep.mubr.bf16.mxu0 0
      %3617 = vmatmul.mubr.bf16.gmra.mxu0 %v3462
      %v3618 = vpop.f32.mrf.mxu0
      %v3619 = vadd.f32 0.0, %v3618
      %v3620 = vpop.f32.mrf.mxu0
      %v3621 = vpop.f32.mrf.mxu0
      %v3622 = vadd.f32 0.0, %v3621
      %v3623 = vpop.f32.mrf.mxu0
      %3624 = vmatprep.mubr.bf16.mxu0 0
      %3625 = vmatmul.mubr.bf16.gmra.mxu0 %v3463
      %v3626 = vpop.f32.mrf.mxu0
      %v3627 = vadd.f32 0.0, %v3626
      %v3628 = vpop.f32.mrf.mxu0
      %v3629 = vpop.f32.mrf.mxu0
      %v3630 = vadd.f32 0.0, %v3629
      %v3631 = vpop.f32.mrf.mxu0
      %3632 = vmatprep.mubr.bf16.mxu0 0
      %3633 = vmatmul.mubr.bf16.gmra.mxu0 %v3464
      %v3634 = vpop.f32.mrf.mxu0
      %v3635 = vadd.f32 0.0, %v3634
      %v3636 = vpop.f32.mrf.mxu0
      %v3637 = vpop.f32.mrf.mxu0
      %v3638 = vadd.f32 0.0, %v3637
      %v3639 = vpop.f32.mrf.mxu0
      %3640 = vmatprep.mubr.bf16.mxu0 0
      %3641 = vmatmul.mubr.bf16.gmra.mxu0 %v3465
      %v3642 = vpop.f32.mrf.mxu0
      %v3643 = vadd.f32 0.0, %v3642
      %v3644 = vpop.f32.mrf.mxu0
      %v3645 = vpop.f32.mrf.mxu0
      %v3646 = vadd.f32 0.0, %v3645
      %v3647 = vpop.f32.mrf.mxu0
      %3648 = vmatprep.mubr.bf16.mxu0 0
      %3649 = vmatmul.mubr.bf16.gmra.mxu0 %v3466
      %v3650 = vpop.f32.mrf.mxu0
      %v3651 = vadd.f32 0.0, %v3650
      %v3652 = vpop.f32.mrf.mxu0
      %v3653 = vpop.f32.mrf.mxu0
      %v3654 = vadd.f32 0.0, %v3653
      %v3655 = vpop.f32.mrf.mxu0
      %3656 = vmatprep.mubr.bf16.mxu0 0
      %3657 = vmatmul.mubr.bf16.gmra.mxu0 %v3467
      %v3658 = vpop.f32.mrf.mxu0
      %v3659 = vadd.f32 0.0, %v3658
      %v3660 = vpop.f32.mrf.mxu0
      %v3661 = vpop.f32.mrf.mxu0
      %v3662 = vadd.f32 0.0, %v3661
      %v3663 = vpop.f32.mrf.mxu0
      %3664 = vmatprep.mubr.bf16.mxu0 0
      %3665 = vmatmul.mubr.bf16.gmra.mxu0 %v3468
      %v3666 = vpop.f32.mrf.mxu0
      %v3667 = vadd.f32 0.0, %v3666
      %v3668 = vpop.f32.mrf.mxu0
      %v3669 = vpop.f32.mrf.mxu0
      %v3670 = vadd.f32 0.0, %v3669
      %v3671 = vpop.f32.mrf.mxu0
      %3672 = vmatprep.mubr.bf16.mxu0 0
      %3673 = vmatmul.mubr.bf16.gmra.mxu0 %v3469
      %v3674 = vpop.f32.mrf.mxu0
      %v3675 = vadd.f32 0.0, %v3674
      %v3676 = vpop.f32.mrf.mxu0
      %v3677 = vpop.f32.mrf.mxu0
      %v3678 = vadd.f32 0.0, %v3677
      %v3679 = vpop.f32.mrf.mxu0
      %3680 = vmatprep.mubr.bf16.mxu0 0
      %3681 = vmatmul.mubr.bf16.gmra.mxu0 %v3470
      %v3682 = vpop.f32.mrf.mxu0
      %v3683 = vadd.f32 0.0, %v3682
      %v3684 = vpop.f32.mrf.mxu0
      %v3685 = vpop.f32.mrf.mxu0
      %v3686 = vadd.f32 0.0, %v3685
      %v3687 = vpop.f32.mrf.mxu0
      %3688 = vmatprep.mubr.bf16.mxu0 0
      %3689 = vmatmul.mubr.bf16.gmra.mxu0 %v3471
      %v3690 = vpop.f32.mrf.mxu0
      %v3691 = vadd.f32 0.0, %v3690
      %v3692 = vpop.f32.mrf.mxu0
      %v3693 = vpop.f32.mrf.mxu0
      %v3694 = vadd.f32 0.0, %v3693
      %v3695 = vpop.f32.mrf.mxu0
      %3696 = vdwg.mxu0
      %v3697 = vadd.f32 %v3310, %v3571
      %v3698 = vadd.f32 %v3311, %v3574
      %v3699 = vadd.f32 %v3312, %v3579
      %v3700 = vadd.f32 %v3313, %v3582
      %v3701 = vadd.f32 %v3314, %v3587
      %v3702 = vadd.f32 %v3315, %v3590
      %v3703 = vadd.f32 %v3316, %v3595
      %v3704 = vadd.f32 %v3317, %v3598
      %v3705 = vadd.f32 %v3318, %v3603
      %v3706 = vadd.f32 %v3319, %v3606
      %v3707 = vadd.f32 %v3320, %v3611
      %v3708 = vadd.f32 %v3321, %v3614
      %v3709 = vadd.f32 %v3322, %v3619
      %v3710 = vadd.f32 %v3323, %v3622
      %v3711 = vadd.f32 %v3324, %v3627
      %v3712 = vadd.f32 %v3325, %v3630
      %v3713 = vadd.f32 %v3326, %v3635
      %v3714 = vadd.f32 %v3327, %v3638
      %v3715 = vadd.f32 %v3328, %v3643
      %v3716 = vadd.f32 %v3329, %v3646
      %v3717 = vadd.f32 %v3330, %v3651
      %v3718 = vadd.f32 %v3331, %v3654
      %v3719 = vadd.f32 %v3332, %v3659
      %v3720 = vadd.f32 %v3333, %v3662
      %v3721 = vadd.f32 %v3334, %v3667
      %v3722 = vadd.f32 %v3335, %v3670
      %v3723 = vadd.f32 %v3336, %v3675
      %v3724 = vadd.f32 %v3337, %v3678
      %v3725 = vadd.f32 %v3338, %v3683
      %v3726 = vadd.f32 %v3339, %v3686
      %v3727 = vadd.f32 %v3340, %v3691
      %v3728 = vadd.f32 %v3341, %v3694
      %v3729 = vld [vmem:[%s3342] sm:$0xf]
      %v3730 = vld [vmem:[%s3342 + $0x4] sm:$0xf]
      %v3731 = vld [vmem:[%s3342 + $0x8] sm:$0x1]
      %v3732 = vld [vmem:[%s3342 + $0xc] sm:$0xf]
      %v3733 = vld [vmem:[%s3342 + $0x10] sm:$0xf]
      %v3734 = vld [vmem:[%s3342 + $0x14] sm:$0x1]
      %v3735 = vld [vmem:[%s3342 + $0x18] sm:$0xf]
      %v3736 = vld [vmem:[%s3342 + $0x1c] sm:$0xf]
      %v3737 = vld [vmem:[%s3342 + $0x20] sm:$0x1]
      %v3738 = vld [vmem:[%s3342 + $0x24] sm:$0xf]
      %v3739 = vld [vmem:[%s3342 + $0x28] sm:$0xf]
      %v3740 = vld [vmem:[%s3342 + $0x2c] sm:$0x1]
      %v3741 = vld [vmem:[%s3342 + $0x30] sm:$0xf]
      %v3742 = vld [vmem:[%s3342 + $0x34] sm:$0xf]
      %v3743 = vld [vmem:[%s3342 + $0x38] sm:$0x1]
      %v3744 = vld [vmem:[%s3342 + $0x3c] sm:$0xf]
      %v3745 = vld [vmem:[%s3342 + $0x40] sm:$0xf]
      %v3746 = vld [vmem:[%s3342 + $0x44] sm:$0x1]
      %v3747 = vld [vmem:[%s3342 + $0x48] sm:$0xf]
      %v3748 = vld [vmem:[%s3342 + $0x4c] sm:$0xf]
      %v3749 = vld [vmem:[%s3342 + $0x50] sm:$0x1]
      %v3750 = vld [vmem:[%s3342 + $0x54] sm:$0xf]
      %v3751 = vld [vmem:[%s3342 + $0x58] sm:$0xf]
      %v3752 = vld [vmem:[%s3342 + $0x5c] sm:$0x1]
      %v3753 = vld [vmem:[%s3342 + $0x60] sm:$0xf]
      %v3754 = vld [vmem:[%s3342 + $0x64] sm:$0xf]
      %v3755 = vld [vmem:[%s3342 + $0x68] sm:$0x1]
      %v3756 = vld [vmem:[%s3342 + $0x6c] sm:$0xf]
      %v3757 = vld [vmem:[%s3342 + $0x70] sm:$0xf]
      %v3758 = vld [vmem:[%s3342 + $0x74] sm:$0x1]
      %v3759 = vld [vmem:[%s3342 + $0x78] sm:$0xf]
      %v3760 = vld [vmem:[%s3342 + $0x7c] sm:$0xf]
      %v3761 = vld [vmem:[%s3342 + $0x80] sm:$0x1]
      %v3762 = vld [vmem:[%s3342 + $0x84] sm:$0xf]
      %v3763 = vld [vmem:[%s3342 + $0x88] sm:$0xf]
      %v3764 = vld [vmem:[%s3342 + $0x8c] sm:$0x1]
      %v3765 = vld [vmem:[%s3342 + $0x90] sm:$0xf]
      %v3766 = vld [vmem:[%s3342 + $0x94] sm:$0xf]
      %v3767 = vld [vmem:[%s3342 + $0x98] sm:$0x1]
      %v3768 = vld [vmem:[%s3342 + $0x9c] sm:$0xf]
      %v3769 = vld [vmem:[%s3342 + $0xa0] sm:$0xf]
      %v3770 = vld [vmem:[%s3342 + $0xa4] sm:$0x1]
      %v3771 = vld [vmem:[%s3342 + $0xa8] sm:$0xf]
      %v3772 = vld [vmem:[%s3342 + $0xac] sm:$0xf]
      %v3773 = vld [vmem:[%s3342 + $0xb0] sm:$0x1]
      %v3774 = vld [vmem:[%s3342 + $0xb4] sm:$0xf]
      %v3775 = vld [vmem:[%s3342 + $0xb8] sm:$0xf]
      %v3776 = vld [vmem:[%s3342 + $0xbc] sm:$0x1]
      %v3778 = vshrl.u32 %v3729, 16
      %v3780 = vrot.slane %v3778, 4
      %v3781 = vshll.u32 %v3729, 16
      %v3783 = vrot.slane %v3781, 5
      %v3784 = vor.u32 %v3780, %v3783
      %v3785 = vrot.slane %v3784, 4
      %v3787 = vshll.u32 %v3730, 16
      %v3789 = vrot.slane %v3787, 5
      %v3790 = vsel %vm238, %v3785, %v3789
      %v3791 = vshrl.u32 %v3730, 16
      %v3793 = vrot.slane %v3791, 4
      %v3794 = vor.u32 %v3793, %v3789
      %v3795 = vrot.slane %v3794, 4
      %v3797 = vshll.u32 %v3731, 16
      %v3799 = vrot.slane %v3797, 5
      %v3800 = vsel %vm238, %v3795, %v3799
      %v3802 = vshrl.u32 %v3732, 16
      %v3804 = vrot.slane %v3802, 4
      %v3805 = vshll.u32 %v3732, 16
      %v3807 = vrot.slane %v3805, 5
      %v3808 = vor.u32 %v3804, %v3807
      %v3809 = vrot.slane %v3808, 4
      %v3811 = vshll.u32 %v3733, 16
      %v3813 = vrot.slane %v3811, 5
      %v3814 = vsel %vm238, %v3809, %v3813
      %v3815 = vshrl.u32 %v3733, 16
      %v3817 = vrot.slane %v3815, 4
      %v3818 = vor.u32 %v3817, %v3813
      %v3819 = vrot.slane %v3818, 4
      %v3821 = vshll.u32 %v3734, 16
      %v3823 = vrot.slane %v3821, 5
      %v3824 = vsel %vm238, %v3819, %v3823
      %v3826 = vshrl.u32 %v3735, 16
      %v3828 = vrot.slane %v3826, 4
      %v3829 = vshll.u32 %v3735, 16
      %v3831 = vrot.slane %v3829, 5
      %v3832 = vor.u32 %v3828, %v3831
      %v3833 = vrot.slane %v3832, 4
      %v3835 = vshll.u32 %v3736, 16
      %v3837 = vrot.slane %v3835, 5
      %v3838 = vsel %vm238, %v3833, %v3837
      %v3839 = vshrl.u32 %v3736, 16
      %v3841 = vrot.slane %v3839, 4
      %v3842 = vor.u32 %v3841, %v3837
      %v3843 = vrot.slane %v3842, 4
      %v3845 = vshll.u32 %v3737, 16
      %v3847 = vrot.slane %v3845, 5
      %v3848 = vsel %vm238, %v3843, %v3847
      %v3850 = vshrl.u32 %v3738, 16
      %v3852 = vrot.slane %v3850, 4
      %v3853 = vshll.u32 %v3738, 16
      %v3855 = vrot.slane %v3853, 5
      %v3856 = vor.u32 %v3852, %v3855
      %v3857 = vrot.slane %v3856, 4
      %v3859 = vshll.u32 %v3739, 16
      %v3861 = vrot.slane %v3859, 5
      %v3862 = vsel %vm238, %v3857, %v3861
      %v3863 = vshrl.u32 %v3739, 16
      %v3865 = vrot.slane %v3863, 4
      %v3866 = vor.u32 %v3865, %v3861
      %v3867 = vrot.slane %v3866, 4
      %v3869 = vshll.u32 %v3740, 16
      %v3871 = vrot.slane %v3869, 5
      %v3872 = vsel %vm238, %v3867, %v3871
      %v3874 = vshrl.u32 %v3741, 16
      %v3876 = vrot.slane %v3874, 4
      %v3877 = vshll.u32 %v3741, 16
      %v3879 = vrot.slane %v3877, 5
      %v3880 = vor.u32 %v3876, %v3879
      %v3881 = vrot.slane %v3880, 4
      %v3883 = vshll.u32 %v3742, 16
      %v3885 = vrot.slane %v3883, 5
      %v3886 = vsel %vm238, %v3881, %v3885
      %v3887 = vshrl.u32 %v3742, 16
      %v3889 = vrot.slane %v3887, 4
      %v3890 = vor.u32 %v3889, %v3885
      %v3891 = vrot.slane %v3890, 4
      %v3893 = vshll.u32 %v3743, 16
      %v3895 = vrot.slane %v3893, 5
      %v3896 = vsel %vm238, %v3891, %v3895
      %v3898 = vshrl.u32 %v3744, 16
      %v3900 = vrot.slane %v3898, 4
      %v3901 = vshll.u32 %v3744, 16
      %v3903 = vrot.slane %v3901, 5
      %v3904 = vor.u32 %v3900, %v3903
      %v3905 = vrot.slane %v3904, 4
      %v3907 = vshll.u32 %v3745, 16
      %v3909 = vrot.slane %v3907, 5
      %v3910 = vsel %vm238, %v3905, %v3909
      %v3911 = vshrl.u32 %v3745, 16
      %v3913 = vrot.slane %v3911, 4
      %v3914 = vor.u32 %v3913, %v3909
      %v3915 = vrot.slane %v3914, 4
      %v3917 = vshll.u32 %v3746, 16
      %v3919 = vrot.slane %v3917, 5
      %v3920 = vsel %vm238, %v3915, %v3919
      %v3922 = vshrl.u32 %v3747, 16
      %v3924 = vrot.slane %v3922, 4
      %v3925 = vshll.u32 %v3747, 16
      %v3927 = vrot.slane %v3925, 5
      %v3928 = vor.u32 %v3924, %v3927
      %v3929 = vrot.slane %v3928, 4
      %v3931 = vshll.u32 %v3748, 16
      %v3933 = vrot.slane %v3931, 5
      %v3934 = vsel %vm238, %v3929, %v3933
      %v3935 = vshrl.u32 %v3748, 16
      %v3937 = vrot.slane %v3935, 4
      %v3938 = vor.u32 %v3937, %v3933
      %v3939 = vrot.slane %v3938, 4
      %v3941 = vshll.u32 %v3749, 16
      %v3943 = vrot.slane %v3941, 5
      %v3944 = vsel %vm238, %v3939, %v3943
      %v3946 = vshrl.u32 %v3750, 16
      %v3948 = vrot.slane %v3946, 4
      %v3949 = vshll.u32 %v3750, 16
      %v3951 = vrot.slane %v3949, 5
      %v3952 = vor.u32 %v3948, %v3951
      %v3953 = vrot.slane %v3952, 4
      %v3955 = vshll.u32 %v3751, 16
      %v3957 = vrot.slane %v3955, 5
      %v3958 = vsel %vm238, %v3953, %v3957
      %v3959 = vshrl.u32 %v3751, 16
      %v3961 = vrot.slane %v3959, 4
      %v3962 = vor.u32 %v3961, %v3957
      %v3963 = vrot.slane %v3962, 4
      %v3965 = vshll.u32 %v3752, 16
      %v3967 = vrot.slane %v3965, 5
      %v3968 = vsel %vm238, %v3963, %v3967
      %v3970 = vshrl.u32 %v3753, 16
      %v3972 = vrot.slane %v3970, 4
      %v3973 = vshll.u32 %v3753, 16
      %v3975 = vrot.slane %v3973, 5
      %v3976 = vor.u32 %v3972, %v3975
      %v3977 = vrot.slane %v3976, 4
      %v3979 = vshll.u32 %v3754, 16
      %v3981 = vrot.slane %v3979, 5
      %v3982 = vsel %vm238, %v3977, %v3981
      %v3983 = vshrl.u32 %v3754, 16
      %v3985 = vrot.slane %v3983, 4
      %v3986 = vor.u32 %v3985, %v3981
      %v3987 = vrot.slane %v3986, 4
      %v3989 = vshll.u32 %v3755, 16
      %v3991 = vrot.slane %v3989, 5
      %v3992 = vsel %vm238, %v3987, %v3991
      %v3994 = vshrl.u32 %v3756, 16
      %v3996 = vrot.slane %v3994, 4
      %v3997 = vshll.u32 %v3756, 16
      %v3999 = vrot.slane %v3997, 5
      %v4000 = vor.u32 %v3996, %v3999
      %v4001 = vrot.slane %v4000, 4
      %v4003 = vshll.u32 %v3757, 16
      %v4005 = vrot.slane %v4003, 5
      %v4006 = vsel %vm238, %v4001, %v4005
      %v4007 = vshrl.u32 %v3757, 16
      %v4009 = vrot.slane %v4007, 4
      %v4010 = vor.u32 %v4009, %v4005
      %v4011 = vrot.slane %v4010, 4
      %v4013 = vshll.u32 %v3758, 16
      %v4015 = vrot.slane %v4013, 5
      %v4016 = vsel %vm238, %v4011, %v4015
      %v4018 = vshrl.u32 %v3759, 16
      %v4020 = vrot.slane %v4018, 4
      %v4021 = vshll.u32 %v3759, 16
      %v4023 = vrot.slane %v4021, 5
      %v4024 = vor.u32 %v4020, %v4023
      %v4025 = vrot.slane %v4024, 4
      %v4027 = vshll.u32 %v3760, 16
      %v4029 = vrot.slane %v4027, 5
      %v4030 = vsel %vm238, %v4025, %v4029
      %v4031 = vshrl.u32 %v3760, 16
      %v4033 = vrot.slane %v4031, 4
      %v4034 = vor.u32 %v4033, %v4029
      %v4035 = vrot.slane %v4034, 4
      %v4037 = vshll.u32 %v3761, 16
      %v4039 = vrot.slane %v4037, 5
      %v4040 = vsel %vm238, %v4035, %v4039
      %v4042 = vshrl.u32 %v3762, 16
      %v4044 = vrot.slane %v4042, 4
      %v4045 = vshll.u32 %v3762, 16
      %v4047 = vrot.slane %v4045, 5
      %v4048 = vor.u32 %v4044, %v4047
      %v4049 = vrot.slane %v4048, 4
      %v4051 = vshll.u32 %v3763, 16
      %v4053 = vrot.slane %v4051, 5
      %v4054 = vsel %vm238, %v4049, %v4053
      %v4055 = vshrl.u32 %v3763, 16
      %v4057 = vrot.slane %v4055, 4
      %v4058 = vor.u32 %v4057, %v4053
      %v4059 = vrot.slane %v4058, 4
      %v4061 = vshll.u32 %v3764, 16
      %v4063 = vrot.slane %v4061, 5
      %v4064 = vsel %vm238, %v4059, %v4063
      %v4066 = vshrl.u32 %v3765, 16
      %v4068 = vrot.slane %v4066, 4
      %v4069 = vshll.u32 %v3765, 16
      %v4071 = vrot.slane %v4069, 5
      %v4072 = vor.u32 %v4068, %v4071
      %v4073 = vrot.slane %v4072, 4
      %v4075 = vshll.u32 %v3766, 16
      %v4077 = vrot.slane %v4075, 5
      %v4078 = vsel %vm238, %v4073, %v4077
      %v4079 = vshrl.u32 %v3766, 16
      %v4081 = vrot.slane %v4079, 4
      %v4082 = vor.u32 %v4081, %v4077
      %v4083 = vrot.slane %v4082, 4
      %v4085 = vshll.u32 %v3767, 16
      %v4087 = vrot.slane %v4085, 5
      %v4088 = vsel %vm238, %v4083, %v4087
      %v4090 = vshrl.u32 %v3768, 16
      %v4092 = vrot.slane %v4090, 4
      %v4093 = vshll.u32 %v3768, 16
      %v4095 = vrot.slane %v4093, 5
      %v4096 = vor.u32 %v4092, %v4095
      %v4097 = vrot.slane %v4096, 4
      %v4099 = vshll.u32 %v3769, 16
      %v4101 = vrot.slane %v4099, 5
      %v4102 = vsel %vm238, %v4097, %v4101
      %v4103 = vshrl.u32 %v3769, 16
      %v4105 = vrot.slane %v4103, 4
      %v4106 = vor.u32 %v4105, %v4101
      %v4107 = vrot.slane %v4106, 4
      %v4109 = vshll.u32 %v3770, 16
      %v4111 = vrot.slane %v4109, 5
      %v4112 = vsel %vm238, %v4107, %v4111
      %v4114 = vshrl.u32 %v3771, 16
      %v4116 = vrot.slane %v4114, 4
      %v4117 = vshll.u32 %v3771, 16
      %v4119 = vrot.slane %v4117, 5
      %v4120 = vor.u32 %v4116, %v4119
      %v4121 = vrot.slane %v4120, 4
      %v4123 = vshll.u32 %v3772, 16
      %v4125 = vrot.slane %v4123, 5
      %v4126 = vsel %vm238, %v4121, %v4125
      %v4127 = vshrl.u32 %v3772, 16
      %v4129 = vrot.slane %v4127, 4
      %v4130 = vor.u32 %v4129, %v4125
      %v4131 = vrot.slane %v4130, 4
      %v4133 = vshll.u32 %v3773, 16
      %v4135 = vrot.slane %v4133, 5
      %v4136 = vsel %vm238, %v4131, %v4135
      %v4138 = vshrl.u32 %v3774, 16
      %v4140 = vrot.slane %v4138, 4
      %v4141 = vshll.u32 %v3774, 16
      %v4143 = vrot.slane %v4141, 5
      %v4144 = vor.u32 %v4140, %v4143
      %v4145 = vrot.slane %v4144, 4
      %v4147 = vshll.u32 %v3775, 16
      %v4149 = vrot.slane %v4147, 5
      %v4150 = vsel %vm238, %v4145, %v4149
      %v4151 = vshrl.u32 %v3775, 16
      %v4153 = vrot.slane %v4151, 4
      %v4154 = vor.u32 %v4153, %v4149
      %v4155 = vrot.slane %v4154, 4
      %v4157 = vshll.u32 %v3776, 16
      %v4159 = vrot.slane %v4157, 5
      %v4160 = vsel %vm238, %v4155, %v4159
      %s4161 = scalar_lea.vmem %s1, 448
      %v4162 = vld [vmem:[%s4161] sm:$0xf]
      %v4163 = vld [vmem:[%s4161 + $0x4] sm:$0xf]
      %v4164 = vld [vmem:[%s4161 + $0x8] sm:$0xf]
      %v4165 = vld [vmem:[%s4161 + $0xc] sm:$0xf]
      %v4166 = vld [vmem:[%s4161 + $0x10] sm:$0xf]
      %v4167 = vld [vmem:[%s4161 + $0x14] sm:$0xf]
      %v4168 = vld [vmem:[%s4161 + $0x18] sm:$0xf]
      %v4169 = vld [vmem:[%s4161 + $0x1c] sm:$0xf]
      %v4170 = vld [vmem:[%s4161 + $0x20] sm:$0xf]
      %v4171 = vld [vmem:[%s4161 + $0x24] sm:$0xf]
      %v4172 = vld [vmem:[%s4161 + $0x28] sm:$0xf]
      %v4173 = vld [vmem:[%s4161 + $0x2c] sm:$0xf]
      %v4174 = vld [vmem:[%s4161 + $0x30] sm:$0xf]
      %v4175 = vld [vmem:[%s4161 + $0x34] sm:$0xf]
      %v4176 = vld [vmem:[%s4161 + $0x38] sm:$0xf]
      %v4177 = vld [vmem:[%s4161 + $0x3c] sm:$0xf]
      %v4178 = vunpack.c.l.b16 %v3790
      %v4179 = vunpack.c.l.b16 %v3800
      %v4180 = vunpack.c.l.b16 %v3814
      %v4181 = vunpack.c.l.b16 %v3824
      %v4182 = vunpack.c.l.b16 %v3838
      %v4183 = vunpack.c.l.b16 %v3848
      %v4184 = vunpack.c.l.b16 %v3862
      %v4185 = vunpack.c.l.b16 %v3872
      %v4186 = vunpack.c.l.b16 %v3886
      %v4187 = vunpack.c.l.b16 %v3896
      %v4188 = vunpack.c.l.b16 %v3910
      %v4189 = vunpack.c.l.b16 %v3920
      %v4190 = vunpack.c.l.b16 %v3934
      %v4191 = vunpack.c.l.b16 %v3944
      %v4192 = vunpack.c.l.b16 %v3958
      %v4193 = vunpack.c.l.b16 %v3968
      %v4194 = vunpack.c.l.b16 %v3982
      %v4195 = vunpack.c.l.b16 %v3992
      %v4196 = vunpack.c.l.b16 %v4006
      %v4197 = vunpack.c.l.b16 %v4016
      %v4198 = vunpack.c.l.b16 %v4030
      %v4199 = vunpack.c.l.b16 %v4040
      %v4200 = vunpack.c.l.b16 %v4054
      %v4201 = vunpack.c.l.b16 %v4064
      %v4202 = vunpack.c.l.b16 %v4078
      %v4203 = vunpack.c.l.b16 %v4088
      %v4204 = vunpack.c.l.b16 %v4102
      %v4205 = vunpack.c.l.b16 %v4112
      %v4206 = vunpack.c.l.b16 %v4126
      %v4207 = vunpack.c.l.b16 %v4136
      %v4208 = vunpack.c.l.b16 %v4150
      %v4209 = vunpack.c.l.b16 %v4160
      %v4210 = vpack.c.b16 %v4179, %v4178
      %v4211 = vpack.c.b16 %v4181, %v4180
      %v4212 = vpack.c.b16 %v4183, %v4182
      %v4213 = vpack.c.b16 %v4185, %v4184
      %v4214 = vpack.c.b16 %v4187, %v4186
      %v4215 = vpack.c.b16 %v4189, %v4188
      %v4216 = vpack.c.b16 %v4191, %v4190
      %v4217 = vpack.c.b16 %v4193, %v4192
      %v4218 = vpack.c.b16 %v4195, %v4194
      %v4219 = vpack.c.b16 %v4197, %v4196
      %v4220 = vpack.c.b16 %v4199, %v4198
      %v4221 = vpack.c.b16 %v4201, %v4200
      %v4222 = vpack.c.b16 %v4203, %v4202
      %v4223 = vpack.c.b16 %v4205, %v4204
      %v4224 = vpack.c.b16 %v4207, %v4206
      %v4225 = vpack.c.b16 %v4209, %v4208
      %v4258 = vunpack.c.l.b16 %v4162
      %v4259 = vunpack.c.l.b16 %v4163
      %v4260 = vunpack.c.l.b16 %v4164
      %v4261 = vunpack.c.l.b16 %v4165
      %v4262 = vunpack.c.l.b16 %v4166
      %v4263 = vunpack.c.l.b16 %v4167
      %v4264 = vunpack.c.l.b16 %v4168
      %v4265 = vunpack.c.l.b16 %v4169
      %v4266 = vunpack.c.l.b16 %v4170
      %v4267 = vunpack.c.l.b16 %v4171
      %v4268 = vunpack.c.l.b16 %v4172
      %v4269 = vunpack.c.l.b16 %v4173
      %v4270 = vunpack.c.l.b16 %v4174
      %v4271 = vunpack.c.l.b16 %v4175
      %v4272 = vunpack.c.l.b16 %v4176
      %v4273 = vunpack.c.l.b16 %v4177
      %v4274 = vpack.c.b16 %v4259, %v4258
      %v4275 = vpack.c.b16 %v4261, %v4260
      %v4276 = vpack.c.b16 %v4263, %v4262
      %v4277 = vpack.c.b16 %v4265, %v4264
      %v4278 = vpack.c.b16 %v4267, %v4266
      %v4279 = vpack.c.b16 %v4269, %v4268
      %v4280 = vpack.c.b16 %v4271, %v4270
      %v4281 = vpack.c.b16 %v4273, %v4272
      %4290 = vmatprep.subr.bf16.mxu0 0
      %4291 = vmatpush1.bf16.msra.mxu0 %v4281
      %4292 = vmatprep.subr.bf16.mxu0 0
      %4293 = vmatpush1.bf16.msra.mxu0 %v4280
      %4294 = vmatprep.subr.bf16.mxu0 0
      %4295 = vmatpush1.bf16.msra.mxu0 %v4279
      %4296 = vmatprep.subr.bf16.mxu0 0
      %4297 = vmatpush1.bf16.msra.mxu0 %v4278
      %4298 = vmatprep.subr.bf16.mxu0 0
      %4299 = vmatpush1.bf16.msra.mxu0 %v4277
      %4300 = vmatprep.subr.bf16.mxu0 0
      %4301 = vmatpush1.bf16.msra.mxu0 %v4276
      %4302 = vmatprep.subr.bf16.mxu0 0
      %4303 = vmatpush1.bf16.msra.mxu0 %v4275
      %4304 = vmatprep.subr.bf16.mxu0 0
      %4305 = vmatpush1.bf16.msra.mxu0 %v4274
      %4306 = vmatprep.subr.bf16.mxu0 0
      %4307 = vmatpush2.bf16.msra.mxu0 0
      %4308 = vmatprep.subr.bf16.mxu0 0
      %4309 = vmatpush2.bf16.msra.mxu0 0
      %4310 = vmatprep.subr.bf16.mxu0 0
      %4311 = vmatpush2.bf16.msra.mxu0 0
      %4312 = vmatprep.subr.bf16.mxu0 0
      %4313 = vmatpush2.bf16.msra.mxu0 0
      %4314 = vmatprep.subr.bf16.mxu0 0
      %4315 = vmatpush2.bf16.msra.mxu0 0
      %4316 = vmatprep.subr.bf16.mxu0 0
      %4317 = vmatpush2.bf16.msra.mxu0 0
      %4318 = vmatprep.subr.bf16.mxu0 0
      %4319 = vmatpush2.bf16.msra.mxu0 0
      %4320 = vmatprep.subr.bf16.mxu0 0
      %4321 = vmatpush2.bf16.msra.mxu0 0
      %4322 = vmatprep.mubr.bf16.mxu0 0
      %4323 = vmatmul.mubr.bf16.gmra.mxu0 %v4210
      %v4324 = vpop.f32.mrf.mxu0
      %v4325 = vadd.f32 0.0, %v4324
      %v4326 = vpop.f32.mrf.mxu0
      %v4327 = vpop.f32.mrf.mxu0
      %v4328 = vadd.f32 0.0, %v4327
      %v4329 = vpop.f32.mrf.mxu0
      %4330 = vmatprep.mubr.bf16.mxu0 0
      %4331 = vmatmul.mubr.bf16.gmra.mxu0 %v4211
      %v4332 = vpop.f32.mrf.mxu0
      %v4333 = vadd.f32 0.0, %v4332
      %v4334 = vpop.f32.mrf.mxu0
      %v4335 = vpop.f32.mrf.mxu0
      %v4336 = vadd.f32 0.0, %v4335
      %v4337 = vpop.f32.mrf.mxu0
      %4338 = vmatprep.mubr.bf16.mxu0 0
      %4339 = vmatmul.mubr.bf16.gmra.mxu0 %v4212
      %v4340 = vpop.f32.mrf.mxu0
      %v4341 = vadd.f32 0.0, %v4340
      %v4342 = vpop.f32.mrf.mxu0
      %v4343 = vpop.f32.mrf.mxu0
      %v4344 = vadd.f32 0.0, %v4343
      %v4345 = vpop.f32.mrf.mxu0
      %4346 = vmatprep.mubr.bf16.mxu0 0
      %4347 = vmatmul.mubr.bf16.gmra.mxu0 %v4213
      %v4348 = vpop.f32.mrf.mxu0
      %v4349 = vadd.f32 0.0, %v4348
      %v4350 = vpop.f32.mrf.mxu0
      %v4351 = vpop.f32.mrf.mxu0
      %v4352 = vadd.f32 0.0, %v4351
      %v4353 = vpop.f32.mrf.mxu0
      %4354 = vmatprep.mubr.bf16.mxu0 0
      %4355 = vmatmul.mubr.bf16.gmra.mxu0 %v4214
      %v4356 = vpop.f32.mrf.mxu0
      %v4357 = vadd.f32 0.0, %v4356
      %v4358 = vpop.f32.mrf.mxu0
      %v4359 = vpop.f32.mrf.mxu0
      %v4360 = vadd.f32 0.0, %v4359
      %v4361 = vpop.f32.mrf.mxu0
      %4362 = vmatprep.mubr.bf16.mxu0 0
      %4363 = vmatmul.mubr.bf16.gmra.mxu0 %v4215
      %v4364 = vpop.f32.mrf.mxu0
      %v4365 = vadd.f32 0.0, %v4364
      %v4366 = vpop.f32.mrf.mxu0
      %v4367 = vpop.f32.mrf.mxu0
      %v4368 = vadd.f32 0.0, %v4367
      %v4369 = vpop.f32.mrf.mxu0
      %4370 = vmatprep.mubr.bf16.mxu0 0
      %4371 = vmatmul.mubr.bf16.gmra.mxu0 %v4216
      %v4372 = vpop.f32.mrf.mxu0
      %v4373 = vadd.f32 0.0, %v4372
      %v4374 = vpop.f32.mrf.mxu0
      %v4375 = vpop.f32.mrf.mxu0
      %v4376 = vadd.f32 0.0, %v4375
      %v4377 = vpop.f32.mrf.mxu0
      %4378 = vmatprep.mubr.bf16.mxu0 0
      %4379 = vmatmul.mubr.bf16.gmra.mxu0 %v4217
      %v4380 = vpop.f32.mrf.mxu0
      %v4381 = vadd.f32 0.0, %v4380
      %v4382 = vpop.f32.mrf.mxu0
      %v4383 = vpop.f32.mrf.mxu0
      %v4384 = vadd.f32 0.0, %v4383
      %v4385 = vpop.f32.mrf.mxu0
      %4386 = vmatprep.mubr.bf16.mxu0 0
      %4387 = vmatmul.mubr.bf16.gmra.mxu0 %v4218
      %v4388 = vpop.f32.mrf.mxu0
      %v4389 = vadd.f32 0.0, %v4388
      %v4390 = vpop.f32.mrf.mxu0
      %v4391 = vpop.f32.mrf.mxu0
      %v4392 = vadd.f32 0.0, %v4391
      %v4393 = vpop.f32.mrf.mxu0
      %4394 = vmatprep.mubr.bf16.mxu0 0
      %4395 = vmatmul.mubr.bf16.gmra.mxu0 %v4219
      %v4396 = vpop.f32.mrf.mxu0
      %v4397 = vadd.f32 0.0, %v4396
      %v4398 = vpop.f32.mrf.mxu0
      %v4399 = vpop.f32.mrf.mxu0
      %v4400 = vadd.f32 0.0, %v4399
      %v4401 = vpop.f32.mrf.mxu0
      %4402 = vmatprep.mubr.bf16.mxu0 0
      %4403 = vmatmul.mubr.bf16.gmra.mxu0 %v4220
      %v4404 = vpop.f32.mrf.mxu0
      %v4405 = vadd.f32 0.0, %v4404
      %v4406 = vpop.f32.mrf.mxu0
      %v4407 = vpop.f32.mrf.mxu0
      %v4408 = vadd.f32 0.0, %v4407
      %v4409 = vpop.f32.mrf.mxu0
      %4410 = vmatprep.mubr.bf16.mxu0 0
      %4411 = vmatmul.mubr.bf16.gmra.mxu0 %v4221
      %v4412 = vpop.f32.mrf.mxu0
      %v4413 = vadd.f32 0.0, %v4412
      %v4414 = vpop.f32.mrf.mxu0
      %v4415 = vpop.f32.mrf.mxu0
      %v4416 = vadd.f32 0.0, %v4415
      %v4417 = vpop.f32.mrf.mxu0
      %4418 = vmatprep.mubr.bf16.mxu0 0
      %4419 = vmatmul.mubr.bf16.gmra.mxu0 %v4222
      %v4420 = vpop.f32.mrf.mxu0
      %v4421 = vadd.f32 0.0, %v4420
      %v4422 = vpop.f32.mrf.mxu0
      %v4423 = vpop.f32.mrf.mxu0
      %v4424 = vadd.f32 0.0, %v4423
      %v4425 = vpop.f32.mrf.mxu0
      %4426 = vmatprep.mubr.bf16.mxu0 0
      %4427 = vmatmul.mubr.bf16.gmra.mxu0 %v4223
      %v4428 = vpop.f32.mrf.mxu0
      %v4429 = vadd.f32 0.0, %v4428
      %v4430 = vpop.f32.mrf.mxu0
      %v4431 = vpop.f32.mrf.mxu0
      %v4432 = vadd.f32 0.0, %v4431
      %v4433 = vpop.f32.mrf.mxu0
      %4434 = vmatprep.mubr.bf16.mxu0 0
      %4435 = vmatmul.mubr.bf16.gmra.mxu0 %v4224
      %v4436 = vpop.f32.mrf.mxu0
      %v4437 = vadd.f32 0.0, %v4436
      %v4438 = vpop.f32.mrf.mxu0
      %v4439 = vpop.f32.mrf.mxu0
      %v4440 = vadd.f32 0.0, %v4439
      %v4441 = vpop.f32.mrf.mxu0
      %4442 = vmatprep.mubr.bf16.mxu0 0
      %4443 = vmatmul.mubr.bf16.gmra.mxu0 %v4225
      %v4444 = vpop.f32.mrf.mxu0
      %v4445 = vadd.f32 0.0, %v4444
      %v4446 = vpop.f32.mrf.mxu0
      %v4447 = vpop.f32.mrf.mxu0
      %v4448 = vadd.f32 0.0, %v4447
      %v4449 = vpop.f32.mrf.mxu0
      %4450 = vdwg.mxu0
      %v4451 = vadd.f32 %v3697, %v4325
      %v4452 = vadd.f32 %v3698, %v4328
      %v4453 = vadd.f32 %v3699, %v4333
      %v4454 = vadd.f32 %v3700, %v4336
      %v4455 = vadd.f32 %v3701, %v4341
      %v4456 = vadd.f32 %v3702, %v4344
      %v4457 = vadd.f32 %v3703, %v4349
      %v4458 = vadd.f32 %v3704, %v4352
      %v4459 = vadd.f32 %v3705, %v4357
      %v4460 = vadd.f32 %v3706, %v4360
      %v4461 = vadd.f32 %v3707, %v4365
      %v4462 = vadd.f32 %v3708, %v4368
      %v4463 = vadd.f32 %v3709, %v4373
      %v4464 = vadd.f32 %v3710, %v4376
      %v4465 = vadd.f32 %v3711, %v4381
      %v4466 = vadd.f32 %v3712, %v4384
      %v4467 = vadd.f32 %v3713, %v4389
      %v4468 = vadd.f32 %v3714, %v4392
      %v4469 = vadd.f32 %v3715, %v4397
      %v4470 = vadd.f32 %v3716, %v4400
      %v4471 = vadd.f32 %v3717, %v4405
      %v4472 = vadd.f32 %v3718, %v4408
      %v4473 = vadd.f32 %v3719, %v4413
      %v4474 = vadd.f32 %v3720, %v4416
      %v4475 = vadd.f32 %v3721, %v4421
      %v4476 = vadd.f32 %v3722, %v4424
      %v4477 = vadd.f32 %v3723, %v4429
      %v4478 = vadd.f32 %v3724, %v4432
      %v4479 = vadd.f32 %v3725, %v4437
      %v4480 = vadd.f32 %v3726, %v4440
      %v4481 = vadd.f32 %v3727, %v4445
      %v4482 = vadd.f32 %v3728, %v4448
      %v4483 = vld [vmem:[%s3342] sm:$0xe]
      %v4484 = vld [vmem:[%s3342 + $0xc] sm:$0xe]
      %v4485 = vld [vmem:[%s3342 + $0x18] sm:$0xe]
      %v4486 = vld [vmem:[%s3342 + $0x24] sm:$0xe]
      %v4487 = vld [vmem:[%s3342 + $0x30] sm:$0xe]
      %v4488 = vld [vmem:[%s3342 + $0x3c] sm:$0xe]
      %v4489 = vld [vmem:[%s3342 + $0x48] sm:$0xe]
      %v4490 = vld [vmem:[%s3342 + $0x54] sm:$0xe]
      %v4491 = vld [vmem:[%s3342 + $0x60] sm:$0xe]
      %v4492 = vld [vmem:[%s3342 + $0x6c] sm:$0xe]
      %v4493 = vld [vmem:[%s3342 + $0x78] sm:$0xe]
      %v4494 = vld [vmem:[%s3342 + $0x84] sm:$0xe]
      %v4495 = vld [vmem:[%s3342 + $0x90] sm:$0xe]
      %v4496 = vld [vmem:[%s3342 + $0x9c] sm:$0xe]
      %v4497 = vld [vmem:[%s3342 + $0xa8] sm:$0xe]
      %v4498 = vld [vmem:[%s3342 + $0xb4] sm:$0xe]
      %v4547 = vrot.slane %v4483, 5
      %v4548 = vrot.slane %v4547, 4
      %v4549 = vrot.slane %v3730, 5
      %v4550 = vsel %vm1268, %v4548, %v4549
      %v4551 = vrot.slane %v4549, 4
      %v4552 = vrot.slane %v3731, 5
      %v4553 = vsel %vm1268, %v4551, %v4552
      %v4554 = vrot.slane %v4484, 5
      %v4555 = vrot.slane %v4554, 4
      %v4556 = vrot.slane %v3733, 5
      %v4557 = vsel %vm1268, %v4555, %v4556
      %v4558 = vrot.slane %v4556, 4
      %v4559 = vrot.slane %v3734, 5
      %v4560 = vsel %vm1268, %v4558, %v4559
      %v4561 = vrot.slane %v4485, 5
      %v4562 = vrot.slane %v4561, 4
      %v4563 = vrot.slane %v3736, 5
      %v4564 = vsel %vm1268, %v4562, %v4563
      %v4565 = vrot.slane %v4563, 4
      %v4566 = vrot.slane %v3737, 5
      %v4567 = vsel %vm1268, %v4565, %v4566
      %v4568 = vrot.slane %v4486, 5
      %v4569 = vrot.slane %v4568, 4
      %v4570 = vrot.slane %v3739, 5
      %v4571 = vsel %vm1268, %v4569, %v4570
      %v4572 = vrot.slane %v4570, 4
      %v4573 = vrot.slane %v3740, 5
      %v4574 = vsel %vm1268, %v4572, %v4573
      %v4575 = vrot.slane %v4487, 5
      %v4576 = vrot.slane %v4575, 4
      %v4577 = vrot.slane %v3742, 5
      %v4578 = vsel %vm1268, %v4576, %v4577
      %v4579 = vrot.slane %v4577, 4
      %v4580 = vrot.slane %v3743, 5
      %v4581 = vsel %vm1268, %v4579, %v4580
      %v4582 = vrot.slane %v4488, 5
      %v4583 = vrot.slane %v4582, 4
      %v4584 = vrot.slane %v3745, 5
      %v4585 = vsel %vm1268, %v4583, %v4584
      %v4586 = vrot.slane %v4584, 4
      %v4587 = vrot.slane %v3746, 5
      %v4588 = vsel %vm1268, %v4586, %v4587
      %v4589 = vrot.slane %v4489, 5
      %v4590 = vrot.slane %v4589, 4
      %v4591 = vrot.slane %v3748, 5
      %v4592 = vsel %vm1268, %v4590, %v4591
      %v4593 = vrot.slane %v4591, 4
      %v4594 = vrot.slane %v3749, 5
      %v4595 = vsel %vm1268, %v4593, %v4594
      %v4596 = vrot.slane %v4490, 5
      %v4597 = vrot.slane %v4596, 4
      %v4598 = vrot.slane %v3751, 5
      %v4599 = vsel %vm1268, %v4597, %v4598
      %v4600 = vrot.slane %v4598, 4
      %v4601 = vrot.slane %v3752, 5
      %v4602 = vsel %vm1268, %v4600, %v4601
      %v4603 = vrot.slane %v4491, 5
      %v4604 = vrot.slane %v4603, 4
      %v4605 = vrot.slane %v3754, 5
      %v4606 = vsel %vm1268, %v4604, %v4605
      %v4607 = vrot.slane %v4605, 4
      %v4608 = vrot.slane %v3755, 5
      %v4609 = vsel %vm1268, %v4607, %v4608
      %v4610 = vrot.slane %v4492, 5
      %v4611 = vrot.slane %v4610, 4
      %v4612 = vrot.slane %v3757, 5
      %v4613 = vsel %vm1268, %v4611, %v4612
      %v4614 = vrot.slane %v4612, 4
      %v4615 = vrot.slane %v3758, 5
      %v4616 = vsel %vm1268, %v4614, %v4615
      %v4617 = vrot.slane %v4493, 5
      %v4618 = vrot.slane %v4617, 4
      %v4619 = vrot.slane %v3760, 5
      %v4620 = vsel %vm1268, %v4618, %v4619
      %v4621 = vrot.slane %v4619, 4
      %v4622 = vrot.slane %v3761, 5
      %v4623 = vsel %vm1268, %v4621, %v4622
      %v4624 = vrot.slane %v4494, 5
      %v4625 = vrot.slane %v4624, 4
      %v4626 = vrot.slane %v3763, 5
      %v4627 = vsel %vm1268, %v4625, %v4626
      %v4628 = vrot.slane %v4626, 4
      %v4629 = vrot.slane %v3764, 5
      %v4630 = vsel %vm1268, %v4628, %v4629
      %v4631 = vrot.slane %v4495, 5
      %v4632 = vrot.slane %v4631, 4
      %v4633 = vrot.slane %v3766, 5
      %v4634 = vsel %vm1268, %v4632, %v4633
      %v4635 = vrot.slane %v4633, 4
      %v4636 = vrot.slane %v3767, 5
      %v4637 = vsel %vm1268, %v4635, %v4636
      %v4638 = vrot.slane %v4496, 5
      %v4639 = vrot.slane %v4638, 4
      %v4640 = vrot.slane %v3769, 5
      %v4641 = vsel %vm1268, %v4639, %v4640
      %v4642 = vrot.slane %v4640, 4
      %v4643 = vrot.slane %v3770, 5
      %v4644 = vsel %vm1268, %v4642, %v4643
      %v4645 = vrot.slane %v4497, 5
      %v4646 = vrot.slane %v4645, 4
      %v4647 = vrot.slane %v3772, 5
      %v4648 = vsel %vm1268, %v4646, %v4647
      %v4649 = vrot.slane %v4647, 4
      %v4650 = vrot.slane %v3773, 5
      %v4651 = vsel %vm1268, %v4649, %v4650
      %v4652 = vrot.slane %v4498, 5
      %v4653 = vrot.slane %v4652, 4
      %v4654 = vrot.slane %v3775, 5
      %v4655 = vsel %vm1268, %v4653, %v4654
      %v4656 = vrot.slane %v4654, 4
      %v4657 = vrot.slane %v3776, 5
      %v4658 = vsel %vm1268, %v4656, %v4657
      %s4659 = scalar_lea.vmem %s1, 512
      %v4660 = vld [vmem:[%s4659] sm:$0xf]
      %v4661 = vld [vmem:[%s4659 + $0x4] sm:$0xf]
      %v4662 = vld [vmem:[%s4659 + $0x8] sm:$0xf]
      %v4663 = vld [vmem:[%s4659 + $0xc] sm:$0xf]
      %v4664 = vld [vmem:[%s4659 + $0x10] sm:$0xf]
      %v4665 = vld [vmem:[%s4659 + $0x14] sm:$0xf]
      %v4666 = vld [vmem:[%s4659 + $0x18] sm:$0xf]
      %v4667 = vld [vmem:[%s4659 + $0x1c] sm:$0xf]
      %v4668 = vld [vmem:[%s4659 + $0x20] sm:$0xf]
      %v4669 = vld [vmem:[%s4659 + $0x24] sm:$0xf]
      %v4670 = vld [vmem:[%s4659 + $0x28] sm:$0xf]
      %v4671 = vld [vmem:[%s4659 + $0x2c] sm:$0xf]
      %v4672 = vld [vmem:[%s4659 + $0x30] sm:$0xf]
      %v4673 = vld [vmem:[%s4659 + $0x34] sm:$0xf]
      %v4674 = vld [vmem:[%s4659 + $0x38] sm:$0xf]
      %v4675 = vld [vmem:[%s4659 + $0x3c] sm:$0xf]
      %v4676 = vunpack.c.l.b16 %v4550
      %v4677 = vunpack.c.l.b16 %v4553
      %v4678 = vunpack.c.l.b16 %v4557
      %v4679 = vunpack.c.l.b16 %v4560
      %v4680 = vunpack.c.l.b16 %v4564
      %v4681 = vunpack.c.l.b16 %v4567
      %v4682 = vunpack.c.l.b16 %v4571
      %v4683 = vunpack.c.l.b16 %v4574
      %v4684 = vunpack.c.l.b16 %v4578
      %v4685 = vunpack.c.l.b16 %v4581
      %v4686 = vunpack.c.l.b16 %v4585
      %v4687 = vunpack.c.l.b16 %v4588
      %v4688 = vunpack.c.l.b16 %v4592
      %v4689 = vunpack.c.l.b16 %v4595
      %v4690 = vunpack.c.l.b16 %v4599
      %v4691 = vunpack.c.l.b16 %v4602
      %v4692 = vunpack.c.l.b16 %v4606
      %v4693 = vunpack.c.l.b16 %v4609
      %v4694 = vunpack.c.l.b16 %v4613
      %v4695 = vunpack.c.l.b16 %v4616
      %v4696 = vunpack.c.l.b16 %v4620
      %v4697 = vunpack.c.l.b16 %v4623
      %v4698 = vunpack.c.l.b16 %v4627
      %v4699 = vunpack.c.l.b16 %v4630
      %v4700 = vunpack.c.l.b16 %v4634
      %v4701 = vunpack.c.l.b16 %v4637
      %v4702 = vunpack.c.l.b16 %v4641
      %v4703 = vunpack.c.l.b16 %v4644
      %v4704 = vunpack.c.l.b16 %v4648
      %v4705 = vunpack.c.l.b16 %v4651
      %v4706 = vunpack.c.l.b16 %v4655
      %v4707 = vunpack.c.l.b16 %v4658
      %v4708 = vpack.c.b16 %v4677, %v4676
      %v4709 = vpack.c.b16 %v4679, %v4678
      %v4710 = vpack.c.b16 %v4681, %v4680
      %v4711 = vpack.c.b16 %v4683, %v4682
      %v4712 = vpack.c.b16 %v4685, %v4684
      %v4713 = vpack.c.b16 %v4687, %v4686
      %v4714 = vpack.c.b16 %v4689, %v4688
      %v4715 = vpack.c.b16 %v4691, %v4690
      %v4716 = vpack.c.b16 %v4693, %v4692
      %v4717 = vpack.c.b16 %v4695, %v4694
      %v4718 = vpack.c.b16 %v4697, %v4696
      %v4719 = vpack.c.b16 %v4699, %v4698
      %v4720 = vpack.c.b16 %v4701, %v4700
      %v4721 = vpack.c.b16 %v4703, %v4702
      %v4722 = vpack.c.b16 %v4705, %v4704
      %v4723 = vpack.c.b16 %v4707, %v4706
      %v4756 = vunpack.c.l.b16 %v4660
      %v4757 = vunpack.c.l.b16 %v4661
      %v4758 = vunpack.c.l.b16 %v4662
      %v4759 = vunpack.c.l.b16 %v4663
      %v4760 = vunpack.c.l.b16 %v4664
      %v4761 = vunpack.c.l.b16 %v4665
      %v4762 = vunpack.c.l.b16 %v4666
      %v4763 = vunpack.c.l.b16 %v4667
      %v4764 = vunpack.c.l.b16 %v4668
      %v4765 = vunpack.c.l.b16 %v4669
      %v4766 = vunpack.c.l.b16 %v4670
      %v4767 = vunpack.c.l.b16 %v4671
      %v4768 = vunpack.c.l.b16 %v4672
      %v4769 = vunpack.c.l.b16 %v4673
      %v4770 = vunpack.c.l.b16 %v4674
      %v4771 = vunpack.c.l.b16 %v4675
      %v4772 = vpack.c.b16 %v4757, %v4756
      %v4773 = vpack.c.b16 %v4759, %v4758
      %v4774 = vpack.c.b16 %v4761, %v4760
      %v4775 = vpack.c.b16 %v4763, %v4762
      %v4776 = vpack.c.b16 %v4765, %v4764
      %v4777 = vpack.c.b16 %v4767, %v4766
      %v4778 = vpack.c.b16 %v4769, %v4768
      %v4779 = vpack.c.b16 %v4771, %v4770
      %4788 = vmatprep.subr.bf16.mxu0 0
      %4789 = vmatpush1.bf16.msra.mxu0 %v4779
      %4790 = vmatprep.subr.bf16.mxu0 0
      %4791 = vmatpush1.bf16.msra.mxu0 %v4778
      %4792 = vmatprep.subr.bf16.mxu0 0
      %4793 = vmatpush1.bf16.msra.mxu0 %v4777
      %4794 = vmatprep.subr.bf16.mxu0 0
      %4795 = vmatpush1.bf16.msra.mxu0 %v4776
      %4796 = vmatprep.subr.bf16.mxu0 0
      %4797 = vmatpush1.bf16.msra.mxu0 %v4775
      %4798 = vmatprep.subr.bf16.mxu0 0
      %4799 = vmatpush1.bf16.msra.mxu0 %v4774
      %4800 = vmatprep.subr.bf16.mxu0 0
      %4801 = vmatpush1.bf16.msra.mxu0 %v4773
      %4802 = vmatprep.subr.bf16.mxu0 0
      %4803 = vmatpush1.bf16.msra.mxu0 %v4772
      %4804 = vmatprep.subr.bf16.mxu0 0
      %4805 = vmatpush2.bf16.msra.mxu0 0
      %4806 = vmatprep.subr.bf16.mxu0 0
      %4807 = vmatpush2.bf16.msra.mxu0 0
      %4808 = vmatprep.subr.bf16.mxu0 0
      %4809 = vmatpush2.bf16.msra.mxu0 0
      %4810 = vmatprep.subr.bf16.mxu0 0
      %4811 = vmatpush2.bf16.msra.mxu0 0
      %4812 = vmatprep.subr.bf16.mxu0 0
      %4813 = vmatpush2.bf16.msra.mxu0 0
      %4814 = vmatprep.subr.bf16.mxu0 0
      %4815 = vmatpush2.bf16.msra.mxu0 0
      %4816 = vmatprep.subr.bf16.mxu0 0
      %4817 = vmatpush2.bf16.msra.mxu0 0
      %4818 = vmatprep.subr.bf16.mxu0 0
      %4819 = vmatpush2.bf16.msra.mxu0 0
      %4820 = vmatprep.mubr.bf16.mxu0 0
      %4821 = vmatmul.mubr.bf16.gmra.mxu0 %v4708
      %v4822 = vpop.f32.mrf.mxu0
      %v4823 = vadd.f32 0.0, %v4822
      %v4824 = vpop.f32.mrf.mxu0
      %v4825 = vpop.f32.mrf.mxu0
      %v4826 = vadd.f32 0.0, %v4825
      %v4827 = vpop.f32.mrf.mxu0
      %4828 = vmatprep.mubr.bf16.mxu0 0
      %4829 = vmatmul.mubr.bf16.gmra.mxu0 %v4709
      %v4830 = vpop.f32.mrf.mxu0
      %v4831 = vadd.f32 0.0, %v4830
      %v4832 = vpop.f32.mrf.mxu0
      %v4833 = vpop.f32.mrf.mxu0
      %v4834 = vadd.f32 0.0, %v4833
      %v4835 = vpop.f32.mrf.mxu0
      %4836 = vmatprep.mubr.bf16.mxu0 0
      %4837 = vmatmul.mubr.bf16.gmra.mxu0 %v4710
      %v4838 = vpop.f32.mrf.mxu0
      %v4839 = vadd.f32 0.0, %v4838
      %v4840 = vpop.f32.mrf.mxu0
      %v4841 = vpop.f32.mrf.mxu0
      %v4842 = vadd.f32 0.0, %v4841
      %v4843 = vpop.f32.mrf.mxu0
      %4844 = vmatprep.mubr.bf16.mxu0 0
      %4845 = vmatmul.mubr.bf16.gmra.mxu0 %v4711
      %v4846 = vpop.f32.mrf.mxu0
      %v4847 = vadd.f32 0.0, %v4846
      %v4848 = vpop.f32.mrf.mxu0
      %v4849 = vpop.f32.mrf.mxu0
      %v4850 = vadd.f32 0.0, %v4849
      %v4851 = vpop.f32.mrf.mxu0
      %4852 = vmatprep.mubr.bf16.mxu0 0
      %4853 = vmatmul.mubr.bf16.gmra.mxu0 %v4712
      %v4854 = vpop.f32.mrf.mxu0
      %v4855 = vadd.f32 0.0, %v4854
      %v4856 = vpop.f32.mrf.mxu0
      %v4857 = vpop.f32.mrf.mxu0
      %v4858 = vadd.f32 0.0, %v4857
      %v4859 = vpop.f32.mrf.mxu0
      %4860 = vmatprep.mubr.bf16.mxu0 0
      %4861 = vmatmul.mubr.bf16.gmra.mxu0 %v4713
      %v4862 = vpop.f32.mrf.mxu0
      %v4863 = vadd.f32 0.0, %v4862
      %v4864 = vpop.f32.mrf.mxu0
      %v4865 = vpop.f32.mrf.mxu0
      %v4866 = vadd.f32 0.0, %v4865
      %v4867 = vpop.f32.mrf.mxu0
      %4868 = vmatprep.mubr.bf16.mxu0 0
      %4869 = vmatmul.mubr.bf16.gmra.mxu0 %v4714
      %v4870 = vpop.f32.mrf.mxu0
      %v4871 = vadd.f32 0.0, %v4870
      %v4872 = vpop.f32.mrf.mxu0
      %v4873 = vpop.f32.mrf.mxu0
      %v4874 = vadd.f32 0.0, %v4873
      %v4875 = vpop.f32.mrf.mxu0
      %4876 = vmatprep.mubr.bf16.mxu0 0
      %4877 = vmatmul.mubr.bf16.gmra.mxu0 %v4715
      %v4878 = vpop.f32.mrf.mxu0
      %v4879 = vadd.f32 0.0, %v4878
      %v4880 = vpop.f32.mrf.mxu0
      %v4881 = vpop.f32.mrf.mxu0
      %v4882 = vadd.f32 0.0, %v4881
      %v4883 = vpop.f32.mrf.mxu0
      %4884 = vmatprep.mubr.bf16.mxu0 0
      %4885 = vmatmul.mubr.bf16.gmra.mxu0 %v4716
      %v4886 = vpop.f32.mrf.mxu0
      %v4887 = vadd.f32 0.0, %v4886
      %v4888 = vpop.f32.mrf.mxu0
      %v4889 = vpop.f32.mrf.mxu0
      %v4890 = vadd.f32 0.0, %v4889
      %v4891 = vpop.f32.mrf.mxu0
      %4892 = vmatprep.mubr.bf16.mxu0 0
      %4893 = vmatmul.mubr.bf16.gmra.mxu0 %v4717
      %v4894 = vpop.f32.mrf.mxu0
      %v4895 = vadd.f32 0.0, %v4894
      %v4896 = vpop.f32.mrf.mxu0
      %v4897 = vpop.f32.mrf.mxu0
      %v4898 = vadd.f32 0.0, %v4897
      %v4899 = vpop.f32.mrf.mxu0
      %4900 = vmatprep.mubr.bf16.mxu0 0
      %4901 = vmatmul.mubr.bf16.gmra.mxu0 %v4718
      %v4902 = vpop.f32.mrf.mxu0
      %v4903 = vadd.f32 0.0, %v4902
      %v4904 = vpop.f32.mrf.mxu0
      %v4905 = vpop.f32.mrf.mxu0
      %v4906 = vadd.f32 0.0, %v4905
      %v4907 = vpop.f32.mrf.mxu0
      %4908 = vmatprep.mubr.bf16.mxu0 0
      %4909 = vmatmul.mubr.bf16.gmra.mxu0 %v4719
      %v4910 = vpop.f32.mrf.mxu0
      %v4911 = vadd.f32 0.0, %v4910
      %v4912 = vpop.f32.mrf.mxu0
      %v4913 = vpop.f32.mrf.mxu0
      %v4914 = vadd.f32 0.0, %v4913
      %v4915 = vpop.f32.mrf.mxu0
      %4916 = vmatprep.mubr.bf16.mxu0 0
      %4917 = vmatmul.mubr.bf16.gmra.mxu0 %v4720
      %v4918 = vpop.f32.mrf.mxu0
      %v4919 = vadd.f32 0.0, %v4918
      %v4920 = vpop.f32.mrf.mxu0
      %v4921 = vpop.f32.mrf.mxu0
      %v4922 = vadd.f32 0.0, %v4921
      %v4923 = vpop.f32.mrf.mxu0
      %4924 = vmatprep.mubr.bf16.mxu0 0
      %4925 = vmatmul.mubr.bf16.gmra.mxu0 %v4721
      %v4926 = vpop.f32.mrf.mxu0
      %v4927 = vadd.f32 0.0, %v4926
      %v4928 = vpop.f32.mrf.mxu0
      %v4929 = vpop.f32.mrf.mxu0
      %v4930 = vadd.f32 0.0, %v4929
      %v4931 = vpop.f32.mrf.mxu0
      %4932 = vmatprep.mubr.bf16.mxu0 0
      %4933 = vmatmul.mubr.bf16.gmra.mxu0 %v4722
      %v4934 = vpop.f32.mrf.mxu0
      %v4935 = vadd.f32 0.0, %v4934
      %v4936 = vpop.f32.mrf.mxu0
      %v4937 = vpop.f32.mrf.mxu0
      %v4938 = vadd.f32 0.0, %v4937
      %v4939 = vpop.f32.mrf.mxu0
      %4940 = vmatprep.mubr.bf16.mxu0 0
      %4941 = vmatmul.mubr.bf16.gmra.mxu0 %v4723
      %v4942 = vpop.f32.mrf.mxu0
      %v4943 = vadd.f32 0.0, %v4942
      %v4944 = vpop.f32.mrf.mxu0
      %v4945 = vpop.f32.mrf.mxu0
      %v4946 = vadd.f32 0.0, %v4945
      %v4947 = vpop.f32.mrf.mxu0
      %4948 = vdwg.mxu0
      %v4949 = vadd.f32 %v4451, %v4823
      %v4950 = vadd.f32 %v4452, %v4826
      %v4951 = vadd.f32 %v4453, %v4831
      %v4952 = vadd.f32 %v4454, %v4834
      %v4953 = vadd.f32 %v4455, %v4839
      %v4954 = vadd.f32 %v4456, %v4842
      %v4955 = vadd.f32 %v4457, %v4847
      %v4956 = vadd.f32 %v4458, %v4850
      %v4957 = vadd.f32 %v4459, %v4855
      %v4958 = vadd.f32 %v4460, %v4858
      %v4959 = vadd.f32 %v4461, %v4863
      %v4960 = vadd.f32 %v4462, %v4866
      %v4961 = vadd.f32 %v4463, %v4871
      %v4962 = vadd.f32 %v4464, %v4874
      %v4963 = vadd.f32 %v4465, %v4879
      %v4964 = vadd.f32 %v4466, %v4882
      %v4965 = vadd.f32 %v4467, %v4887
      %v4966 = vadd.f32 %v4468, %v4890
      %v4967 = vadd.f32 %v4469, %v4895
      %v4968 = vadd.f32 %v4470, %v4898
      %v4969 = vadd.f32 %v4471, %v4903
      %v4970 = vadd.f32 %v4472, %v4906
      %v4971 = vadd.f32 %v4473, %v4911
      %v4972 = vadd.f32 %v4474, %v4914
      %v4973 = vadd.f32 %v4475, %v4919
      %v4974 = vadd.f32 %v4476, %v4922
      %v4975 = vadd.f32 %v4477, %v4927
      %v4976 = vadd.f32 %v4478, %v4930
      %v4977 = vadd.f32 %v4479, %v4935
      %v4978 = vadd.f32 %v4480, %v4938
      %v4979 = vadd.f32 %v4481, %v4943
      %v4980 = vadd.f32 %v4482, %v4946
      %v4981 = vld [vmem:[%s2] sm:$0x1]
      %v4983 = vlaneseq
      %v4984 = vshrl.u32 %v4983, 7
      %v4985 = vsub.s32 0, %v4984
      %v4986 = vrot.slane %v4981, %v4985
      %v4988 = vadd.f32 %v4949, %v4986
      %v4989 = vadd.f32 %v4950, %v4986
      %v4990 = vadd.f32 %v4951, %v4986
      %v4991 = vadd.f32 %v4952, %v4986
      %v4992 = vadd.f32 %v4953, %v4986
      %v4993 = vadd.f32 %v4954, %v4986
      %v4994 = vadd.f32 %v4955, %v4986
      %v4995 = vadd.f32 %v4956, %v4986
      %v4996 = vadd.f32 %v4957, %v4986
      %v4997 = vadd.f32 %v4958, %v4986
      %v4998 = vadd.f32 %v4959, %v4986
      %v4999 = vadd.f32 %v4960, %v4986
      %v5000 = vadd.f32 %v4961, %v4986
      %v5001 = vadd.f32 %v4962, %v4986
      %v5002 = vadd.f32 %v4963, %v4986
      %v5003 = vadd.f32 %v4964, %v4986
      %v5004 = vadd.f32 %v4965, %v4986
      %v5005 = vadd.f32 %v4966, %v4986
      %v5006 = vadd.f32 %v4967, %v4986
      %v5007 = vadd.f32 %v4968, %v4986
      %v5008 = vadd.f32 %v4969, %v4986
      %v5009 = vadd.f32 %v4970, %v4986
      %v5010 = vadd.f32 %v4971, %v4986
      %v5011 = vadd.f32 %v4972, %v4986
      %v5012 = vadd.f32 %v4973, %v4986
      %v5013 = vadd.f32 %v4974, %v4986
      %v5014 = vadd.f32 %v4975, %v4986
      %v5015 = vadd.f32 %v4976, %v4986
      %v5016 = vadd.f32 %v4977, %v4986
      %v5017 = vadd.f32 %v4978, %v4986
      %v5018 = vadd.f32 %v4979, %v4986
      %v5019 = vadd.f32 %v4980, %v4986
      %v5020 = vmax.f32 %v4988, 0.0
      %v5021 = vmax.f32 %v4989, 0.0
      %v5022 = vmax.f32 %v4990, 0.0
      %v5023 = vmax.f32 %v4991, 0.0
      %v5024 = vmax.f32 %v4992, 0.0
      %v5025 = vmax.f32 %v4993, 0.0
      %v5026 = vmax.f32 %v4994, 0.0
      %v5027 = vmax.f32 %v4995, 0.0
      %v5028 = vmax.f32 %v4996, 0.0
      %v5029 = vmax.f32 %v4997, 0.0
      %v5030 = vmax.f32 %v4998, 0.0
      %v5031 = vmax.f32 %v4999, 0.0
      %v5032 = vmax.f32 %v5000, 0.0
      %v5033 = vmax.f32 %v5001, 0.0
      %v5034 = vmax.f32 %v5002, 0.0
      %v5035 = vmax.f32 %v5003, 0.0
      %v5036 = vmax.f32 %v5004, 0.0
      %v5037 = vmax.f32 %v5005, 0.0
      %v5038 = vmax.f32 %v5006, 0.0
      %v5039 = vmax.f32 %v5007, 0.0
      %v5040 = vmax.f32 %v5008, 0.0
      %v5041 = vmax.f32 %v5009, 0.0
      %v5042 = vmax.f32 %v5010, 0.0
      %v5043 = vmax.f32 %v5011, 0.0
      %v5044 = vmax.f32 %v5012, 0.0
      %v5045 = vmax.f32 %v5013, 0.0
      %v5046 = vmax.f32 %v5014, 0.0
      %v5047 = vmax.f32 %v5015, 0.0
      %v5048 = vmax.f32 %v5016, 0.0
      %v5049 = vmax.f32 %v5017, 0.0
      %v5050 = vmax.f32 %v5018, 0.0
      %v5051 = vmax.f32 %v5019, 0.0
      %v5052 = vpack.c.bf16 %v5021, %v5020
      %v5053 = vpack.c.bf16 %v5023, %v5022
      %v5054 = vpack.c.bf16 %v5025, %v5024
      %v5055 = vpack.c.bf16 %v5027, %v5026
      %v5056 = vpack.c.bf16 %v5029, %v5028
      %v5057 = vpack.c.bf16 %v5031, %v5030
      %v5058 = vpack.c.bf16 %v5033, %v5032
      %v5059 = vpack.c.bf16 %v5035, %v5034
      %v5060 = vpack.c.bf16 %v5037, %v5036
      %v5061 = vpack.c.bf16 %v5039, %v5038
      %v5062 = vpack.c.bf16 %v5041, %v5040
      %v5063 = vpack.c.bf16 %v5043, %v5042
      %v5064 = vpack.c.bf16 %v5045, %v5044
      %v5065 = vpack.c.bf16 %v5047, %v5046
      %v5066 = vpack.c.bf16 %v5049, %v5048
      %v5067 = vpack.c.bf16 %v5051, %v5050
      %v5084 = vunpack.c.l.b16 %v5052
      %v5085 = vunpack.c.h.b16 %v5052
      %v5086 = vunpack.c.l.b16 %v5053
      %v5087 = vunpack.c.h.b16 %v5053
      %v5088 = vunpack.c.l.b16 %v5054
      %v5089 = vunpack.c.h.b16 %v5054
      %v5090 = vunpack.c.l.b16 %v5055
      %v5091 = vunpack.c.h.b16 %v5055
      %v5092 = vunpack.c.l.b16 %v5056
      %v5093 = vunpack.c.h.b16 %v5056
      %v5094 = vunpack.c.l.b16 %v5057
      %v5095 = vunpack.c.h.b16 %v5057
      %v5096 = vunpack.c.l.b16 %v5058
      %v5097 = vunpack.c.h.b16 %v5058
      %v5098 = vunpack.c.l.b16 %v5059
      %v5099 = vunpack.c.h.b16 %v5059
      %v5100 = vunpack.c.l.b16 %v5060
      %v5101 = vunpack.c.h.b16 %v5060
      %v5102 = vunpack.c.l.b16 %v5061
      %v5103 = vunpack.c.h.b16 %v5061
      %v5104 = vunpack.c.l.b16 %v5062
      %v5105 = vunpack.c.h.b16 %v5062
      %v5106 = vunpack.c.l.b16 %v5063
      %v5107 = vunpack.c.h.b16 %v5063
      %v5108 = vunpack.c.l.b16 %v5064
      %v5109 = vunpack.c.h.b16 %v5064
      %v5110 = vunpack.c.l.b16 %v5065
      %v5111 = vunpack.c.h.b16 %v5065
      %v5112 = vunpack.c.l.b16 %v5066
      %v5113 = vunpack.c.h.b16 %v5066
      %v5114 = vunpack.c.l.b16 %v5067
      %v5115 = vunpack.c.h.b16 %v5067
      %v5116 = vpack.c.b16 %v5084, %v5084
      %v5117 = vpack.c.b16 %v5085, %v5085
      %v5118 = vpack.c.b16 %v5086, %v5086
      %v5119 = vpack.c.b16 %v5087, %v5087
      %v5120 = vpack.c.b16 %v5088, %v5088
      %v5121 = vpack.c.b16 %v5089, %v5089
      %v5122 = vpack.c.b16 %v5090, %v5090
      %v5123 = vpack.c.b16 %v5091, %v5091
      %v5124 = vpack.c.b16 %v5092, %v5092
      %v5125 = vpack.c.b16 %v5093, %v5093
      %v5126 = vpack.c.b16 %v5094, %v5094
      %v5127 = vpack.c.b16 %v5095, %v5095
      %v5128 = vpack.c.b16 %v5096, %v5096
      %v5129 = vpack.c.b16 %v5097, %v5097
      %v5130 = vpack.c.b16 %v5098, %v5098
      %v5131 = vpack.c.b16 %v5099, %v5099
      %v5132 = vpack.c.b16 %v5100, %v5100
      %v5133 = vpack.c.b16 %v5101, %v5101
      %v5134 = vpack.c.b16 %v5102, %v5102
      %v5135 = vpack.c.b16 %v5103, %v5103
      %v5136 = vpack.c.b16 %v5104, %v5104
      %v5137 = vpack.c.b16 %v5105, %v5105
      %v5138 = vpack.c.b16 %v5106, %v5106
      %v5139 = vpack.c.b16 %v5107, %v5107
      %v5140 = vpack.c.b16 %v5108, %v5108
      %v5141 = vpack.c.b16 %v5109, %v5109
      %v5142 = vpack.c.b16 %v5110, %v5110
      %v5143 = vpack.c.b16 %v5111, %v5111
      %v5144 = vpack.c.b16 %v5112, %v5112
      %v5145 = vpack.c.b16 %v5113, %v5113
      %v5146 = vpack.c.b16 %v5114, %v5114
      %v5147 = vpack.c.b16 %v5115, %v5115
      %5180 = vst [vmem:[%s170] sm:$0xf] %v5116
      %5181 = vst [vmem:[%s170 + $0x4] sm:$0xf] %v5117
      %5182 = vst [vmem:[%s170 + $0x8] sm:$0xf] %v5118
      %5183 = vst [vmem:[%s170 + $0xc] sm:$0xf] %v5119
      %5184 = vst [vmem:[%s170 + $0x10] sm:$0xf] %v5120
      %5185 = vst [vmem:[%s170 + $0x14] sm:$0xf] %v5121
      %5186 = vst [vmem:[%s170 + $0x18] sm:$0xf] %v5122
      %5187 = vst [vmem:[%s170 + $0x1c] sm:$0xf] %v5123
      %5188 = vst [vmem:[%s170 + $0x20] sm:$0xf] %v5124
      %5189 = vst [vmem:[%s170 + $0x24] sm:$0xf] %v5125
      %5190 = vst [vmem:[%s170 + $0x28] sm:$0xf] %v5126
      %5191 = vst [vmem:[%s170 + $0x2c] sm:$0xf] %v5127
      %5192 = vst [vmem:[%s170 + $0x30] sm:$0xf] %v5128
      %5193 = vst [vmem:[%s170 + $0x34] sm:$0xf] %v5129
      %5194 = vst [vmem:[%s170 + $0x38] sm:$0xf] %v5130
      %5195 = vst [vmem:[%s170 + $0x3c] sm:$0xf] %v5131
      %5196 = vst [vmem:[%s170 + $0x40] sm:$0xf] %v5132
      %5197 = vst [vmem:[%s170 + $0x44] sm:$0xf] %v5133
      %5198 = vst [vmem:[%s170 + $0x48] sm:$0xf] %v5134
      %5199 = vst [vmem:[%s170 + $0x4c] sm:$0xf] %v5135
      %5200 = vst [vmem:[%s170 + $0x50] sm:$0xf] %v5136
      %5201 = vst [vmem:[%s170 + $0x54] sm:$0xf] %v5137
      %5202 = vst [vmem:[%s170 + $0x58] sm:$0xf] %v5138
      %5203 = vst [vmem:[%s170 + $0x5c] sm:$0xf] %v5139
      %5204 = vst [vmem:[%s170 + $0x60] sm:$0xf] %v5140
      %5205 = vst [vmem:[%s170 + $0x64] sm:$0xf] %v5141
      %5206 = vst [vmem:[%s170 + $0x68] sm:$0xf] %v5142
      %5207 = vst [vmem:[%s170 + $0x6c] sm:$0xf] %v5143
      %5208 = vst [vmem:[%s170 + $0x70] sm:$0xf] %v5144
      %5209 = vst [vmem:[%s170 + $0x74] sm:$0xf] %v5145
      %5210 = vst [vmem:[%s170 + $0x78] sm:$0xf] %v5146
      %5211 = vst [vmem:[%s170 + $0x7c] sm:$0xf] %v5147
      %p5212 = scmp.lt.s32.totalorder %s14, 1
      %s5213 = scalar_select %p5212, %s14, 1
      %s5214 = smul.addr %s5213, 32
      %s5215 = smul.addr %s5214, 4
      %s5216 = scalar_lea.vmem %s3, %s5215
      // Predicated region
      $region33: #{continual_ssl_forward.2} parent=31 // pred_check
        %p5217 = pneg %p100
      $region34: #{continual_ssl_forward.2} parent=31 // pred_check_branch
        %5219 = sbr.rel (%p5217) target = $region36
      $region35: #{continual_ssl_forward.2} parent=31 // pred_region
        _
      $region36: #{continual_ssl_forward.2} parent=31 // pred_fallthru
        _
    $region32: #{continual_ssl_forward.2} parent=5 // pred_fallthru
      _
    %p5220 = scmp.le.s32.totalorder 2, %s9
    // Predicated region
    $region37: #{continual_ssl_forward.2} parent=5 // pred_check
      %p5221 = pneg %p5220
    $region38: #{continual_ssl_forward.2} parent=5 // pred_check_branch
      %5223 = sbr.rel (%p5221) target = $region40
    $region39: #{continual_ssl_forward.2} parent=5 // pred_region
      %s5224 = ssub.s32 %s9, 2
      // Predicated region
      $region41: #{continual_ssl_forward.2} parent=39 // pred_check
        %p5225 = pneg %p106
      $region42: #{continual_ssl_forward.2} parent=39 // pred_check_branch
        %5227 = sbr.rel (%p5225) target = $region44
      $region43: #{continual_ssl_forward.2} parent=39 // pred_region
        %p5228 = scmp.lt.s32.totalorder %s15, 1
        %s5229 = scalar_select %p5228, %s15, 1
        %s5230 = smul.addr %s5229, 32
        %s5231 = smul.addr %s5230, 4
        %s5232 = scalar_lea.vmem %s3, %s5231
      $region44: #{continual_ssl_forward.2} parent=39 // pred_fallthru
        _
    $region40: #{continual_ssl_forward.2} parent=5 // pred_fallthru
      _
  $region6: #{continual_ssl_forward.2} parent=0 // loop_footer
    %s13 = sadd.s32 1, %s9
  $region7: #{continual_ssl_forward.2} parent=0 // loop_footer_branch
    %8 = sbr.rel target = $region3
  $region8: #{continual_ssl_forward.2} parent=0 // loop_exit
    _

// kernel: continual_ssl_forward.3
$region0: #{continual_ssl_forward.3}
  #allocation0 [shape = 'u32[]', space=smem, size = 0x4, offset = 0x4, fixed_abs, tag = 'smem constant byte address 0x4 - core index']
  #allocation1 [shape = 'u32[144,128]{1,0:T(1,128)}', space=vmem, size = 0x12000, scoped, tag = 'internal scratch']
  %s0 = inlined_call_operand.vmem [shape: bf16[2,18,18,128], index: 0, kind: input, shape index: {}]
  %s1 = inlined_call_operand.vmem [shape: bf16[9,128,128], index: 1, kind: input, shape index: {}]
  %s2 = inlined_call_operand.vmem [shape: f32[1,128], index: 2, kind: input, shape index: {}]
  %s3 = inlined_call_operand.vmem [shape: bf16[128,128], index: 3, kind: input, shape index: {}]
  %s4 = inlined_call_operand.vmem [shape: f32[1,128], index: 4, kind: input, shape index: {}]
  %s5 = inlined_call_operand.vmem [shape: bf16[128,128], index: 5, kind: input, shape index: {}]
  %s6 = inlined_call_operand.vmem [shape: f32[1,128], index: 6, kind: input, shape index: {}]
  %s7 = inlined_call_operand.hbm [shape: f32[2,1,128], index: 7, kind: output, shape index: {0}]
  %s8 = inlined_call_operand.hbm [shape: f32[2,1,128], index: 8, kind: output, shape index: {1}]
  %9 = xla_tuple %s7, %s8
  %s10 = sld [smem:[#allocation0]]
  $region69: #{continual_ssl_forward.3} parent=0
    _
  %s12 = ssub.s32 1, %s10
  %s13 = scalar_select 0, %s12, %s10
  $region1: #{continual_ssl_forward.3} parent=0
    #allocation2 [shape = 'u8[1024]{0}', space=vmem, size = 0x400, scoped, tag = 'output window, operand 0']
    #allocation3 [shape = 's32[2]{0}', space=sflag, size = 0x8, scoped, tag = 'scoped memory for continual_ssl_forward.3']
    #allocation4 [shape = 'u8[1024]{0}', space=vmem, size = 0x400, scoped, tag = 'output window, operand 1']
    #allocation5 [shape = 's32[2]{0}', space=sflag, size = 0x8, scoped, tag = 'scoped memory for continual_ssl_forward.3']
    %14 = vsyncpa [#allocation3], 0
    %s15 = scalar_lea.sflag [#allocation3], 1
    %16 = vsyncpa %s15, 0
    %17 = vsyncpa [#allocation5], 0
    %s18 = scalar_lea.sflag [#allocation5], 1
    %19 = vsyncpa %s18, 0
    loop: start=0, step=1, limit=4
    $region2: #{continual_ssl_forward.3} parent=1 // loop_pre_header
      _
    $region3: #{continual_ssl_forward.3} parent=1 // loop_header
      %s21 = sphi 0, %s25
      %p22 = scmp.ge.s32.totalorder %s21, 4
      %s31 = sphi 0, %s33
      %s34 = sphi 0, %s31
      %s35 = sphi 0, %s34
      %s51 = sphi 0, %s35
      %s55 = sphi 0, %s55
      %s57 = sphi 0, %s55
      %s58 = sphi 0, %s57
      %s72 = sphi 0, %s58
      %s76 = sphi 0, %s76
      %s78 = sphi 0, %s76
      %s79 = sphi 0, %s78
      %s93 = sphi 0, %s79
      %s97 = sphi 0, %s97
      %s99 = sphi 0, %s97
      %s100 = sphi 0, %s99
      %s114 = sphi 0, %s100
      %s118 = sphi 0, %s118
      %s120 = sphi 0, %s118
      %s121 = sphi 0, %s120
      %s135 = sphi 0, %s121
      %s139 = sphi 0, %s139
      %s141 = sphi 0, %s139
      %s142 = sphi 0, %s141
      %s156 = sphi 0, %s142
      %s160 = sphi 0, %s160
      %s162 = sphi 0, %s160
      %s163 = sphi 0, %s162
      %s177 = sphi 0, %s163
      %s183 = sphi 0, %s185
      %s186 = sphi 0, %s183
      %s187 = sphi 0, %s186
      %s203 = sphi 0, %s187
      %s209 = sphi 0, %s211
      %s212 = sphi 0, %s209
      %s213 = sphi 0, %s212
      %s229 = sphi 0, %s213
    $region4: #{continual_ssl_forward.3} parent=1 // loop_header_branch
      %24 = sbr.rel (%p22) target = $region8
    $region5: #{continual_ssl_forward.3} parent=1 // loop_body
      %s26 = ssub.s32 %s21, 1
      %s27 = ssub.s32 %s21, 2
      %s28 = sadd.s32 %s21, 1
      %s29 = ssub.s32 %s21, %s28
      %p30 = scmp.eq.s32.totalorder %s29, 0
      %s32 = sadd.s32 %s31, 1
      %s33 = scalar_select %p30, %s31, %s32
      %p36 = pneg %p30
      %p37 = scmp.eq.s32.totalorder %s21, 1
      %p38 = por %p36, %p37
      %p39 = scmp.ne.s32.totalorder %s31, %s34
      %p40 = scmp.eq.s32.totalorder %s21, 0
      %p41 = por %p39, %p40
      %p42 = scmp.ne.s32.totalorder %s31, %s34
      %p43 = scmp.eq.s32.totalorder %s26, 1
      %p44 = por %p42, %p43
      %p45 = scmp.ne.s32.totalorder %s34, %s35
      %p46 = scmp.eq.s32.totalorder %s26, 0
      %p47 = por %p45, %p46
      %p48 = scmp.ne.s32.totalorder %s34, %s35
      %p49 = scmp.eq.s32.totalorder %s27, 1
      %p50 = por %p48, %p49
      %p52 = scmp.ne.s32.totalorder %s35, %s51
      %p53 = scmp.eq.s32.totalorder %s27, 0
      %p54 = por %p52, %p53
      %s56 = sadd.s32 %s55, 1
      %p59 = scmp.eq.s32.totalorder %s21, 1
      %p60 = scmp.ne.s32.totalorder %s55, %s57
      %p61 = scmp.eq.s32.totalorder %s21, 0
      %p62 = por %p60, %p61
      %p63 = scmp.ne.s32.totalorder %s55, %s57
      %p64 = scmp.eq.s32.totalorder %s26, 1
      %p65 = por %p63, %p64
      %p66 = scmp.ne.s32.totalorder %s57, %s58
      %p67 = scmp.eq.s32.totalorder %s26, 0
      %p68 = por %p66, %p67
      %p69 = scmp.ne.s32.totalorder %s57, %s58
      %p70 = scmp.eq.s32.totalorder %s27, 1
      %p71 = por %p69, %p70
      %p73 = scmp.ne.s32.totalorder %s58, %s72
      %p74 = scmp.eq.s32.totalorder %s27, 0
      %p75 = por %p73, %p74
      %s77 = sadd.s32 %s76, 1
      %p80 = scmp.eq.s32.totalorder %s21, 1
      %p81 = scmp.ne.s32.totalorder %s76, %s78
      %p82 = scmp.eq.s32.totalorder %s21, 0
      %p83 = por %p81, %p82
      %p84 = scmp.ne.s32.totalorder %s76, %s78
      %p85 = scmp.eq.s32.totalorder %s26, 1
      %p86 = por %p84, %p85
      %p87 = scmp.ne.s32.totalorder %s78, %s79
      %p88 = scmp.eq.s32.totalorder %s26, 0
      %p89 = por %p87, %p88
      %p90 = scmp.ne.s32.totalorder %s78, %s79
      %p91 = scmp.eq.s32.totalorder %s27, 1
      %p92 = por %p90, %p91
      %p94 = scmp.ne.s32.totalorder %s79, %s93
      %p95 = scmp.eq.s32.totalorder %s27, 0
      %p96 = por %p94, %p95
      %s98 = sadd.s32 %s97, 1
      %p101 = scmp.eq.s32.totalorder %s21, 1
      %p102 = scmp.ne.s32.totalorder %s97, %s99
      %p103 = scmp.eq.s32.totalorder %s21, 0
      %p104 = por %p102, %p103
      %p105 = scmp.ne.s32.totalorder %s97, %s99
      %p106 = scmp.eq.s32.totalorder %s26, 1
      %p107 = por %p105, %p106
      %p108 = scmp.ne.s32.totalorder %s99, %s100
      %p109 = scmp.eq.s32.totalorder %s26, 0
      %p110 = por %p108, %p109
      %p111 = scmp.ne.s32.totalorder %s99, %s100
      %p112 = scmp.eq.s32.totalorder %s27, 1
      %p113 = por %p111, %p112
      %p115 = scmp.ne.s32.totalorder %s100, %s114
      %p116 = scmp.eq.s32.totalorder %s27, 0
      %p117 = por %p115, %p116
      %s119 = sadd.s32 %s118, 1
      %p122 = scmp.eq.s32.totalorder %s21, 1
      %p123 = scmp.ne.s32.totalorder %s118, %s120
      %p124 = scmp.eq.s32.totalorder %s21, 0
      %p125 = por %p123, %p124
      %p126 = scmp.ne.s32.totalorder %s118, %s120
      %p127 = scmp.eq.s32.totalorder %s26, 1
      %p128 = por %p126, %p127
      %p129 = scmp.ne.s32.totalorder %s120, %s121
      %p130 = scmp.eq.s32.totalorder %s26, 0
      %p131 = por %p129, %p130
      %p132 = scmp.ne.s32.totalorder %s120, %s121
      %p133 = scmp.eq.s32.totalorder %s27, 1
      %p134 = por %p132, %p133
      %p136 = scmp.ne.s32.totalorder %s121, %s135
      %p137 = scmp.eq.s32.totalorder %s27, 0
      %p138 = por %p136, %p137
      %s140 = sadd.s32 %s139, 1
      %p143 = scmp.eq.s32.totalorder %s21, 1
      %p144 = scmp.ne.s32.totalorder %s139, %s141
      %p145 = scmp.eq.s32.totalorder %s21, 0
      %p146 = por %p144, %p145
      %p147 = scmp.ne.s32.totalorder %s139, %s141
      %p148 = scmp.eq.s32.totalorder %s26, 1
      %p149 = por %p147, %p148
      %p150 = scmp.ne.s32.totalorder %s141, %s142
      %p151 = scmp.eq.s32.totalorder %s26, 0
      %p152 = por %p150, %p151
      %p153 = scmp.ne.s32.totalorder %s141, %s142
      %p154 = scmp.eq.s32.totalorder %s27, 1
      %p155 = por %p153, %p154
      %p157 = scmp.ne.s32.totalorder %s142, %s156
      %p158 = scmp.eq.s32.totalorder %s27, 0
      %p159 = por %p157, %p158
      %s161 = sadd.s32 %s160, 1
      %p164 = scmp.eq.s32.totalorder %s21, 1
      %p165 = scmp.ne.s32.totalorder %s160, %s162
      %p166 = scmp.eq.s32.totalorder %s21, 0
      %p167 = por %p165, %p166
      %p168 = scmp.ne.s32.totalorder %s160, %s162
      %p169 = scmp.eq.s32.totalorder %s26, 1
      %p170 = por %p168, %p169
      %p171 = scmp.ne.s32.totalorder %s162, %s163
      %p172 = scmp.eq.s32.totalorder %s26, 0
      %p173 = por %p171, %p172
      %p174 = scmp.ne.s32.totalorder %s162, %s163
      %p175 = scmp.eq.s32.totalorder %s27, 1
      %p176 = por %p174, %p175
      %p178 = scmp.ne.s32.totalorder %s163, %s177
      %p179 = scmp.eq.s32.totalorder %s27, 0
      %p180 = por %p178, %p179
      %s181 = ssub.s32 %s21, %s28
      %p182 = scmp.eq.s32.totalorder %s181, 0
      %s184 = sadd.s32 %s183, 1
      %s185 = scalar_select %p182, %s183, %s184
      %p188 = pneg %p182
      %p189 = scmp.eq.s32.totalorder %s21, 1
      %p190 = por %p188, %p189
      %p191 = scmp.ne.s32.totalorder %s183, %s186
      %p192 = scmp.eq.s32.totalorder %s21, 0
      %p193 = por %p191, %p192
      %p194 = scmp.ne.s32.totalorder %s183, %s186
      %p195 = scmp.eq.s32.totalorder %s26, 1
      %p196 = por %p194, %p195
      %p197 = scmp.ne.s32.totalorder %s186, %s187
      %p198 = scmp.eq.s32.totalorder %s26, 0
      %p199 = por %p197, %p198
      %p200 = scmp.ne.s32.totalorder %s186, %s187
      %p201 = scmp.eq.s32.totalorder %s27, 1
      %p202 = por %p200, %p201
      %p204 = scmp.ne.s32.totalorder %s187, %s203
      %p205 = scmp.eq.s32.totalorder %s27, 0
      %p206 = por %p204, %p205
      %s207 = ssub.s32 %s21, %s28
      %p208 = scmp.eq.s32.totalorder %s207, 0
      %s210 = sadd.s32 %s209, 1
      %s211 = scalar_select %p208, %s209, %s210
      %p214 = pneg %p208
      %p215 = scmp.eq.s32.totalorder %s21, 1
      %p216 = por %p214, %p215
      %p217 = scmp.ne.s32.totalorder %s209, %s212
      %p218 = scmp.eq.s32.totalorder %s21, 0
      %p219 = por %p217, %p218
      %p220 = scmp.ne.s32.totalorder %s209, %s212
      %p221 = scmp.eq.s32.totalorder %s26, 1
      %p222 = por %p220, %p221
      %p223 = scmp.ne.s32.totalorder %s212, %s213
      %p224 = scmp.eq.s32.totalorder %s26, 0
      %p225 = por %p223, %p224
      %p226 = scmp.ne.s32.totalorder %s212, %s213
      %p227 = scmp.eq.s32.totalorder %s27, 1
      %p228 = por %p226, %p227
      %p230 = scmp.ne.s32.totalorder %s213, %s229
      %p231 = scmp.eq.s32.totalorder %s27, 0
      %p232 = por %p230, %p231
      %p233 = scmp.le.s32.totalorder 1, %s21
      %p234 = scmp.lt.s32.totalorder %s21, 3
      %p235 = pnand %p233, %p234
      %p236 = pneg %p235
      // Predicated region
      $region9: #{continual_ssl_forward.3} parent=5 // pred_check
        _
      $region10: #{continual_ssl_forward.3} parent=5 // pred_check_branch
        %238 = sbr.rel (%p235) target = $region12
      $region11: #{continual_ssl_forward.3} parent=5 // pred_region
        %s239 = ssub.s32 %s21, 1
        // Predicated region
        $region13: #{continual_ssl_forward.3} parent=11 // pred_check
          %p240 = pneg %p68
        $region14: #{continual_ssl_forward.3} parent=11 // pred_check_branch
          %242 = sbr.rel (%p240) target = $region16
        $region15: #{continual_ssl_forward.3} parent=11 // pred_region
          _
        $region16: #{continual_ssl_forward.3} parent=11 // pred_fallthru
          _
        // Predicated region
        $region17: #{continual_ssl_forward.3} parent=11 // pred_check
          %p243 = pneg %p89
        $region18: #{continual_ssl_forward.3} parent=11 // pred_check_branch
          %245 = sbr.rel (%p243) target = $region20
        $region19: #{continual_ssl_forward.3} parent=11 // pred_region
          _
        $region20: #{continual_ssl_forward.3} parent=11 // pred_fallthru
          _
        // Predicated region
        $region21: #{continual_ssl_forward.3} parent=11 // pred_check
          %p246 = pneg %p110
        $region22: #{continual_ssl_forward.3} parent=11 // pred_check_branch
          %248 = sbr.rel (%p246) target = $region24
        $region23: #{continual_ssl_forward.3} parent=11 // pred_region
          _
        $region24: #{continual_ssl_forward.3} parent=11 // pred_fallthru
          _
        // Predicated region
        $region25: #{continual_ssl_forward.3} parent=11 // pred_check
          %p249 = pneg %p131
        $region26: #{continual_ssl_forward.3} parent=11 // pred_check_branch
          %251 = sbr.rel (%p249) target = $region28
        $region27: #{continual_ssl_forward.3} parent=11 // pred_region
          _
        $region28: #{continual_ssl_forward.3} parent=11 // pred_fallthru
          _
        // Predicated region
        $region29: #{continual_ssl_forward.3} parent=11 // pred_check
          %p252 = pneg %p152
        $region30: #{continual_ssl_forward.3} parent=11 // pred_check_branch
          %254 = sbr.rel (%p252) target = $region32
        $region31: #{continual_ssl_forward.3} parent=11 // pred_region
          _
        $region32: #{continual_ssl_forward.3} parent=11 // pred_fallthru
          _
        // Predicated region
        $region33: #{continual_ssl_forward.3} parent=11 // pred_check
          %p255 = pneg %p173
        $region34: #{continual_ssl_forward.3} parent=11 // pred_check_branch
          %257 = sbr.rel (%p255) target = $region36
        $region35: #{continual_ssl_forward.3} parent=11 // pred_region
          _
        $region36: #{continual_ssl_forward.3} parent=11 // pred_fallthru
          _
      $region12: #{continual_ssl_forward.3} parent=5 // pred_fallthru
        _
      %p258 = scmp.lt.s32.totalorder %s21, 2
      // Predicated region
      $region37: #{continual_ssl_forward.3} parent=5 // pred_check
        %p259 = pneg %p258
      $region38: #{continual_ssl_forward.3} parent=5 // pred_check_branch
        %261 = sbr.rel (%p259) target = $region40
      $region39: #{continual_ssl_forward.3} parent=5 // pred_region
        // Predicated region
        $region41: #{continual_ssl_forward.3} parent=39 // pred_check
          %p262 = pneg %p41
        $region42: #{continual_ssl_forward.3} parent=39 // pred_check_branch
          %264 = sbr.rel (%p262) target = $region44
        $region43: #{continual_ssl_forward.3} parent=39 // pred_region
          %p265 = scmp.lt.s32.totalorder %s21, 1
          %s266 = scalar_select %p265, %s21, 1
          %s267 = smul.addr %s266, 54
          %s268 = smul.addr %s267, 4
          %s269 = scalar_lea.vmem %s0, %s268
        $region44: #{continual_ssl_forward.3} parent=39 // pred_fallthru
          _
      $region40: #{continual_ssl_forward.3} parent=5 // pred_fallthru
        _
      %p270 = scmp.le.s32.totalorder 1, %s21
      %p271 = scmp.lt.s32.totalorder %s21, 3
      %p272 = pnand %p270, %p271
      %p273 = pneg %p272
      // Predicated region
      $region45: #{continual_ssl_forward.3} parent=5 // pred_check
        _
      $region46: #{continual_ssl_forward.3} parent=5 // pred_check_branch
        %275 = sbr.rel (%p272) target = $region48
      $region47: #{continual_ssl_forward.3} parent=5 // pred_region
        %s276 = ssub.s32 %s21, 1
        %p277 = scmp.lt.s32.totalorder %s26, 1
        %s278 = scalar_select %p277, %s26, 1
        %s279 = smul.addr %s278, 54
        %s280 = smul.addr %s279, 4
        %s281 = scalar_lea.vmem %s0, %s280
        %p282 = pneg %p47
        %p283 = pneg %p44
        %p284 = pneg %p68
        %p285 = pneg %p65
        %p286 = pneg %p89
        %p287 = pneg %p86
        %p288 = pneg %p110
        %p289 = pneg %p107
        %p290 = pneg %p131
        %p291 = pneg %p128
        %p292 = pneg %p152
        %p293 = pneg %p149
        %p294 = pneg %p173
        %p295 = pneg %p170
        %p296 = pneg %p199
        %p297 = pneg %p196
        %s298 = sand.u32 %s186, 1
        %s299 = scalar_lea.sflag [#allocation3], %s298
        %s300 = sand.u32 %s186, 1
        %s301 = scalar_lea.vmem [#allocation2], %s300
        %p302 = pneg %p225
        %p303 = pneg %p222
        %s304 = sand.u32 %s212, 1
        %s305 = scalar_lea.sflag [#allocation5], %s304
        %s306 = sand.u32 %s212, 1
        %s307 = scalar_lea.vmem [#allocation4], %s306
        %p308 = scmp.lt.s32.totalorder %s26, 1
        %s309 = scalar_select %p308, %s26, 1
        %s310 = smul.addr %s309, 54
        %s311 = smul.addr %s310, 4
        %s312 = scalar_lea.vmem %s0, %s311
        %v314 = vld [vmem:[%s312] sm:$0xf]
        %v315 = vld [vmem:[%s312 + $0x4] sm:$0xf]
        %v316 = vld [vmem:[%s312 + $0xc] sm:$0xf]
        %v317 = vld [vmem:[%s312 + $0x10] sm:$0xf]
        %v318 = vld [vmem:[%s312 + $0x18] sm:$0xf]
        %v319 = vld [vmem:[%s312 + $0x1c] sm:$0xf]
        %v320 = vld [vmem:[%s312 + $0x24] sm:$0xf]
        %v321 = vld [vmem:[%s312 + $0x28] sm:$0xf]
        %v322 = vld [vmem:[%s312 + $0x30] sm:$0xf]
        %v323 = vld [vmem:[%s312 + $0x34] sm:$0xf]
        %v324 = vld [vmem:[%s312 + $0x3c] sm:$0xf]
        %v325 = vld [vmem:[%s312 + $0x40] sm:$0xf]
        %v326 = vld [vmem:[%s312 + $0x48] sm:$0xf]
        %v327 = vld [vmem:[%s312 + $0x4c] sm:$0xf]
        %v328 = vld [vmem:[%s312 + $0x54] sm:$0xf]
        %v329 = vld [vmem:[%s312 + $0x58] sm:$0xf]
        %v330 = vld [vmem:[%s312 + $0x60] sm:$0xf]
        %v331 = vld [vmem:[%s312 + $0x64] sm:$0xf]
        %v332 = vld [vmem:[%s312 + $0x6c] sm:$0xf]
        %v333 = vld [vmem:[%s312 + $0x70] sm:$0xf]
        %v334 = vld [vmem:[%s312 + $0x78] sm:$0xf]
        %v335 = vld [vmem:[%s312 + $0x7c] sm:$0xf]
        %v336 = vld [vmem:[%s312 + $0x84] sm:$0xf]
        %v337 = vld [vmem:[%s312 + $0x88] sm:$0xf]
        %v338 = vld [vmem:[%s312 + $0x90] sm:$0xf]
        %v339 = vld [vmem:[%s312 + $0x94] sm:$0xf]
        %v340 = vld [vmem:[%s312 + $0x9c] sm:$0xf]
        %v341 = vld [vmem:[%s312 + $0xa0] sm:$0xf]
        %v342 = vld [vmem:[%s312 + $0xa8] sm:$0xf]
        %v343 = vld [vmem:[%s312 + $0xac] sm:$0xf]
        %v344 = vld [vmem:[%s312 + $0xb4] sm:$0xf]
        %v345 = vld [vmem:[%s312 + $0xb8] sm:$0xf]
        %v346 = vld [vmem:[%s1] sm:$0xf]
        %v347 = vld [vmem:[%s1 + $0x4] sm:$0xf]
        %v348 = vld [vmem:[%s1 + $0x8] sm:$0xf]
        %v349 = vld [vmem:[%s1 + $0xc] sm:$0xf]
        %v350 = vld [vmem:[%s1 + $0x10] sm:$0xf]
        %v351 = vld [vmem:[%s1 + $0x14] sm:$0xf]
        %v352 = vld [vmem:[%s1 + $0x18] sm:$0xf]
        %v353 = vld [vmem:[%s1 + $0x1c] sm:$0xf]
        %v354 = vld [vmem:[%s1 + $0x20] sm:$0xf]
        %v355 = vld [vmem:[%s1 + $0x24] sm:$0xf]
        %v356 = vld [vmem:[%s1 + $0x28] sm:$0xf]
        %v357 = vld [vmem:[%s1 + $0x2c] sm:$0xf]
        %v358 = vld [vmem:[%s1 + $0x30] sm:$0xf]
        %v359 = vld [vmem:[%s1 + $0x34] sm:$0xf]
        %v360 = vld [vmem:[%s1 + $0x38] sm:$0xf]
        %v361 = vld [vmem:[%s1 + $0x3c] sm:$0xf]
        %v362 = vld [vmem:[%s312 + $0x8] sm:$0x1]
        %v363 = vld [vmem:[%s312 + $0x14] sm:$0x1]
        %v364 = vld [vmem:[%s312 + $0x20] sm:$0x1]
        %v365 = vld [vmem:[%s312 + $0x2c] sm:$0x1]
        %v366 = vld [vmem:[%s312 + $0x38] sm:$0x1]
        %v367 = vld [vmem:[%s312 + $0x44] sm:$0x1]
        %v368 = vld [vmem:[%s312 + $0x50] sm:$0x1]
        %v369 = vld [vmem:[%s312 + $0x5c] sm:$0x1]
        %v370 = vld [vmem:[%s312 + $0x68] sm:$0x1]
        %v371 = vld [vmem:[%s312 + $0x74] sm:$0x1]
        %v372 = vld [vmem:[%s312 + $0x80] sm:$0x1]
        %v373 = vld [vmem:[%s312 + $0x8c] sm:$0x1]
        %v374 = vld [vmem:[%s312 + $0x98] sm:$0x1]
        %v375 = vld [vmem:[%s312 + $0xa4] sm:$0x1]
        %v376 = vld [vmem:[%s312 + $0xb0] sm:$0x1]
        %v377 = vld [vmem:[%s312 + $0xbc] sm:$0x1]
        %vm378 = vsmask.f32 3328
        %vm379 = vsmask.f32 7440
        %vm380 = vmor %vm378, %vm379
        %v382 = vshrl.u32 %v314, 16
        %v384 = vrot.slane %v382, 4
        %v385 = vshll.u32 %v314, 16
        %v387 = vrot.slane %v385, 5
        %v388 = vor.u32 %v384, %v387
        %v389 = vrot.slane %v388, 4
        %v391 = vshll.u32 %v315, 16
        %v393 = vrot.slane %v391, 5
        %v394 = vsel %vm380, %v389, %v393
        %v395 = vshrl.u32 %v315, 16
        %v397 = vrot.slane %v395, 4
        %v398 = vor.u32 %v397, %v393
        %v399 = vrot.slane %v398, 4
        %v401 = vshll.u32 %v362, 16
        %v403 = vrot.slane %v401, 5
        %v404 = vsel %vm380, %v399, %v403
        %v406 = vshrl.u32 %v316, 16
        %v408 = vrot.slane %v406, 4
        %v409 = vshll.u32 %v316, 16
        %v411 = vrot.slane %v409, 5
        %v412 = vor.u32 %v408, %v411
        %v413 = vrot.slane %v412, 4
        %v415 = vshll.u32 %v317, 16
        %v417 = vrot.slane %v415, 5
        %v418 = vsel %vm380, %v413, %v417
        %v419 = vshrl.u32 %v317, 16
        %v421 = vrot.slane %v419, 4
        %v422 = vor.u32 %v421, %v417
        %v423 = vrot.slane %v422, 4
        %v425 = vshll.u32 %v363, 16
        %v427 = vrot.slane %v425, 5
        %v428 = vsel %vm380, %v423, %v427
        %v430 = vshrl.u32 %v318, 16
        %v432 = vrot.slane %v430, 4
        %v433 = vshll.u32 %v318, 16
        %v435 = vrot.slane %v433, 5
        %v436 = vor.u32 %v432, %v435
        %v437 = vrot.slane %v436, 4
        %v439 = vshll.u32 %v319, 16
        %v441 = vrot.slane %v439, 5
        %v442 = vsel %vm380, %v437, %v441
        %v443 = vshrl.u32 %v319, 16
        %v445 = vrot.slane %v443, 4
        %v446 = vor.u32 %v445, %v441
        %v447 = vrot.slane %v446, 4
        %v449 = vshll.u32 %v364, 16
        %v451 = vrot.slane %v449, 5
        %v452 = vsel %vm380, %v447, %v451
        %v454 = vshrl.u32 %v320, 16
        %v456 = vrot.slane %v454, 4
        %v457 = vshll.u32 %v320, 16
        %v459 = vrot.slane %v457, 5
        %v460 = vor.u32 %v456, %v459
        %v461 = vrot.slane %v460, 4
        %v463 = vshll.u32 %v321, 16
        %v465 = vrot.slane %v463, 5
        %v466 = vsel %vm380, %v461, %v465
        %v467 = vshrl.u32 %v321, 16
        %v469 = vrot.slane %v467, 4
        %v470 = vor.u32 %v469, %v465
        %v471 = vrot.slane %v470, 4
        %v473 = vshll.u32 %v365, 16
        %v475 = vrot.slane %v473, 5
        %v476 = vsel %vm380, %v471, %v475
        %v478 = vshrl.u32 %v322, 16
        %v480 = vrot.slane %v478, 4
        %v481 = vshll.u32 %v322, 16
        %v483 = vrot.slane %v481, 5
        %v484 = vor.u32 %v480, %v483
        %v485 = vrot.slane %v484, 4
        %v487 = vshll.u32 %v323, 16
        %v489 = vrot.slane %v487, 5
        %v490 = vsel %vm380, %v485, %v489
        %v491 = vshrl.u32 %v323, 16
        %v493 = vrot.slane %v491, 4
        %v494 = vor.u32 %v493, %v489
        %v495 = vrot.slane %v494, 4
        %v497 = vshll.u32 %v366, 16
        %v499 = vrot.slane %v497, 5
        %v500 = vsel %vm380, %v495, %v499
        %v502 = vshrl.u32 %v324, 16
        %v504 = vrot.slane %v502, 4
        %v505 = vshll.u32 %v324, 16
        %v507 = vrot.slane %v505, 5
        %v508 = vor.u32 %v504, %v507
        %v509 = vrot.slane %v508, 4
        %v511 = vshll.u32 %v325, 16
        %v513 = vrot.slane %v511, 5
        %v514 = vsel %vm380, %v509, %v513
        %v515 = vshrl.u32 %v325, 16
        %v517 = vrot.slane %v515, 4
        %v518 = vor.u32 %v517, %v513
        %v519 = vrot.slane %v518, 4
        %v521 = vshll.u32 %v367, 16
        %v523 = vrot.slane %v521, 5
        %v524 = vsel %vm380, %v519, %v523
        %v526 = vshrl.u32 %v326, 16
        %v528 = vrot.slane %v526, 4
        %v529 = vshll.u32 %v326, 16
        %v531 = vrot.slane %v529, 5
        %v532 = vor.u32 %v528, %v531
        %v533 = vrot.slane %v532, 4
        %v535 = vshll.u32 %v327, 16
        %v537 = vrot.slane %v535, 5
        %v538 = vsel %vm380, %v533, %v537
        %v539 = vshrl.u32 %v327, 16
        %v541 = vrot.slane %v539, 4
        %v542 = vor.u32 %v541, %v537
        %v543 = vrot.slane %v542, 4
        %v545 = vshll.u32 %v368, 16
        %v547 = vrot.slane %v545, 5
        %v548 = vsel %vm380, %v543, %v547
        %v550 = vshrl.u32 %v328, 16
        %v552 = vrot.slane %v550, 4
        %v553 = vshll.u32 %v328, 16
        %v555 = vrot.slane %v553, 5
        %v556 = vor.u32 %v552, %v555
        %v557 = vrot.slane %v556, 4
        %v559 = vshll.u32 %v329, 16
        %v561 = vrot.slane %v559, 5
        %v562 = vsel %vm380, %v557, %v561
        %v563 = vshrl.u32 %v329, 16
        %v565 = vrot.slane %v563, 4
        %v566 = vor.u32 %v565, %v561
        %v567 = vrot.slane %v566, 4
        %v569 = vshll.u32 %v369, 16
        %v571 = vrot.slane %v569, 5
        %v572 = vsel %vm380, %v567, %v571
        %v574 = vshrl.u32 %v330, 16
        %v576 = vrot.slane %v574, 4
        %v577 = vshll.u32 %v330, 16
        %v579 = vrot.slane %v577, 5
        %v580 = vor.u32 %v576, %v579
        %v581 = vrot.slane %v580, 4
        %v583 = vshll.u32 %v331, 16
        %v585 = vrot.slane %v583, 5
        %v586 = vsel %vm380, %v581, %v585
        %v587 = vshrl.u32 %v331, 16
        %v589 = vrot.slane %v587, 4
        %v590 = vor.u32 %v589, %v585
        %v591 = vrot.slane %v590, 4
        %v593 = vshll.u32 %v370, 16
        %v595 = vrot.slane %v593, 5
        %v596 = vsel %vm380, %v591, %v595
        %v598 = vshrl.u32 %v332, 16
        %v600 = vrot.slane %v598, 4
        %v601 = vshll.u32 %v332, 16
        %v603 = vrot.slane %v601, 5
        %v604 = vor.u32 %v600, %v603
        %v605 = vrot.slane %v604, 4
        %v607 = vshll.u32 %v333, 16
        %v609 = vrot.slane %v607, 5
        %v610 = vsel %vm380, %v605, %v609
        %v611 = vshrl.u32 %v333, 16
        %v613 = vrot.slane %v611, 4
        %v614 = vor.u32 %v613, %v609
        %v615 = vrot.slane %v614, 4
        %v617 = vshll.u32 %v371, 16
        %v619 = vrot.slane %v617, 5
        %v620 = vsel %vm380, %v615, %v619
        %v622 = vshrl.u32 %v334, 16
        %v624 = vrot.slane %v622, 4
        %v625 = vshll.u32 %v334, 16
        %v627 = vrot.slane %v625, 5
        %v628 = vor.u32 %v624, %v627
        %v629 = vrot.slane %v628, 4
        %v631 = vshll.u32 %v335, 16
        %v633 = vrot.slane %v631, 5
        %v634 = vsel %vm380, %v629, %v633
        %v635 = vshrl.u32 %v335, 16
        %v637 = vrot.slane %v635, 4
        %v638 = vor.u32 %v637, %v633
        %v639 = vrot.slane %v638, 4
        %v641 = vshll.u32 %v372, 16
        %v643 = vrot.slane %v641, 5
        %v644 = vsel %vm380, %v639, %v643
        %v646 = vshrl.u32 %v336, 16
        %v648 = vrot.slane %v646, 4
        %v649 = vshll.u32 %v336, 16
        %v651 = vrot.slane %v649, 5
        %v652 = vor.u32 %v648, %v651
        %v653 = vrot.slane %v652, 4
        %v655 = vshll.u32 %v337, 16
        %v657 = vrot.slane %v655, 5
        %v658 = vsel %vm380, %v653, %v657
        %v659 = vshrl.u32 %v337, 16
        %v661 = vrot.slane %v659, 4
        %v662 = vor.u32 %v661, %v657
        %v663 = vrot.slane %v662, 4
        %v665 = vshll.u32 %v373, 16
        %v667 = vrot.slane %v665, 5
        %v668 = vsel %vm380, %v663, %v667
        %v670 = vshrl.u32 %v338, 16
        %v672 = vrot.slane %v670, 4
        %v673 = vshll.u32 %v338, 16
        %v675 = vrot.slane %v673, 5
        %v676 = vor.u32 %v672, %v675
        %v677 = vrot.slane %v676, 4
        %v679 = vshll.u32 %v339, 16
        %v681 = vrot.slane %v679, 5
        %v682 = vsel %vm380, %v677, %v681
        %v683 = vshrl.u32 %v339, 16
        %v685 = vrot.slane %v683, 4
        %v686 = vor.u32 %v685, %v681
        %v687 = vrot.slane %v686, 4
        %v689 = vshll.u32 %v374, 16
        %v691 = vrot.slane %v689, 5
        %v692 = vsel %vm380, %v687, %v691
        %v694 = vshrl.u32 %v340, 16
        %v696 = vrot.slane %v694, 4
        %v697 = vshll.u32 %v340, 16
        %v699 = vrot.slane %v697, 5
        %v700 = vor.u32 %v696, %v699
        %v701 = vrot.slane %v700, 4
        %v703 = vshll.u32 %v341, 16
        %v705 = vrot.slane %v703, 5
        %v706 = vsel %vm380, %v701, %v705
        %v707 = vshrl.u32 %v341, 16
        %v709 = vrot.slane %v707, 4
        %v710 = vor.u32 %v709, %v705
        %v711 = vrot.slane %v710, 4
        %v713 = vshll.u32 %v375, 16
        %v715 = vrot.slane %v713, 5
        %v716 = vsel %vm380, %v711, %v715
        %v718 = vshrl.u32 %v342, 16
        %v720 = vrot.slane %v718, 4
        %v721 = vshll.u32 %v342, 16
        %v723 = vrot.slane %v721, 5
        %v724 = vor.u32 %v720, %v723
        %v725 = vrot.slane %v724, 4
        %v727 = vshll.u32 %v343, 16
        %v729 = vrot.slane %v727, 5
        %v730 = vsel %vm380, %v725, %v729
        %v731 = vshrl.u32 %v343, 16
        %v733 = vrot.slane %v731, 4
        %v734 = vor.u32 %v733, %v729
        %v735 = vrot.slane %v734, 4
        %v737 = vshll.u32 %v376, 16
        %v739 = vrot.slane %v737, 5
        %v740 = vsel %vm380, %v735, %v739
        %v742 = vshrl.u32 %v344, 16
        %v744 = vrot.slane %v742, 4
        %v745 = vshll.u32 %v344, 16
        %v747 = vrot.slane %v745, 5
        %v748 = vor.u32 %v744, %v747
        %v749 = vrot.slane %v748, 4
        %v751 = vshll.u32 %v345, 16
        %v753 = vrot.slane %v751, 5
        %v754 = vsel %vm380, %v749, %v753
        %v755 = vshrl.u32 %v345, 16
        %v757 = vrot.slane %v755, 4
        %v758 = vor.u32 %v757, %v753
        %v759 = vrot.slane %v758, 4
        %v761 = vshll.u32 %v377, 16
        %v763 = vrot.slane %v761, 5
        %v764 = vsel %vm380, %v759, %v763
        %s765 = scalar_lea.vmem %s1, 64
        %v766 = vld [vmem:[%s765] sm:$0xf]
        %v767 = vld [vmem:[%s765 + $0x4] sm:$0xf]
        %v768 = vld [vmem:[%s765 + $0x8] sm:$0xf]
        %v769 = vld [vmem:[%s765 + $0xc] sm:$0xf]
        %v770 = vld [vmem:[%s765 + $0x10] sm:$0xf]
        %v771 = vld [vmem:[%s765 + $0x14] sm:$0xf]
        %v772 = vld [vmem:[%s765 + $0x18] sm:$0xf]
        %v773 = vld [vmem:[%s765 + $0x1c] sm:$0xf]
        %v774 = vld [vmem:[%s765 + $0x20] sm:$0xf]
        %v775 = vld [vmem:[%s765 + $0x24] sm:$0xf]
        %v776 = vld [vmem:[%s765 + $0x28] sm:$0xf]
        %v777 = vld [vmem:[%s765 + $0x2c] sm:$0xf]
        %v778 = vld [vmem:[%s765 + $0x30] sm:$0xf]
        %v779 = vld [vmem:[%s765 + $0x34] sm:$0xf]
        %v780 = vld [vmem:[%s765 + $0x38] sm:$0xf]
        %v781 = vld [vmem:[%s765 + $0x3c] sm:$0xf]
        %v782 = vunpack.c.l.b16 %v394
        %v783 = vunpack.c.l.b16 %v404
        %v784 = vunpack.c.l.b16 %v418
        %v785 = vunpack.c.l.b16 %v428
        %v786 = vunpack.c.l.b16 %v442
        %v787 = vunpack.c.l.b16 %v452
        %v788 = vunpack.c.l.b16 %v466
        %v789 = vunpack.c.l.b16 %v476
        %v790 = vunpack.c.l.b16 %v490
        %v791 = vunpack.c.l.b16 %v500
        %v792 = vunpack.c.l.b16 %v514
        %v793 = vunpack.c.l.b16 %v524
        %v794 = vunpack.c.l.b16 %v538
        %v795 = vunpack.c.l.b16 %v548
        %v796 = vunpack.c.l.b16 %v562
        %v797 = vunpack.c.l.b16 %v572
        %v798 = vunpack.c.l.b16 %v586
        %v799 = vunpack.c.l.b16 %v596
        %v800 = vunpack.c.l.b16 %v610
        %v801 = vunpack.c.l.b16 %v620
        %v802 = vunpack.c.l.b16 %v634
        %v803 = vunpack.c.l.b16 %v644
        %v804 = vunpack.c.l.b16 %v658
        %v805 = vunpack.c.l.b16 %v668
        %v806 = vunpack.c.l.b16 %v682
        %v807 = vunpack.c.l.b16 %v692
        %v808 = vunpack.c.l.b16 %v706
        %v809 = vunpack.c.l.b16 %v716
        %v810 = vunpack.c.l.b16 %v730
        %v811 = vunpack.c.l.b16 %v740
        %v812 = vunpack.c.l.b16 %v754
        %v813 = vunpack.c.l.b16 %v764
        %v814 = vpack.c.b16 %v783, %v782
        %v815 = vpack.c.b16 %v785, %v784
        %v816 = vpack.c.b16 %v787, %v786
        %v817 = vpack.c.b16 %v789, %v788
        %v818 = vpack.c.b16 %v791, %v790
        %v819 = vpack.c.b16 %v793, %v792
        %v820 = vpack.c.b16 %v795, %v794
        %v821 = vpack.c.b16 %v797, %v796
        %v822 = vpack.c.b16 %v799, %v798
        %v823 = vpack.c.b16 %v801, %v800
        %v824 = vpack.c.b16 %v803, %v802
        %v825 = vpack.c.b16 %v805, %v804
        %v826 = vpack.c.b16 %v807, %v806
        %v827 = vpack.c.b16 %v809, %v808
        %v828 = vpack.c.b16 %v811, %v810
        %v829 = vpack.c.b16 %v813, %v812
        %v862 = vunpack.c.l.b16 %v766
        %v863 = vunpack.c.l.b16 %v767
        %v864 = vunpack.c.l.b16 %v768
        %v865 = vunpack.c.l.b16 %v769
        %v866 = vunpack.c.l.b16 %v770
        %v867 = vunpack.c.l.b16 %v771
        %v868 = vunpack.c.l.b16 %v772
        %v869 = vunpack.c.l.b16 %v773
        %v870 = vunpack.c.l.b16 %v774
        %v871 = vunpack.c.l.b16 %v775
        %v872 = vunpack.c.l.b16 %v776
        %v873 = vunpack.c.l.b16 %v777
        %v874 = vunpack.c.l.b16 %v778
        %v875 = vunpack.c.l.b16 %v779
        %v876 = vunpack.c.l.b16 %v780
        %v877 = vunpack.c.l.b16 %v781
        %v878 = vpack.c.b16 %v863, %v862
        %v879 = vpack.c.b16 %v865, %v864
        %v880 = vpack.c.b16 %v867, %v866
        %v881 = vpack.c.b16 %v869, %v868
        %v882 = vpack.c.b16 %v871, %v870
        %v883 = vpack.c.b16 %v873, %v872
        %v884 = vpack.c.b16 %v875, %v874
        %v885 = vpack.c.b16 %v877, %v876
        %894 = vmatprep.subr.bf16.mxu0 0
        %895 = vmatpush1.bf16.msra.mxu0 %v885
        %896 = vmatprep.subr.bf16.mxu0 0
        %897 = vmatpush1.bf16.msra.mxu0 %v884
        %898 = vmatprep.subr.bf16.mxu0 0
        %899 = vmatpush1.bf16.msra.mxu0 %v883
        %900 = vmatprep.subr.bf16.mxu0 0
        %901 = vmatpush1.bf16.msra.mxu0 %v882
        %902 = vmatprep.subr.bf16.mxu0 0
        %903 = vmatpush1.bf16.msra.mxu0 %v881
        %904 = vmatprep.subr.bf16.mxu0 0
        %905 = vmatpush1.bf16.msra.mxu0 %v880
        %906 = vmatprep.subr.bf16.mxu0 0
        %907 = vmatpush1.bf16.msra.mxu0 %v879
        %908 = vmatprep.subr.bf16.mxu0 0
        %909 = vmatpush1.bf16.msra.mxu0 %v878
        %910 = vmatprep.subr.bf16.mxu0 0
        %911 = vmatpush2.bf16.msra.mxu0 0
        %912 = vmatprep.subr.bf16.mxu0 0
        %913 = vmatpush2.bf16.msra.mxu0 0
        %914 = vmatprep.subr.bf16.mxu0 0
        %915 = vmatpush2.bf16.msra.mxu0 0
        %916 = vmatprep.subr.bf16.mxu0 0
        %917 = vmatpush2.bf16.msra.mxu0 0
        %918 = vmatprep.subr.bf16.mxu0 0
        %919 = vmatpush2.bf16.msra.mxu0 0
        %920 = vmatprep.subr.bf16.mxu0 0
        %921 = vmatpush2.bf16.msra.mxu0 0
        %922 = vmatprep.subr.bf16.mxu0 0
        %923 = vmatpush2.bf16.msra.mxu0 0
        %924 = vmatprep.subr.bf16.mxu0 0
        %925 = vmatpush2.bf16.msra.mxu0 0
        %926 = vmatprep.mubr.bf16.mxu0 0
        %927 = vmatmul.mubr.bf16.gmra.mxu0 %v814
        %v928 = vpop.f32.mrf.mxu0
        %v929 = vadd.f32 0.0, %v928
        %v930 = vpop.f32.mrf.mxu0
        %v931 = vpop.f32.mrf.mxu0
        %v932 = vadd.f32 0.0, %v931
        %v933 = vpop.f32.mrf.mxu0
        %934 = vmatprep.mubr.bf16.mxu0 0
        %935 = vmatmul.mubr.bf16.gmra.mxu0 %v815
        %v936 = vpop.f32.mrf.mxu0
        %v937 = vadd.f32 0.0, %v936
        %v938 = vpop.f32.mrf.mxu0
        %v939 = vpop.f32.mrf.mxu0
        %v940 = vadd.f32 0.0, %v939
        %v941 = vpop.f32.mrf.mxu0
        %942 = vmatprep.mubr.bf16.mxu0 0
        %943 = vmatmul.mubr.bf16.gmra.mxu0 %v816
        %v944 = vpop.f32.mrf.mxu0
        %v945 = vadd.f32 0.0, %v944
        %v946 = vpop.f32.mrf.mxu0
        %v947 = vpop.f32.mrf.mxu0
        %v948 = vadd.f32 0.0, %v947
        %v949 = vpop.f32.mrf.mxu0
        %950 = vmatprep.mubr.bf16.mxu0 0
        %951 = vmatmul.mubr.bf16.gmra.mxu0 %v817
        %v952 = vpop.f32.mrf.mxu0
        %v953 = vadd.f32 0.0, %v952
        %v954 = vpop.f32.mrf.mxu0
        %v955 = vpop.f32.mrf.mxu0
        %v956 = vadd.f32 0.0, %v955
        %v957 = vpop.f32.mrf.mxu0
        %958 = vmatprep.mubr.bf16.mxu0 0
        %959 = vmatmul.mubr.bf16.gmra.mxu0 %v818
        %v960 = vpop.f32.mrf.mxu0
        %v961 = vadd.f32 0.0, %v960
        %v962 = vpop.f32.mrf.mxu0
        %v963 = vpop.f32.mrf.mxu0
        %v964 = vadd.f32 0.0, %v963
        %v965 = vpop.f32.mrf.mxu0
        %966 = vmatprep.mubr.bf16.mxu0 0
        %967 = vmatmul.mubr.bf16.gmra.mxu0 %v819
        %v968 = vpop.f32.mrf.mxu0
        %v969 = vadd.f32 0.0, %v968
        %v970 = vpop.f32.mrf.mxu0
        %v971 = vpop.f32.mrf.mxu0
        %v972 = vadd.f32 0.0, %v971
        %v973 = vpop.f32.mrf.mxu0
        %974 = vmatprep.mubr.bf16.mxu0 0
        %975 = vmatmul.mubr.bf16.gmra.mxu0 %v820
        %v976 = vpop.f32.mrf.mxu0
        %v977 = vadd.f32 0.0, %v976
        %v978 = vpop.f32.mrf.mxu0
        %v979 = vpop.f32.mrf.mxu0
        %v980 = vadd.f32 0.0, %v979
        %v981 = vpop.f32.mrf.mxu0
        %982 = vmatprep.mubr.bf16.mxu0 0
        %983 = vmatmul.mubr.bf16.gmra.mxu0 %v821
        %v984 = vpop.f32.mrf.mxu0
        %v985 = vadd.f32 0.0, %v984
        %v986 = vpop.f32.mrf.mxu0
        %v987 = vpop.f32.mrf.mxu0
        %v988 = vadd.f32 0.0, %v987
        %v989 = vpop.f32.mrf.mxu0
        %990 = vmatprep.mubr.bf16.mxu0 0
        %991 = vmatmul.mubr.bf16.gmra.mxu0 %v822
        %v992 = vpop.f32.mrf.mxu0
        %v993 = vadd.f32 0.0, %v992
        %v994 = vpop.f32.mrf.mxu0
        %v995 = vpop.f32.mrf.mxu0
        %v996 = vadd.f32 0.0, %v995
        %v997 = vpop.f32.mrf.mxu0
        %998 = vmatprep.mubr.bf16.mxu0 0
        %999 = vmatmul.mubr.bf16.gmra.mxu0 %v823
        %v1000 = vpop.f32.mrf.mxu0
        %v1001 = vadd.f32 0.0, %v1000
        %v1002 = vpop.f32.mrf.mxu0
        %v1003 = vpop.f32.mrf.mxu0
        %v1004 = vadd.f32 0.0, %v1003
        %v1005 = vpop.f32.mrf.mxu0
        %1006 = vmatprep.mubr.bf16.mxu0 0
        %1007 = vmatmul.mubr.bf16.gmra.mxu0 %v824
        %v1008 = vpop.f32.mrf.mxu0
        %v1009 = vadd.f32 0.0, %v1008
        %v1010 = vpop.f32.mrf.mxu0
        %v1011 = vpop.f32.mrf.mxu0
        %v1012 = vadd.f32 0.0, %v1011
        %v1013 = vpop.f32.mrf.mxu0
        %1014 = vmatprep.mubr.bf16.mxu0 0
        %1015 = vmatmul.mubr.bf16.gmra.mxu0 %v825
        %v1016 = vpop.f32.mrf.mxu0
        %v1017 = vadd.f32 0.0, %v1016
        %v1018 = vpop.f32.mrf.mxu0
        %v1019 = vpop.f32.mrf.mxu0
        %v1020 = vadd.f32 0.0, %v1019
        %v1021 = vpop.f32.mrf.mxu0
        %1022 = vmatprep.mubr.bf16.mxu0 0
        %1023 = vmatmul.mubr.bf16.gmra.mxu0 %v826
        %v1024 = vpop.f32.mrf.mxu0
        %v1025 = vadd.f32 0.0, %v1024
        %v1026 = vpop.f32.mrf.mxu0
        %v1027 = vpop.f32.mrf.mxu0
        %v1028 = vadd.f32 0.0, %v1027
        %v1029 = vpop.f32.mrf.mxu0
        %1030 = vmatprep.mubr.bf16.mxu0 0
        %1031 = vmatmul.mubr.bf16.gmra.mxu0 %v827
        %v1032 = vpop.f32.mrf.mxu0
        %v1033 = vadd.f32 0.0, %v1032
        %v1034 = vpop.f32.mrf.mxu0
        %v1035 = vpop.f32.mrf.mxu0
        %v1036 = vadd.f32 0.0, %v1035
        %v1037 = vpop.f32.mrf.mxu0
        %1038 = vmatprep.mubr.bf16.mxu0 0
        %1039 = vmatmul.mubr.bf16.gmra.mxu0 %v828
        %v1040 = vpop.f32.mrf.mxu0
        %v1041 = vadd.f32 0.0, %v1040
        %v1042 = vpop.f32.mrf.mxu0
        %v1043 = vpop.f32.mrf.mxu0
        %v1044 = vadd.f32 0.0, %v1043
        %v1045 = vpop.f32.mrf.mxu0
        %1046 = vmatprep.mubr.bf16.mxu0 0
        %1047 = vmatmul.mubr.bf16.gmra.mxu0 %v829
        %v1048 = vpop.f32.mrf.mxu0
        %v1049 = vadd.f32 0.0, %v1048
        %v1050 = vpop.f32.mrf.mxu0
        %v1051 = vpop.f32.mrf.mxu0
        %v1052 = vadd.f32 0.0, %v1051
        %v1053 = vpop.f32.mrf.mxu0
        %1054 = vdwg.mxu0
        %v1087 = vunpack.c.l.b16 %v314
        %v1088 = vunpack.c.l.b16 %v315
        %v1089 = vunpack.c.l.b16 %v316
        %v1090 = vunpack.c.l.b16 %v317
        %v1091 = vunpack.c.l.b16 %v318
        %v1092 = vunpack.c.l.b16 %v319
        %v1093 = vunpack.c.l.b16 %v320
        %v1094 = vunpack.c.l.b16 %v321
        %v1095 = vunpack.c.l.b16 %v322
        %v1096 = vunpack.c.l.b16 %v323
        %v1097 = vunpack.c.l.b16 %v324
        %v1098 = vunpack.c.l.b16 %v325
        %v1099 = vunpack.c.l.b16 %v326
        %v1100 = vunpack.c.l.b16 %v327
        %v1101 = vunpack.c.l.b16 %v328
        %v1102 = vunpack.c.l.b16 %v329
        %v1103 = vunpack.c.l.b16 %v330
        %v1104 = vunpack.c.l.b16 %v331
        %v1105 = vunpack.c.l.b16 %v332
        %v1106 = vunpack.c.l.b16 %v333
        %v1107 = vunpack.c.l.b16 %v334
        %v1108 = vunpack.c.l.b16 %v335
        %v1109 = vunpack.c.l.b16 %v336
        %v1110 = vunpack.c.l.b16 %v337
        %v1111 = vunpack.c.l.b16 %v338
        %v1112 = vunpack.c.l.b16 %v339
        %v1113 = vunpack.c.l.b16 %v340
        %v1114 = vunpack.c.l.b16 %v341
        %v1115 = vunpack.c.l.b16 %v342
        %v1116 = vunpack.c.l.b16 %v343
        %v1117 = vunpack.c.l.b16 %v344
        %v1118 = vunpack.c.l.b16 %v345
        %v1119 = vpack.c.b16 %v1088, %v1087
        %v1120 = vpack.c.b16 %v1090, %v1089
        %v1121 = vpack.c.b16 %v1092, %v1091
        %v1122 = vpack.c.b16 %v1094, %v1093
        %v1123 = vpack.c.b16 %v1096, %v1095
        %v1124 = vpack.c.b16 %v1098, %v1097
        %v1125 = vpack.c.b16 %v1100, %v1099
        %v1126 = vpack.c.b16 %v1102, %v1101
        %v1127 = vpack.c.b16 %v1104, %v1103
        %v1128 = vpack.c.b16 %v1106, %v1105
        %v1129 = vpack.c.b16 %v1108, %v1107
        %v1130 = vpack.c.b16 %v1110, %v1109
        %v1131 = vpack.c.b16 %v1112, %v1111
        %v1132 = vpack.c.b16 %v1114, %v1113
        %v1133 = vpack.c.b16 %v1116, %v1115
        %v1134 = vpack.c.b16 %v1118, %v1117
        %v1167 = vunpack.c.l.b16 %v346
        %v1168 = vunpack.c.l.b16 %v347
        %v1169 = vunpack.c.l.b16 %v348
        %v1170 = vunpack.c.l.b16 %v349
        %v1171 = vunpack.c.l.b16 %v350
        %v1172 = vunpack.c.l.b16 %v351
        %v1173 = vunpack.c.l.b16 %v352
        %v1174 = vunpack.c.l.b16 %v353
        %v1175 = vunpack.c.l.b16 %v354
        %v1176 = vunpack.c.l.b16 %v355
        %v1177 = vunpack.c.l.b16 %v356
        %v1178 = vunpack.c.l.b16 %v357
        %v1179 = vunpack.c.l.b16 %v358
        %v1180 = vunpack.c.l.b16 %v359
        %v1181 = vunpack.c.l.b16 %v360
        %v1182 = vunpack.c.l.b16 %v361
        %v1183 = vpack.c.b16 %v1168, %v1167
        %v1184 = vpack.c.b16 %v1170, %v1169
        %v1185 = vpack.c.b16 %v1172, %v1171
        %v1186 = vpack.c.b16 %v1174, %v1173
        %v1187 = vpack.c.b16 %v1176, %v1175
        %v1188 = vpack.c.b16 %v1178, %v1177
        %v1189 = vpack.c.b16 %v1180, %v1179
        %v1190 = vpack.c.b16 %v1182, %v1181
        %1199 = vmatprep.subr.bf16.mxu0 0
        %1200 = vmatpush1.bf16.msra.mxu0 %v1190
        %1201 = vmatprep.subr.bf16.mxu0 0
        %1202 = vmatpush1.bf16.msra.mxu0 %v1189
        %1203 = vmatprep.subr.bf16.mxu0 0
        %1204 = vmatpush1.bf16.msra.mxu0 %v1188
        %1205 = vmatprep.subr.bf16.mxu0 0
        %1206 = vmatpush1.bf16.msra.mxu0 %v1187
        %1207 = vmatprep.subr.bf16.mxu0 0
        %1208 = vmatpush1.bf16.msra.mxu0 %v1186
        %1209 = vmatprep.subr.bf16.mxu0 0
        %1210 = vmatpush1.bf16.msra.mxu0 %v1185
        %1211 = vmatprep.subr.bf16.mxu0 0
        %1212 = vmatpush1.bf16.msra.mxu0 %v1184
        %1213 = vmatprep.subr.bf16.mxu0 0
        %1214 = vmatpush1.bf16.msra.mxu0 %v1183
        %1215 = vmatprep.subr.bf16.mxu0 0
        %1216 = vmatpush2.bf16.msra.mxu0 0
        %1217 = vmatprep.subr.bf16.mxu0 0
        %1218 = vmatpush2.bf16.msra.mxu0 0
        %1219 = vmatprep.subr.bf16.mxu0 0
        %1220 = vmatpush2.bf16.msra.mxu0 0
        %1221 = vmatprep.subr.bf16.mxu0 0
        %1222 = vmatpush2.bf16.msra.mxu0 0
        %1223 = vmatprep.subr.bf16.mxu0 0
        %1224 = vmatpush2.bf16.msra.mxu0 0
        %1225 = vmatprep.subr.bf16.mxu0 0
        %1226 = vmatpush2.bf16.msra.mxu0 0
        %1227 = vmatprep.subr.bf16.mxu0 0
        %1228 = vmatpush2.bf16.msra.mxu0 0
        %1229 = vmatprep.subr.bf16.mxu0 0
        %1230 = vmatpush2.bf16.msra.mxu0 0
        %1231 = vmatprep.mubr.bf16.mxu0 0
        %1232 = vmatmul.mubr.bf16.gmra.mxu0 %v1119
        %v1233 = vpop.f32.mrf.mxu0
        %v1234 = vadd.f32 %v929, %v1233
        %v1235 = vpop.f32.mrf.mxu0
        %v1236 = vpop.f32.mrf.mxu0
        %v1237 = vadd.f32 %v932, %v1236
        %v1238 = vpop.f32.mrf.mxu0
        %1239 = vmatprep.mubr.bf16.mxu0 0
        %1240 = vmatmul.mubr.bf16.gmra.mxu0 %v1120
        %v1241 = vpop.f32.mrf.mxu0
        %v1242 = vadd.f32 %v937, %v1241
        %v1243 = vpop.f32.mrf.mxu0
        %v1244 = vpop.f32.mrf.mxu0
        %v1245 = vadd.f32 %v940, %v1244
        %v1246 = vpop.f32.mrf.mxu0
        %1247 = vmatprep.mubr.bf16.mxu0 0
        %1248 = vmatmul.mubr.bf16.gmra.mxu0 %v1121
        %v1249 = vpop.f32.mrf.mxu0
        %v1250 = vadd.f32 %v945, %v1249
        %v1251 = vpop.f32.mrf.mxu0
        %v1252 = vpop.f32.mrf.mxu0
        %v1253 = vadd.f32 %v948, %v1252
        %v1254 = vpop.f32.mrf.mxu0
        %1255 = vmatprep.mubr.bf16.mxu0 0
        %1256 = vmatmul.mubr.bf16.gmra.mxu0 %v1122
        %v1257 = vpop.f32.mrf.mxu0
        %v1258 = vadd.f32 %v953, %v1257
        %v1259 = vpop.f32.mrf.mxu0
        %v1260 = vpop.f32.mrf.mxu0
        %v1261 = vadd.f32 %v956, %v1260
        %v1262 = vpop.f32.mrf.mxu0
        %1263 = vmatprep.mubr.bf16.mxu0 0
        %1264 = vmatmul.mubr.bf16.gmra.mxu0 %v1123
        %v1265 = vpop.f32.mrf.mxu0
        %v1266 = vadd.f32 %v961, %v1265
        %v1267 = vpop.f32.mrf.mxu0
        %v1268 = vpop.f32.mrf.mxu0
        %v1269 = vadd.f32 %v964, %v1268
        %v1270 = vpop.f32.mrf.mxu0
        %1271 = vmatprep.mubr.bf16.mxu0 0
        %1272 = vmatmul.mubr.bf16.gmra.mxu0 %v1124
        %v1273 = vpop.f32.mrf.mxu0
        %v1274 = vadd.f32 %v969, %v1273
        %v1275 = vpop.f32.mrf.mxu0
        %v1276 = vpop.f32.mrf.mxu0
        %v1277 = vadd.f32 %v972, %v1276
        %v1278 = vpop.f32.mrf.mxu0
        %1279 = vmatprep.mubr.bf16.mxu0 0
        %1280 = vmatmul.mubr.bf16.gmra.mxu0 %v1125
        %v1281 = vpop.f32.mrf.mxu0
        %v1282 = vadd.f32 %v977, %v1281
        %v1283 = vpop.f32.mrf.mxu0
        %v1284 = vpop.f32.mrf.mxu0
        %v1285 = vadd.f32 %v980, %v1284
        %v1286 = vpop.f32.mrf.mxu0
        %1287 = vmatprep.mubr.bf16.mxu0 0
        %1288 = vmatmul.mubr.bf16.gmra.mxu0 %v1126
        %v1289 = vpop.f32.mrf.mxu0
        %v1290 = vadd.f32 %v985, %v1289
        %v1291 = vpop.f32.mrf.mxu0
        %v1292 = vpop.f32.mrf.mxu0
        %v1293 = vadd.f32 %v988, %v1292
        %v1294 = vpop.f32.mrf.mxu0
        %1295 = vmatprep.mubr.bf16.mxu0 0
        %1296 = vmatmul.mubr.bf16.gmra.mxu0 %v1127
        %v1297 = vpop.f32.mrf.mxu0
        %v1298 = vadd.f32 %v993, %v1297
        %v1299 = vpop.f32.mrf.mxu0
        %v1300 = vpop.f32.mrf.mxu0
        %v1301 = vadd.f32 %v996, %v1300
        %v1302 = vpop.f32.mrf.mxu0
        %1303 = vmatprep.mubr.bf16.mxu0 0
        %1304 = vmatmul.mubr.bf16.gmra.mxu0 %v1128
        %v1305 = vpop.f32.mrf.mxu0
        %v1306 = vadd.f32 %v1001, %v1305
        %v1307 = vpop.f32.mrf.mxu0
        %v1308 = vpop.f32.mrf.mxu0
        %v1309 = vadd.f32 %v1004, %v1308
        %v1310 = vpop.f32.mrf.mxu0
        %1311 = vmatprep.mubr.bf16.mxu0 0
        %1312 = vmatmul.mubr.bf16.gmra.mxu0 %v1129
        %v1313 = vpop.f32.mrf.mxu0
        %v1314 = vadd.f32 %v1009, %v1313
        %v1315 = vpop.f32.mrf.mxu0
        %v1316 = vpop.f32.mrf.mxu0
        %v1317 = vadd.f32 %v1012, %v1316
        %v1318 = vpop.f32.mrf.mxu0
        %1319 = vmatprep.mubr.bf16.mxu0 0
        %1320 = vmatmul.mubr.bf16.gmra.mxu0 %v1130
        %v1321 = vpop.f32.mrf.mxu0
        %v1322 = vadd.f32 %v1017, %v1321
        %v1323 = vpop.f32.mrf.mxu0
        %v1324 = vpop.f32.mrf.mxu0
        %v1325 = vadd.f32 %v1020, %v1324
        %v1326 = vpop.f32.mrf.mxu0
        %1327 = vmatprep.mubr.bf16.mxu0 0
        %1328 = vmatmul.mubr.bf16.gmra.mxu0 %v1131
        %v1329 = vpop.f32.mrf.mxu0
        %v1330 = vadd.f32 %v1025, %v1329
        %v1331 = vpop.f32.mrf.mxu0
        %v1332 = vpop.f32.mrf.mxu0
        %v1333 = vadd.f32 %v1028, %v1332
        %v1334 = vpop.f32.mrf.mxu0
        %1335 = vmatprep.mubr.bf16.mxu0 0
        %1336 = vmatmul.mubr.bf16.gmra.mxu0 %v1132
        %v1337 = vpop.f32.mrf.mxu0
        %v1338 = vadd.f32 %v1033, %v1337
        %v1339 = vpop.f32.mrf.mxu0
        %v1340 = vpop.f32.mrf.mxu0
        %v1341 = vadd.f32 %v1036, %v1340
        %v1342 = vpop.f32.mrf.mxu0
        %1343 = vmatprep.mubr.bf16.mxu0 0
        %1344 = vmatmul.mubr.bf16.gmra.mxu0 %v1133
        %v1345 = vpop.f32.mrf.mxu0
        %v1346 = vadd.f32 %v1041, %v1345
        %v1347 = vpop.f32.mrf.mxu0
        %v1348 = vpop.f32.mrf.mxu0
        %v1349 = vadd.f32 %v1044, %v1348
        %v1350 = vpop.f32.mrf.mxu0
        %1351 = vmatprep.mubr.bf16.mxu0 0
        %1352 = vmatmul.mubr.bf16.gmra.mxu0 %v1134
        %v1353 = vpop.f32.mrf.mxu0
        %v1354 = vadd.f32 %v1049, %v1353
        %v1355 = vpop.f32.mrf.mxu0
        %v1356 = vpop.f32.mrf.mxu0
        %v1357 = vadd.f32 %v1052, %v1356
        %v1358 = vpop.f32.mrf.mxu0
        %1359 = vdwg.mxu0
        %v1360 = vld [vmem:[%s312] sm:$0xe]
        %v1361 = vld [vmem:[%s312 + $0xc] sm:$0xe]
        %v1362 = vld [vmem:[%s312 + $0x18] sm:$0xe]
        %v1363 = vld [vmem:[%s312 + $0x24] sm:$0xe]
        %v1364 = vld [vmem:[%s312 + $0x30] sm:$0xe]
        %v1365 = vld [vmem:[%s312 + $0x3c] sm:$0xe]
        %v1366 = vld [vmem:[%s312 + $0x48] sm:$0xe]
        %v1367 = vld [vmem:[%s312 + $0x54] sm:$0xe]
        %v1368 = vld [vmem:[%s312 + $0x60] sm:$0xe]
        %v1369 = vld [vmem:[%s312 + $0x6c] sm:$0xe]
        %v1370 = vld [vmem:[%s312 + $0x78] sm:$0xe]
        %v1371 = vld [vmem:[%s312 + $0x84] sm:$0xe]
        %v1372 = vld [vmem:[%s312 + $0x90] sm:$0xe]
        %v1373 = vld [vmem:[%s312 + $0x9c] sm:$0xe]
        %v1374 = vld [vmem:[%s312 + $0xa8] sm:$0xe]
        %v1375 = vld [vmem:[%s312 + $0xb4] sm:$0xe]
        %vm1408 = vcmask 1042432
        %vm1409 = vcmask 1046532
        %vm1410 = vmor %vm1408, %vm1409
        %v1411 = vrot.slane %v1360, 5
        %v1412 = vrot.slane %v1411, 4
        %v1413 = vrot.slane %v315, 5
        %v1414 = vsel %vm1410, %v1412, %v1413
        %v1415 = vrot.slane %v1413, 4
        %v1416 = vrot.slane %v362, 5
        %v1417 = vsel %vm1410, %v1415, %v1416
        %v1418 = vrot.slane %v1361, 5
        %v1419 = vrot.slane %v1418, 4
        %v1420 = vrot.slane %v317, 5
        %v1421 = vsel %vm1410, %v1419, %v1420
        %v1422 = vrot.slane %v1420, 4
        %v1423 = vrot.slane %v363, 5
        %v1424 = vsel %vm1410, %v1422, %v1423
        %v1425 = vrot.slane %v1362, 5
        %v1426 = vrot.slane %v1425, 4
        %v1427 = vrot.slane %v319, 5
        %v1428 = vsel %vm1410, %v1426, %v1427
        %v1429 = vrot.slane %v1427, 4
        %v1430 = vrot.slane %v364, 5
        %v1431 = vsel %vm1410, %v1429, %v1430
        %v1432 = vrot.slane %v1363, 5
        %v1433 = vrot.slane %v1432, 4
        %v1434 = vrot.slane %v321, 5
        %v1435 = vsel %vm1410, %v1433, %v1434
        %v1436 = vrot.slane %v1434, 4
        %v1437 = vrot.slane %v365, 5
        %v1438 = vsel %vm1410, %v1436, %v1437
        %v1439 = vrot.slane %v1364, 5
        %v1440 = vrot.slane %v1439, 4
        %v1441 = vrot.slane %v323, 5
        %v1442 = vsel %vm1410, %v1440, %v1441
        %v1443 = vrot.slane %v1441, 4
        %v1444 = vrot.slane %v366, 5
        %v1445 = vsel %vm1410, %v1443, %v1444
        %v1446 = vrot.slane %v1365, 5
        %v1447 = vrot.slane %v1446, 4
        %v1448 = vrot.slane %v325, 5
        %v1449 = vsel %vm1410, %v1447, %v1448
        %v1450 = vrot.slane %v1448, 4
        %v1451 = vrot.slane %v367, 5
        %v1452 = vsel %vm1410, %v1450, %v1451
        %v1453 = vrot.slane %v1366, 5
        %v1454 = vrot.slane %v1453, 4
        %v1455 = vrot.slane %v327, 5
        %v1456 = vsel %vm1410, %v1454, %v1455
        %v1457 = vrot.slane %v1455, 4
        %v1458 = vrot.slane %v368, 5
        %v1459 = vsel %vm1410, %v1457, %v1458
        %v1460 = vrot.slane %v1367, 5
        %v1461 = vrot.slane %v1460, 4
        %v1462 = vrot.slane %v329, 5
        %v1463 = vsel %vm1410, %v1461, %v1462
        %v1464 = vrot.slane %v1462, 4
        %v1465 = vrot.slane %v369, 5
        %v1466 = vsel %vm1410, %v1464, %v1465
        %v1467 = vrot.slane %v1368, 5
        %v1468 = vrot.slane %v1467, 4
        %v1469 = vrot.slane %v331, 5
        %v1470 = vsel %vm1410, %v1468, %v1469
        %v1471 = vrot.slane %v1469, 4
        %v1472 = vrot.slane %v370, 5
        %v1473 = vsel %vm1410, %v1471, %v1472
        %v1474 = vrot.slane %v1369, 5
        %v1475 = vrot.slane %v1474, 4
        %v1476 = vrot.slane %v333, 5
        %v1477 = vsel %vm1410, %v1475, %v1476
        %v1478 = vrot.slane %v1476, 4
        %v1479 = vrot.slane %v371, 5
        %v1480 = vsel %vm1410, %v1478, %v1479
        %v1481 = vrot.slane %v1370, 5
        %v1482 = vrot.slane %v1481, 4
        %v1483 = vrot.slane %v335, 5
        %v1484 = vsel %vm1410, %v1482, %v1483
        %v1485 = vrot.slane %v1483, 4
        %v1486 = vrot.slane %v372, 5
        %v1487 = vsel %vm1410, %v1485, %v1486
        %v1488 = vrot.slane %v1371, 5
        %v1489 = vrot.slane %v1488, 4
        %v1490 = vrot.slane %v337, 5
        %v1491 = vsel %vm1410, %v1489, %v1490
        %v1492 = vrot.slane %v1490, 4
        %v1493 = vrot.slane %v373, 5
        %v1494 = vsel %vm1410, %v1492, %v1493
        %v1495 = vrot.slane %v1372, 5
        %v1496 = vrot.slane %v1495, 4
        %v1497 = vrot.slane %v339, 5
        %v1498 = vsel %vm1410, %v1496, %v1497
        %v1499 = vrot.slane %v1497, 4
        %v1500 = vrot.slane %v374, 5
        %v1501 = vsel %vm1410, %v1499, %v1500
        %v1502 = vrot.slane %v1373, 5
        %v1503 = vrot.slane %v1502, 4
        %v1504 = vrot.slane %v341, 5
        %v1505 = vsel %vm1410, %v1503, %v1504
        %v1506 = vrot.slane %v1504, 4
        %v1507 = vrot.slane %v375, 5
        %v1508 = vsel %vm1410, %v1506, %v1507
        %v1509 = vrot.slane %v1374, 5
        %v1510 = vrot.slane %v1509, 4
        %v1511 = vrot.slane %v343, 5
        %v1512 = vsel %vm1410, %v1510, %v1511
        %v1513 = vrot.slane %v1511, 4
        %v1514 = vrot.slane %v376, 5
        %v1515 = vsel %vm1410, %v1513, %v1514
        %v1516 = vrot.slane %v1375, 5
        %v1517 = vrot.slane %v1516, 4
        %v1518 = vrot.slane %v345, 5
        %v1519 = vsel %vm1410, %v1517, %v1518
        %v1520 = vrot.slane %v1518, 4
        %v1521 = vrot.slane %v377, 5
        %v1522 = vsel %vm1410, %v1520, %v1521
        %s1523 = scalar_lea.vmem %s1, 128
        %v1524 = vld [vmem:[%s1523] sm:$0xf]
        %v1525 = vld [vmem:[%s1523 + $0x4] sm:$0xf]
        %v1526 = vld [vmem:[%s1523 + $0x8] sm:$0xf]
        %v1527 = vld [vmem:[%s1523 + $0xc] sm:$0xf]
        %v1528 = vld [vmem:[%s1523 + $0x10] sm:$0xf]
        %v1529 = vld [vmem:[%s1523 + $0x14] sm:$0xf]
        %v1530 = vld [vmem:[%s1523 + $0x18] sm:$0xf]
        %v1531 = vld [vmem:[%s1523 + $0x1c] sm:$0xf]
        %v1532 = vld [vmem:[%s1523 + $0x20] sm:$0xf]
        %v1533 = vld [vmem:[%s1523 + $0x24] sm:$0xf]
        %v1534 = vld [vmem:[%s1523 + $0x28] sm:$0xf]
        %v1535 = vld [vmem:[%s1523 + $0x2c] sm:$0xf]
        %v1536 = vld [vmem:[%s1523 + $0x30] sm:$0xf]
        %v1537 = vld [vmem:[%s1523 + $0x34] sm:$0xf]
        %v1538 = vld [vmem:[%s1523 + $0x38] sm:$0xf]
        %v1539 = vld [vmem:[%s1523 + $0x3c] sm:$0xf]
        %v1540 = vunpack.c.l.b16 %v1414
        %v1541 = vunpack.c.l.b16 %v1417
        %v1542 = vunpack.c.l.b16 %v1421
        %v1543 = vunpack.c.l.b16 %v1424
        %v1544 = vunpack.c.l.b16 %v1428
        %v1545 = vunpack.c.l.b16 %v1431
        %v1546 = vunpack.c.l.b16 %v1435
        %v1547 = vunpack.c.l.b16 %v1438
        %v1548 = vunpack.c.l.b16 %v1442
        %v1549 = vunpack.c.l.b16 %v1445
        %v1550 = vunpack.c.l.b16 %v1449
        %v1551 = vunpack.c.l.b16 %v1452
        %v1552 = vunpack.c.l.b16 %v1456
        %v1553 = vunpack.c.l.b16 %v1459
        %v1554 = vunpack.c.l.b16 %v1463
        %v1555 = vunpack.c.l.b16 %v1466
        %v1556 = vunpack.c.l.b16 %v1470
        %v1557 = vunpack.c.l.b16 %v1473
        %v1558 = vunpack.c.l.b16 %v1477
        %v1559 = vunpack.c.l.b16 %v1480
        %v1560 = vunpack.c.l.b16 %v1484
        %v1561 = vunpack.c.l.b16 %v1487
        %v1562 = vunpack.c.l.b16 %v1491
        %v1563 = vunpack.c.l.b16 %v1494
        %v1564 = vunpack.c.l.b16 %v1498
        %v1565 = vunpack.c.l.b16 %v1501
        %v1566 = vunpack.c.l.b16 %v1505
        %v1567 = vunpack.c.l.b16 %v1508
        %v1568 = vunpack.c.l.b16 %v1512
        %v1569 = vunpack.c.l.b16 %v1515
        %v1570 = vunpack.c.l.b16 %v1519
        %v1571 = vunpack.c.l.b16 %v1522
        %v1572 = vpack.c.b16 %v1541, %v1540
        %v1573 = vpack.c.b16 %v1543, %v1542
        %v1574 = vpack.c.b16 %v1545, %v1544
        %v1575 = vpack.c.b16 %v1547, %v1546
        %v1576 = vpack.c.b16 %v1549, %v1548
        %v1577 = vpack.c.b16 %v1551, %v1550
        %v1578 = vpack.c.b16 %v1553, %v1552
        %v1579 = vpack.c.b16 %v1555, %v1554
        %v1580 = vpack.c.b16 %v1557, %v1556
        %v1581 = vpack.c.b16 %v1559, %v1558
        %v1582 = vpack.c.b16 %v1561, %v1560
        %v1583 = vpack.c.b16 %v1563, %v1562
        %v1584 = vpack.c.b16 %v1565, %v1564
        %v1585 = vpack.c.b16 %v1567, %v1566
        %v1586 = vpack.c.b16 %v1569, %v1568
        %v1587 = vpack.c.b16 %v1571, %v1570
        %v1620 = vunpack.c.l.b16 %v1524
        %v1621 = vunpack.c.l.b16 %v1525
        %v1622 = vunpack.c.l.b16 %v1526
        %v1623 = vunpack.c.l.b16 %v1527
        %v1624 = vunpack.c.l.b16 %v1528
        %v1625 = vunpack.c.l.b16 %v1529
        %v1626 = vunpack.c.l.b16 %v1530
        %v1627 = vunpack.c.l.b16 %v1531
        %v1628 = vunpack.c.l.b16 %v1532
        %v1629 = vunpack.c.l.b16 %v1533
        %v1630 = vunpack.c.l.b16 %v1534
        %v1631 = vunpack.c.l.b16 %v1535
        %v1632 = vunpack.c.l.b16 %v1536
        %v1633 = vunpack.c.l.b16 %v1537
        %v1634 = vunpack.c.l.b16 %v1538
        %v1635 = vunpack.c.l.b16 %v1539
        %v1636 = vpack.c.b16 %v1621, %v1620
        %v1637 = vpack.c.b16 %v1623, %v1622
        %v1638 = vpack.c.b16 %v1625, %v1624
        %v1639 = vpack.c.b16 %v1627, %v1626
        %v1640 = vpack.c.b16 %v1629, %v1628
        %v1641 = vpack.c.b16 %v1631, %v1630
        %v1642 = vpack.c.b16 %v1633, %v1632
        %v1643 = vpack.c.b16 %v1635, %v1634
        %1652 = vmatprep.subr.bf16.mxu0 0
        %1653 = vmatpush1.bf16.msra.mxu0 %v1643
        %1654 = vmatprep.subr.bf16.mxu0 0
        %1655 = vmatpush1.bf16.msra.mxu0 %v1642
        %1656 = vmatprep.subr.bf16.mxu0 0
        %1657 = vmatpush1.bf16.msra.mxu0 %v1641
        %1658 = vmatprep.subr.bf16.mxu0 0
        %1659 = vmatpush1.bf16.msra.mxu0 %v1640
        %1660 = vmatprep.subr.bf16.mxu0 0
        %1661 = vmatpush1.bf16.msra.mxu0 %v1639
        %1662 = vmatprep.subr.bf16.mxu0 0
        %1663 = vmatpush1.bf16.msra.mxu0 %v1638
        %1664 = vmatprep.subr.bf16.mxu0 0
        %1665 = vmatpush1.bf16.msra.mxu0 %v1637
        %1666 = vmatprep.subr.bf16.mxu0 0
        %1667 = vmatpush1.bf16.msra.mxu0 %v1636
        %1668 = vmatprep.subr.bf16.mxu0 0
        %1669 = vmatpush2.bf16.msra.mxu0 0
        %1670 = vmatprep.subr.bf16.mxu0 0
        %1671 = vmatpush2.bf16.msra.mxu0 0
        %1672 = vmatprep.subr.bf16.mxu0 0
        %1673 = vmatpush2.bf16.msra.mxu0 0
        %1674 = vmatprep.subr.bf16.mxu0 0
        %1675 = vmatpush2.bf16.msra.mxu0 0
        %1676 = vmatprep.subr.bf16.mxu0 0
        %1677 = vmatpush2.bf16.msra.mxu0 0
        %1678 = vmatprep.subr.bf16.mxu0 0
        %1679 = vmatpush2.bf16.msra.mxu0 0
        %1680 = vmatprep.subr.bf16.mxu0 0
        %1681 = vmatpush2.bf16.msra.mxu0 0
        %1682 = vmatprep.subr.bf16.mxu0 0
        %1683 = vmatpush2.bf16.msra.mxu0 0
        %1684 = vmatprep.mubr.bf16.mxu0 0
        %1685 = vmatmul.mubr.bf16.gmra.mxu0 %v1572
        %v1686 = vpop.f32.mrf.mxu0
        %v1687 = vadd.f32 0.0, %v1686
        %v1688 = vpop.f32.mrf.mxu0
        %v1689 = vpop.f32.mrf.mxu0
        %v1690 = vadd.f32 0.0, %v1689
        %v1691 = vpop.f32.mrf.mxu0
        %1692 = vmatprep.mubr.bf16.mxu0 0
        %1693 = vmatmul.mubr.bf16.gmra.mxu0 %v1573
        %v1694 = vpop.f32.mrf.mxu0
        %v1695 = vadd.f32 0.0, %v1694
        %v1696 = vpop.f32.mrf.mxu0
        %v1697 = vpop.f32.mrf.mxu0
        %v1698 = vadd.f32 0.0, %v1697
        %v1699 = vpop.f32.mrf.mxu0
        %1700 = vmatprep.mubr.bf16.mxu0 0
        %1701 = vmatmul.mubr.bf16.gmra.mxu0 %v1574
        %v1702 = vpop.f32.mrf.mxu0
        %v1703 = vadd.f32 0.0, %v1702
        %v1704 = vpop.f32.mrf.mxu0
        %v1705 = vpop.f32.mrf.mxu0
        %v1706 = vadd.f32 0.0, %v1705
        %v1707 = vpop.f32.mrf.mxu0
        %1708 = vmatprep.mubr.bf16.mxu0 0
        %1709 = vmatmul.mubr.bf16.gmra.mxu0 %v1575
        %v1710 = vpop.f32.mrf.mxu0
        %v1711 = vadd.f32 0.0, %v1710
        %v1712 = vpop.f32.mrf.mxu0
        %v1713 = vpop.f32.mrf.mxu0
        %v1714 = vadd.f32 0.0, %v1713
        %v1715 = vpop.f32.mrf.mxu0
        %1716 = vmatprep.mubr.bf16.mxu0 0
        %1717 = vmatmul.mubr.bf16.gmra.mxu0 %v1576
        %v1718 = vpop.f32.mrf.mxu0
        %v1719 = vadd.f32 0.0, %v1718
        %v1720 = vpop.f32.mrf.mxu0
        %v1721 = vpop.f32.mrf.mxu0
        %v1722 = vadd.f32 0.0, %v1721
        %v1723 = vpop.f32.mrf.mxu0
        %1724 = vmatprep.mubr.bf16.mxu0 0
        %1725 = vmatmul.mubr.bf16.gmra.mxu0 %v1577
        %v1726 = vpop.f32.mrf.mxu0
        %v1727 = vadd.f32 0.0, %v1726
        %v1728 = vpop.f32.mrf.mxu0
        %v1729 = vpop.f32.mrf.mxu0
        %v1730 = vadd.f32 0.0, %v1729
        %v1731 = vpop.f32.mrf.mxu0
        %1732 = vmatprep.mubr.bf16.mxu0 0
        %1733 = vmatmul.mubr.bf16.gmra.mxu0 %v1578
        %v1734 = vpop.f32.mrf.mxu0
        %v1735 = vadd.f32 0.0, %v1734
        %v1736 = vpop.f32.mrf.mxu0
        %v1737 = vpop.f32.mrf.mxu0
        %v1738 = vadd.f32 0.0, %v1737
        %v1739 = vpop.f32.mrf.mxu0
        %1740 = vmatprep.mubr.bf16.mxu0 0
        %1741 = vmatmul.mubr.bf16.gmra.mxu0 %v1579
        %v1742 = vpop.f32.mrf.mxu0
        %v1743 = vadd.f32 0.0, %v1742
        %v1744 = vpop.f32.mrf.mxu0
        %v1745 = vpop.f32.mrf.mxu0
        %v1746 = vadd.f32 0.0, %v1745
        %v1747 = vpop.f32.mrf.mxu0
        %1748 = vmatprep.mubr.bf16.mxu0 0
        %1749 = vmatmul.mubr.bf16.gmra.mxu0 %v1580
        %v1750 = vpop.f32.mrf.mxu0
        %v1751 = vadd.f32 0.0, %v1750
        %v1752 = vpop.f32.mrf.mxu0
        %v1753 = vpop.f32.mrf.mxu0
        %v1754 = vadd.f32 0.0, %v1753
        %v1755 = vpop.f32.mrf.mxu0
        %1756 = vmatprep.mubr.bf16.mxu0 0
        %1757 = vmatmul.mubr.bf16.gmra.mxu0 %v1581
        %v1758 = vpop.f32.mrf.mxu0
        %v1759 = vadd.f32 0.0, %v1758
        %v1760 = vpop.f32.mrf.mxu0
        %v1761 = vpop.f32.mrf.mxu0
        %v1762 = vadd.f32 0.0, %v1761
        %v1763 = vpop.f32.mrf.mxu0
        %1764 = vmatprep.mubr.bf16.mxu0 0
        %1765 = vmatmul.mubr.bf16.gmra.mxu0 %v1582
        %v1766 = vpop.f32.mrf.mxu0
        %v1767 = vadd.f32 0.0, %v1766
        %v1768 = vpop.f32.mrf.mxu0
        %v1769 = vpop.f32.mrf.mxu0
        %v1770 = vadd.f32 0.0, %v1769
        %v1771 = vpop.f32.mrf.mxu0
        %1772 = vmatprep.mubr.bf16.mxu0 0
        %1773 = vmatmul.mubr.bf16.gmra.mxu0 %v1583
        %v1774 = vpop.f32.mrf.mxu0
        %v1775 = vadd.f32 0.0, %v1774
        %v1776 = vpop.f32.mrf.mxu0
        %v1777 = vpop.f32.mrf.mxu0
        %v1778 = vadd.f32 0.0, %v1777
        %v1779 = vpop.f32.mrf.mxu0
        %1780 = vmatprep.mubr.bf16.mxu0 0
        %1781 = vmatmul.mubr.bf16.gmra.mxu0 %v1584
        %v1782 = vpop.f32.mrf.mxu0
        %v1783 = vadd.f32 0.0, %v1782
        %v1784 = vpop.f32.mrf.mxu0
        %v1785 = vpop.f32.mrf.mxu0
        %v1786 = vadd.f32 0.0, %v1785
        %v1787 = vpop.f32.mrf.mxu0
        %1788 = vmatprep.mubr.bf16.mxu0 0
        %1789 = vmatmul.mubr.bf16.gmra.mxu0 %v1585
        %v1790 = vpop.f32.mrf.mxu0
        %v1791 = vadd.f32 0.0, %v1790
        %v1792 = vpop.f32.mrf.mxu0
        %v1793 = vpop.f32.mrf.mxu0
        %v1794 = vadd.f32 0.0, %v1793
        %v1795 = vpop.f32.mrf.mxu0
        %1796 = vmatprep.mubr.bf16.mxu0 0
        %1797 = vmatmul.mubr.bf16.gmra.mxu0 %v1586
        %v1798 = vpop.f32.mrf.mxu0
        %v1799 = vadd.f32 0.0, %v1798
        %v1800 = vpop.f32.mrf.mxu0
        %v1801 = vpop.f32.mrf.mxu0
        %v1802 = vadd.f32 0.0, %v1801
        %v1803 = vpop.f32.mrf.mxu0
        %1804 = vmatprep.mubr.bf16.mxu0 0
        %1805 = vmatmul.mubr.bf16.gmra.mxu0 %v1587
        %v1806 = vpop.f32.mrf.mxu0
        %v1807 = vadd.f32 0.0, %v1806
        %v1808 = vpop.f32.mrf.mxu0
        %v1809 = vpop.f32.mrf.mxu0
        %v1810 = vadd.f32 0.0, %v1809
        %v1811 = vpop.f32.mrf.mxu0
        %1812 = vdwg.mxu0
        %v1813 = vadd.f32 %v1234, %v1687
        %v1814 = vadd.f32 %v1237, %v1690
        %v1815 = vadd.f32 %v1242, %v1695
        %v1816 = vadd.f32 %v1245, %v1698
        %v1817 = vadd.f32 %v1250, %v1703
        %v1818 = vadd.f32 %v1253, %v1706
        %v1819 = vadd.f32 %v1258, %v1711
        %v1820 = vadd.f32 %v1261, %v1714
        %v1821 = vadd.f32 %v1266, %v1719
        %v1822 = vadd.f32 %v1269, %v1722
        %v1823 = vadd.f32 %v1274, %v1727
        %v1824 = vadd.f32 %v1277, %v1730
        %v1825 = vadd.f32 %v1282, %v1735
        %v1826 = vadd.f32 %v1285, %v1738
        %v1827 = vadd.f32 %v1290, %v1743
        %v1828 = vadd.f32 %v1293, %v1746
        %v1829 = vadd.f32 %v1298, %v1751
        %v1830 = vadd.f32 %v1301, %v1754
        %v1831 = vadd.f32 %v1306, %v1759
        %v1832 = vadd.f32 %v1309, %v1762
        %v1833 = vadd.f32 %v1314, %v1767
        %v1834 = vadd.f32 %v1317, %v1770
        %v1835 = vadd.f32 %v1322, %v1775
        %v1836 = vadd.f32 %v1325, %v1778
        %v1837 = vadd.f32 %v1330, %v1783
        %v1838 = vadd.f32 %v1333, %v1786
        %v1839 = vadd.f32 %v1338, %v1791
        %v1840 = vadd.f32 %v1341, %v1794
        %v1841 = vadd.f32 %v1346, %v1799
        %v1842 = vadd.f32 %v1349, %v1802
        %v1843 = vadd.f32 %v1354, %v1807
        %v1844 = vadd.f32 %v1357, %v1810
        %s1845 = scalar_lea.vmem %s312, 12
        %v1846 = vld [vmem:[%s1845] sm:$0xf]
        %v1847 = vld [vmem:[%s1845 + $0x4] sm:$0xf]
        %v1848 = vld [vmem:[%s1845 + $0xc] sm:$0xf]
        %v1849 = vld [vmem:[%s1845 + $0x10] sm:$0xf]
        %v1850 = vld [vmem:[%s1845 + $0x18] sm:$0xf]
        %v1851 = vld [vmem:[%s1845 + $0x1c] sm:$0xf]
        %v1852 = vld [vmem:[%s1845 + $0x24] sm:$0xf]
        %v1853 = vld [vmem:[%s1845 + $0x28] sm:$0xf]
        %v1854 = vld [vmem:[%s1845 + $0x30] sm:$0xf]
        %v1855 = vld [vmem:[%s1845 + $0x34] sm:$0xf]
        %v1856 = vld [vmem:[%s1845 + $0x3c] sm:$0xf]
        %v1857 = vld [vmem:[%s1845 + $0x40] sm:$0xf]
        %v1858 = vld [vmem:[%s1845 + $0x48] sm:$0xf]
        %v1859 = vld [vmem:[%s1845 + $0x4c] sm:$0xf]
        %v1860 = vld [vmem:[%s1845 + $0x54] sm:$0xf]
        %v1861 = vld [vmem:[%s1845 + $0x58] sm:$0xf]
        %v1862 = vld [vmem:[%s1845 + $0x60] sm:$0xf]
        %v1863 = vld [vmem:[%s1845 + $0x64] sm:$0xf]
        %v1864 = vld [vmem:[%s1845 + $0x6c] sm:$0xf]
        %v1865 = vld [vmem:[%s1845 + $0x70] sm:$0xf]
        %v1866 = vld [vmem:[%s1845 + $0x78] sm:$0xf]
        %v1867 = vld [vmem:[%s1845 + $0x7c] sm:$0xf]
        %v1868 = vld [vmem:[%s1845 + $0x84] sm:$0xf]
        %v1869 = vld [vmem:[%s1845 + $0x88] sm:$0xf]
        %v1870 = vld [vmem:[%s1845 + $0x90] sm:$0xf]
        %v1871 = vld [vmem:[%s1845 + $0x94] sm:$0xf]
        %v1872 = vld [vmem:[%s1845 + $0x9c] sm:$0xf]
        %v1873 = vld [vmem:[%s1845 + $0xa0] sm:$0xf]
        %v1874 = vld [vmem:[%s1845 + $0xa8] sm:$0xf]
        %v1875 = vld [vmem:[%s1845 + $0xac] sm:$0xf]
        %v1876 = vld [vmem:[%s1845 + $0xb4] sm:$0xf]
        %v1877 = vld [vmem:[%s1845 + $0xb8] sm:$0xf]
        %s1878 = scalar_lea.vmem %s1, 192
        %v1879 = vld [vmem:[%s1878] sm:$0xf]
        %v1880 = vld [vmem:[%s1878 + $0x4] sm:$0xf]
        %v1881 = vld [vmem:[%s1878 + $0x8] sm:$0xf]
        %v1882 = vld [vmem:[%s1878 + $0xc] sm:$0xf]
        %v1883 = vld [vmem:[%s1878 + $0x10] sm:$0xf]
        %v1884 = vld [vmem:[%s1878 + $0x14] sm:$0xf]
        %v1885 = vld [vmem:[%s1878 + $0x18] sm:$0xf]
        %v1886 = vld [vmem:[%s1878 + $0x1c] sm:$0xf]
        %v1887 = vld [vmem:[%s1878 + $0x20] sm:$0xf]
        %v1888 = vld [vmem:[%s1878 + $0x24] sm:$0xf]
        %v1889 = vld [vmem:[%s1878 + $0x28] sm:$0xf]
        %v1890 = vld [vmem:[%s1878 + $0x2c] sm:$0xf]
        %v1891 = vld [vmem:[%s1878 + $0x30] sm:$0xf]
        %v1892 = vld [vmem:[%s1878 + $0x34] sm:$0xf]
        %v1893 = vld [vmem:[%s1878 + $0x38] sm:$0xf]
        %v1894 = vld [vmem:[%s1878 + $0x3c] sm:$0xf]
        %v1927 = vunpack.c.l.b16 %v1846
        %v1928 = vunpack.c.l.b16 %v1847
        %v1929 = vunpack.c.l.b16 %v1848
        %v1930 = vunpack.c.l.b16 %v1849
        %v1931 = vunpack.c.l.b16 %v1850
        %v1932 = vunpack.c.l.b16 %v1851
        %v1933 = vunpack.c.l.b16 %v1852
        %v1934 = vunpack.c.l.b16 %v1853
        %v1935 = vunpack.c.l.b16 %v1854
        %v1936 = vunpack.c.l.b16 %v1855
        %v1937 = vunpack.c.l.b16 %v1856
        %v1938 = vunpack.c.l.b16 %v1857
        %v1939 = vunpack.c.l.b16 %v1858
        %v1940 = vunpack.c.l.b16 %v1859
        %v1941 = vunpack.c.l.b16 %v1860
        %v1942 = vunpack.c.l.b16 %v1861
        %v1943 = vunpack.c.l.b16 %v1862
        %v1944 = vunpack.c.l.b16 %v1863
        %v1945 = vunpack.c.l.b16 %v1864
        %v1946 = vunpack.c.l.b16 %v1865
        %v1947 = vunpack.c.l.b16 %v1866
        %v1948 = vunpack.c.l.b16 %v1867
        %v1949 = vunpack.c.l.b16 %v1868
        %v1950 = vunpack.c.l.b16 %v1869
        %v1951 = vunpack.c.l.b16 %v1870
        %v1952 = vunpack.c.l.b16 %v1871
        %v1953 = vunpack.c.l.b16 %v1872
        %v1954 = vunpack.c.l.b16 %v1873
        %v1955 = vunpack.c.l.b16 %v1874
        %v1956 = vunpack.c.l.b16 %v1875
        %v1957 = vunpack.c.l.b16 %v1876
        %v1958 = vunpack.c.l.b16 %v1877
        %v1959 = vpack.c.b16 %v1928, %v1927
        %v1960 = vpack.c.b16 %v1930, %v1929
        %v1961 = vpack.c.b16 %v1932, %v1931
        %v1962 = vpack.c.b16 %v1934, %v1933
        %v1963 = vpack.c.b16 %v1936, %v1935
        %v1964 = vpack.c.b16 %v1938, %v1937
        %v1965 = vpack.c.b16 %v1940, %v1939
        %v1966 = vpack.c.b16 %v1942, %v1941
        %v1967 = vpack.c.b16 %v1944, %v1943
        %v1968 = vpack.c.b16 %v1946, %v1945
        %v1969 = vpack.c.b16 %v1948, %v1947
        %v1970 = vpack.c.b16 %v1950, %v1949
        %v1971 = vpack.c.b16 %v1952, %v1951
        %v1972 = vpack.c.b16 %v1954, %v1953
        %v1973 = vpack.c.b16 %v1956, %v1955
        %v1974 = vpack.c.b16 %v1958, %v1957
        %v2007 = vunpack.c.l.b16 %v1879
        %v2008 = vunpack.c.l.b16 %v1880
        %v2009 = vunpack.c.l.b16 %v1881
        %v2010 = vunpack.c.l.b16 %v1882
        %v2011 = vunpack.c.l.b16 %v1883
        %v2012 = vunpack.c.l.b16 %v1884
        %v2013 = vunpack.c.l.b16 %v1885
        %v2014 = vunpack.c.l.b16 %v1886
        %v2015 = vunpack.c.l.b16 %v1887
        %v2016 = vunpack.c.l.b16 %v1888
        %v2017 = vunpack.c.l.b16 %v1889
        %v2018 = vunpack.c.l.b16 %v1890
        %v2019 = vunpack.c.l.b16 %v1891
        %v2020 = vunpack.c.l.b16 %v1892
        %v2021 = vunpack.c.l.b16 %v1893
        %v2022 = vunpack.c.l.b16 %v1894
        %v2023 = vpack.c.b16 %v2008, %v2007
        %v2024 = vpack.c.b16 %v2010, %v2009
        %v2025 = vpack.c.b16 %v2012, %v2011
        %v2026 = vpack.c.b16 %v2014, %v2013
        %v2027 = vpack.c.b16 %v2016, %v2015
        %v2028 = vpack.c.b16 %v2018, %v2017
        %v2029 = vpack.c.b16 %v2020, %v2019
        %v2030 = vpack.c.b16 %v2022, %v2021
        %2039 = vmatprep.subr.bf16.mxu0 0
        %2040 = vmatpush1.bf16.msra.mxu0 %v2030
        %2041 = vmatprep.subr.bf16.mxu0 0
        %2042 = vmatpush1.bf16.msra.mxu0 %v2029
        %2043 = vmatprep.subr.bf16.mxu0 0
        %2044 = vmatpush1.bf16.msra.mxu0 %v2028
        %2045 = vmatprep.subr.bf16.mxu0 0
        %2046 = vmatpush1.bf16.msra.mxu0 %v2027
        %2047 = vmatprep.subr.bf16.mxu0 0
        %2048 = vmatpush1.bf16.msra.mxu0 %v2026
        %2049 = vmatprep.subr.bf16.mxu0 0
        %2050 = vmatpush1.bf16.msra.mxu0 %v2025
        %2051 = vmatprep.subr.bf16.mxu0 0
        %2052 = vmatpush1.bf16.msra.mxu0 %v2024
        %2053 = vmatprep.subr.bf16.mxu0 0
        %2054 = vmatpush1.bf16.msra.mxu0 %v2023
        %2055 = vmatprep.subr.bf16.mxu0 0
        %2056 = vmatpush2.bf16.msra.mxu0 0
        %2057 = vmatprep.subr.bf16.mxu0 0
        %2058 = vmatpush2.bf16.msra.mxu0 0
        %2059 = vmatprep.subr.bf16.mxu0 0
        %2060 = vmatpush2.bf16.msra.mxu0 0
        %2061 = vmatprep.subr.bf16.mxu0 0
        %2062 = vmatpush2.bf16.msra.mxu0 0
        %2063 = vmatprep.subr.bf16.mxu0 0
        %2064 = vmatpush2.bf16.msra.mxu0 0
        %2065 = vmatprep.subr.bf16.mxu0 0
        %2066 = vmatpush2.bf16.msra.mxu0 0
        %2067 = vmatprep.subr.bf16.mxu0 0
        %2068 = vmatpush2.bf16.msra.mxu0 0
        %2069 = vmatprep.subr.bf16.mxu0 0
        %2070 = vmatpush2.bf16.msra.mxu0 0
        %2071 = vmatprep.mubr.bf16.mxu0 0
        %2072 = vmatmul.mubr.bf16.gmra.mxu0 %v1959
        %v2073 = vpop.f32.mrf.mxu0
        %v2074 = vadd.f32 0.0, %v2073
        %v2075 = vpop.f32.mrf.mxu0
        %v2076 = vpop.f32.mrf.mxu0
        %v2077 = vadd.f32 0.0, %v2076
        %v2078 = vpop.f32.mrf.mxu0
        %2079 = vmatprep.mubr.bf16.mxu0 0
        %2080 = vmatmul.mubr.bf16.gmra.mxu0 %v1960
        %v2081 = vpop.f32.mrf.mxu0
        %v2082 = vadd.f32 0.0, %v2081
        %v2083 = vpop.f32.mrf.mxu0
        %v2084 = vpop.f32.mrf.mxu0
        %v2085 = vadd.f32 0.0, %v2084
        %v2086 = vpop.f32.mrf.mxu0
        %2087 = vmatprep.mubr.bf16.mxu0 0
        %2088 = vmatmul.mubr.bf16.gmra.mxu0 %v1961
        %v2089 = vpop.f32.mrf.mxu0
        %v2090 = vadd.f32 0.0, %v2089
        %v2091 = vpop.f32.mrf.mxu0
        %v2092 = vpop.f32.mrf.mxu0
        %v2093 = vadd.f32 0.0, %v2092
        %v2094 = vpop.f32.mrf.mxu0
        %2095 = vmatprep.mubr.bf16.mxu0 0
        %2096 = vmatmul.mubr.bf16.gmra.mxu0 %v1962
        %v2097 = vpop.f32.mrf.mxu0
        %v2098 = vadd.f32 0.0, %v2097
        %v2099 = vpop.f32.mrf.mxu0
        %v2100 = vpop.f32.mrf.mxu0
        %v2101 = vadd.f32 0.0, %v2100
        %v2102 = vpop.f32.mrf.mxu0
        %2103 = vmatprep.mubr.bf16.mxu0 0
        %2104 = vmatmul.mubr.bf16.gmra.mxu0 %v1963
        %v2105 = vpop.f32.mrf.mxu0
        %v2106 = vadd.f32 0.0, %v2105
        %v2107 = vpop.f32.mrf.mxu0
        %v2108 = vpop.f32.mrf.mxu0
        %v2109 = vadd.f32 0.0, %v2108
        %v2110 = vpop.f32.mrf.mxu0
        %2111 = vmatprep.mubr.bf16.mxu0 0
        %2112 = vmatmul.mubr.bf16.gmra.mxu0 %v1964
        %v2113 = vpop.f32.mrf.mxu0
        %v2114 = vadd.f32 0.0, %v2113
        %v2115 = vpop.f32.mrf.mxu0
        %v2116 = vpop.f32.mrf.mxu0
        %v2117 = vadd.f32 0.0, %v2116
        %v2118 = vpop.f32.mrf.mxu0
        %2119 = vmatprep.mubr.bf16.mxu0 0
        %2120 = vmatmul.mubr.bf16.gmra.mxu0 %v1965
        %v2121 = vpop.f32.mrf.mxu0
        %v2122 = vadd.f32 0.0, %v2121
        %v2123 = vpop.f32.mrf.mxu0
        %v2124 = vpop.f32.mrf.mxu0
        %v2125 = vadd.f32 0.0, %v2124
        %v2126 = vpop.f32.mrf.mxu0
        %2127 = vmatprep.mubr.bf16.mxu0 0
        %2128 = vmatmul.mubr.bf16.gmra.mxu0 %v1966
        %v2129 = vpop.f32.mrf.mxu0
        %v2130 = vadd.f32 0.0, %v2129
        %v2131 = vpop.f32.mrf.mxu0
        %v2132 = vpop.f32.mrf.mxu0
        %v2133 = vadd.f32 0.0, %v2132
        %v2134 = vpop.f32.mrf.mxu0
        %2135 = vmatprep.mubr.bf16.mxu0 0
        %2136 = vmatmul.mubr.bf16.gmra.mxu0 %v1967
        %v2137 = vpop.f32.mrf.mxu0
        %v2138 = vadd.f32 0.0, %v2137
        %v2139 = vpop.f32.mrf.mxu0
        %v2140 = vpop.f32.mrf.mxu0
        %v2141 = vadd.f32 0.0, %v2140
        %v2142 = vpop.f32.mrf.mxu0
        %2143 = vmatprep.mubr.bf16.mxu0 0
        %2144 = vmatmul.mubr.bf16.gmra.mxu0 %v1968
        %v2145 = vpop.f32.mrf.mxu0
        %v2146 = vadd.f32 0.0, %v2145
        %v2147 = vpop.f32.mrf.mxu0
        %v2148 = vpop.f32.mrf.mxu0
        %v2149 = vadd.f32 0.0, %v2148
        %v2150 = vpop.f32.mrf.mxu0
        %2151 = vmatprep.mubr.bf16.mxu0 0
        %2152 = vmatmul.mubr.bf16.gmra.mxu0 %v1969
        %v2153 = vpop.f32.mrf.mxu0
        %v2154 = vadd.f32 0.0, %v2153
        %v2155 = vpop.f32.mrf.mxu0
        %v2156 = vpop.f32.mrf.mxu0
        %v2157 = vadd.f32 0.0, %v2156
        %v2158 = vpop.f32.mrf.mxu0
        %2159 = vmatprep.mubr.bf16.mxu0 0
        %2160 = vmatmul.mubr.bf16.gmra.mxu0 %v1970
        %v2161 = vpop.f32.mrf.mxu0
        %v2162 = vadd.f32 0.0, %v2161
        %v2163 = vpop.f32.mrf.mxu0
        %v2164 = vpop.f32.mrf.mxu0
        %v2165 = vadd.f32 0.0, %v2164
        %v2166 = vpop.f32.mrf.mxu0
        %2167 = vmatprep.mubr.bf16.mxu0 0
        %2168 = vmatmul.mubr.bf16.gmra.mxu0 %v1971
        %v2169 = vpop.f32.mrf.mxu0
        %v2170 = vadd.f32 0.0, %v2169
        %v2171 = vpop.f32.mrf.mxu0
        %v2172 = vpop.f32.mrf.mxu0
        %v2173 = vadd.f32 0.0, %v2172
        %v2174 = vpop.f32.mrf.mxu0
        %2175 = vmatprep.mubr.bf16.mxu0 0
        %2176 = vmatmul.mubr.bf16.gmra.mxu0 %v1972
        %v2177 = vpop.f32.mrf.mxu0
        %v2178 = vadd.f32 0.0, %v2177
        %v2179 = vpop.f32.mrf.mxu0
        %v2180 = vpop.f32.mrf.mxu0
        %v2181 = vadd.f32 0.0, %v2180
        %v2182 = vpop.f32.mrf.mxu0
        %2183 = vmatprep.mubr.bf16.mxu0 0
        %2184 = vmatmul.mubr.bf16.gmra.mxu0 %v1973
        %v2185 = vpop.f32.mrf.mxu0
        %v2186 = vadd.f32 0.0, %v2185
        %v2187 = vpop.f32.mrf.mxu0
        %v2188 = vpop.f32.mrf.mxu0
        %v2189 = vadd.f32 0.0, %v2188
        %v2190 = vpop.f32.mrf.mxu0
        %2191 = vmatprep.mubr.bf16.mxu0 0
        %2192 = vmatmul.mubr.bf16.gmra.mxu0 %v1974
        %v2193 = vpop.f32.mrf.mxu0
        %v2194 = vadd.f32 0.0, %v2193
        %v2195 = vpop.f32.mrf.mxu0
        %v2196 = vpop.f32.mrf.mxu0
        %v2197 = vadd.f32 0.0, %v2196
        %v2198 = vpop.f32.mrf.mxu0
        %2199 = vdwg.mxu0
        %v2200 = vadd.f32 %v1813, %v2074
        %v2201 = vadd.f32 %v1814, %v2077
        %v2202 = vadd.f32 %v1815, %v2082
        %v2203 = vadd.f32 %v1816, %v2085
        %v2204 = vadd.f32 %v1817, %v2090
        %v2205 = vadd.f32 %v1818, %v2093
        %v2206 = vadd.f32 %v1819, %v2098
        %v2207 = vadd.f32 %v1820, %v2101
        %v2208 = vadd.f32 %v1821, %v2106
        %v2209 = vadd.f32 %v1822, %v2109
        %v2210 = vadd.f32 %v1823, %v2114
        %v2211 = vadd.f32 %v1824, %v2117
        %v2212 = vadd.f32 %v1825, %v2122
        %v2213 = vadd.f32 %v1826, %v2125
        %v2214 = vadd.f32 %v1827, %v2130
        %v2215 = vadd.f32 %v1828, %v2133
        %v2216 = vadd.f32 %v1829, %v2138
        %v2217 = vadd.f32 %v1830, %v2141
        %v2218 = vadd.f32 %v1831, %v2146
        %v2219 = vadd.f32 %v1832, %v2149
        %v2220 = vadd.f32 %v1833, %v2154
        %v2221 = vadd.f32 %v1834, %v2157
        %v2222 = vadd.f32 %v1835, %v2162
        %v2223 = vadd.f32 %v1836, %v2165
        %v2224 = vadd.f32 %v1837, %v2170
        %v2225 = vadd.f32 %v1838, %v2173
        %v2226 = vadd.f32 %v1839, %v2178
        %v2227 = vadd.f32 %v1840, %v2181
        %v2228 = vadd.f32 %v1841, %v2186
        %v2229 = vadd.f32 %v1842, %v2189
        %v2230 = vadd.f32 %v1843, %v2194
        %v2231 = vadd.f32 %v1844, %v2197
        %v2232 = vld [vmem:[%s1845] sm:$0xf]
        %v2233 = vld [vmem:[%s1845 + $0x4] sm:$0xf]
        %v2234 = vld [vmem:[%s1845 + $0x8] sm:$0x1]
        %v2235 = vld [vmem:[%s1845 + $0xc] sm:$0xf]
        %v2236 = vld [vmem:[%s1845 + $0x10] sm:$0xf]
        %v2237 = vld [vmem:[%s1845 + $0x14] sm:$0x1]
        %v2238 = vld [vmem:[%s1845 + $0x18] sm:$0xf]
        %v2239 = vld [vmem:[%s1845 + $0x1c] sm:$0xf]
        %v2240 = vld [vmem:[%s1845 + $0x20] sm:$0x1]
        %v2241 = vld [vmem:[%s1845 + $0x24] sm:$0xf]
        %v2242 = vld [vmem:[%s1845 + $0x28] sm:$0xf]
        %v2243 = vld [vmem:[%s1845 + $0x2c] sm:$0x1]
        %v2244 = vld [vmem:[%s1845 + $0x30] sm:$0xf]
        %v2245 = vld [vmem:[%s1845 + $0x34] sm:$0xf]
        %v2246 = vld [vmem:[%s1845 + $0x38] sm:$0x1]
        %v2247 = vld [vmem:[%s1845 + $0x3c] sm:$0xf]
        %v2248 = vld [vmem:[%s1845 + $0x40] sm:$0xf]
        %v2249 = vld [vmem:[%s1845 + $0x44] sm:$0x1]
        %v2250 = vld [vmem:[%s1845 + $0x48] sm:$0xf]
        %v2251 = vld [vmem:[%s1845 + $0x4c] sm:$0xf]
        %v2252 = vld [vmem:[%s1845 + $0x50] sm:$0x1]
        %v2253 = vld [vmem:[%s1845 + $0x54] sm:$0xf]
        %v2254 = vld [vmem:[%s1845 + $0x58] sm:$0xf]
        %v2255 = vld [vmem:[%s1845 + $0x5c] sm:$0x1]
        %v2256 = vld [vmem:[%s1845 + $0x60] sm:$0xf]
        %v2257 = vld [vmem:[%s1845 + $0x64] sm:$0xf]
        %v2258 = vld [vmem:[%s1845 + $0x68] sm:$0x1]
        %v2259 = vld [vmem:[%s1845 + $0x6c] sm:$0xf]
        %v2260 = vld [vmem:[%s1845 + $0x70] sm:$0xf]
        %v2261 = vld [vmem:[%s1845 + $0x74] sm:$0x1]
        %v2262 = vld [vmem:[%s1845 + $0x78] sm:$0xf]
        %v2263 = vld [vmem:[%s1845 + $0x7c] sm:$0xf]
        %v2264 = vld [vmem:[%s1845 + $0x80] sm:$0x1]
        %v2265 = vld [vmem:[%s1845 + $0x84] sm:$0xf]
        %v2266 = vld [vmem:[%s1845 + $0x88] sm:$0xf]
        %v2267 = vld [vmem:[%s1845 + $0x8c] sm:$0x1]
        %v2268 = vld [vmem:[%s1845 + $0x90] sm:$0xf]
        %v2269 = vld [vmem:[%s1845 + $0x94] sm:$0xf]
        %v2270 = vld [vmem:[%s1845 + $0x98] sm:$0x1]
        %v2271 = vld [vmem:[%s1845 + $0x9c] sm:$0xf]
        %v2272 = vld [vmem:[%s1845 + $0xa0] sm:$0xf]
        %v2273 = vld [vmem:[%s1845 + $0xa4] sm:$0x1]
        %v2274 = vld [vmem:[%s1845 + $0xa8] sm:$0xf]
        %v2275 = vld [vmem:[%s1845 + $0xac] sm:$0xf]
        %v2276 = vld [vmem:[%s1845 + $0xb0] sm:$0x1]
        %v2277 = vld [vmem:[%s1845 + $0xb4] sm:$0xf]
        %v2278 = vld [vmem:[%s1845 + $0xb8] sm:$0xf]
        %v2279 = vld [vmem:[%s1845 + $0xbc] sm:$0x1]
        %v2281 = vshrl.u32 %v2232, 16
        %v2283 = vrot.slane %v2281, 4
        %v2284 = vshll.u32 %v2232, 16
        %v2286 = vrot.slane %v2284, 5
        %v2287 = vor.u32 %v2283, %v2286
        %v2288 = vrot.slane %v2287, 4
        %v2290 = vshll.u32 %v2233, 16
        %v2292 = vrot.slane %v2290, 5
        %v2293 = vsel %vm380, %v2288, %v2292
        %v2294 = vshrl.u32 %v2233, 16
        %v2296 = vrot.slane %v2294, 4
        %v2297 = vor.u32 %v2296, %v2292
        %v2298 = vrot.slane %v2297, 4
        %v2300 = vshll.u32 %v2234, 16
        %v2302 = vrot.slane %v2300, 5
        %v2303 = vsel %vm380, %v2298, %v2302
        %v2305 = vshrl.u32 %v2235, 16
        %v2307 = vrot.slane %v2305, 4
        %v2308 = vshll.u32 %v2235, 16
        %v2310 = vrot.slane %v2308, 5
        %v2311 = vor.u32 %v2307, %v2310
        %v2312 = vrot.slane %v2311, 4
        %v2314 = vshll.u32 %v2236, 16
        %v2316 = vrot.slane %v2314, 5
        %v2317 = vsel %vm380, %v2312, %v2316
        %v2318 = vshrl.u32 %v2236, 16
        %v2320 = vrot.slane %v2318, 4
        %v2321 = vor.u32 %v2320, %v2316
        %v2322 = vrot.slane %v2321, 4
        %v2324 = vshll.u32 %v2237, 16
        %v2326 = vrot.slane %v2324, 5
        %v2327 = vsel %vm380, %v2322, %v2326
        %v2329 = vshrl.u32 %v2238, 16
        %v2331 = vrot.slane %v2329, 4
        %v2332 = vshll.u32 %v2238, 16
        %v2334 = vrot.slane %v2332, 5
        %v2335 = vor.u32 %v2331, %v2334
        %v2336 = vrot.slane %v2335, 4
        %v2338 = vshll.u32 %v2239, 16
        %v2340 = vrot.slane %v2338, 5
        %v2341 = vsel %vm380, %v2336, %v2340
        %v2342 = vshrl.u32 %v2239, 16
        %v2344 = vrot.slane %v2342, 4
        %v2345 = vor.u32 %v2344, %v2340
        %v2346 = vrot.slane %v2345, 4
        %v2348 = vshll.u32 %v2240, 16
        %v2350 = vrot.slane %v2348, 5
        %v2351 = vsel %vm380, %v2346, %v2350
        %v2353 = vshrl.u32 %v2241, 16
        %v2355 = vrot.slane %v2353, 4
        %v2356 = vshll.u32 %v2241, 16
        %v2358 = vrot.slane %v2356, 5
        %v2359 = vor.u32 %v2355, %v2358
        %v2360 = vrot.slane %v2359, 4
        %v2362 = vshll.u32 %v2242, 16
        %v2364 = vrot.slane %v2362, 5
        %v2365 = vsel %vm380, %v2360, %v2364
        %v2366 = vshrl.u32 %v2242, 16
        %v2368 = vrot.slane %v2366, 4
        %v2369 = vor.u32 %v2368, %v2364
        %v2370 = vrot.slane %v2369, 4
        %v2372 = vshll.u32 %v2243, 16
        %v2374 = vrot.slane %v2372, 5
        %v2375 = vsel %vm380, %v2370, %v2374
        %v2377 = vshrl.u32 %v2244, 16
        %v2379 = vrot.slane %v2377, 4
        %v2380 = vshll.u32 %v2244, 16
        %v2382 = vrot.slane %v2380, 5
        %v2383 = vor.u32 %v2379, %v2382
        %v2384 = vrot.slane %v2383, 4
        %v2386 = vshll.u32 %v2245, 16
        %v2388 = vrot.slane %v2386, 5
        %v2389 = vsel %vm380, %v2384, %v2388
        %v2390 = vshrl.u32 %v2245, 16
        %v2392 = vrot.slane %v2390, 4
        %v2393 = vor.u32 %v2392, %v2388
        %v2394 = vrot.slane %v2393, 4
        %v2396 = vshll.u32 %v2246, 16
        %v2398 = vrot.slane %v2396, 5
        %v2399 = vsel %vm380, %v2394, %v2398
        %v2401 = vshrl.u32 %v2247, 16
        %v2403 = vrot.slane %v2401, 4
        %v2404 = vshll.u32 %v2247, 16
        %v2406 = vrot.slane %v2404, 5
        %v2407 = vor.u32 %v2403, %v2406
        %v2408 = vrot.slane %v2407, 4
        %v2410 = vshll.u32 %v2248, 16
        %v2412 = vrot.slane %v2410, 5
        %v2413 = vsel %vm380, %v2408, %v2412
        %v2414 = vshrl.u32 %v2248, 16
        %v2416 = vrot.slane %v2414, 4
        %v2417 = vor.u32 %v2416, %v2412
        %v2418 = vrot.slane %v2417, 4
        %v2420 = vshll.u32 %v2249, 16
        %v2422 = vrot.slane %v2420, 5
        %v2423 = vsel %vm380, %v2418, %v2422
        %v2425 = vshrl.u32 %v2250, 16
        %v2427 = vrot.slane %v2425, 4
        %v2428 = vshll.u32 %v2250, 16
        %v2430 = vrot.slane %v2428, 5
        %v2431 = vor.u32 %v2427, %v2430
        %v2432 = vrot.slane %v2431, 4
        %v2434 = vshll.u32 %v2251, 16
        %v2436 = vrot.slane %v2434, 5
        %v2437 = vsel %vm380, %v2432, %v2436
        %v2438 = vshrl.u32 %v2251, 16
        %v2440 = vrot.slane %v2438, 4
        %v2441 = vor.u32 %v2440, %v2436
        %v2442 = vrot.slane %v2441, 4
        %v2444 = vshll.u32 %v2252, 16
        %v2446 = vrot.slane %v2444, 5
        %v2447 = vsel %vm380, %v2442, %v2446
        %v2449 = vshrl.u32 %v2253, 16
        %v2451 = vrot.slane %v2449, 4
        %v2452 = vshll.u32 %v2253, 16
        %v2454 = vrot.slane %v2452, 5
        %v2455 = vor.u32 %v2451, %v2454
        %v2456 = vrot.slane %v2455, 4
        %v2458 = vshll.u32 %v2254, 16
        %v2460 = vrot.slane %v2458, 5
        %v2461 = vsel %vm380, %v2456, %v2460
        %v2462 = vshrl.u32 %v2254, 16
        %v2464 = vrot.slane %v2462, 4
        %v2465 = vor.u32 %v2464, %v2460
        %v2466 = vrot.slane %v2465, 4
        %v2468 = vshll.u32 %v2255, 16
        %v2470 = vrot.slane %v2468, 5
        %v2471 = vsel %vm380, %v2466, %v2470
        %v2473 = vshrl.u32 %v2256, 16
        %v2475 = vrot.slane %v2473, 4
        %v2476 = vshll.u32 %v2256, 16
        %v2478 = vrot.slane %v2476, 5
        %v2479 = vor.u32 %v2475, %v2478
        %v2480 = vrot.slane %v2479, 4
        %v2482 = vshll.u32 %v2257, 16
        %v2484 = vrot.slane %v2482, 5
        %v2485 = vsel %vm380, %v2480, %v2484
        %v2486 = vshrl.u32 %v2257, 16
        %v2488 = vrot.slane %v2486, 4
        %v2489 = vor.u32 %v2488, %v2484
        %v2490 = vrot.slane %v2489, 4
        %v2492 = vshll.u32 %v2258, 16
        %v2494 = vrot.slane %v2492, 5
        %v2495 = vsel %vm380, %v2490, %v2494
        %v2497 = vshrl.u32 %v2259, 16
        %v2499 = vrot.slane %v2497, 4
        %v2500 = vshll.u32 %v2259, 16
        %v2502 = vrot.slane %v2500, 5
        %v2503 = vor.u32 %v2499, %v2502
        %v2504 = vrot.slane %v2503, 4
        %v2506 = vshll.u32 %v2260, 16
        %v2508 = vrot.slane %v2506, 5
        %v2509 = vsel %vm380, %v2504, %v2508
        %v2510 = vshrl.u32 %v2260, 16
        %v2512 = vrot.slane %v2510, 4
        %v2513 = vor.u32 %v2512, %v2508
        %v2514 = vrot.slane %v2513, 4
        %v2516 = vshll.u32 %v2261, 16
        %v2518 = vrot.slane %v2516, 5
        %v2519 = vsel %vm380, %v2514, %v2518
        %v2521 = vshrl.u32 %v2262, 16
        %v2523 = vrot.slane %v2521, 4
        %v2524 = vshll.u32 %v2262, 16
        %v2526 = vrot.slane %v2524, 5
        %v2527 = vor.u32 %v2523, %v2526
        %v2528 = vrot.slane %v2527, 4
        %v2530 = vshll.u32 %v2263, 16
        %v2532 = vrot.slane %v2530, 5
        %v2533 = vsel %vm380, %v2528, %v2532
        %v2534 = vshrl.u32 %v2263, 16
        %v2536 = vrot.slane %v2534, 4
        %v2537 = vor.u32 %v2536, %v2532
        %v2538 = vrot.slane %v2537, 4
        %v2540 = vshll.u32 %v2264, 16
        %v2542 = vrot.slane %v2540, 5
        %v2543 = vsel %vm380, %v2538, %v2542
        %v2545 = vshrl.u32 %v2265, 16
        %v2547 = vrot.slane %v2545, 4
        %v2548 = vshll.u32 %v2265, 16
        %v2550 = vrot.slane %v2548, 5
        %v2551 = vor.u32 %v2547, %v2550
        %v2552 = vrot.slane %v2551, 4
        %v2554 = vshll.u32 %v2266, 16
        %v2556 = vrot.slane %v2554, 5
        %v2557 = vsel %vm380, %v2552, %v2556
        %v2558 = vshrl.u32 %v2266, 16
        %v2560 = vrot.slane %v2558, 4
        %v2561 = vor.u32 %v2560, %v2556
        %v2562 = vrot.slane %v2561, 4
        %v2564 = vshll.u32 %v2267, 16
        %v2566 = vrot.slane %v2564, 5
        %v2567 = vsel %vm380, %v2562, %v2566
        %v2569 = vshrl.u32 %v2268, 16
        %v2571 = vrot.slane %v2569, 4
        %v2572 = vshll.u32 %v2268, 16
        %v2574 = vrot.slane %v2572, 5
        %v2575 = vor.u32 %v2571, %v2574
        %v2576 = vrot.slane %v2575, 4
        %v2578 = vshll.u32 %v2269, 16
        %v2580 = vrot.slane %v2578, 5
        %v2581 = vsel %vm380, %v2576, %v2580
        %v2582 = vshrl.u32 %v2269, 16
        %v2584 = vrot.slane %v2582, 4
        %v2585 = vor.u32 %v2584, %v2580
        %v2586 = vrot.slane %v2585, 4
        %v2588 = vshll.u32 %v2270, 16
        %v2590 = vrot.slane %v2588, 5
        %v2591 = vsel %vm380, %v2586, %v2590
        %v2593 = vshrl.u32 %v2271, 16
        %v2595 = vrot.slane %v2593, 4
        %v2596 = vshll.u32 %v2271, 16
        %v2598 = vrot.slane %v2596, 5
        %v2599 = vor.u32 %v2595, %v2598
        %v2600 = vrot.slane %v2599, 4
        %v2602 = vshll.u32 %v2272, 16
        %v2604 = vrot.slane %v2602, 5
        %v2605 = vsel %vm380, %v2600, %v2604
        %v2606 = vshrl.u32 %v2272, 16
        %v2608 = vrot.slane %v2606, 4
        %v2609 = vor.u32 %v2608, %v2604
        %v2610 = vrot.slane %v2609, 4
        %v2612 = vshll.u32 %v2273, 16
        %v2614 = vrot.slane %v2612, 5
        %v2615 = vsel %vm380, %v2610, %v2614
        %v2617 = vshrl.u32 %v2274, 16
        %v2619 = vrot.slane %v2617, 4
        %v2620 = vshll.u32 %v2274, 16
        %v2622 = vrot.slane %v2620, 5
        %v2623 = vor.u32 %v2619, %v2622
        %v2624 = vrot.slane %v2623, 4
        %v2626 = vshll.u32 %v2275, 16
        %v2628 = vrot.slane %v2626, 5
        %v2629 = vsel %vm380, %v2624, %v2628
        %v2630 = vshrl.u32 %v2275, 16
        %v2632 = vrot.slane %v2630, 4
        %v2633 = vor.u32 %v2632, %v2628
        %v2634 = vrot.slane %v2633, 4
        %v2636 = vshll.u32 %v2276, 16
        %v2638 = vrot.slane %v2636, 5
        %v2639 = vsel %vm380, %v2634, %v2638
        %v2641 = vshrl.u32 %v2277, 16
        %v2643 = vrot.slane %v2641, 4
        %v2644 = vshll.u32 %v2277, 16
        %v2646 = vrot.slane %v2644, 5
        %v2647 = vor.u32 %v2643, %v2646
        %v2648 = vrot.slane %v2647, 4
        %v2650 = vshll.u32 %v2278, 16
        %v2652 = vrot.slane %v2650, 5
        %v2653 = vsel %vm380, %v2648, %v2652
        %v2654 = vshrl.u32 %v2278, 16
        %v2656 = vrot.slane %v2654, 4
        %v2657 = vor.u32 %v2656, %v2652
        %v2658 = vrot.slane %v2657, 4
        %v2660 = vshll.u32 %v2279, 16
        %v2662 = vrot.slane %v2660, 5
        %v2663 = vsel %vm380, %v2658, %v2662
        %s2664 = scalar_lea.vmem %s1, 256
        %v2665 = vld [vmem:[%s2664] sm:$0xf]
        %v2666 = vld [vmem:[%s2664 + $0x4] sm:$0xf]
        %v2667 = vld [vmem:[%s2664 + $0x8] sm:$0xf]
        %v2668 = vld [vmem:[%s2664 + $0xc] sm:$0xf]
        %v2669 = vld [vmem:[%s2664 + $0x10] sm:$0xf]
        %v2670 = vld [vmem:[%s2664 + $0x14] sm:$0xf]
        %v2671 = vld [vmem:[%s2664 + $0x18] sm:$0xf]
        %v2672 = vld [vmem:[%s2664 + $0x1c] sm:$0xf]
        %v2673 = vld [vmem:[%s2664 + $0x20] sm:$0xf]
        %v2674 = vld [vmem:[%s2664 + $0x24] sm:$0xf]
        %v2675 = vld [vmem:[%s2664 + $0x28] sm:$0xf]
        %v2676 = vld [vmem:[%s2664 + $0x2c] sm:$0xf]
        %v2677 = vld [vmem:[%s2664 + $0x30] sm:$0xf]
        %v2678 = vld [vmem:[%s2664 + $0x34] sm:$0xf]
        %v2679 = vld [vmem:[%s2664 + $0x38] sm:$0xf]
        %v2680 = vld [vmem:[%s2664 + $0x3c] sm:$0xf]
        %v2681 = vunpack.c.l.b16 %v2293
        %v2682 = vunpack.c.l.b16 %v2303
        %v2683 = vunpack.c.l.b16 %v2317
        %v2684 = vunpack.c.l.b16 %v2327
        %v2685 = vunpack.c.l.b16 %v2341
        %v2686 = vunpack.c.l.b16 %v2351
        %v2687 = vunpack.c.l.b16 %v2365
        %v2688 = vunpack.c.l.b16 %v2375
        %v2689 = vunpack.c.l.b16 %v2389
        %v2690 = vunpack.c.l.b16 %v2399
        %v2691 = vunpack.c.l.b16 %v2413
        %v2692 = vunpack.c.l.b16 %v2423
        %v2693 = vunpack.c.l.b16 %v2437
        %v2694 = vunpack.c.l.b16 %v2447
        %v2695 = vunpack.c.l.b16 %v2461
        %v2696 = vunpack.c.l.b16 %v2471
        %v2697 = vunpack.c.l.b16 %v2485
        %v2698 = vunpack.c.l.b16 %v2495
        %v2699 = vunpack.c.l.b16 %v2509
        %v2700 = vunpack.c.l.b16 %v2519
        %v2701 = vunpack.c.l.b16 %v2533
        %v2702 = vunpack.c.l.b16 %v2543
        %v2703 = vunpack.c.l.b16 %v2557
        %v2704 = vunpack.c.l.b16 %v2567
        %v2705 = vunpack.c.l.b16 %v2581
        %v2706 = vunpack.c.l.b16 %v2591
        %v2707 = vunpack.c.l.b16 %v2605
        %v2708 = vunpack.c.l.b16 %v2615
        %v2709 = vunpack.c.l.b16 %v2629
        %v2710 = vunpack.c.l.b16 %v2639
        %v2711 = vunpack.c.l.b16 %v2653
        %v2712 = vunpack.c.l.b16 %v2663
        %v2713 = vpack.c.b16 %v2682, %v2681
        %v2714 = vpack.c.b16 %v2684, %v2683
        %v2715 = vpack.c.b16 %v2686, %v2685
        %v2716 = vpack.c.b16 %v2688, %v2687
        %v2717 = vpack.c.b16 %v2690, %v2689
        %v2718 = vpack.c.b16 %v2692, %v2691
        %v2719 = vpack.c.b16 %v2694, %v2693
        %v2720 = vpack.c.b16 %v2696, %v2695
        %v2721 = vpack.c.b16 %v2698, %v2697
        %v2722 = vpack.c.b16 %v2700, %v2699
        %v2723 = vpack.c.b16 %v2702, %v2701
        %v2724 = vpack.c.b16 %v2704, %v2703
        %v2725 = vpack.c.b16 %v2706, %v2705
        %v2726 = vpack.c.b16 %v2708, %v2707
        %v2727 = vpack.c.b16 %v2710, %v2709
        %v2728 = vpack.c.b16 %v2712, %v2711
        %v2761 = vunpack.c.l.b16 %v2665
        %v2762 = vunpack.c.l.b16 %v2666
        %v2763 = vunpack.c.l.b16 %v2667
        %v2764 = vunpack.c.l.b16 %v2668
        %v2765 = vunpack.c.l.b16 %v2669
        %v2766 = vunpack.c.l.b16 %v2670
        %v2767 = vunpack.c.l.b16 %v2671
        %v2768 = vunpack.c.l.b16 %v2672
        %v2769 = vunpack.c.l.b16 %v2673
        %v2770 = vunpack.c.l.b16 %v2674
        %v2771 = vunpack.c.l.b16 %v2675
        %v2772 = vunpack.c.l.b16 %v2676
        %v2773 = vunpack.c.l.b16 %v2677
        %v2774 = vunpack.c.l.b16 %v2678
        %v2775 = vunpack.c.l.b16 %v2679
        %v2776 = vunpack.c.l.b16 %v2680
        %v2777 = vpack.c.b16 %v2762, %v2761
        %v2778 = vpack.c.b16 %v2764, %v2763
        %v2779 = vpack.c.b16 %v2766, %v2765
        %v2780 = vpack.c.b16 %v2768, %v2767
        %v2781 = vpack.c.b16 %v2770, %v2769
        %v2782 = vpack.c.b16 %v2772, %v2771
        %v2783 = vpack.c.b16 %v2774, %v2773
        %v2784 = vpack.c.b16 %v2776, %v2775
        %2793 = vmatprep.subr.bf16.mxu0 0
        %2794 = vmatpush1.bf16.msra.mxu0 %v2784
        %2795 = vmatprep.subr.bf16.mxu0 0
        %2796 = vmatpush1.bf16.msra.mxu0 %v2783
        %2797 = vmatprep.subr.bf16.mxu0 0
        %2798 = vmatpush1.bf16.msra.mxu0 %v2782
        %2799 = vmatprep.subr.bf16.mxu0 0
        %2800 = vmatpush1.bf16.msra.mxu0 %v2781
        %2801 = vmatprep.subr.bf16.mxu0 0
        %2802 = vmatpush1.bf16.msra.mxu0 %v2780
        %2803 = vmatprep.subr.bf16.mxu0 0
        %2804 = vmatpush1.bf16.msra.mxu0 %v2779
        %2805 = vmatprep.subr.bf16.mxu0 0
        %2806 = vmatpush1.bf16.msra.mxu0 %v2778
        %2807 = vmatprep.subr.bf16.mxu0 0
        %2808 = vmatpush1.bf16.msra.mxu0 %v2777
        %2809 = vmatprep.subr.bf16.mxu0 0
        %2810 = vmatpush2.bf16.msra.mxu0 0
        %2811 = vmatprep.subr.bf16.mxu0 0
        %2812 = vmatpush2.bf16.msra.mxu0 0
        %2813 = vmatprep.subr.bf16.mxu0 0
        %2814 = vmatpush2.bf16.msra.mxu0 0
        %2815 = vmatprep.subr.bf16.mxu0 0
        %2816 = vmatpush2.bf16.msra.mxu0 0
        %2817 = vmatprep.subr.bf16.mxu0 0
        %2818 = vmatpush2.bf16.msra.mxu0 0
        %2819 = vmatprep.subr.bf16.mxu0 0
        %2820 = vmatpush2.bf16.msra.mxu0 0
        %2821 = vmatprep.subr.bf16.mxu0 0
        %2822 = vmatpush2.bf16.msra.mxu0 0
        %2823 = vmatprep.subr.bf16.mxu0 0
        %2824 = vmatpush2.bf16.msra.mxu0 0
        %2825 = vmatprep.mubr.bf16.mxu0 0
        %2826 = vmatmul.mubr.bf16.gmra.mxu0 %v2713
        %v2827 = vpop.f32.mrf.mxu0
        %v2828 = vadd.f32 0.0, %v2827
        %v2829 = vpop.f32.mrf.mxu0
        %v2830 = vpop.f32.mrf.mxu0
        %v2831 = vadd.f32 0.0, %v2830
        %v2832 = vpop.f32.mrf.mxu0
        %2833 = vmatprep.mubr.bf16.mxu0 0
        %2834 = vmatmul.mubr.bf16.gmra.mxu0 %v2714
        %v2835 = vpop.f32.mrf.mxu0
        %v2836 = vadd.f32 0.0, %v2835
        %v2837 = vpop.f32.mrf.mxu0
        %v2838 = vpop.f32.mrf.mxu0
        %v2839 = vadd.f32 0.0, %v2838
        %v2840 = vpop.f32.mrf.mxu0
        %2841 = vmatprep.mubr.bf16.mxu0 0
        %2842 = vmatmul.mubr.bf16.gmra.mxu0 %v2715
        %v2843 = vpop.f32.mrf.mxu0
        %v2844 = vadd.f32 0.0, %v2843
        %v2845 = vpop.f32.mrf.mxu0
        %v2846 = vpop.f32.mrf.mxu0
        %v2847 = vadd.f32 0.0, %v2846
        %v2848 = vpop.f32.mrf.mxu0
        %2849 = vmatprep.mubr.bf16.mxu0 0
        %2850 = vmatmul.mubr.bf16.gmra.mxu0 %v2716
        %v2851 = vpop.f32.mrf.mxu0
        %v2852 = vadd.f32 0.0, %v2851
        %v2853 = vpop.f32.mrf.mxu0
        %v2854 = vpop.f32.mrf.mxu0
        %v2855 = vadd.f32 0.0, %v2854
        %v2856 = vpop.f32.mrf.mxu0
        %2857 = vmatprep.mubr.bf16.mxu0 0
        %2858 = vmatmul.mubr.bf16.gmra.mxu0 %v2717
        %v2859 = vpop.f32.mrf.mxu0
        %v2860 = vadd.f32 0.0, %v2859
        %v2861 = vpop.f32.mrf.mxu0
        %v2862 = vpop.f32.mrf.mxu0
        %v2863 = vadd.f32 0.0, %v2862
        %v2864 = vpop.f32.mrf.mxu0
        %2865 = vmatprep.mubr.bf16.mxu0 0
        %2866 = vmatmul.mubr.bf16.gmra.mxu0 %v2718
        %v2867 = vpop.f32.mrf.mxu0
        %v2868 = vadd.f32 0.0, %v2867
        %v2869 = vpop.f32.mrf.mxu0
        %v2870 = vpop.f32.mrf.mxu0
        %v2871 = vadd.f32 0.0, %v2870
        %v2872 = vpop.f32.mrf.mxu0
        %2873 = vmatprep.mubr.bf16.mxu0 0
        %2874 = vmatmul.mubr.bf16.gmra.mxu0 %v2719
        %v2875 = vpop.f32.mrf.mxu0
        %v2876 = vadd.f32 0.0, %v2875
        %v2877 = vpop.f32.mrf.mxu0
        %v2878 = vpop.f32.mrf.mxu0
        %v2879 = vadd.f32 0.0, %v2878
        %v2880 = vpop.f32.mrf.mxu0
        %2881 = vmatprep.mubr.bf16.mxu0 0
        %2882 = vmatmul.mubr.bf16.gmra.mxu0 %v2720
        %v2883 = vpop.f32.mrf.mxu0
        %v2884 = vadd.f32 0.0, %v2883
        %v2885 = vpop.f32.mrf.mxu0
        %v2886 = vpop.f32.mrf.mxu0
        %v2887 = vadd.f32 0.0, %v2886
        %v2888 = vpop.f32.mrf.mxu0
        %2889 = vmatprep.mubr.bf16.mxu0 0
        %2890 = vmatmul.mubr.bf16.gmra.mxu0 %v2721
        %v2891 = vpop.f32.mrf.mxu0
        %v2892 = vadd.f32 0.0, %v2891
        %v2893 = vpop.f32.mrf.mxu0
        %v2894 = vpop.f32.mrf.mxu0
        %v2895 = vadd.f32 0.0, %v2894
        %v2896 = vpop.f32.mrf.mxu0
        %2897 = vmatprep.mubr.bf16.mxu0 0
        %2898 = vmatmul.mubr.bf16.gmra.mxu0 %v2722
        %v2899 = vpop.f32.mrf.mxu0
        %v2900 = vadd.f32 0.0, %v2899
        %v2901 = vpop.f32.mrf.mxu0
        %v2902 = vpop.f32.mrf.mxu0
        %v2903 = vadd.f32 0.0, %v2902
        %v2904 = vpop.f32.mrf.mxu0
        %2905 = vmatprep.mubr.bf16.mxu0 0
        %2906 = vmatmul.mubr.bf16.gmra.mxu0 %v2723
        %v2907 = vpop.f32.mrf.mxu0
        %v2908 = vadd.f32 0.0, %v2907
        %v2909 = vpop.f32.mrf.mxu0
        %v2910 = vpop.f32.mrf.mxu0
        %v2911 = vadd.f32 0.0, %v2910
        %v2912 = vpop.f32.mrf.mxu0
        %2913 = vmatprep.mubr.bf16.mxu0 0
        %2914 = vmatmul.mubr.bf16.gmra.mxu0 %v2724
        %v2915 = vpop.f32.mrf.mxu0
        %v2916 = vadd.f32 0.0, %v2915
        %v2917 = vpop.f32.mrf.mxu0
        %v2918 = vpop.f32.mrf.mxu0
        %v2919 = vadd.f32 0.0, %v2918
        %v2920 = vpop.f32.mrf.mxu0
        %2921 = vmatprep.mubr.bf16.mxu0 0
        %2922 = vmatmul.mubr.bf16.gmra.mxu0 %v2725
        %v2923 = vpop.f32.mrf.mxu0
        %v2924 = vadd.f32 0.0, %v2923
        %v2925 = vpop.f32.mrf.mxu0
        %v2926 = vpop.f32.mrf.mxu0
        %v2927 = vadd.f32 0.0, %v2926
        %v2928 = vpop.f32.mrf.mxu0
        %2929 = vmatprep.mubr.bf16.mxu0 0
        %2930 = vmatmul.mubr.bf16.gmra.mxu0 %v2726
        %v2931 = vpop.f32.mrf.mxu0
        %v2932 = vadd.f32 0.0, %v2931
        %v2933 = vpop.f32.mrf.mxu0
        %v2934 = vpop.f32.mrf.mxu0
        %v2935 = vadd.f32 0.0, %v2934
        %v2936 = vpop.f32.mrf.mxu0
        %2937 = vmatprep.mubr.bf16.mxu0 0
        %2938 = vmatmul.mubr.bf16.gmra.mxu0 %v2727
        %v2939 = vpop.f32.mrf.mxu0
        %v2940 = vadd.f32 0.0, %v2939
        %v2941 = vpop.f32.mrf.mxu0
        %v2942 = vpop.f32.mrf.mxu0
        %v2943 = vadd.f32 0.0, %v2942
        %v2944 = vpop.f32.mrf.mxu0
        %2945 = vmatprep.mubr.bf16.mxu0 0
        %2946 = vmatmul.mubr.bf16.gmra.mxu0 %v2728
        %v2947 = vpop.f32.mrf.mxu0
        %v2948 = vadd.f32 0.0, %v2947
        %v2949 = vpop.f32.mrf.mxu0
        %v2950 = vpop.f32.mrf.mxu0
        %v2951 = vadd.f32 0.0, %v2950
        %v2952 = vpop.f32.mrf.mxu0
        %2953 = vdwg.mxu0
        %v2954 = vadd.f32 %v2200, %v2828
        %v2955 = vadd.f32 %v2201, %v2831
        %v2956 = vadd.f32 %v2202, %v2836
        %v2957 = vadd.f32 %v2203, %v2839
        %v2958 = vadd.f32 %v2204, %v2844
        %v2959 = vadd.f32 %v2205, %v2847
        %v2960 = vadd.f32 %v2206, %v2852
        %v2961 = vadd.f32 %v2207, %v2855
        %v2962 = vadd.f32 %v2208, %v2860
        %v2963 = vadd.f32 %v2209, %v2863
        %v2964 = vadd.f32 %v2210, %v2868
        %v2965 = vadd.f32 %v2211, %v2871
        %v2966 = vadd.f32 %v2212, %v2876
        %v2967 = vadd.f32 %v2213, %v2879
        %v2968 = vadd.f32 %v2214, %v2884
        %v2969 = vadd.f32 %v2215, %v2887
        %v2970 = vadd.f32 %v2216, %v2892
        %v2971 = vadd.f32 %v2217, %v2895
        %v2972 = vadd.f32 %v2218, %v2900
        %v2973 = vadd.f32 %v2219, %v2903
        %v2974 = vadd.f32 %v2220, %v2908
        %v2975 = vadd.f32 %v2221, %v2911
        %v2976 = vadd.f32 %v2222, %v2916
        %v2977 = vadd.f32 %v2223, %v2919
        %v2978 = vadd.f32 %v2224, %v2924
        %v2979 = vadd.f32 %v2225, %v2927
        %v2980 = vadd.f32 %v2226, %v2932
        %v2981 = vadd.f32 %v2227, %v2935
        %v2982 = vadd.f32 %v2228, %v2940
        %v2983 = vadd.f32 %v2229, %v2943
        %v2984 = vadd.f32 %v2230, %v2948
        %v2985 = vadd.f32 %v2231, %v2951
        %v2986 = vld [vmem:[%s1845] sm:$0xe]
        %v2987 = vld [vmem:[%s1845 + $0xc] sm:$0xe]
        %v2988 = vld [vmem:[%s1845 + $0x18] sm:$0xe]
        %v2989 = vld [vmem:[%s1845 + $0x24] sm:$0xe]
        %v2990 = vld [vmem:[%s1845 + $0x30] sm:$0xe]
        %v2991 = vld [vmem:[%s1845 + $0x3c] sm:$0xe]
        %v2992 = vld [vmem:[%s1845 + $0x48] sm:$0xe]
        %v2993 = vld [vmem:[%s1845 + $0x54] sm:$0xe]
        %v2994 = vld [vmem:[%s1845 + $0x60] sm:$0xe]
        %v2995 = vld [vmem:[%s1845 + $0x6c] sm:$0xe]
        %v2996 = vld [vmem:[%s1845 + $0x78] sm:$0xe]
        %v2997 = vld [vmem:[%s1845 + $0x84] sm:$0xe]
        %v2998 = vld [vmem:[%s1845 + $0x90] sm:$0xe]
        %v2999 = vld [vmem:[%s1845 + $0x9c] sm:$0xe]
        %v3000 = vld [vmem:[%s1845 + $0xa8] sm:$0xe]
        %v3001 = vld [vmem:[%s1845 + $0xb4] sm:$0xe]
        %v3050 = vrot.slane %v2986, 5
        %v3051 = vrot.slane %v3050, 4
        %v3052 = vrot.slane %v2233, 5
        %v3053 = vsel %vm1410, %v3051, %v3052
        %v3054 = vrot.slane %v3052, 4
        %v3055 = vrot.slane %v2234, 5
        %v3056 = vsel %vm1410, %v3054, %v3055
        %v3057 = vrot.slane %v2987, 5
        %v3058 = vrot.slane %v3057, 4
        %v3059 = vrot.slane %v2236, 5
        %v3060 = vsel %vm1410, %v3058, %v3059
        %v3061 = vrot.slane %v3059, 4
        %v3062 = vrot.slane %v2237, 5
        %v3063 = vsel %vm1410, %v3061, %v3062
        %v3064 = vrot.slane %v2988, 5
        %v3065 = vrot.slane %v3064, 4
        %v3066 = vrot.slane %v2239, 5
        %v3067 = vsel %vm1410, %v3065, %v3066
        %v3068 = vrot.slane %v3066, 4
        %v3069 = vrot.slane %v2240, 5
        %v3070 = vsel %vm1410, %v3068, %v3069
        %v3071 = vrot.slane %v2989, 5
        %v3072 = vrot.slane %v3071, 4
        %v3073 = vrot.slane %v2242, 5
        %v3074 = vsel %vm1410, %v3072, %v3073
        %v3075 = vrot.slane %v3073, 4
        %v3076 = vrot.slane %v2243, 5
        %v3077 = vsel %vm1410, %v3075, %v3076
        %v3078 = vrot.slane %v2990, 5
        %v3079 = vrot.slane %v3078, 4
        %v3080 = vrot.slane %v2245, 5
        %v3081 = vsel %vm1410, %v3079, %v3080
        %v3082 = vrot.slane %v3080, 4
        %v3083 = vrot.slane %v2246, 5
        %v3084 = vsel %vm1410, %v3082, %v3083
        %v3085 = vrot.slane %v2991, 5
        %v3086 = vrot.slane %v3085, 4
        %v3087 = vrot.slane %v2248, 5
        %v3088 = vsel %vm1410, %v3086, %v3087
        %v3089 = vrot.slane %v3087, 4
        %v3090 = vrot.slane %v2249, 5
        %v3091 = vsel %vm1410, %v3089, %v3090
        %v3092 = vrot.slane %v2992, 5
        %v3093 = vrot.slane %v3092, 4
        %v3094 = vrot.slane %v2251, 5
        %v3095 = vsel %vm1410, %v3093, %v3094
        %v3096 = vrot.slane %v3094, 4
        %v3097 = vrot.slane %v2252, 5
        %v3098 = vsel %vm1410, %v3096, %v3097
        %v3099 = vrot.slane %v2993, 5
        %v3100 = vrot.slane %v3099, 4
        %v3101 = vrot.slane %v2254, 5
        %v3102 = vsel %vm1410, %v3100, %v3101
        %v3103 = vrot.slane %v3101, 4
        %v3104 = vrot.slane %v2255, 5
        %v3105 = vsel %vm1410, %v3103, %v3104
        %v3106 = vrot.slane %v2994, 5
        %v3107 = vrot.slane %v3106, 4
        %v3108 = vrot.slane %v2257, 5
        %v3109 = vsel %vm1410, %v3107, %v3108
        %v3110 = vrot.slane %v3108, 4
        %v3111 = vrot.slane %v2258, 5
        %v3112 = vsel %vm1410, %v3110, %v3111
        %v3113 = vrot.slane %v2995, 5
        %v3114 = vrot.slane %v3113, 4
        %v3115 = vrot.slane %v2260, 5
        %v3116 = vsel %vm1410, %v3114, %v3115
        %v3117 = vrot.slane %v3115, 4
        %v3118 = vrot.slane %v2261, 5
        %v3119 = vsel %vm1410, %v3117, %v3118
        %v3120 = vrot.slane %v2996, 5
        %v3121 = vrot.slane %v3120, 4
        %v3122 = vrot.slane %v2263, 5
        %v3123 = vsel %vm1410, %v3121, %v3122
        %v3124 = vrot.slane %v3122, 4
        %v3125 = vrot.slane %v2264, 5
        %v3126 = vsel %vm1410, %v3124, %v3125
        %v3127 = vrot.slane %v2997, 5
        %v3128 = vrot.slane %v3127, 4
        %v3129 = vrot.slane %v2266, 5
        %v3130 = vsel %vm1410, %v3128, %v3129
        %v3131 = vrot.slane %v3129, 4
        %v3132 = vrot.slane %v2267, 5
        %v3133 = vsel %vm1410, %v3131, %v3132
        %v3134 = vrot.slane %v2998, 5
        %v3135 = vrot.slane %v3134, 4
        %v3136 = vrot.slane %v2269, 5
        %v3137 = vsel %vm1410, %v3135, %v3136
        %v3138 = vrot.slane %v3136, 4
        %v3139 = vrot.slane %v2270, 5
        %v3140 = vsel %vm1410, %v3138, %v3139
        %v3141 = vrot.slane %v2999, 5
        %v3142 = vrot.slane %v3141, 4
        %v3143 = vrot.slane %v2272, 5
        %v3144 = vsel %vm1410, %v3142, %v3143
        %v3145 = vrot.slane %v3143, 4
        %v3146 = vrot.slane %v2273, 5
        %v3147 = vsel %vm1410, %v3145, %v3146
        %v3148 = vrot.slane %v3000, 5
        %v3149 = vrot.slane %v3148, 4
        %v3150 = vrot.slane %v2275, 5
        %v3151 = vsel %vm1410, %v3149, %v3150
        %v3152 = vrot.slane %v3150, 4
        %v3153 = vrot.slane %v2276, 5
        %v3154 = vsel %vm1410, %v3152, %v3153
        %v3155 = vrot.slane %v3001, 5
        %v3156 = vrot.slane %v3155, 4
        %v3157 = vrot.slane %v2278, 5
        %v3158 = vsel %vm1410, %v3156, %v3157
        %v3159 = vrot.slane %v3157, 4
        %v3160 = vrot.slane %v2279, 5
        %v3161 = vsel %vm1410, %v3159, %v3160
        %s3162 = scalar_lea.vmem %s1, 320
        %v3163 = vld [vmem:[%s3162] sm:$0xf]
        %v3164 = vld [vmem:[%s3162 + $0x4] sm:$0xf]
        %v3165 = vld [vmem:[%s3162 + $0x8] sm:$0xf]
        %v3166 = vld [vmem:[%s3162 + $0xc] sm:$0xf]
        %v3167 = vld [vmem:[%s3162 + $0x10] sm:$0xf]
        %v3168 = vld [vmem:[%s3162 + $0x14] sm:$0xf]
        %v3169 = vld [vmem:[%s3162 + $0x18] sm:$0xf]
        %v3170 = vld [vmem:[%s3162 + $0x1c] sm:$0xf]
        %v3171 = vld [vmem:[%s3162 + $0x20] sm:$0xf]
        %v3172 = vld [vmem:[%s3162 + $0x24] sm:$0xf]
        %v3173 = vld [vmem:[%s3162 + $0x28] sm:$0xf]
        %v3174 = vld [vmem:[%s3162 + $0x2c] sm:$0xf]
        %v3175 = vld [vmem:[%s3162 + $0x30] sm:$0xf]
        %v3176 = vld [vmem:[%s3162 + $0x34] sm:$0xf]
        %v3177 = vld [vmem:[%s3162 + $0x38] sm:$0xf]
        %v3178 = vld [vmem:[%s3162 + $0x3c] sm:$0xf]
        %v3179 = vunpack.c.l.b16 %v3053
        %v3180 = vunpack.c.l.b16 %v3056
        %v3181 = vunpack.c.l.b16 %v3060
        %v3182 = vunpack.c.l.b16 %v3063
        %v3183 = vunpack.c.l.b16 %v3067
        %v3184 = vunpack.c.l.b16 %v3070
        %v3185 = vunpack.c.l.b16 %v3074
        %v3186 = vunpack.c.l.b16 %v3077
        %v3187 = vunpack.c.l.b16 %v3081
        %v3188 = vunpack.c.l.b16 %v3084
        %v3189 = vunpack.c.l.b16 %v3088
        %v3190 = vunpack.c.l.b16 %v3091
        %v3191 = vunpack.c.l.b16 %v3095
        %v3192 = vunpack.c.l.b16 %v3098
        %v3193 = vunpack.c.l.b16 %v3102
        %v3194 = vunpack.c.l.b16 %v3105
        %v3195 = vunpack.c.l.b16 %v3109
        %v3196 = vunpack.c.l.b16 %v3112
        %v3197 = vunpack.c.l.b16 %v3116
        %v3198 = vunpack.c.l.b16 %v3119
        %v3199 = vunpack.c.l.b16 %v3123
        %v3200 = vunpack.c.l.b16 %v3126
        %v3201 = vunpack.c.l.b16 %v3130
        %v3202 = vunpack.c.l.b16 %v3133
        %v3203 = vunpack.c.l.b16 %v3137
        %v3204 = vunpack.c.l.b16 %v3140
        %v3205 = vunpack.c.l.b16 %v3144
        %v3206 = vunpack.c.l.b16 %v3147
        %v3207 = vunpack.c.l.b16 %v3151
        %v3208 = vunpack.c.l.b16 %v3154
        %v3209 = vunpack.c.l.b16 %v3158
        %v3210 = vunpack.c.l.b16 %v3161
        %v3211 = vpack.c.b16 %v3180, %v3179
        %v3212 = vpack.c.b16 %v3182, %v3181
        %v3213 = vpack.c.b16 %v3184, %v3183
        %v3214 = vpack.c.b16 %v3186, %v3185
        %v3215 = vpack.c.b16 %v3188, %v3187
        %v3216 = vpack.c.b16 %v3190, %v3189
        %v3217 = vpack.c.b16 %v3192, %v3191
        %v3218 = vpack.c.b16 %v3194, %v3193
        %v3219 = vpack.c.b16 %v3196, %v3195
        %v3220 = vpack.c.b16 %v3198, %v3197
        %v3221 = vpack.c.b16 %v3200, %v3199
        %v3222 = vpack.c.b16 %v3202, %v3201
        %v3223 = vpack.c.b16 %v3204, %v3203
        %v3224 = vpack.c.b16 %v3206, %v3205
        %v3225 = vpack.c.b16 %v3208, %v3207
        %v3226 = vpack.c.b16 %v3210, %v3209
        %v3259 = vunpack.c.l.b16 %v3163
        %v3260 = vunpack.c.l.b16 %v3164
        %v3261 = vunpack.c.l.b16 %v3165
        %v3262 = vunpack.c.l.b16 %v3166
        %v3263 = vunpack.c.l.b16 %v3167
        %v3264 = vunpack.c.l.b16 %v3168
        %v3265 = vunpack.c.l.b16 %v3169
        %v3266 = vunpack.c.l.b16 %v3170
        %v3267 = vunpack.c.l.b16 %v3171
        %v3268 = vunpack.c.l.b16 %v3172
        %v3269 = vunpack.c.l.b16 %v3173
        %v3270 = vunpack.c.l.b16 %v3174
        %v3271 = vunpack.c.l.b16 %v3175
        %v3272 = vunpack.c.l.b16 %v3176
        %v3273 = vunpack.c.l.b16 %v3177
        %v3274 = vunpack.c.l.b16 %v3178
        %v3275 = vpack.c.b16 %v3260, %v3259
        %v3276 = vpack.c.b16 %v3262, %v3261
        %v3277 = vpack.c.b16 %v3264, %v3263
        %v3278 = vpack.c.b16 %v3266, %v3265
        %v3279 = vpack.c.b16 %v3268, %v3267
        %v3280 = vpack.c.b16 %v3270, %v3269
        %v3281 = vpack.c.b16 %v3272, %v3271
        %v3282 = vpack.c.b16 %v3274, %v3273
        %3291 = vmatprep.subr.bf16.mxu0 0
        %3292 = vmatpush1.bf16.msra.mxu0 %v3282
        %3293 = vmatprep.subr.bf16.mxu0 0
        %3294 = vmatpush1.bf16.msra.mxu0 %v3281
        %3295 = vmatprep.subr.bf16.mxu0 0
        %3296 = vmatpush1.bf16.msra.mxu0 %v3280
        %3297 = vmatprep.subr.bf16.mxu0 0
        %3298 = vmatpush1.bf16.msra.mxu0 %v3279
        %3299 = vmatprep.subr.bf16.mxu0 0
        %3300 = vmatpush1.bf16.msra.mxu0 %v3278
        %3301 = vmatprep.subr.bf16.mxu0 0
        %3302 = vmatpush1.bf16.msra.mxu0 %v3277
        %3303 = vmatprep.subr.bf16.mxu0 0
        %3304 = vmatpush1.bf16.msra.mxu0 %v3276
        %3305 = vmatprep.subr.bf16.mxu0 0
        %3306 = vmatpush1.bf16.msra.mxu0 %v3275
        %3307 = vmatprep.subr.bf16.mxu0 0
        %3308 = vmatpush2.bf16.msra.mxu0 0
        %3309 = vmatprep.subr.bf16.mxu0 0
        %3310 = vmatpush2.bf16.msra.mxu0 0
        %3311 = vmatprep.subr.bf16.mxu0 0
        %3312 = vmatpush2.bf16.msra.mxu0 0
        %3313 = vmatprep.subr.bf16.mxu0 0
        %3314 = vmatpush2.bf16.msra.mxu0 0
        %3315 = vmatprep.subr.bf16.mxu0 0
        %3316 = vmatpush2.bf16.msra.mxu0 0
        %3317 = vmatprep.subr.bf16.mxu0 0
        %3318 = vmatpush2.bf16.msra.mxu0 0
        %3319 = vmatprep.subr.bf16.mxu0 0
        %3320 = vmatpush2.bf16.msra.mxu0 0
        %3321 = vmatprep.subr.bf16.mxu0 0
        %3322 = vmatpush2.bf16.msra.mxu0 0
        %3323 = vmatprep.mubr.bf16.mxu0 0
        %3324 = vmatmul.mubr.bf16.gmra.mxu0 %v3211
        %v3325 = vpop.f32.mrf.mxu0
        %v3326 = vadd.f32 0.0, %v3325
        %v3327 = vpop.f32.mrf.mxu0
        %v3328 = vpop.f32.mrf.mxu0
        %v3329 = vadd.f32 0.0, %v3328
        %v3330 = vpop.f32.mrf.mxu0
        %3331 = vmatprep.mubr.bf16.mxu0 0
        %3332 = vmatmul.mubr.bf16.gmra.mxu0 %v3212
        %v3333 = vpop.f32.mrf.mxu0
        %v3334 = vadd.f32 0.0, %v3333
        %v3335 = vpop.f32.mrf.mxu0
        %v3336 = vpop.f32.mrf.mxu0
        %v3337 = vadd.f32 0.0, %v3336
        %v3338 = vpop.f32.mrf.mxu0
        %3339 = vmatprep.mubr.bf16.mxu0 0
        %3340 = vmatmul.mubr.bf16.gmra.mxu0 %v3213
        %v3341 = vpop.f32.mrf.mxu0
        %v3342 = vadd.f32 0.0, %v3341
        %v3343 = vpop.f32.mrf.mxu0
        %v3344 = vpop.f32.mrf.mxu0
        %v3345 = vadd.f32 0.0, %v3344
        %v3346 = vpop.f32.mrf.mxu0
        %3347 = vmatprep.mubr.bf16.mxu0 0
        %3348 = vmatmul.mubr.bf16.gmra.mxu0 %v3214
        %v3349 = vpop.f32.mrf.mxu0
        %v3350 = vadd.f32 0.0, %v3349
        %v3351 = vpop.f32.mrf.mxu0
        %v3352 = vpop.f32.mrf.mxu0
        %v3353 = vadd.f32 0.0, %v3352
        %v3354 = vpop.f32.mrf.mxu0
        %3355 = vmatprep.mubr.bf16.mxu0 0
        %3356 = vmatmul.mubr.bf16.gmra.mxu0 %v3215
        %v3357 = vpop.f32.mrf.mxu0
        %v3358 = vadd.f32 0.0, %v3357
        %v3359 = vpop.f32.mrf.mxu0
        %v3360 = vpop.f32.mrf.mxu0
        %v3361 = vadd.f32 0.0, %v3360
        %v3362 = vpop.f32.mrf.mxu0
        %3363 = vmatprep.mubr.bf16.mxu0 0
        %3364 = vmatmul.mubr.bf16.gmra.mxu0 %v3216
        %v3365 = vpop.f32.mrf.mxu0
        %v3366 = vadd.f32 0.0, %v3365
        %v3367 = vpop.f32.mrf.mxu0
        %v3368 = vpop.f32.mrf.mxu0
        %v3369 = vadd.f32 0.0, %v3368
        %v3370 = vpop.f32.mrf.mxu0
        %3371 = vmatprep.mubr.bf16.mxu0 0
        %3372 = vmatmul.mubr.bf16.gmra.mxu0 %v3217
        %v3373 = vpop.f32.mrf.mxu0
        %v3374 = vadd.f32 0.0, %v3373
        %v3375 = vpop.f32.mrf.mxu0
        %v3376 = vpop.f32.mrf.mxu0
        %v3377 = vadd.f32 0.0, %v3376
        %v3378 = vpop.f32.mrf.mxu0
        %3379 = vmatprep.mubr.bf16.mxu0 0
        %3380 = vmatmul.mubr.bf16.gmra.mxu0 %v3218
        %v3381 = vpop.f32.mrf.mxu0
        %v3382 = vadd.f32 0.0, %v3381
        %v3383 = vpop.f32.mrf.mxu0
        %v3384 = vpop.f32.mrf.mxu0
        %v3385 = vadd.f32 0.0, %v3384
        %v3386 = vpop.f32.mrf.mxu0
        %3387 = vmatprep.mubr.bf16.mxu0 0
        %3388 = vmatmul.mubr.bf16.gmra.mxu0 %v3219
        %v3389 = vpop.f32.mrf.mxu0
        %v3390 = vadd.f32 0.0, %v3389
        %v3391 = vpop.f32.mrf.mxu0
        %v3392 = vpop.f32.mrf.mxu0
        %v3393 = vadd.f32 0.0, %v3392
        %v3394 = vpop.f32.mrf.mxu0
        %3395 = vmatprep.mubr.bf16.mxu0 0
        %3396 = vmatmul.mubr.bf16.gmra.mxu0 %v3220
        %v3397 = vpop.f32.mrf.mxu0
        %v3398 = vadd.f32 0.0, %v3397
        %v3399 = vpop.f32.mrf.mxu0
        %v3400 = vpop.f32.mrf.mxu0
        %v3401 = vadd.f32 0.0, %v3400
        %v3402 = vpop.f32.mrf.mxu0
        %3403 = vmatprep.mubr.bf16.mxu0 0
        %3404 = vmatmul.mubr.bf16.gmra.mxu0 %v3221
        %v3405 = vpop.f32.mrf.mxu0
        %v3406 = vadd.f32 0.0, %v3405
        %v3407 = vpop.f32.mrf.mxu0
        %v3408 = vpop.f32.mrf.mxu0
        %v3409 = vadd.f32 0.0, %v3408
        %v3410 = vpop.f32.mrf.mxu0
        %3411 = vmatprep.mubr.bf16.mxu0 0
        %3412 = vmatmul.mubr.bf16.gmra.mxu0 %v3222
        %v3413 = vpop.f32.mrf.mxu0
        %v3414 = vadd.f32 0.0, %v3413
        %v3415 = vpop.f32.mrf.mxu0
        %v3416 = vpop.f32.mrf.mxu0
        %v3417 = vadd.f32 0.0, %v3416
        %v3418 = vpop.f32.mrf.mxu0
        %3419 = vmatprep.mubr.bf16.mxu0 0
        %3420 = vmatmul.mubr.bf16.gmra.mxu0 %v3223
        %v3421 = vpop.f32.mrf.mxu0
        %v3422 = vadd.f32 0.0, %v3421
        %v3423 = vpop.f32.mrf.mxu0
        %v3424 = vpop.f32.mrf.mxu0
        %v3425 = vadd.f32 0.0, %v3424
        %v3426 = vpop.f32.mrf.mxu0
        %3427 = vmatprep.mubr.bf16.mxu0 0
        %3428 = vmatmul.mubr.bf16.gmra.mxu0 %v3224
        %v3429 = vpop.f32.mrf.mxu0
        %v3430 = vadd.f32 0.0, %v3429
        %v3431 = vpop.f32.mrf.mxu0
        %v3432 = vpop.f32.mrf.mxu0
        %v3433 = vadd.f32 0.0, %v3432
        %v3434 = vpop.f32.mrf.mxu0
        %3435 = vmatprep.mubr.bf16.mxu0 0
        %3436 = vmatmul.mubr.bf16.gmra.mxu0 %v3225
        %v3437 = vpop.f32.mrf.mxu0
        %v3438 = vadd.f32 0.0, %v3437
        %v3439 = vpop.f32.mrf.mxu0
        %v3440 = vpop.f32.mrf.mxu0
        %v3441 = vadd.f32 0.0, %v3440
        %v3442 = vpop.f32.mrf.mxu0
        %3443 = vmatprep.mubr.bf16.mxu0 0
        %3444 = vmatmul.mubr.bf16.gmra.mxu0 %v3226
        %v3445 = vpop.f32.mrf.mxu0
        %v3446 = vadd.f32 0.0, %v3445
        %v3447 = vpop.f32.mrf.mxu0
        %v3448 = vpop.f32.mrf.mxu0
        %v3449 = vadd.f32 0.0, %v3448
        %v3450 = vpop.f32.mrf.mxu0
        %3451 = vdwg.mxu0
        %v3452 = vadd.f32 %v2954, %v3326
        %v3453 = vadd.f32 %v2955, %v3329
        %v3454 = vadd.f32 %v2956, %v3334
        %v3455 = vadd.f32 %v2957, %v3337
        %v3456 = vadd.f32 %v2958, %v3342
        %v3457 = vadd.f32 %v2959, %v3345
        %v3458 = vadd.f32 %v2960, %v3350
        %v3459 = vadd.f32 %v2961, %v3353
        %v3460 = vadd.f32 %v2962, %v3358
        %v3461 = vadd.f32 %v2963, %v3361
        %v3462 = vadd.f32 %v2964, %v3366
        %v3463 = vadd.f32 %v2965, %v3369
        %v3464 = vadd.f32 %v2966, %v3374
        %v3465 = vadd.f32 %v2967, %v3377
        %v3466 = vadd.f32 %v2968, %v3382
        %v3467 = vadd.f32 %v2969, %v3385
        %v3468 = vadd.f32 %v2970, %v3390
        %v3469 = vadd.f32 %v2971, %v3393
        %v3470 = vadd.f32 %v2972, %v3398
        %v3471 = vadd.f32 %v2973, %v3401
        %v3472 = vadd.f32 %v2974, %v3406
        %v3473 = vadd.f32 %v2975, %v3409
        %v3474 = vadd.f32 %v2976, %v3414
        %v3475 = vadd.f32 %v2977, %v3417
        %v3476 = vadd.f32 %v2978, %v3422
        %v3477 = vadd.f32 %v2979, %v3425
        %v3478 = vadd.f32 %v2980, %v3430
        %v3479 = vadd.f32 %v2981, %v3433
        %v3480 = vadd.f32 %v2982, %v3438
        %v3481 = vadd.f32 %v2983, %v3441
        %v3482 = vadd.f32 %v2984, %v3446
        %v3483 = vadd.f32 %v2985, %v3449
        %s3484 = scalar_lea.vmem %s312, 24
        %v3485 = vld [vmem:[%s3484] sm:$0xf]
        %v3486 = vld [vmem:[%s3484 + $0x4] sm:$0xf]
        %v3487 = vld [vmem:[%s3484 + $0xc] sm:$0xf]
        %v3488 = vld [vmem:[%s3484 + $0x10] sm:$0xf]
        %v3489 = vld [vmem:[%s3484 + $0x18] sm:$0xf]
        %v3490 = vld [vmem:[%s3484 + $0x1c] sm:$0xf]
        %v3491 = vld [vmem:[%s3484 + $0x24] sm:$0xf]
        %v3492 = vld [vmem:[%s3484 + $0x28] sm:$0xf]
        %v3493 = vld [vmem:[%s3484 + $0x30] sm:$0xf]
        %v3494 = vld [vmem:[%s3484 + $0x34] sm:$0xf]
        %v3495 = vld [vmem:[%s3484 + $0x3c] sm:$0xf]
        %v3496 = vld [vmem:[%s3484 + $0x40] sm:$0xf]
        %v3497 = vld [vmem:[%s3484 + $0x48] sm:$0xf]
        %v3498 = vld [vmem:[%s3484 + $0x4c] sm:$0xf]
        %v3499 = vld [vmem:[%s3484 + $0x54] sm:$0xf]
        %v3500 = vld [vmem:[%s3484 + $0x58] sm:$0xf]
        %v3501 = vld [vmem:[%s3484 + $0x60] sm:$0xf]
        %v3502 = vld [vmem:[%s3484 + $0x64] sm:$0xf]
        %v3503 = vld [vmem:[%s3484 + $0x6c] sm:$0xf]
        %v3504 = vld [vmem:[%s3484 + $0x70] sm:$0xf]
        %v3505 = vld [vmem:[%s3484 + $0x78] sm:$0xf]
        %v3506 = vld [vmem:[%s3484 + $0x7c] sm:$0xf]
        %v3507 = vld [vmem:[%s3484 + $0x84] sm:$0xf]
        %v3508 = vld [vmem:[%s3484 + $0x88] sm:$0xf]
        %v3509 = vld [vmem:[%s3484 + $0x90] sm:$0xf]
        %v3510 = vld [vmem:[%s3484 + $0x94] sm:$0xf]
        %v3511 = vld [vmem:[%s3484 + $0x9c] sm:$0xf]
        %v3512 = vld [vmem:[%s3484 + $0xa0] sm:$0xf]
        %v3513 = vld [vmem:[%s3484 + $0xa8] sm:$0xf]
        %v3514 = vld [vmem:[%s3484 + $0xac] sm:$0xf]
        %v3515 = vld [vmem:[%s3484 + $0xb4] sm:$0xf]
        %v3516 = vld [vmem:[%s3484 + $0xb8] sm:$0xf]
        %s3517 = scalar_lea.vmem %s1, 384
        %v3518 = vld [vmem:[%s3517] sm:$0xf]
        %v3519 = vld [vmem:[%s3517 + $0x4] sm:$0xf]
        %v3520 = vld [vmem:[%s3517 + $0x8] sm:$0xf]
        %v3521 = vld [vmem:[%s3517 + $0xc] sm:$0xf]
        %v3522 = vld [vmem:[%s3517 + $0x10] sm:$0xf]
        %v3523 = vld [vmem:[%s3517 + $0x14] sm:$0xf]
        %v3524 = vld [vmem:[%s3517 + $0x18] sm:$0xf]
        %v3525 = vld [vmem:[%s3517 + $0x1c] sm:$0xf]
        %v3526 = vld [vmem:[%s3517 + $0x20] sm:$0xf]
        %v3527 = vld [vmem:[%s3517 + $0x24] sm:$0xf]
        %v3528 = vld [vmem:[%s3517 + $0x28] sm:$0xf]
        %v3529 = vld [vmem:[%s3517 + $0x2c] sm:$0xf]
        %v3530 = vld [vmem:[%s3517 + $0x30] sm:$0xf]
        %v3531 = vld [vmem:[%s3517 + $0x34] sm:$0xf]
        %v3532 = vld [vmem:[%s3517 + $0x38] sm:$0xf]
        %v3533 = vld [vmem:[%s3517 + $0x3c] sm:$0xf]
        %v3566 = vunpack.c.l.b16 %v3485
        %v3567 = vunpack.c.l.b16 %v3486
        %v3568 = vunpack.c.l.b16 %v3487
        %v3569 = vunpack.c.l.b16 %v3488
        %v3570 = vunpack.c.l.b16 %v3489
        %v3571 = vunpack.c.l.b16 %v3490
        %v3572 = vunpack.c.l.b16 %v3491
        %v3573 = vunpack.c.l.b16 %v3492
        %v3574 = vunpack.c.l.b16 %v3493
        %v3575 = vunpack.c.l.b16 %v3494
        %v3576 = vunpack.c.l.b16 %v3495
        %v3577 = vunpack.c.l.b16 %v3496
        %v3578 = vunpack.c.l.b16 %v3497
        %v3579 = vunpack.c.l.b16 %v3498
        %v3580 = vunpack.c.l.b16 %v3499
        %v3581 = vunpack.c.l.b16 %v3500
        %v3582 = vunpack.c.l.b16 %v3501
        %v3583 = vunpack.c.l.b16 %v3502
        %v3584 = vunpack.c.l.b16 %v3503
        %v3585 = vunpack.c.l.b16 %v3504
        %v3586 = vunpack.c.l.b16 %v3505
        %v3587 = vunpack.c.l.b16 %v3506
        %v3588 = vunpack.c.l.b16 %v3507
        %v3589 = vunpack.c.l.b16 %v3508
        %v3590 = vunpack.c.l.b16 %v3509
        %v3591 = vunpack.c.l.b16 %v3510
        %v3592 = vunpack.c.l.b16 %v3511
        %v3593 = vunpack.c.l.b16 %v3512
        %v3594 = vunpack.c.l.b16 %v3513
        %v3595 = vunpack.c.l.b16 %v3514
        %v3596 = vunpack.c.l.b16 %v3515
        %v3597 = vunpack.c.l.b16 %v3516
        %v3598 = vpack.c.b16 %v3567, %v3566
        %v3599 = vpack.c.b16 %v3569, %v3568
        %v3600 = vpack.c.b16 %v3571, %v3570
        %v3601 = vpack.c.b16 %v3573, %v3572
        %v3602 = vpack.c.b16 %v3575, %v3574
        %v3603 = vpack.c.b16 %v3577, %v3576
        %v3604 = vpack.c.b16 %v3579, %v3578
        %v3605 = vpack.c.b16 %v3581, %v3580
        %v3606 = vpack.c.b16 %v3583, %v3582
        %v3607 = vpack.c.b16 %v3585, %v3584
        %v3608 = vpack.c.b16 %v3587, %v3586
        %v3609 = vpack.c.b16 %v3589, %v3588
        %v3610 = vpack.c.b16 %v3591, %v3590
        %v3611 = vpack.c.b16 %v3593, %v3592
        %v3612 = vpack.c.b16 %v3595, %v3594
        %v3613 = vpack.c.b16 %v3597, %v3596
        %v3646 = vunpack.c.l.b16 %v3518
        %v3647 = vunpack.c.l.b16 %v3519
        %v3648 = vunpack.c.l.b16 %v3520
        %v3649 = vunpack.c.l.b16 %v3521
        %v3650 = vunpack.c.l.b16 %v3522
        %v3651 = vunpack.c.l.b16 %v3523
        %v3652 = vunpack.c.l.b16 %v3524
        %v3653 = vunpack.c.l.b16 %v3525
        %v3654 = vunpack.c.l.b16 %v3526
        %v3655 = vunpack.c.l.b16 %v3527
        %v3656 = vunpack.c.l.b16 %v3528
        %v3657 = vunpack.c.l.b16 %v3529
        %v3658 = vunpack.c.l.b16 %v3530
        %v3659 = vunpack.c.l.b16 %v3531
        %v3660 = vunpack.c.l.b16 %v3532
        %v3661 = vunpack.c.l.b16 %v3533
        %v3662 = vpack.c.b16 %v3647, %v3646
        %v3663 = vpack.c.b16 %v3649, %v3648
        %v3664 = vpack.c.b16 %v3651, %v3650
        %v3665 = vpack.c.b16 %v3653, %v3652
        %v3666 = vpack.c.b16 %v3655, %v3654
        %v3667 = vpack.c.b16 %v3657, %v3656
        %v3668 = vpack.c.b16 %v3659, %v3658
        %v3669 = vpack.c.b16 %v3661, %v3660
        %3678 = vmatprep.subr.bf16.mxu0 0
        %3679 = vmatpush1.bf16.msra.mxu0 %v3669
        %3680 = vmatprep.subr.bf16.mxu0 0
        %3681 = vmatpush1.bf16.msra.mxu0 %v3668
        %3682 = vmatprep.subr.bf16.mxu0 0
        %3683 = vmatpush1.bf16.msra.mxu0 %v3667
        %3684 = vmatprep.subr.bf16.mxu0 0
        %3685 = vmatpush1.bf16.msra.mxu0 %v3666
        %3686 = vmatprep.subr.bf16.mxu0 0
        %3687 = vmatpush1.bf16.msra.mxu0 %v3665
        %3688 = vmatprep.subr.bf16.mxu0 0
        %3689 = vmatpush1.bf16.msra.mxu0 %v3664
        %3690 = vmatprep.subr.bf16.mxu0 0
        %3691 = vmatpush1.bf16.msra.mxu0 %v3663
        %3692 = vmatprep.subr.bf16.mxu0 0
        %3693 = vmatpush1.bf16.msra.mxu0 %v3662
        %3694 = vmatprep.subr.bf16.mxu0 0
        %3695 = vmatpush2.bf16.msra.mxu0 0
        %3696 = vmatprep.subr.bf16.mxu0 0
        %3697 = vmatpush2.bf16.msra.mxu0 0
        %3698 = vmatprep.subr.bf16.mxu0 0
        %3699 = vmatpush2.bf16.msra.mxu0 0
        %3700 = vmatprep.subr.bf16.mxu0 0
        %3701 = vmatpush2.bf16.msra.mxu0 0
        %3702 = vmatprep.subr.bf16.mxu0 0
        %3703 = vmatpush2.bf16.msra.mxu0 0
        %3704 = vmatprep.subr.bf16.mxu0 0
        %3705 = vmatpush2.bf16.msra.mxu0 0
        %3706 = vmatprep.subr.bf16.mxu0 0
        %3707 = vmatpush2.bf16.msra.mxu0 0
        %3708 = vmatprep.subr.bf16.mxu0 0
        %3709 = vmatpush2.bf16.msra.mxu0 0
        %3710 = vmatprep.mubr.bf16.mxu0 0
        %3711 = vmatmul.mubr.bf16.gmra.mxu0 %v3598
        %v3712 = vpop.f32.mrf.mxu0
        %v3713 = vadd.f32 0.0, %v3712
        %v3714 = vpop.f32.mrf.mxu0
        %v3715 = vpop.f32.mrf.mxu0
        %v3716 = vadd.f32 0.0, %v3715
        %v3717 = vpop.f32.mrf.mxu0
        %3718 = vmatprep.mubr.bf16.mxu0 0
        %3719 = vmatmul.mubr.bf16.gmra.mxu0 %v3599
        %v3720 = vpop.f32.mrf.mxu0
        %v3721 = vadd.f32 0.0, %v3720
        %v3722 = vpop.f32.mrf.mxu0
        %v3723 = vpop.f32.mrf.mxu0
        %v3724 = vadd.f32 0.0, %v3723
        %v3725 = vpop.f32.mrf.mxu0
        %3726 = vmatprep.mubr.bf16.mxu0 0
        %3727 = vmatmul.mubr.bf16.gmra.mxu0 %v3600
        %v3728 = vpop.f32.mrf.mxu0
        %v3729 = vadd.f32 0.0, %v3728
        %v3730 = vpop.f32.mrf.mxu0
        %v3731 = vpop.f32.mrf.mxu0
        %v3732 = vadd.f32 0.0, %v3731
        %v3733 = vpop.f32.mrf.mxu0
        %3734 = vmatprep.mubr.bf16.mxu0 0
        %3735 = vmatmul.mubr.bf16.gmra.mxu0 %v3601
        %v3736 = vpop.f32.mrf.mxu0
        %v3737 = vadd.f32 0.0, %v3736
        %v3738 = vpop.f32.mrf.mxu0
        %v3739 = vpop.f32.mrf.mxu0
        %v3740 = vadd.f32 0.0, %v3739
        %v3741 = vpop.f32.mrf.mxu0
        %3742 = vmatprep.mubr.bf16.mxu0 0
        %3743 = vmatmul.mubr.bf16.gmra.mxu0 %v3602
        %v3744 = vpop.f32.mrf.mxu0
        %v3745 = vadd.f32 0.0, %v3744
        %v3746 = vpop.f32.mrf.mxu0
        %v3747 = vpop.f32.mrf.mxu0
        %v3748 = vadd.f32 0.0, %v3747
        %v3749 = vpop.f32.mrf.mxu0
        %3750 = vmatprep.mubr.bf16.mxu0 0
        %3751 = vmatmul.mubr.bf16.gmra.mxu0 %v3603
        %v3752 = vpop.f32.mrf.mxu0
        %v3753 = vadd.f32 0.0, %v3752
        %v3754 = vpop.f32.mrf.mxu0
        %v3755 = vpop.f32.mrf.mxu0
        %v3756 = vadd.f32 0.0, %v3755
        %v3757 = vpop.f32.mrf.mxu0
        %3758 = vmatprep.mubr.bf16.mxu0 0
        %3759 = vmatmul.mubr.bf16.gmra.mxu0 %v3604
        %v3760 = vpop.f32.mrf.mxu0
        %v3761 = vadd.f32 0.0, %v3760
        %v3762 = vpop.f32.mrf.mxu0
        %v3763 = vpop.f32.mrf.mxu0
        %v3764 = vadd.f32 0.0, %v3763
        %v3765 = vpop.f32.mrf.mxu0
        %3766 = vmatprep.mubr.bf16.mxu0 0
        %3767 = vmatmul.mubr.bf16.gmra.mxu0 %v3605
        %v3768 = vpop.f32.mrf.mxu0
        %v3769 = vadd.f32 0.0, %v3768
        %v3770 = vpop.f32.mrf.mxu0
        %v3771 = vpop.f32.mrf.mxu0
        %v3772 = vadd.f32 0.0, %v3771
        %v3773 = vpop.f32.mrf.mxu0
        %3774 = vmatprep.mubr.bf16.mxu0 0
        %3775 = vmatmul.mubr.bf16.gmra.mxu0 %v3606
        %v3776 = vpop.f32.mrf.mxu0
        %v3777 = vadd.f32 0.0, %v3776
        %v3778 = vpop.f32.mrf.mxu0
        %v3779 = vpop.f32.mrf.mxu0
        %v3780 = vadd.f32 0.0, %v3779
        %v3781 = vpop.f32.mrf.mxu0
        %3782 = vmatprep.mubr.bf16.mxu0 0
        %3783 = vmatmul.mubr.bf16.gmra.mxu0 %v3607
        %v3784 = vpop.f32.mrf.mxu0
        %v3785 = vadd.f32 0.0, %v3784
        %v3786 = vpop.f32.mrf.mxu0
        %v3787 = vpop.f32.mrf.mxu0
        %v3788 = vadd.f32 0.0, %v3787
        %v3789 = vpop.f32.mrf.mxu0
        %3790 = vmatprep.mubr.bf16.mxu0 0
        %3791 = vmatmul.mubr.bf16.gmra.mxu0 %v3608
        %v3792 = vpop.f32.mrf.mxu0
        %v3793 = vadd.f32 0.0, %v3792
        %v3794 = vpop.f32.mrf.mxu0
        %v3795 = vpop.f32.mrf.mxu0
        %v3796 = vadd.f32 0.0, %v3795
        %v3797 = vpop.f32.mrf.mxu0
        %3798 = vmatprep.mubr.bf16.mxu0 0
        %3799 = vmatmul.mubr.bf16.gmra.mxu0 %v3609
        %v3800 = vpop.f32.mrf.mxu0
        %v3801 = vadd.f32 0.0, %v3800
        %v3802 = vpop.f32.mrf.mxu0
        %v3803 = vpop.f32.mrf.mxu0
        %v3804 = vadd.f32 0.0, %v3803
        %v3805 = vpop.f32.mrf.mxu0
        %3806 = vmatprep.mubr.bf16.mxu0 0
        %3807 = vmatmul.mubr.bf16.gmra.mxu0 %v3610
        %v3808 = vpop.f32.mrf.mxu0
        %v3809 = vadd.f32 0.0, %v3808
        %v3810 = vpop.f32.mrf.mxu0
        %v3811 = vpop.f32.mrf.mxu0
        %v3812 = vadd.f32 0.0, %v3811
        %v3813 = vpop.f32.mrf.mxu0
        %3814 = vmatprep.mubr.bf16.mxu0 0
        %3815 = vmatmul.mubr.bf16.gmra.mxu0 %v3611
        %v3816 = vpop.f32.mrf.mxu0
        %v3817 = vadd.f32 0.0, %v3816
        %v3818 = vpop.f32.mrf.mxu0
        %v3819 = vpop.f32.mrf.mxu0
        %v3820 = vadd.f32 0.0, %v3819
        %v3821 = vpop.f32.mrf.mxu0
        %3822 = vmatprep.mubr.bf16.mxu0 0
        %3823 = vmatmul.mubr.bf16.gmra.mxu0 %v3612
        %v3824 = vpop.f32.mrf.mxu0
        %v3825 = vadd.f32 0.0, %v3824
        %v3826 = vpop.f32.mrf.mxu0
        %v3827 = vpop.f32.mrf.mxu0
        %v3828 = vadd.f32 0.0, %v3827
        %v3829 = vpop.f32.mrf.mxu0
        %3830 = vmatprep.mubr.bf16.mxu0 0
        %3831 = vmatmul.mubr.bf16.gmra.mxu0 %v3613
        %v3832 = vpop.f32.mrf.mxu0
        %v3833 = vadd.f32 0.0, %v3832
        %v3834 = vpop.f32.mrf.mxu0
        %v3835 = vpop.f32.mrf.mxu0
        %v3836 = vadd.f32 0.0, %v3835
        %v3837 = vpop.f32.mrf.mxu0
        %3838 = vdwg.mxu0
        %v3839 = vadd.f32 %v3452, %v3713
        %v3840 = vadd.f32 %v3453, %v3716
        %v3841 = vadd.f32 %v3454, %v3721
        %v3842 = vadd.f32 %v3455, %v3724
        %v3843 = vadd.f32 %v3456, %v3729
        %v3844 = vadd.f32 %v3457, %v3732
        %v3845 = vadd.f32 %v3458, %v3737
        %v3846 = vadd.f32 %v3459, %v3740
        %v3847 = vadd.f32 %v3460, %v3745
        %v3848 = vadd.f32 %v3461, %v3748
        %v3849 = vadd.f32 %v3462, %v3753
        %v3850 = vadd.f32 %v3463, %v3756
        %v3851 = vadd.f32 %v3464, %v3761
        %v3852 = vadd.f32 %v3465, %v3764
        %v3853 = vadd.f32 %v3466, %v3769
        %v3854 = vadd.f32 %v3467, %v3772
        %v3855 = vadd.f32 %v3468, %v3777
        %v3856 = vadd.f32 %v3469, %v3780
        %v3857 = vadd.f32 %v3470, %v3785
        %v3858 = vadd.f32 %v3471, %v3788
        %v3859 = vadd.f32 %v3472, %v3793
        %v3860 = vadd.f32 %v3473, %v3796
        %v3861 = vadd.f32 %v3474, %v3801
        %v3862 = vadd.f32 %v3475, %v3804
        %v3863 = vadd.f32 %v3476, %v3809
        %v3864 = vadd.f32 %v3477, %v3812
        %v3865 = vadd.f32 %v3478, %v3817
        %v3866 = vadd.f32 %v3479, %v3820
        %v3867 = vadd.f32 %v3480, %v3825
        %v3868 = vadd.f32 %v3481, %v3828
        %v3869 = vadd.f32 %v3482, %v3833
        %v3870 = vadd.f32 %v3483, %v3836
        %v3871 = vld [vmem:[%s3484] sm:$0xf]
        %v3872 = vld [vmem:[%s3484 + $0x4] sm:$0xf]
        %v3873 = vld [vmem:[%s3484 + $0x8] sm:$0x1]
        %v3874 = vld [vmem:[%s3484 + $0xc] sm:$0xf]
        %v3875 = vld [vmem:[%s3484 + $0x10] sm:$0xf]
        %v3876 = vld [vmem:[%s3484 + $0x14] sm:$0x1]
        %v3877 = vld [vmem:[%s3484 + $0x18] sm:$0xf]
        %v3878 = vld [vmem:[%s3484 + $0x1c] sm:$0xf]
        %v3879 = vld [vmem:[%s3484 + $0x20] sm:$0x1]
        %v3880 = vld [vmem:[%s3484 + $0x24] sm:$0xf]
        %v3881 = vld [vmem:[%s3484 + $0x28] sm:$0xf]
        %v3882 = vld [vmem:[%s3484 + $0x2c] sm:$0x1]
        %v3883 = vld [vmem:[%s3484 + $0x30] sm:$0xf]
        %v3884 = vld [vmem:[%s3484 + $0x34] sm:$0xf]
        %v3885 = vld [vmem:[%s3484 + $0x38] sm:$0x1]
        %v3886 = vld [vmem:[%s3484 + $0x3c] sm:$0xf]
        %v3887 = vld [vmem:[%s3484 + $0x40] sm:$0xf]
        %v3888 = vld [vmem:[%s3484 + $0x44] sm:$0x1]
        %v3889 = vld [vmem:[%s3484 + $0x48] sm:$0xf]
        %v3890 = vld [vmem:[%s3484 + $0x4c] sm:$0xf]
        %v3891 = vld [vmem:[%s3484 + $0x50] sm:$0x1]
        %v3892 = vld [vmem:[%s3484 + $0x54] sm:$0xf]
        %v3893 = vld [vmem:[%s3484 + $0x58] sm:$0xf]
        %v3894 = vld [vmem:[%s3484 + $0x5c] sm:$0x1]
        %v3895 = vld [vmem:[%s3484 + $0x60] sm:$0xf]
        %v3896 = vld [vmem:[%s3484 + $0x64] sm:$0xf]
        %v3897 = vld [vmem:[%s3484 + $0x68] sm:$0x1]
        %v3898 = vld [vmem:[%s3484 + $0x6c] sm:$0xf]
        %v3899 = vld [vmem:[%s3484 + $0x70] sm:$0xf]
        %v3900 = vld [vmem:[%s3484 + $0x74] sm:$0x1]
        %v3901 = vld [vmem:[%s3484 + $0x78] sm:$0xf]
        %v3902 = vld [vmem:[%s3484 + $0x7c] sm:$0xf]
        %v3903 = vld [vmem:[%s3484 + $0x80] sm:$0x1]
        %v3904 = vld [vmem:[%s3484 + $0x84] sm:$0xf]
        %v3905 = vld [vmem:[%s3484 + $0x88] sm:$0xf]
        %v3906 = vld [vmem:[%s3484 + $0x8c] sm:$0x1]
        %v3907 = vld [vmem:[%s3484 + $0x90] sm:$0xf]
        %v3908 = vld [vmem:[%s3484 + $0x94] sm:$0xf]
        %v3909 = vld [vmem:[%s3484 + $0x98] sm:$0x1]
        %v3910 = vld [vmem:[%s3484 + $0x9c] sm:$0xf]
        %v3911 = vld [vmem:[%s3484 + $0xa0] sm:$0xf]
        %v3912 = vld [vmem:[%s3484 + $0xa4] sm:$0x1]
        %v3913 = vld [vmem:[%s3484 + $0xa8] sm:$0xf]
        %v3914 = vld [vmem:[%s3484 + $0xac] sm:$0xf]
        %v3915 = vld [vmem:[%s3484 + $0xb0] sm:$0x1]
        %v3916 = vld [vmem:[%s3484 + $0xb4] sm:$0xf]
        %v3917 = vld [vmem:[%s3484 + $0xb8] sm:$0xf]
        %v3918 = vld [vmem:[%s3484 + $0xbc] sm:$0x1]
        %v3920 = vshrl.u32 %v3871, 16
        %v3922 = vrot.slane %v3920, 4
        %v3923 = vshll.u32 %v3871, 16
        %v3925 = vrot.slane %v3923, 5
        %v3926 = vor.u32 %v3922, %v3925
        %v3927 = vrot.slane %v3926, 4
        %v3929 = vshll.u32 %v3872, 16
        %v3931 = vrot.slane %v3929, 5
        %v3932 = vsel %vm380, %v3927, %v3931
        %v3933 = vshrl.u32 %v3872, 16
        %v3935 = vrot.slane %v3933, 4
        %v3936 = vor.u32 %v3935, %v3931
        %v3937 = vrot.slane %v3936, 4
        %v3939 = vshll.u32 %v3873, 16
        %v3941 = vrot.slane %v3939, 5
        %v3942 = vsel %vm380, %v3937, %v3941
        %v3944 = vshrl.u32 %v3874, 16
        %v3946 = vrot.slane %v3944, 4
        %v3947 = vshll.u32 %v3874, 16
        %v3949 = vrot.slane %v3947, 5
        %v3950 = vor.u32 %v3946, %v3949
        %v3951 = vrot.slane %v3950, 4
        %v3953 = vshll.u32 %v3875, 16
        %v3955 = vrot.slane %v3953, 5
        %v3956 = vsel %vm380, %v3951, %v3955
        %v3957 = vshrl.u32 %v3875, 16
        %v3959 = vrot.slane %v3957, 4
        %v3960 = vor.u32 %v3959, %v3955
        %v3961 = vrot.slane %v3960, 4
        %v3963 = vshll.u32 %v3876, 16
        %v3965 = vrot.slane %v3963, 5
        %v3966 = vsel %vm380, %v3961, %v3965
        %v3968 = vshrl.u32 %v3877, 16
        %v3970 = vrot.slane %v3968, 4
        %v3971 = vshll.u32 %v3877, 16
        %v3973 = vrot.slane %v3971, 5
        %v3974 = vor.u32 %v3970, %v3973
        %v3975 = vrot.slane %v3974, 4
        %v3977 = vshll.u32 %v3878, 16
        %v3979 = vrot.slane %v3977, 5
        %v3980 = vsel %vm380, %v3975, %v3979
        %v3981 = vshrl.u32 %v3878, 16
        %v3983 = vrot.slane %v3981, 4
        %v3984 = vor.u32 %v3983, %v3979
        %v3985 = vrot.slane %v3984, 4
        %v3987 = vshll.u32 %v3879, 16
        %v3989 = vrot.slane %v3987, 5
        %v3990 = vsel %vm380, %v3985, %v3989
        %v3992 = vshrl.u32 %v3880, 16
        %v3994 = vrot.slane %v3992, 4
        %v3995 = vshll.u32 %v3880, 16
        %v3997 = vrot.slane %v3995, 5
        %v3998 = vor.u32 %v3994, %v3997
        %v3999 = vrot.slane %v3998, 4
        %v4001 = vshll.u32 %v3881, 16
        %v4003 = vrot.slane %v4001, 5
        %v4004 = vsel %vm380, %v3999, %v4003
        %v4005 = vshrl.u32 %v3881, 16
        %v4007 = vrot.slane %v4005, 4
        %v4008 = vor.u32 %v4007, %v4003
        %v4009 = vrot.slane %v4008, 4
        %v4011 = vshll.u32 %v3882, 16
        %v4013 = vrot.slane %v4011, 5
        %v4014 = vsel %vm380, %v4009, %v4013
        %v4016 = vshrl.u32 %v3883, 16
        %v4018 = vrot.slane %v4016, 4
        %v4019 = vshll.u32 %v3883, 16
        %v4021 = vrot.slane %v4019, 5
        %v4022 = vor.u32 %v4018, %v4021
        %v4023 = vrot.slane %v4022, 4
        %v4025 = vshll.u32 %v3884, 16
        %v4027 = vrot.slane %v4025, 5
        %v4028 = vsel %vm380, %v4023, %v4027
        %v4029 = vshrl.u32 %v3884, 16
        %v4031 = vrot.slane %v4029, 4
        %v4032 = vor.u32 %v4031, %v4027
        %v4033 = vrot.slane %v4032, 4
        %v4035 = vshll.u32 %v3885, 16
        %v4037 = vrot.slane %v4035, 5
        %v4038 = vsel %vm380, %v4033, %v4037
        %v4040 = vshrl.u32 %v3886, 16
        %v4042 = vrot.slane %v4040, 4
        %v4043 = vshll.u32 %v3886, 16
        %v4045 = vrot.slane %v4043, 5
        %v4046 = vor.u32 %v4042, %v4045
        %v4047 = vrot.slane %v4046, 4
        %v4049 = vshll.u32 %v3887, 16
        %v4051 = vrot.slane %v4049, 5
        %v4052 = vsel %vm380, %v4047, %v4051
        %v4053 = vshrl.u32 %v3887, 16
        %v4055 = vrot.slane %v4053, 4
        %v4056 = vor.u32 %v4055, %v4051
        %v4057 = vrot.slane %v4056, 4
        %v4059 = vshll.u32 %v3888, 16
        %v4061 = vrot.slane %v4059, 5
        %v4062 = vsel %vm380, %v4057, %v4061
        %v4064 = vshrl.u32 %v3889, 16
        %v4066 = vrot.slane %v4064, 4
        %v4067 = vshll.u32 %v3889, 16
        %v4069 = vrot.slane %v4067, 5
        %v4070 = vor.u32 %v4066, %v4069
        %v4071 = vrot.slane %v4070, 4
        %v4073 = vshll.u32 %v3890, 16
        %v4075 = vrot.slane %v4073, 5
        %v4076 = vsel %vm380, %v4071, %v4075
        %v4077 = vshrl.u32 %v3890, 16
        %v4079 = vrot.slane %v4077, 4
        %v4080 = vor.u32 %v4079, %v4075
        %v4081 = vrot.slane %v4080, 4
        %v4083 = vshll.u32 %v3891, 16
        %v4085 = vrot.slane %v4083, 5
        %v4086 = vsel %vm380, %v4081, %v4085
        %v4088 = vshrl.u32 %v3892, 16
        %v4090 = vrot.slane %v4088, 4
        %v4091 = vshll.u32 %v3892, 16
        %v4093 = vrot.slane %v4091, 5
        %v4094 = vor.u32 %v4090, %v4093
        %v4095 = vrot.slane %v4094, 4
        %v4097 = vshll.u32 %v3893, 16
        %v4099 = vrot.slane %v4097, 5
        %v4100 = vsel %vm380, %v4095, %v4099
        %v4101 = vshrl.u32 %v3893, 16
        %v4103 = vrot.slane %v4101, 4
        %v4104 = vor.u32 %v4103, %v4099
        %v4105 = vrot.slane %v4104, 4
        %v4107 = vshll.u32 %v3894, 16
        %v4109 = vrot.slane %v4107, 5
        %v4110 = vsel %vm380, %v4105, %v4109
        %v4112 = vshrl.u32 %v3895, 16
        %v4114 = vrot.slane %v4112, 4
        %v4115 = vshll.u32 %v3895, 16
        %v4117 = vrot.slane %v4115, 5
        %v4118 = vor.u32 %v4114, %v4117
        %v4119 = vrot.slane %v4118, 4
        %v4121 = vshll.u32 %v3896, 16
        %v4123 = vrot.slane %v4121, 5
        %v4124 = vsel %vm380, %v4119, %v4123
        %v4125 = vshrl.u32 %v3896, 16
        %v4127 = vrot.slane %v4125, 4
        %v4128 = vor.u32 %v4127, %v4123
        %v4129 = vrot.slane %v4128, 4
        %v4131 = vshll.u32 %v3897, 16
        %v4133 = vrot.slane %v4131, 5
        %v4134 = vsel %vm380, %v4129, %v4133
        %v4136 = vshrl.u32 %v3898, 16
        %v4138 = vrot.slane %v4136, 4
        %v4139 = vshll.u32 %v3898, 16
        %v4141 = vrot.slane %v4139, 5
        %v4142 = vor.u32 %v4138, %v4141
        %v4143 = vrot.slane %v4142, 4
        %v4145 = vshll.u32 %v3899, 16
        %v4147 = vrot.slane %v4145, 5
        %v4148 = vsel %vm380, %v4143, %v4147
        %v4149 = vshrl.u32 %v3899, 16
        %v4151 = vrot.slane %v4149, 4
        %v4152 = vor.u32 %v4151, %v4147
        %v4153 = vrot.slane %v4152, 4
        %v4155 = vshll.u32 %v3900, 16
        %v4157 = vrot.slane %v4155, 5
        %v4158 = vsel %vm380, %v4153, %v4157
        %v4160 = vshrl.u32 %v3901, 16
        %v4162 = vrot.slane %v4160, 4
        %v4163 = vshll.u32 %v3901, 16
        %v4165 = vrot.slane %v4163, 5
        %v4166 = vor.u32 %v4162, %v4165
        %v4167 = vrot.slane %v4166, 4
        %v4169 = vshll.u32 %v3902, 16
        %v4171 = vrot.slane %v4169, 5
        %v4172 = vsel %vm380, %v4167, %v4171
        %v4173 = vshrl.u32 %v3902, 16
        %v4175 = vrot.slane %v4173, 4
        %v4176 = vor.u32 %v4175, %v4171
        %v4177 = vrot.slane %v4176, 4
        %v4179 = vshll.u32 %v3903, 16
        %v4181 = vrot.slane %v4179, 5
        %v4182 = vsel %vm380, %v4177, %v4181
        %v4184 = vshrl.u32 %v3904, 16
        %v4186 = vrot.slane %v4184, 4
        %v4187 = vshll.u32 %v3904, 16
        %v4189 = vrot.slane %v4187, 5
        %v4190 = vor.u32 %v4186, %v4189
        %v4191 = vrot.slane %v4190, 4
        %v4193 = vshll.u32 %v3905, 16
        %v4195 = vrot.slane %v4193, 5
        %v4196 = vsel %vm380, %v4191, %v4195
        %v4197 = vshrl.u32 %v3905, 16
        %v4199 = vrot.slane %v4197, 4
        %v4200 = vor.u32 %v4199, %v4195
        %v4201 = vrot.slane %v4200, 4
        %v4203 = vshll.u32 %v3906, 16
        %v4205 = vrot.slane %v4203, 5
        %v4206 = vsel %vm380, %v4201, %v4205
        %v4208 = vshrl.u32 %v3907, 16
        %v4210 = vrot.slane %v4208, 4
        %v4211 = vshll.u32 %v3907, 16
        %v4213 = vrot.slane %v4211, 5
        %v4214 = vor.u32 %v4210, %v4213
        %v4215 = vrot.slane %v4214, 4
        %v4217 = vshll.u32 %v3908, 16
        %v4219 = vrot.slane %v4217, 5
        %v4220 = vsel %vm380, %v4215, %v4219
        %v4221 = vshrl.u32 %v3908, 16
        %v4223 = vrot.slane %v4221, 4
        %v4224 = vor.u32 %v4223, %v4219
        %v4225 = vrot.slane %v4224, 4
        %v4227 = vshll.u32 %v3909, 16
        %v4229 = vrot.slane %v4227, 5
        %v4230 = vsel %vm380, %v4225, %v4229
        %v4232 = vshrl.u32 %v3910, 16
        %v4234 = vrot.slane %v4232, 4
        %v4235 = vshll.u32 %v3910, 16
        %v4237 = vrot.slane %v4235, 5
        %v4238 = vor.u32 %v4234, %v4237
        %v4239 = vrot.slane %v4238, 4
        %v4241 = vshll.u32 %v3911, 16
        %v4243 = vrot.slane %v4241, 5
        %v4244 = vsel %vm380, %v4239, %v4243
        %v4245 = vshrl.u32 %v3911, 16
        %v4247 = vrot.slane %v4245, 4
        %v4248 = vor.u32 %v4247, %v4243
        %v4249 = vrot.slane %v4248, 4
        %v4251 = vshll.u32 %v3912, 16
        %v4253 = vrot.slane %v4251, 5
        %v4254 = vsel %vm380, %v4249, %v4253
        %v4256 = vshrl.u32 %v3913, 16
        %v4258 = vrot.slane %v4256, 4
        %v4259 = vshll.u32 %v3913, 16
        %v4261 = vrot.slane %v4259, 5
        %v4262 = vor.u32 %v4258, %v4261
        %v4263 = vrot.slane %v4262, 4
        %v4265 = vshll.u32 %v3914, 16
        %v4267 = vrot.slane %v4265, 5
        %v4268 = vsel %vm380, %v4263, %v4267
        %v4269 = vshrl.u32 %v3914, 16
        %v4271 = vrot.slane %v4269, 4
        %v4272 = vor.u32 %v4271, %v4267
        %v4273 = vrot.slane %v4272, 4
        %v4275 = vshll.u32 %v3915, 16
        %v4277 = vrot.slane %v4275, 5
        %v4278 = vsel %vm380, %v4273, %v4277
        %v4280 = vshrl.u32 %v3916, 16
        %v4282 = vrot.slane %v4280, 4
        %v4283 = vshll.u32 %v3916, 16
        %v4285 = vrot.slane %v4283, 5
        %v4286 = vor.u32 %v4282, %v4285
        %v4287 = vrot.slane %v4286, 4
        %v4289 = vshll.u32 %v3917, 16
        %v4291 = vrot.slane %v4289, 5
        %v4292 = vsel %vm380, %v4287, %v4291
        %v4293 = vshrl.u32 %v3917, 16
        %v4295 = vrot.slane %v4293, 4
        %v4296 = vor.u32 %v4295, %v4291
        %v4297 = vrot.slane %v4296, 4
        %v4299 = vshll.u32 %v3918, 16
        %v4301 = vrot.slane %v4299, 5
        %v4302 = vsel %vm380, %v4297, %v4301
        %s4303 = scalar_lea.vmem %s1, 448
        %v4304 = vld [vmem:[%s4303] sm:$0xf]
        %v4305 = vld [vmem:[%s4303 + $0x4] sm:$0xf]
        %v4306 = vld [vmem:[%s4303 + $0x8] sm:$0xf]
        %v4307 = vld [vmem:[%s4303 + $0xc] sm:$0xf]
        %v4308 = vld [vmem:[%s4303 + $0x10] sm:$0xf]
        %v4309 = vld [vmem:[%s4303 + $0x14] sm:$0xf]
        %v4310 = vld [vmem:[%s4303 + $0x18] sm:$0xf]
        %v4311 = vld [vmem:[%s4303 + $0x1c] sm:$0xf]
        %v4312 = vld [vmem:[%s4303 + $0x20] sm:$0xf]
        %v4313 = vld [vmem:[%s4303 + $0x24] sm:$0xf]
        %v4314 = vld [vmem:[%s4303 + $0x28] sm:$0xf]
        %v4315 = vld [vmem:[%s4303 + $0x2c] sm:$0xf]
        %v4316 = vld [vmem:[%s4303 + $0x30] sm:$0xf]
        %v4317 = vld [vmem:[%s4303 + $0x34] sm:$0xf]
        %v4318 = vld [vmem:[%s4303 + $0x38] sm:$0xf]
        %v4319 = vld [vmem:[%s4303 + $0x3c] sm:$0xf]
        %v4320 = vunpack.c.l.b16 %v3932
        %v4321 = vunpack.c.l.b16 %v3942
        %v4322 = vunpack.c.l.b16 %v3956
        %v4323 = vunpack.c.l.b16 %v3966
        %v4324 = vunpack.c.l.b16 %v3980
        %v4325 = vunpack.c.l.b16 %v3990
        %v4326 = vunpack.c.l.b16 %v4004
        %v4327 = vunpack.c.l.b16 %v4014
        %v4328 = vunpack.c.l.b16 %v4028
        %v4329 = vunpack.c.l.b16 %v4038
        %v4330 = vunpack.c.l.b16 %v4052
        %v4331 = vunpack.c.l.b16 %v4062
        %v4332 = vunpack.c.l.b16 %v4076
        %v4333 = vunpack.c.l.b16 %v4086
        %v4334 = vunpack.c.l.b16 %v4100
        %v4335 = vunpack.c.l.b16 %v4110
        %v4336 = vunpack.c.l.b16 %v4124
        %v4337 = vunpack.c.l.b16 %v4134
        %v4338 = vunpack.c.l.b16 %v4148
        %v4339 = vunpack.c.l.b16 %v4158
        %v4340 = vunpack.c.l.b16 %v4172
        %v4341 = vunpack.c.l.b16 %v4182
        %v4342 = vunpack.c.l.b16 %v4196
        %v4343 = vunpack.c.l.b16 %v4206
        %v4344 = vunpack.c.l.b16 %v4220
        %v4345 = vunpack.c.l.b16 %v4230
        %v4346 = vunpack.c.l.b16 %v4244
        %v4347 = vunpack.c.l.b16 %v4254
        %v4348 = vunpack.c.l.b16 %v4268
        %v4349 = vunpack.c.l.b16 %v4278
        %v4350 = vunpack.c.l.b16 %v4292
        %v4351 = vunpack.c.l.b16 %v4302
        %v4352 = vpack.c.b16 %v4321, %v4320
        %v4353 = vpack.c.b16 %v4323, %v4322
        %v4354 = vpack.c.b16 %v4325, %v4324
        %v4355 = vpack.c.b16 %v4327, %v4326
        %v4356 = vpack.c.b16 %v4329, %v4328
        %v4357 = vpack.c.b16 %v4331, %v4330
        %v4358 = vpack.c.b16 %v4333, %v4332
        %v4359 = vpack.c.b16 %v4335, %v4334
        %v4360 = vpack.c.b16 %v4337, %v4336
        %v4361 = vpack.c.b16 %v4339, %v4338
        %v4362 = vpack.c.b16 %v4341, %v4340
        %v4363 = vpack.c.b16 %v4343, %v4342
        %v4364 = vpack.c.b16 %v4345, %v4344
        %v4365 = vpack.c.b16 %v4347, %v4346
        %v4366 = vpack.c.b16 %v4349, %v4348
        %v4367 = vpack.c.b16 %v4351, %v4350
        %v4400 = vunpack.c.l.b16 %v4304
        %v4401 = vunpack.c.l.b16 %v4305
        %v4402 = vunpack.c.l.b16 %v4306
        %v4403 = vunpack.c.l.b16 %v4307
        %v4404 = vunpack.c.l.b16 %v4308
        %v4405 = vunpack.c.l.b16 %v4309
        %v4406 = vunpack.c.l.b16 %v4310
        %v4407 = vunpack.c.l.b16 %v4311
        %v4408 = vunpack.c.l.b16 %v4312
        %v4409 = vunpack.c.l.b16 %v4313
        %v4410 = vunpack.c.l.b16 %v4314
        %v4411 = vunpack.c.l.b16 %v4315
        %v4412 = vunpack.c.l.b16 %v4316
        %v4413 = vunpack.c.l.b16 %v4317
        %v4414 = vunpack.c.l.b16 %v4318
        %v4415 = vunpack.c.l.b16 %v4319
        %v4416 = vpack.c.b16 %v4401, %v4400
        %v4417 = vpack.c.b16 %v4403, %v4402
        %v4418 = vpack.c.b16 %v4405, %v4404
        %v4419 = vpack.c.b16 %v4407, %v4406
        %v4420 = vpack.c.b16 %v4409, %v4408
        %v4421 = vpack.c.b16 %v4411, %v4410
        %v4422 = vpack.c.b16 %v4413, %v4412
        %v4423 = vpack.c.b16 %v4415, %v4414
        %4432 = vmatprep.subr.bf16.mxu0 0
        %4433 = vmatpush1.bf16.msra.mxu0 %v4423
        %4434 = vmatprep.subr.bf16.mxu0 0
        %4435 = vmatpush1.bf16.msra.mxu0 %v4422
        %4436 = vmatprep.subr.bf16.mxu0 0
        %4437 = vmatpush1.bf16.msra.mxu0 %v4421
        %4438 = vmatprep.subr.bf16.mxu0 0
        %4439 = vmatpush1.bf16.msra.mxu0 %v4420
        %4440 = vmatprep.subr.bf16.mxu0 0
        %4441 = vmatpush1.bf16.msra.mxu0 %v4419
        %4442 = vmatprep.subr.bf16.mxu0 0
        %4443 = vmatpush1.bf16.msra.mxu0 %v4418
        %4444 = vmatprep.subr.bf16.mxu0 0
        %4445 = vmatpush1.bf16.msra.mxu0 %v4417
        %4446 = vmatprep.subr.bf16.mxu0 0
        %4447 = vmatpush1.bf16.msra.mxu0 %v4416
        %4448 = vmatprep.subr.bf16.mxu0 0
        %4449 = vmatpush2.bf16.msra.mxu0 0
        %4450 = vmatprep.subr.bf16.mxu0 0
        %4451 = vmatpush2.bf16.msra.mxu0 0
        %4452 = vmatprep.subr.bf16.mxu0 0
        %4453 = vmatpush2.bf16.msra.mxu0 0
        %4454 = vmatprep.subr.bf16.mxu0 0
        %4455 = vmatpush2.bf16.msra.mxu0 0
        %4456 = vmatprep.subr.bf16.mxu0 0
        %4457 = vmatpush2.bf16.msra.mxu0 0
        %4458 = vmatprep.subr.bf16.mxu0 0
        %4459 = vmatpush2.bf16.msra.mxu0 0
        %4460 = vmatprep.subr.bf16.mxu0 0
        %4461 = vmatpush2.bf16.msra.mxu0 0
        %4462 = vmatprep.subr.bf16.mxu0 0
        %4463 = vmatpush2.bf16.msra.mxu0 0
        %4464 = vmatprep.mubr.bf16.mxu0 0
        %4465 = vmatmul.mubr.bf16.gmra.mxu0 %v4352
        %v4466 = vpop.f32.mrf.mxu0
        %v4467 = vadd.f32 0.0, %v4466
        %v4468 = vpop.f32.mrf.mxu0
        %v4469 = vpop.f32.mrf.mxu0
        %v4470 = vadd.f32 0.0, %v4469
        %v4471 = vpop.f32.mrf.mxu0
        %4472 = vmatprep.mubr.bf16.mxu0 0
        %4473 = vmatmul.mubr.bf16.gmra.mxu0 %v4353
        %v4474 = vpop.f32.mrf.mxu0
        %v4475 = vadd.f32 0.0, %v4474
        %v4476 = vpop.f32.mrf.mxu0
        %v4477 = vpop.f32.mrf.mxu0
        %v4478 = vadd.f32 0.0, %v4477
        %v4479 = vpop.f32.mrf.mxu0
        %4480 = vmatprep.mubr.bf16.mxu0 0
        %4481 = vmatmul.mubr.bf16.gmra.mxu0 %v4354
        %v4482 = vpop.f32.mrf.mxu0
        %v4483 = vadd.f32 0.0, %v4482
        %v4484 = vpop.f32.mrf.mxu0
        %v4485 = vpop.f32.mrf.mxu0
        %v4486 = vadd.f32 0.0, %v4485
        %v4487 = vpop.f32.mrf.mxu0
        %4488 = vmatprep.mubr.bf16.mxu0 0
        %4489 = vmatmul.mubr.bf16.gmra.mxu0 %v4355
        %v4490 = vpop.f32.mrf.mxu0
        %v4491 = vadd.f32 0.0, %v4490
        %v4492 = vpop.f32.mrf.mxu0
        %v4493 = vpop.f32.mrf.mxu0
        %v4494 = vadd.f32 0.0, %v4493
        %v4495 = vpop.f32.mrf.mxu0
        %4496 = vmatprep.mubr.bf16.mxu0 0
        %4497 = vmatmul.mubr.bf16.gmra.mxu0 %v4356
        %v4498 = vpop.f32.mrf.mxu0
        %v4499 = vadd.f32 0.0, %v4498
        %v4500 = vpop.f32.mrf.mxu0
        %v4501 = vpop.f32.mrf.mxu0
        %v4502 = vadd.f32 0.0, %v4501
        %v4503 = vpop.f32.mrf.mxu0
        %4504 = vmatprep.mubr.bf16.mxu0 0
        %4505 = vmatmul.mubr.bf16.gmra.mxu0 %v4357
        %v4506 = vpop.f32.mrf.mxu0
        %v4507 = vadd.f32 0.0, %v4506
        %v4508 = vpop.f32.mrf.mxu0
        %v4509 = vpop.f32.mrf.mxu0
        %v4510 = vadd.f32 0.0, %v4509
        %v4511 = vpop.f32.mrf.mxu0
        %4512 = vmatprep.mubr.bf16.mxu0 0
        %4513 = vmatmul.mubr.bf16.gmra.mxu0 %v4358
        %v4514 = vpop.f32.mrf.mxu0
        %v4515 = vadd.f32 0.0, %v4514
        %v4516 = vpop.f32.mrf.mxu0
        %v4517 = vpop.f32.mrf.mxu0
        %v4518 = vadd.f32 0.0, %v4517
        %v4519 = vpop.f32.mrf.mxu0
        %4520 = vmatprep.mubr.bf16.mxu0 0
        %4521 = vmatmul.mubr.bf16.gmra.mxu0 %v4359
        %v4522 = vpop.f32.mrf.mxu0
        %v4523 = vadd.f32 0.0, %v4522
        %v4524 = vpop.f32.mrf.mxu0
        %v4525 = vpop.f32.mrf.mxu0
        %v4526 = vadd.f32 0.0, %v4525
        %v4527 = vpop.f32.mrf.mxu0
        %4528 = vmatprep.mubr.bf16.mxu0 0
        %4529 = vmatmul.mubr.bf16.gmra.mxu0 %v4360
        %v4530 = vpop.f32.mrf.mxu0
        %v4531 = vadd.f32 0.0, %v4530
        %v4532 = vpop.f32.mrf.mxu0
        %v4533 = vpop.f32.mrf.mxu0
        %v4534 = vadd.f32 0.0, %v4533
        %v4535 = vpop.f32.mrf.mxu0
        %4536 = vmatprep.mubr.bf16.mxu0 0
        %4537 = vmatmul.mubr.bf16.gmra.mxu0 %v4361
        %v4538 = vpop.f32.mrf.mxu0
        %v4539 = vadd.f32 0.0, %v4538
        %v4540 = vpop.f32.mrf.mxu0
        %v4541 = vpop.f32.mrf.mxu0
        %v4542 = vadd.f32 0.0, %v4541
        %v4543 = vpop.f32.mrf.mxu0
        %4544 = vmatprep.mubr.bf16.mxu0 0
        %4545 = vmatmul.mubr.bf16.gmra.mxu0 %v4362
        %v4546 = vpop.f32.mrf.mxu0
        %v4547 = vadd.f32 0.0, %v4546
        %v4548 = vpop.f32.mrf.mxu0
        %v4549 = vpop.f32.mrf.mxu0
        %v4550 = vadd.f32 0.0, %v4549
        %v4551 = vpop.f32.mrf.mxu0
        %4552 = vmatprep.mubr.bf16.mxu0 0
        %4553 = vmatmul.mubr.bf16.gmra.mxu0 %v4363
        %v4554 = vpop.f32.mrf.mxu0
        %v4555 = vadd.f32 0.0, %v4554
        %v4556 = vpop.f32.mrf.mxu0
        %v4557 = vpop.f32.mrf.mxu0
        %v4558 = vadd.f32 0.0, %v4557
        %v4559 = vpop.f32.mrf.mxu0
        %4560 = vmatprep.mubr.bf16.mxu0 0
        %4561 = vmatmul.mubr.bf16.gmra.mxu0 %v4364
        %v4562 = vpop.f32.mrf.mxu0
        %v4563 = vadd.f32 0.0, %v4562
        %v4564 = vpop.f32.mrf.mxu0
        %v4565 = vpop.f32.mrf.mxu0
        %v4566 = vadd.f32 0.0, %v4565
        %v4567 = vpop.f32.mrf.mxu0
        %4568 = vmatprep.mubr.bf16.mxu0 0
        %4569 = vmatmul.mubr.bf16.gmra.mxu0 %v4365
        %v4570 = vpop.f32.mrf.mxu0
        %v4571 = vadd.f32 0.0, %v4570
        %v4572 = vpop.f32.mrf.mxu0
        %v4573 = vpop.f32.mrf.mxu0
        %v4574 = vadd.f32 0.0, %v4573
        %v4575 = vpop.f32.mrf.mxu0
        %4576 = vmatprep.mubr.bf16.mxu0 0
        %4577 = vmatmul.mubr.bf16.gmra.mxu0 %v4366
        %v4578 = vpop.f32.mrf.mxu0
        %v4579 = vadd.f32 0.0, %v4578
        %v4580 = vpop.f32.mrf.mxu0
        %v4581 = vpop.f32.mrf.mxu0
        %v4582 = vadd.f32 0.0, %v4581
        %v4583 = vpop.f32.mrf.mxu0
        %4584 = vmatprep.mubr.bf16.mxu0 0
        %4585 = vmatmul.mubr.bf16.gmra.mxu0 %v4367
        %v4586 = vpop.f32.mrf.mxu0
        %v4587 = vadd.f32 0.0, %v4586
        %v4588 = vpop.f32.mrf.mxu0
        %v4589 = vpop.f32.mrf.mxu0
        %v4590 = vadd.f32 0.0, %v4589
        %v4591 = vpop.f32.mrf.mxu0
        %4592 = vdwg.mxu0
        %v4593 = vadd.f32 %v3839, %v4467
        %v4594 = vadd.f32 %v3840, %v4470
        %v4595 = vadd.f32 %v3841, %v4475
        %v4596 = vadd.f32 %v3842, %v4478
        %v4597 = vadd.f32 %v3843, %v4483
        %v4598 = vadd.f32 %v3844, %v4486
        %v4599 = vadd.f32 %v3845, %v4491
        %v4600 = vadd.f32 %v3846, %v4494
        %v4601 = vadd.f32 %v3847, %v4499
        %v4602 = vadd.f32 %v3848, %v4502
        %v4603 = vadd.f32 %v3849, %v4507
        %v4604 = vadd.f32 %v3850, %v4510
        %v4605 = vadd.f32 %v3851, %v4515
        %v4606 = vadd.f32 %v3852, %v4518
        %v4607 = vadd.f32 %v3853, %v4523
        %v4608 = vadd.f32 %v3854, %v4526
        %v4609 = vadd.f32 %v3855, %v4531
        %v4610 = vadd.f32 %v3856, %v4534
        %v4611 = vadd.f32 %v3857, %v4539
        %v4612 = vadd.f32 %v3858, %v4542
        %v4613 = vadd.f32 %v3859, %v4547
        %v4614 = vadd.f32 %v3860, %v4550
        %v4615 = vadd.f32 %v3861, %v4555
        %v4616 = vadd.f32 %v3862, %v4558
        %v4617 = vadd.f32 %v3863, %v4563
        %v4618 = vadd.f32 %v3864, %v4566
        %v4619 = vadd.f32 %v3865, %v4571
        %v4620 = vadd.f32 %v3866, %v4574
        %v4621 = vadd.f32 %v3867, %v4579
        %v4622 = vadd.f32 %v3868, %v4582
        %v4623 = vadd.f32 %v3869, %v4587
        %v4624 = vadd.f32 %v3870, %v4590
        %v4625 = vld [vmem:[%s3484] sm:$0xe]
        %v4626 = vld [vmem:[%s3484 + $0xc] sm:$0xe]
        %v4627 = vld [vmem:[%s3484 + $0x18] sm:$0xe]
        %v4628 = vld [vmem:[%s3484 + $0x24] sm:$0xe]
        %v4629 = vld [vmem:[%s3484 + $0x30] sm:$0xe]
        %v4630 = vld [vmem:[%s3484 + $0x3c] sm:$0xe]
        %v4631 = vld [vmem:[%s3484 + $0x48] sm:$0xe]
        %v4632 = vld [vmem:[%s3484 + $0x54] sm:$0xe]
        %v4633 = vld [vmem:[%s3484 + $0x60] sm:$0xe]
        %v4634 = vld [vmem:[%s3484 + $0x6c] sm:$0xe]
        %v4635 = vld [vmem:[%s3484 + $0x78] sm:$0xe]
        %v4636 = vld [vmem:[%s3484 + $0x84] sm:$0xe]
        %v4637 = vld [vmem:[%s3484 + $0x90] sm:$0xe]
        %v4638 = vld [vmem:[%s3484 + $0x9c] sm:$0xe]
        %v4639 = vld [vmem:[%s3484 + $0xa8] sm:$0xe]
        %v4640 = vld [vmem:[%s3484 + $0xb4] sm:$0xe]
        %v4689 = vrot.slane %v4625, 5
        %v4690 = vrot.slane %v4689, 4
        %v4691 = vrot.slane %v3872, 5
        %v4692 = vsel %vm1410, %v4690, %v4691
        %v4693 = vrot.slane %v4691, 4
        %v4694 = vrot.slane %v3873, 5
        %v4695 = vsel %vm1410, %v4693, %v4694
        %v4696 = vrot.slane %v4626, 5
        %v4697 = vrot.slane %v4696, 4
        %v4698 = vrot.slane %v3875, 5
        %v4699 = vsel %vm1410, %v4697, %v4698
        %v4700 = vrot.slane %v4698, 4
        %v4701 = vrot.slane %v3876, 5
        %v4702 = vsel %vm1410, %v4700, %v4701
        %v4703 = vrot.slane %v4627, 5
        %v4704 = vrot.slane %v4703, 4
        %v4705 = vrot.slane %v3878, 5
        %v4706 = vsel %vm1410, %v4704, %v4705
        %v4707 = vrot.slane %v4705, 4
        %v4708 = vrot.slane %v3879, 5
        %v4709 = vsel %vm1410, %v4707, %v4708
        %v4710 = vrot.slane %v4628, 5
        %v4711 = vrot.slane %v4710, 4
        %v4712 = vrot.slane %v3881, 5
        %v4713 = vsel %vm1410, %v4711, %v4712
        %v4714 = vrot.slane %v4712, 4
        %v4715 = vrot.slane %v3882, 5
        %v4716 = vsel %vm1410, %v4714, %v4715
        %v4717 = vrot.slane %v4629, 5
        %v4718 = vrot.slane %v4717, 4
        %v4719 = vrot.slane %v3884, 5
        %v4720 = vsel %vm1410, %v4718, %v4719
        %v4721 = vrot.slane %v4719, 4
        %v4722 = vrot.slane %v3885, 5
        %v4723 = vsel %vm1410, %v4721, %v4722
        %v4724 = vrot.slane %v4630, 5
        %v4725 = vrot.slane %v4724, 4
        %v4726 = vrot.slane %v3887, 5
        %v4727 = vsel %vm1410, %v4725, %v4726
        %v4728 = vrot.slane %v4726, 4
        %v4729 = vrot.slane %v3888, 5
        %v4730 = vsel %vm1410, %v4728, %v4729
        %v4731 = vrot.slane %v4631, 5
        %v4732 = vrot.slane %v4731, 4
        %v4733 = vrot.slane %v3890, 5
        %v4734 = vsel %vm1410, %v4732, %v4733
        %v4735 = vrot.slane %v4733, 4
        %v4736 = vrot.slane %v3891, 5
        %v4737 = vsel %vm1410, %v4735, %v4736
        %v4738 = vrot.slane %v4632, 5
        %v4739 = vrot.slane %v4738, 4
        %v4740 = vrot.slane %v3893, 5
        %v4741 = vsel %vm1410, %v4739, %v4740
        %v4742 = vrot.slane %v4740, 4
        %v4743 = vrot.slane %v3894, 5
        %v4744 = vsel %vm1410, %v4742, %v4743
        %v4745 = vrot.slane %v4633, 5
        %v4746 = vrot.slane %v4745, 4
        %v4747 = vrot.slane %v3896, 5
        %v4748 = vsel %vm1410, %v4746, %v4747
        %v4749 = vrot.slane %v4747, 4
        %v4750 = vrot.slane %v3897, 5
        %v4751 = vsel %vm1410, %v4749, %v4750
        %v4752 = vrot.slane %v4634, 5
        %v4753 = vrot.slane %v4752, 4
        %v4754 = vrot.slane %v3899, 5
        %v4755 = vsel %vm1410, %v4753, %v4754
        %v4756 = vrot.slane %v4754, 4
        %v4757 = vrot.slane %v3900, 5
        %v4758 = vsel %vm1410, %v4756, %v4757
        %v4759 = vrot.slane %v4635, 5
        %v4760 = vrot.slane %v4759, 4
        %v4761 = vrot.slane %v3902, 5
        %v4762 = vsel %vm1410, %v4760, %v4761
        %v4763 = vrot.slane %v4761, 4
        %v4764 = vrot.slane %v3903, 5
        %v4765 = vsel %vm1410, %v4763, %v4764
        %v4766 = vrot.slane %v4636, 5
        %v4767 = vrot.slane %v4766, 4
        %v4768 = vrot.slane %v3905, 5
        %v4769 = vsel %vm1410, %v4767, %v4768
        %v4770 = vrot.slane %v4768, 4
        %v4771 = vrot.slane %v3906, 5
        %v4772 = vsel %vm1410, %v4770, %v4771
        %v4773 = vrot.slane %v4637, 5
        %v4774 = vrot.slane %v4773, 4
        %v4775 = vrot.slane %v3908, 5
        %v4776 = vsel %vm1410, %v4774, %v4775
        %v4777 = vrot.slane %v4775, 4
        %v4778 = vrot.slane %v3909, 5
        %v4779 = vsel %vm1410, %v4777, %v4778
        %v4780 = vrot.slane %v4638, 5
        %v4781 = vrot.slane %v4780, 4
        %v4782 = vrot.slane %v3911, 5
        %v4783 = vsel %vm1410, %v4781, %v4782
        %v4784 = vrot.slane %v4782, 4
        %v4785 = vrot.slane %v3912, 5
        %v4786 = vsel %vm1410, %v4784, %v4785
        %v4787 = vrot.slane %v4639, 5
        %v4788 = vrot.slane %v4787, 4
        %v4789 = vrot.slane %v3914, 5
        %v4790 = vsel %vm1410, %v4788, %v4789
        %v4791 = vrot.slane %v4789, 4
        %v4792 = vrot.slane %v3915, 5
        %v4793 = vsel %vm1410, %v4791, %v4792
        %v4794 = vrot.slane %v4640, 5
        %v4795 = vrot.slane %v4794, 4
        %v4796 = vrot.slane %v3917, 5
        %v4797 = vsel %vm1410, %v4795, %v4796
        %v4798 = vrot.slane %v4796, 4
        %v4799 = vrot.slane %v3918, 5
        %v4800 = vsel %vm1410, %v4798, %v4799
        %s4801 = scalar_lea.vmem %s1, 512
        %v4802 = vld [vmem:[%s4801] sm:$0xf]
        %v4803 = vld [vmem:[%s4801 + $0x4] sm:$0xf]
        %v4804 = vld [vmem:[%s4801 + $0x8] sm:$0xf]
        %v4805 = vld [vmem:[%s4801 + $0xc] sm:$0xf]
        %v4806 = vld [vmem:[%s4801 + $0x10] sm:$0xf]
        %v4807 = vld [vmem:[%s4801 + $0x14] sm:$0xf]
        %v4808 = vld [vmem:[%s4801 + $0x18] sm:$0xf]
        %v4809 = vld [vmem:[%s4801 + $0x1c] sm:$0xf]
        %v4810 = vld [vmem:[%s4801 + $0x20] sm:$0xf]
        %v4811 = vld [vmem:[%s4801 + $0x24] sm:$0xf]
        %v4812 = vld [vmem:[%s4801 + $0x28] sm:$0xf]
        %v4813 = vld [vmem:[%s4801 + $0x2c] sm:$0xf]
        %v4814 = vld [vmem:[%s4801 + $0x30] sm:$0xf]
        %v4815 = vld [vmem:[%s4801 + $0x34] sm:$0xf]
        %v4816 = vld [vmem:[%s4801 + $0x38] sm:$0xf]
        %v4817 = vld [vmem:[%s4801 + $0x3c] sm:$0xf]
        %v4818 = vunpack.c.l.b16 %v4692
        %v4819 = vunpack.c.l.b16 %v4695
        %v4820 = vunpack.c.l.b16 %v4699
        %v4821 = vunpack.c.l.b16 %v4702
        %v4822 = vunpack.c.l.b16 %v4706
        %v4823 = vunpack.c.l.b16 %v4709
        %v4824 = vunpack.c.l.b16 %v4713
        %v4825 = vunpack.c.l.b16 %v4716
        %v4826 = vunpack.c.l.b16 %v4720
        %v4827 = vunpack.c.l.b16 %v4723
        %v4828 = vunpack.c.l.b16 %v4727
        %v4829 = vunpack.c.l.b16 %v4730
        %v4830 = vunpack.c.l.b16 %v4734
        %v4831 = vunpack.c.l.b16 %v4737
        %v4832 = vunpack.c.l.b16 %v4741
        %v4833 = vunpack.c.l.b16 %v4744
        %v4834 = vunpack.c.l.b16 %v4748
        %v4835 = vunpack.c.l.b16 %v4751
        %v4836 = vunpack.c.l.b16 %v4755
        %v4837 = vunpack.c.l.b16 %v4758
        %v4838 = vunpack.c.l.b16 %v4762
        %v4839 = vunpack.c.l.b16 %v4765
        %v4840 = vunpack.c.l.b16 %v4769
        %v4841 = vunpack.c.l.b16 %v4772
        %v4842 = vunpack.c.l.b16 %v4776
        %v4843 = vunpack.c.l.b16 %v4779
        %v4844 = vunpack.c.l.b16 %v4783
        %v4845 = vunpack.c.l.b16 %v4786
        %v4846 = vunpack.c.l.b16 %v4790
        %v4847 = vunpack.c.l.b16 %v4793
        %v4848 = vunpack.c.l.b16 %v4797
        %v4849 = vunpack.c.l.b16 %v4800
        %v4850 = vpack.c.b16 %v4819, %v4818
        %v4851 = vpack.c.b16 %v4821, %v4820
        %v4852 = vpack.c.b16 %v4823, %v4822
        %v4853 = vpack.c.b16 %v4825, %v4824
        %v4854 = vpack.c.b16 %v4827, %v4826
        %v4855 = vpack.c.b16 %v4829, %v4828
        %v4856 = vpack.c.b16 %v4831, %v4830
        %v4857 = vpack.c.b16 %v4833, %v4832
        %v4858 = vpack.c.b16 %v4835, %v4834
        %v4859 = vpack.c.b16 %v4837, %v4836
        %v4860 = vpack.c.b16 %v4839, %v4838
        %v4861 = vpack.c.b16 %v4841, %v4840
        %v4862 = vpack.c.b16 %v4843, %v4842
        %v4863 = vpack.c.b16 %v4845, %v4844
        %v4864 = vpack.c.b16 %v4847, %v4846
        %v4865 = vpack.c.b16 %v4849, %v4848
        %v4898 = vunpack.c.l.b16 %v4802
        %v4899 = vunpack.c.l.b16 %v4803
        %v4900 = vunpack.c.l.b16 %v4804
        %v4901 = vunpack.c.l.b16 %v4805
        %v4902 = vunpack.c.l.b16 %v4806
        %v4903 = vunpack.c.l.b16 %v4807
        %v4904 = vunpack.c.l.b16 %v4808
        %v4905 = vunpack.c.l.b16 %v4809
        %v4906 = vunpack.c.l.b16 %v4810
        %v4907 = vunpack.c.l.b16 %v4811
        %v4908 = vunpack.c.l.b16 %v4812
        %v4909 = vunpack.c.l.b16 %v4813
        %v4910 = vunpack.c.l.b16 %v4814
        %v4911 = vunpack.c.l.b16 %v4815
        %v4912 = vunpack.c.l.b16 %v4816
        %v4913 = vunpack.c.l.b16 %v4817
        %v4914 = vpack.c.b16 %v4899, %v4898
        %v4915 = vpack.c.b16 %v4901, %v4900
        %v4916 = vpack.c.b16 %v4903, %v4902
        %v4917 = vpack.c.b16 %v4905, %v4904
        %v4918 = vpack.c.b16 %v4907, %v4906
        %v4919 = vpack.c.b16 %v4909, %v4908
        %v4920 = vpack.c.b16 %v4911, %v4910
        %v4921 = vpack.c.b16 %v4913, %v4912
        %4930 = vmatprep.subr.bf16.mxu0 0
        %4931 = vmatpush1.bf16.msra.mxu0 %v4921
        %4932 = vmatprep.subr.bf16.mxu0 0
        %4933 = vmatpush1.bf16.msra.mxu0 %v4920
        %4934 = vmatprep.subr.bf16.mxu0 0
        %4935 = vmatpush1.bf16.msra.mxu0 %v4919
        %4936 = vmatprep.subr.bf16.mxu0 0
        %4937 = vmatpush1.bf16.msra.mxu0 %v4918
        %4938 = vmatprep.subr.bf16.mxu0 0
        %4939 = vmatpush1.bf16.msra.mxu0 %v4917
        %4940 = vmatprep.subr.bf16.mxu0 0
        %4941 = vmatpush1.bf16.msra.mxu0 %v4916
        %4942 = vmatprep.subr.bf16.mxu0 0
        %4943 = vmatpush1.bf16.msra.mxu0 %v4915
        %4944 = vmatprep.subr.bf16.mxu0 0
        %4945 = vmatpush1.bf16.msra.mxu0 %v4914
        %4946 = vmatprep.subr.bf16.mxu0 0
        %4947 = vmatpush2.bf16.msra.mxu0 0
        %4948 = vmatprep.subr.bf16.mxu0 0
        %4949 = vmatpush2.bf16.msra.mxu0 0
        %4950 = vmatprep.subr.bf16.mxu0 0
        %4951 = vmatpush2.bf16.msra.mxu0 0
        %4952 = vmatprep.subr.bf16.mxu0 0
        %4953 = vmatpush2.bf16.msra.mxu0 0
        %4954 = vmatprep.subr.bf16.mxu0 0
        %4955 = vmatpush2.bf16.msra.mxu0 0
        %4956 = vmatprep.subr.bf16.mxu0 0
        %4957 = vmatpush2.bf16.msra.mxu0 0
        %4958 = vmatprep.subr.bf16.mxu0 0
        %4959 = vmatpush2.bf16.msra.mxu0 0
        %4960 = vmatprep.subr.bf16.mxu0 0
        %4961 = vmatpush2.bf16.msra.mxu0 0
        %4962 = vmatprep.mubr.bf16.mxu0 0
        %4963 = vmatmul.mubr.bf16.gmra.mxu0 %v4850
        %v4964 = vpop.f32.mrf.mxu0
        %v4965 = vadd.f32 0.0, %v4964
        %v4966 = vpop.f32.mrf.mxu0
        %v4967 = vpop.f32.mrf.mxu0
        %v4968 = vadd.f32 0.0, %v4967
        %v4969 = vpop.f32.mrf.mxu0
        %4970 = vmatprep.mubr.bf16.mxu0 0
        %4971 = vmatmul.mubr.bf16.gmra.mxu0 %v4851
        %v4972 = vpop.f32.mrf.mxu0
        %v4973 = vadd.f32 0.0, %v4972
        %v4974 = vpop.f32.mrf.mxu0
        %v4975 = vpop.f32.mrf.mxu0
        %v4976 = vadd.f32 0.0, %v4975
        %v4977 = vpop.f32.mrf.mxu0
        %4978 = vmatprep.mubr.bf16.mxu0 0
        %4979 = vmatmul.mubr.bf16.gmra.mxu0 %v4852
        %v4980 = vpop.f32.mrf.mxu0
        %v4981 = vadd.f32 0.0, %v4980
        %v4982 = vpop.f32.mrf.mxu0
        %v4983 = vpop.f32.mrf.mxu0
        %v4984 = vadd.f32 0.0, %v4983
        %v4985 = vpop.f32.mrf.mxu0
        %4986 = vmatprep.mubr.bf16.mxu0 0
        %4987 = vmatmul.mubr.bf16.gmra.mxu0 %v4853
        %v4988 = vpop.f32.mrf.mxu0
        %v4989 = vadd.f32 0.0, %v4988
        %v4990 = vpop.f32.mrf.mxu0
        %v4991 = vpop.f32.mrf.mxu0
        %v4992 = vadd.f32 0.0, %v4991
        %v4993 = vpop.f32.mrf.mxu0
        %4994 = vmatprep.mubr.bf16.mxu0 0
        %4995 = vmatmul.mubr.bf16.gmra.mxu0 %v4854
        %v4996 = vpop.f32.mrf.mxu0
        %v4997 = vadd.f32 0.0, %v4996
        %v4998 = vpop.f32.mrf.mxu0
        %v4999 = vpop.f32.mrf.mxu0
        %v5000 = vadd.f32 0.0, %v4999
        %v5001 = vpop.f32.mrf.mxu0
        %5002 = vmatprep.mubr.bf16.mxu0 0
        %5003 = vmatmul.mubr.bf16.gmra.mxu0 %v4855
        %v5004 = vpop.f32.mrf.mxu0
        %v5005 = vadd.f32 0.0, %v5004
        %v5006 = vpop.f32.mrf.mxu0
        %v5007 = vpop.f32.mrf.mxu0
        %v5008 = vadd.f32 0.0, %v5007
        %v5009 = vpop.f32.mrf.mxu0
        %5010 = vmatprep.mubr.bf16.mxu0 0
        %5011 = vmatmul.mubr.bf16.gmra.mxu0 %v4856
        %v5012 = vpop.f32.mrf.mxu0
        %v5013 = vadd.f32 0.0, %v5012
        %v5014 = vpop.f32.mrf.mxu0
        %v5015 = vpop.f32.mrf.mxu0
        %v5016 = vadd.f32 0.0, %v5015
        %v5017 = vpop.f32.mrf.mxu0
        %5018 = vmatprep.mubr.bf16.mxu0 0
        %5019 = vmatmul.mubr.bf16.gmra.mxu0 %v4857
        %v5020 = vpop.f32.mrf.mxu0
        %v5021 = vadd.f32 0.0, %v5020
        %v5022 = vpop.f32.mrf.mxu0
        %v5023 = vpop.f32.mrf.mxu0
        %v5024 = vadd.f32 0.0, %v5023
        %v5025 = vpop.f32.mrf.mxu0
        %5026 = vmatprep.mubr.bf16.mxu0 0
        %5027 = vmatmul.mubr.bf16.gmra.mxu0 %v4858
        %v5028 = vpop.f32.mrf.mxu0
        %v5029 = vadd.f32 0.0, %v5028
        %v5030 = vpop.f32.mrf.mxu0
        %v5031 = vpop.f32.mrf.mxu0
        %v5032 = vadd.f32 0.0, %v5031
        %v5033 = vpop.f32.mrf.mxu0
        %5034 = vmatprep.mubr.bf16.mxu0 0
        %5035 = vmatmul.mubr.bf16.gmra.mxu0 %v4859
        %v5036 = vpop.f32.mrf.mxu0
        %v5037 = vadd.f32 0.0, %v5036
        %v5038 = vpop.f32.mrf.mxu0
        %v5039 = vpop.f32.mrf.mxu0
        %v5040 = vadd.f32 0.0, %v5039
        %v5041 = vpop.f32.mrf.mxu0
        %5042 = vmatprep.mubr.bf16.mxu0 0
        %5043 = vmatmul.mubr.bf16.gmra.mxu0 %v4860
        %v5044 = vpop.f32.mrf.mxu0
        %v5045 = vadd.f32 0.0, %v5044
        %v5046 = vpop.f32.mrf.mxu0
        %v5047 = vpop.f32.mrf.mxu0
        %v5048 = vadd.f32 0.0, %v5047
        %v5049 = vpop.f32.mrf.mxu0
        %5050 = vmatprep.mubr.bf16.mxu0 0
        %5051 = vmatmul.mubr.bf16.gmra.mxu0 %v4861
        %v5052 = vpop.f32.mrf.mxu0
        %v5053 = vadd.f32 0.0, %v5052
        %v5054 = vpop.f32.mrf.mxu0
        %v5055 = vpop.f32.mrf.mxu0
        %v5056 = vadd.f32 0.0, %v5055
        %v5057 = vpop.f32.mrf.mxu0
        %5058 = vmatprep.mubr.bf16.mxu0 0
        %5059 = vmatmul.mubr.bf16.gmra.mxu0 %v4862
        %v5060 = vpop.f32.mrf.mxu0
        %v5061 = vadd.f32 0.0, %v5060
        %v5062 = vpop.f32.mrf.mxu0
        %v5063 = vpop.f32.mrf.mxu0
        %v5064 = vadd.f32 0.0, %v5063
        %v5065 = vpop.f32.mrf.mxu0
        %5066 = vmatprep.mubr.bf16.mxu0 0
        %5067 = vmatmul.mubr.bf16.gmra.mxu0 %v4863
        %v5068 = vpop.f32.mrf.mxu0
        %v5069 = vadd.f32 0.0, %v5068
        %v5070 = vpop.f32.mrf.mxu0
        %v5071 = vpop.f32.mrf.mxu0
        %v5072 = vadd.f32 0.0, %v5071
        %v5073 = vpop.f32.mrf.mxu0
        %5074 = vmatprep.mubr.bf16.mxu0 0
        %5075 = vmatmul.mubr.bf16.gmra.mxu0 %v4864
        %v5076 = vpop.f32.mrf.mxu0
        %v5077 = vadd.f32 0.0, %v5076
        %v5078 = vpop.f32.mrf.mxu0
        %v5079 = vpop.f32.mrf.mxu0
        %v5080 = vadd.f32 0.0, %v5079
        %v5081 = vpop.f32.mrf.mxu0
        %5082 = vmatprep.mubr.bf16.mxu0 0
        %5083 = vmatmul.mubr.bf16.gmra.mxu0 %v4865
        %v5084 = vpop.f32.mrf.mxu0
        %v5085 = vadd.f32 0.0, %v5084
        %v5086 = vpop.f32.mrf.mxu0
        %v5087 = vpop.f32.mrf.mxu0
        %v5088 = vadd.f32 0.0, %v5087
        %v5089 = vpop.f32.mrf.mxu0
        %5090 = vdwg.mxu0
        %v5091 = vadd.f32 %v4593, %v4965
        %v5092 = vadd.f32 %v4594, %v4968
        %v5093 = vadd.f32 %v4595, %v4973
        %v5094 = vadd.f32 %v4596, %v4976
        %v5095 = vadd.f32 %v4597, %v4981
        %v5096 = vadd.f32 %v4598, %v4984
        %v5097 = vadd.f32 %v4599, %v4989
        %v5098 = vadd.f32 %v4600, %v4992
        %v5099 = vadd.f32 %v4601, %v4997
        %v5100 = vadd.f32 %v4602, %v5000
        %v5101 = vadd.f32 %v4603, %v5005
        %v5102 = vadd.f32 %v4604, %v5008
        %v5103 = vadd.f32 %v4605, %v5013
        %v5104 = vadd.f32 %v4606, %v5016
        %v5105 = vadd.f32 %v4607, %v5021
        %v5106 = vadd.f32 %v4608, %v5024
        %v5107 = vadd.f32 %v4609, %v5029
        %v5108 = vadd.f32 %v4610, %v5032
        %v5109 = vadd.f32 %v4611, %v5037
        %v5110 = vadd.f32 %v4612, %v5040
        %v5111 = vadd.f32 %v4613, %v5045
        %v5112 = vadd.f32 %v4614, %v5048
        %v5113 = vadd.f32 %v4615, %v5053
        %v5114 = vadd.f32 %v4616, %v5056
        %v5115 = vadd.f32 %v4617, %v5061
        %v5116 = vadd.f32 %v4618, %v5064
        %v5117 = vadd.f32 %v4619, %v5069
        %v5118 = vadd.f32 %v4620, %v5072
        %v5119 = vadd.f32 %v4621, %v5077
        %v5120 = vadd.f32 %v4622, %v5080
        %v5121 = vadd.f32 %v4623, %v5085
        %v5122 = vadd.f32 %v4624, %v5088
        %v5123 = vld [vmem:[%s2] sm:$0x1]
        %v5125 = vlaneseq
        %v5126 = vshrl.u32 %v5125, 7
        %v5127 = vsub.s32 0, %v5126
        %v5128 = vrot.slane %v5123, %v5127
        %v5130 = vadd.f32 %v5091, %v5128
        %v5131 = vadd.f32 %v5092, %v5128
        %v5132 = vadd.f32 %v5093, %v5128
        %v5133 = vadd.f32 %v5094, %v5128
        %v5134 = vadd.f32 %v5095, %v5128
        %v5135 = vadd.f32 %v5096, %v5128
        %v5136 = vadd.f32 %v5097, %v5128
        %v5137 = vadd.f32 %v5098, %v5128
        %v5138 = vadd.f32 %v5099, %v5128
        %v5139 = vadd.f32 %v5100, %v5128
        %v5140 = vadd.f32 %v5101, %v5128
        %v5141 = vadd.f32 %v5102, %v5128
        %v5142 = vadd.f32 %v5103, %v5128
        %v5143 = vadd.f32 %v5104, %v5128
        %v5144 = vadd.f32 %v5105, %v5128
        %v5145 = vadd.f32 %v5106, %v5128
        %v5146 = vadd.f32 %v5107, %v5128
        %v5147 = vadd.f32 %v5108, %v5128
        %v5148 = vadd.f32 %v5109, %v5128
        %v5149 = vadd.f32 %v5110, %v5128
        %v5150 = vadd.f32 %v5111, %v5128
        %v5151 = vadd.f32 %v5112, %v5128
        %v5152 = vadd.f32 %v5113, %v5128
        %v5153 = vadd.f32 %v5114, %v5128
        %v5154 = vadd.f32 %v5115, %v5128
        %v5155 = vadd.f32 %v5116, %v5128
        %v5156 = vadd.f32 %v5117, %v5128
        %v5157 = vadd.f32 %v5118, %v5128
        %v5158 = vadd.f32 %v5119, %v5128
        %v5159 = vadd.f32 %v5120, %v5128
        %v5160 = vadd.f32 %v5121, %v5128
        %v5161 = vadd.f32 %v5122, %v5128
        %v5162 = vmax.f32 %v5130, 0.0
        %v5163 = vmax.f32 %v5131, 0.0
        %v5164 = vmax.f32 %v5132, 0.0
        %v5165 = vmax.f32 %v5133, 0.0
        %v5166 = vmax.f32 %v5134, 0.0
        %v5167 = vmax.f32 %v5135, 0.0
        %v5168 = vmax.f32 %v5136, 0.0
        %v5169 = vmax.f32 %v5137, 0.0
        %v5170 = vmax.f32 %v5138, 0.0
        %v5171 = vmax.f32 %v5139, 0.0
        %v5172 = vmax.f32 %v5140, 0.0
        %v5173 = vmax.f32 %v5141, 0.0
        %v5174 = vmax.f32 %v5142, 0.0
        %v5175 = vmax.f32 %v5143, 0.0
        %v5176 = vmax.f32 %v5144, 0.0
        %v5177 = vmax.f32 %v5145, 0.0
        %v5178 = vmax.f32 %v5146, 0.0
        %v5179 = vmax.f32 %v5147, 0.0
        %v5180 = vmax.f32 %v5148, 0.0
        %v5181 = vmax.f32 %v5149, 0.0
        %v5182 = vmax.f32 %v5150, 0.0
        %v5183 = vmax.f32 %v5151, 0.0
        %v5184 = vmax.f32 %v5152, 0.0
        %v5185 = vmax.f32 %v5153, 0.0
        %v5186 = vmax.f32 %v5154, 0.0
        %v5187 = vmax.f32 %v5155, 0.0
        %v5188 = vmax.f32 %v5156, 0.0
        %v5189 = vmax.f32 %v5157, 0.0
        %v5190 = vmax.f32 %v5158, 0.0
        %v5191 = vmax.f32 %v5159, 0.0
        %v5192 = vmax.f32 %v5160, 0.0
        %v5193 = vmax.f32 %v5161, 0.0
        %v5194 = vadd.f32 %v5162, %v5163
        %v5195 = vadd.f32 %v5194, %v5164
        %v5196 = vadd.f32 %v5195, %v5165
        %v5197 = vadd.f32 %v5196, %v5166
        %v5198 = vadd.f32 %v5197, %v5167
        %v5199 = vadd.f32 %v5198, %v5168
        %v5200 = vadd.f32 %v5199, %v5169
        %v5201 = vadd.f32 %v5200, %v5170
        %v5202 = vadd.f32 %v5201, %v5171
        %v5203 = vadd.f32 %v5202, %v5172
        %v5204 = vadd.f32 %v5203, %v5173
        %v5205 = vadd.f32 %v5204, %v5174
        %v5206 = vadd.f32 %v5205, %v5175
        %v5207 = vadd.f32 %v5206, %v5176
        %v5208 = vadd.f32 %v5207, %v5177
        %v5209 = vadd.f32 %v5208, %v5178
        %v5210 = vadd.f32 %v5209, %v5179
        %v5211 = vadd.f32 %v5210, %v5180
        %v5212 = vadd.f32 %v5211, %v5181
        %v5213 = vadd.f32 %v5212, %v5182
        %v5214 = vadd.f32 %v5213, %v5183
        %v5215 = vadd.f32 %v5214, %v5184
        %v5216 = vadd.f32 %v5215, %v5185
        %v5217 = vadd.f32 %v5216, %v5186
        %v5218 = vadd.f32 %v5217, %v5187
        %v5219 = vadd.f32 %v5218, %v5188
        %v5220 = vadd.f32 %v5219, %v5189
        %v5221 = vadd.f32 %v5220, %v5190
        %v5222 = vadd.f32 %v5221, %v5191
        %v5223 = vadd.f32 %v5222, %v5192
        %v5224 = vadd.f32 %v5223, %v5193
        %v5225 = vrot.slane %v5224, 4
        %v5226 = vadd.f32 %v5224, %v5225
        %v5227 = vrot.slane %v5226, 2
        %v5228 = vadd.f32 %v5226, %v5227
        %v5229 = vrot.slane %v5228, 1
        %v5230 = vadd.f32 %v5228, %v5229
        %v5231 = vrcp.pop 256.0
        %v5232 = vmul.f32 %v5230, %v5231
        %5233 = vst [vmem:[%s301] sm:$0x1] %v5232
        %v5234 = vpack.c.bf16 %v5232, %v5232
        %v5235 = vld [vmem:[%s3] sm:$0xf]
        %v5236 = vld [vmem:[%s3 + $0x4] sm:$0xf]
        %v5237 = vld [vmem:[%s3 + $0x8] sm:$0xf]
        %v5238 = vld [vmem:[%s3 + $0xc] sm:$0xf]
        %v5239 = vld [vmem:[%s3 + $0x10] sm:$0xf]
        %v5240 = vld [vmem:[%s3 + $0x14] sm:$0xf]
        %v5241 = vld [vmem:[%s3 + $0x18] sm:$0xf]
        %v5242 = vld [vmem:[%s3 + $0x1c] sm:$0xf]
        %v5243 = vld [vmem:[%s3 + $0x20] sm:$0xf]
        %v5244 = vld [vmem:[%s3 + $0x24] sm:$0xf]
        %v5245 = vld [vmem:[%s3 + $0x28] sm:$0xf]
        %v5246 = vld [vmem:[%s3 + $0x2c] sm:$0xf]
        %v5247 = vld [vmem:[%s3 + $0x30] sm:$0xf]
        %v5248 = vld [vmem:[%s3 + $0x34] sm:$0xf]
        %v5249 = vld [vmem:[%s3 + $0x38] sm:$0xf]
        %v5250 = vld [vmem:[%s3 + $0x3c] sm:$0xf]
        %v5251 = vld [vmem:[%s4] sm:$0x1]
        %v5268 = vunpack.c.l.b16 %v5235
        %v5269 = vunpack.c.l.b16 %v5236
        %v5270 = vunpack.c.l.b16 %v5237
        %v5271 = vunpack.c.l.b16 %v5238
        %v5272 = vunpack.c.l.b16 %v5239
        %v5273 = vunpack.c.l.b16 %v5240
        %v5274 = vunpack.c.l.b16 %v5241
        %v5275 = vunpack.c.l.b16 %v5242
        %v5276 = vunpack.c.l.b16 %v5243
        %v5277 = vunpack.c.l.b16 %v5244
        %v5278 = vunpack.c.l.b16 %v5245
        %v5279 = vunpack.c.l.b16 %v5246
        %v5280 = vunpack.c.l.b16 %v5247
        %v5281 = vunpack.c.l.b16 %v5248
        %v5282 = vunpack.c.l.b16 %v5249
        %v5283 = vunpack.c.l.b16 %v5250
        %v5284 = vpack.c.b16 %v5269, %v5268
        %v5285 = vpack.c.b16 %v5271, %v5270
        %v5286 = vpack.c.b16 %v5273, %v5272
        %v5287 = vpack.c.b16 %v5275, %v5274
        %v5288 = vpack.c.b16 %v5277, %v5276
        %v5289 = vpack.c.b16 %v5279, %v5278
        %v5290 = vpack.c.b16 %v5281, %v5280
        %v5291 = vpack.c.b16 %v5283, %v5282
        %5300 = vmatprep.subr.bf16.mxu0 0
        %5301 = vmatpush1.bf16.msra.mxu0 %v5291
        %5302 = vmatprep.subr.bf16.mxu0 0
        %5303 = vmatpush1.bf16.msra.mxu0 %v5290
        %5304 = vmatprep.subr.bf16.mxu0 0
        %5305 = vmatpush1.bf16.msra.mxu0 %v5289
        %5306 = vmatprep.subr.bf16.mxu0 0
        %5307 = vmatpush1.bf16.msra.mxu0 %v5288
        %5308 = vmatprep.subr.bf16.mxu0 0
        %5309 = vmatpush1.bf16.msra.mxu0 %v5287
        %5310 = vmatprep.subr.bf16.mxu0 0
        %5311 = vmatpush1.bf16.msra.mxu0 %v5286
        %5312 = vmatprep.subr.bf16.mxu0 0
        %5313 = vmatpush1.bf16.msra.mxu0 %v5285
        %5314 = vmatprep.subr.bf16.mxu0 0
        %5315 = vmatpush1.bf16.msra.mxu0 %v5284
        %5316 = vmatprep.subr.bf16.mxu0 0
        %5317 = vmatpush2.bf16.msra.mxu0 0
        %5318 = vmatprep.subr.bf16.mxu0 0
        %5319 = vmatpush2.bf16.msra.mxu0 0
        %5320 = vmatprep.subr.bf16.mxu0 0
        %5321 = vmatpush2.bf16.msra.mxu0 0
        %5322 = vmatprep.subr.bf16.mxu0 0
        %5323 = vmatpush2.bf16.msra.mxu0 0
        %5324 = vmatprep.subr.bf16.mxu0 0
        %5325 = vmatpush2.bf16.msra.mxu0 0
        %5326 = vmatprep.subr.bf16.mxu0 0
        %5327 = vmatpush2.bf16.msra.mxu0 0
        %5328 = vmatprep.subr.bf16.mxu0 0
        %5329 = vmatpush2.bf16.msra.mxu0 0
        %5330 = vmatprep.subr.bf16.mxu0 0
        %5331 = vmatpush2.bf16.msra.mxu0 0
        %5332 = vmatprep.mubr.bf16.mxu0 0
        %5333 = vmatmul.mubr.bf16.gmra.mxu0 %v5234
        %v5334 = vpop.f32.mrf.mxu0
        %v5335 = vadd.f32 %v5251, %v5334
        %v5336 = vpop.f32.mrf.mxu0
        %v5337 = vpop.f32.mrf.mxu0
        %v5338 = vpop.f32.mrf.mxu0
        %5339 = vdwg.mxu0
        %v5340 = vmax.f32 %v5335, 0.0
        %v5341 = vpack.c.bf16 %v5340, %v5340
        %v5342 = vld [vmem:[%s5] sm:$0xf]
        %v5343 = vld [vmem:[%s5 + $0x4] sm:$0xf]
        %v5344 = vld [vmem:[%s5 + $0x8] sm:$0xf]
        %v5345 = vld [vmem:[%s5 + $0xc] sm:$0xf]
        %v5346 = vld [vmem:[%s5 + $0x10] sm:$0xf]
        %v5347 = vld [vmem:[%s5 + $0x14] sm:$0xf]
        %v5348 = vld [vmem:[%s5 + $0x18] sm:$0xf]
        %v5349 = vld [vmem:[%s5 + $0x1c] sm:$0xf]
        %v5350 = vld [vmem:[%s5 + $0x20] sm:$0xf]
        %v5351 = vld [vmem:[%s5 + $0x24] sm:$0xf]
        %v5352 = vld [vmem:[%s5 + $0x28] sm:$0xf]
        %v5353 = vld [vmem:[%s5 + $0x2c] sm:$0xf]
        %v5354 = vld [vmem:[%s5 + $0x30] sm:$0xf]
        %v5355 = vld [vmem:[%s5 + $0x34] sm:$0xf]
        %v5356 = vld [vmem:[%s5 + $0x38] sm:$0xf]
        %v5357 = vld [vmem:[%s5 + $0x3c] sm:$0xf]
        %v5358 = vld [vmem:[%s6] sm:$0x1]
        %v5375 = vunpack.c.l.b16 %v5342
        %v5376 = vunpack.c.l.b16 %v5343
        %v5377 = vunpack.c.l.b16 %v5344
        %v5378 = vunpack.c.l.b16 %v5345
        %v5379 = vunpack.c.l.b16 %v5346
        %v5380 = vunpack.c.l.b16 %v5347
        %v5381 = vunpack.c.l.b16 %v5348
        %v5382 = vunpack.c.l.b16 %v5349
        %v5383 = vunpack.c.l.b16 %v5350
        %v5384 = vunpack.c.l.b16 %v5351
        %v5385 = vunpack.c.l.b16 %v5352
        %v5386 = vunpack.c.l.b16 %v5353
        %v5387 = vunpack.c.l.b16 %v5354
        %v5388 = vunpack.c.l.b16 %v5355
        %v5389 = vunpack.c.l.b16 %v5356
        %v5390 = vunpack.c.l.b16 %v5357
        %v5391 = vpack.c.b16 %v5376, %v5375
        %v5392 = vpack.c.b16 %v5378, %v5377
        %v5393 = vpack.c.b16 %v5380, %v5379
        %v5394 = vpack.c.b16 %v5382, %v5381
        %v5395 = vpack.c.b16 %v5384, %v5383
        %v5396 = vpack.c.b16 %v5386, %v5385
        %v5397 = vpack.c.b16 %v5388, %v5387
        %v5398 = vpack.c.b16 %v5390, %v5389
        %5407 = vmatprep.subr.bf16.mxu0 0
        %5408 = vmatpush1.bf16.msra.mxu0 %v5398
        %5409 = vmatprep.subr.bf16.mxu0 0
        %5410 = vmatpush1.bf16.msra.mxu0 %v5397
        %5411 = vmatprep.subr.bf16.mxu0 0
        %5412 = vmatpush1.bf16.msra.mxu0 %v5396
        %5413 = vmatprep.subr.bf16.mxu0 0
        %5414 = vmatpush1.bf16.msra.mxu0 %v5395
        %5415 = vmatprep.subr.bf16.mxu0 0
        %5416 = vmatpush1.bf16.msra.mxu0 %v5394
        %5417 = vmatprep.subr.bf16.mxu0 0
        %5418 = vmatpush1.bf16.msra.mxu0 %v5393
        %5419 = vmatprep.subr.bf16.mxu0 0
        %5420 = vmatpush1.bf16.msra.mxu0 %v5392
        %5421 = vmatprep.subr.bf16.mxu0 0
        %5422 = vmatpush1.bf16.msra.mxu0 %v5391
        %5423 = vmatprep.subr.bf16.mxu0 0
        %5424 = vmatpush2.bf16.msra.mxu0 0
        %5425 = vmatprep.subr.bf16.mxu0 0
        %5426 = vmatpush2.bf16.msra.mxu0 0
        %5427 = vmatprep.subr.bf16.mxu0 0
        %5428 = vmatpush2.bf16.msra.mxu0 0
        %5429 = vmatprep.subr.bf16.mxu0 0
        %5430 = vmatpush2.bf16.msra.mxu0 0
        %5431 = vmatprep.subr.bf16.mxu0 0
        %5432 = vmatpush2.bf16.msra.mxu0 0
        %5433 = vmatprep.subr.bf16.mxu0 0
        %5434 = vmatpush2.bf16.msra.mxu0 0
        %5435 = vmatprep.subr.bf16.mxu0 0
        %5436 = vmatpush2.bf16.msra.mxu0 0
        %5437 = vmatprep.subr.bf16.mxu0 0
        %5438 = vmatpush2.bf16.msra.mxu0 0
        %5439 = vmatprep.mubr.bf16.mxu0 0
        %5440 = vmatmul.mubr.bf16.gmra.mxu0 %v5341
        %v5441 = vpop.f32.mrf.mxu0
        %v5442 = vadd.f32 %v5358, %v5441
        %v5443 = vpop.f32.mrf.mxu0
        %v5444 = vpop.f32.mrf.mxu0
        %v5445 = vpop.f32.mrf.mxu0
        %5446 = vdwg.mxu0
        %5447 = vst [vmem:[%s307] sm:$0x1] %v5442
        %s5448 = sand.u32 %s186, 1
        %s5449 = scalar_lea.sflag [#allocation3], %s5448
        %s5450 = sand.u32 %s186, 1
        %s5451 = scalar_lea.vmem [#allocation2], %s5450
        %s5452 = sand.u32 %s212, 1
        %s5453 = scalar_lea.sflag [#allocation5], %s5452
        %s5454 = sand.u32 %s212, 1
        %s5455 = scalar_lea.vmem [#allocation4], %s5454
        // Predicated region
        $region49: #{continual_ssl_forward.3} parent=47 // pred_check
          %p5456 = pneg %p196
        $region50: #{continual_ssl_forward.3} parent=47 // pred_check_branch
          %5458 = sbr.rel (%p5456) target = $region52
        $region51: #{continual_ssl_forward.3} parent=47 // pred_region
          %s5460 = ssub.s32 16, 16
          %5461 = vsyncadd %s5449, %s5460
          %s5462 = smul.addr %s26, 16
          %s5463 = scalar_lea.hbm %s7, %s5462
          %s5465 = sshll.u32 %s5451, 4
          %s5466 = int_to_ptr.vmem [resolvable:$true] %s5465
          %5468 = dma.vmem_to_hbm [thread:$0]  %s5466, 16, %s5463, %s5449
        $region52: #{continual_ssl_forward.3} parent=47 // pred_fallthru
          _
        // Predicated region
        $region53: #{continual_ssl_forward.3} parent=47 // pred_check
          %p5469 = pneg %p222
        $region54: #{continual_ssl_forward.3} parent=47 // pred_check_branch
          %5471 = sbr.rel (%p5469) target = $region56
        $region55: #{continual_ssl_forward.3} parent=47 // pred_region
          %s5473 = ssub.s32 16, 16
          %5474 = vsyncadd %s5453, %s5473
          %s5475 = smul.addr %s26, 16
          %s5476 = scalar_lea.hbm %s8, %s5475
          %s5478 = sshll.u32 %s5455, 4
          %s5479 = int_to_ptr.vmem [resolvable:$true] %s5478
          %5481 = dma.vmem_to_hbm [thread:$0]  %s5479, 16, %s5476, %s5453
        $region56: #{continual_ssl_forward.3} parent=47 // pred_fallthru
          _
      $region48: #{continual_ssl_forward.3} parent=5 // pred_fallthru
        _
      %p5482 = scmp.le.s32.totalorder 2, %s21
      // Predicated region
      $region57: #{continual_ssl_forward.3} parent=5 // pred_check
        %p5483 = pneg %p5482
      $region58: #{continual_ssl_forward.3} parent=5 // pred_check_branch
        %5485 = sbr.rel (%p5483) target = $region60
      $region59: #{continual_ssl_forward.3} parent=5 // pred_region
        %s5486 = ssub.s32 %s21, 2
        // Predicated region
        $region61: #{continual_ssl_forward.3} parent=59 // pred_check
          %p5487 = pneg %p202
        $region62: #{continual_ssl_forward.3} parent=59 // pred_check_branch
          %5489 = sbr.rel (%p5487) target = $region64
        $region63: #{continual_ssl_forward.3} parent=59 // pred_region
          %s5490 = sand.u32 %s187, 1
          %s5491 = scalar_lea.sflag [#allocation3], %s5490
          %s5492 = sand.u32 %s187, 1
          %s5493 = scalar_lea.vmem [#allocation2], %s5492
          %5494 = dma.done %s5491, 16
        $region64: #{continual_ssl_forward.3} parent=59 // pred_fallthru
          _
        // Predicated region
        $region65: #{continual_ssl_forward.3} parent=59 // pred_check
          %p5495 = pneg %p228
        $region66: #{continual_ssl_forward.3} parent=59 // pred_check_branch
          %5497 = sbr.rel (%p5495) target = $region68
        $region67: #{continual_ssl_forward.3} parent=59 // pred_region
          %s5498 = sand.u32 %s213, 1
          %s5499 = scalar_lea.sflag [#allocation5], %s5498
          %s5500 = sand.u32 %s213, 1
          %s5501 = scalar_lea.vmem [#allocation4], %s5500
          %5502 = dma.done %s5499, 16
        $region68: #{continual_ssl_forward.3} parent=59 // pred_fallthru
          _
      $region60: #{continual_ssl_forward.3} parent=5 // pred_fallthru
        _
    $region6: #{continual_ssl_forward.3} parent=1 // loop_footer
      %s25 = sadd.s32 1, %s21
    $region7: #{continual_ssl_forward.3} parent=1 // loop_footer_branch
      %20 = sbr.rel target = $region3
    $region8: #{continual_ssl_forward.3} parent=1 // loop_exit
      _
    %5503 = vsyncpa [#allocation3], 1
    %s5504 = scalar_lea.sflag [#allocation3], 1
    %5505 = vsyncpa %s5504, 1
    %5506 = vsyncpa [#allocation5], 1
    %s5507 = scalar_lea.sflag [#allocation5], 1
    %5508 = vsyncpa %s5507, 1

</llo_original>
